<compile_context>
chip_gen: v7x
topology: tpu7x:2x2x1
jax: 0.10.0
libtpu: 0.0.40
codegen_flags: <defaults>
</compile_context>

<pallas_src>
import functools

import jax
import jax.numpy as jnp
from jax.experimental import pallas as pl
from jax.experimental.pallas import tpu as pltpu

NUM_CLASSES = 2
NUM_PROPOSALS = 8          # stand-in for RPN proposals (box_detections_per_img=400 in ref)
POOL_SIZE = 7              # roi_heads box_roi_pool output_size
FPN_CH = 16                # FPN out_channels (256 in the real model, shrunk)
REPR_SIZE = 64             # TwoMLPHead representation size (1024 in the real model)
NUM_ANCHORS = 3
CP = 128                   # lane-dense output channel width (all outputs padded to this)


# ------------------------------------------------------------------ utilities
def _round_up(n, m):
    return ((n + m - 1) // m) * m


def _pad_to(a, shape):
    return jnp.pad(a, [(0, t - s) for s, t in zip(a.shape, shape)])


def _apply_act(x, act):
    if act == "relu":
        return jnp.maximum(x, 0.0)
    if act == "hardswish":
        return x * jnp.clip(x + 3.0, 0.0, 6.0) * (1.0 / 6.0)
    return x


def _tiles(M, K):
    """M tile chosen so large calls get >=2 grid steps (v7x dual-TC) with
    minimal row padding; K tiled only when it would not fit a single block."""
    Mp = _round_up(M, 8)
    TM = Mp if Mp <= 256 else 256
    Mp = _round_up(Mp, TM)
    Kp = _round_up(K, 8)
    TK = Kp if Kp <= 1024 else 512
    Kp = _round_up(Kp, TK)
    return Mp, TM, Kp, TK


# ----------------------------------------------------- generic fused matmul
def _mm_kernel(x_ref, w_ref, b_ref, o_ref, acc_ref, *, act):
    @pl.when(pl.program_id(1) == 0)
    def _():
        acc_ref[...] = jnp.zeros_like(acc_ref)

    acc_ref[...] += jnp.dot(x_ref[...], w_ref[...], preferred_element_type=jnp.float32)

    @pl.when(pl.program_id(1) == pl.num_programs(1) - 1)
    def _():
        o_ref[...] = _apply_act(acc_ref[...] + b_ref[...], act).astype(o_ref.dtype)


def matmul_bias_act(x, w, b, act="none", out_dtype=jnp.bfloat16):
    """x:(M,K), w:(K,N) bf16 (N multiple of 128), b:(1,N) f32 -> (M,N).
    K-tiled accumulation (f32 scratch), bias/act only on the final K step."""
    M, K = x.shape
    N = w.shape[1]
    Mp, TM, Kp, TK = _tiles(M, K)
    x = x.astype(jnp.bfloat16)
    if (Mp, Kp) != (M, K):
        x = jnp.pad(x, ((0, Mp - M), (0, Kp - K)))
    if Kp != w.shape[0]:
        w = jnp.pad(w, ((0, Kp - w.shape[0]), (0, 0)))
    out = pl.pallas_call(
        functools.partial(_mm_kernel, act=act),
        out_shape=jax.ShapeDtypeStruct((Mp, N), out_dtype),
        grid=(Mp // TM, Kp // TK),
        in_specs=[
            pl.BlockSpec((TM, TK), lambda i, k: (i, k)),
            pl.BlockSpec((TK, N), lambda i, k: (k, 0)),
            pl.BlockSpec((1, N), lambda i, k: (0, 0)),
        ],
        out_specs=pl.BlockSpec((TM, N), lambda i, k: (i, 0)),
        scratch_shapes=[pltpu.VMEM((TM, N), jnp.float32)],
        compiler_params=pltpu.CompilerParams(
            dimension_semantics=("parallel", "arbitrary"),
            vmem_limit_bytes=32 * 1024 * 1024),
    )(x, w, b.astype(jnp.float32))
    return out[:M] if Mp != M else out


def pointwise_conv2d(x, w, b, act="none"):
    """1x1 conv: reshape NHWC -> (M, C) and fused matmul (no im2col)."""
    B, H, W, C = x.shape
    out = matmul_bias_act(x.reshape(B * H * W, C), w, b, act)
    return out.reshape(B, H, W, w.shape[1])


# -------------------------------------- fused depthwise(s2) + pointwise block
def _dwpw_kernel(x_ref, dww_ref, dwb_ref, pww_ref, pwb_ref, o_ref, *, act):
    """3x3 depthwise (stride 2) + 1x1 pointwise, one call. Per-tap VPU FMA
    accumulation (no (9,TM,C) f32 materialization), then one MXU matmul."""
    _, Ho, Wo, N = o_ref.shape
    C = x_ref.shape[-1]
    acc = jnp.zeros((Ho, Wo, C), jnp.float32)
    for k in range(9):
        dy, dx = k // 3, k % 3
        ph = (dy % 2) * 2 + (dx % 2)
        t = x_ref[ph, 0, dy // 2:dy // 2 + Ho, dx // 2:dx // 2 + Wo, :]
        acc = acc + t.astype(jnp.float32) * dww_ref[k].astype(jnp.float32)
    h = _apply_act(acc + dwb_ref[...], act).astype(jnp.bfloat16).reshape(Ho * Wo, C)
    out = jnp.dot(h, pww_ref[...], preferred_element_type=jnp.float32) + pwb_ref[...]
    o_ref[...] = _apply_act(out, act).reshape(1, Ho, Wo, N).astype(o_ref.dtype)


def dw_pw_block(x, dw_w, dw_b, pw_w, pw_b, act="hardswish"):
    """One-time space-to-depth phase split in JAX so every in-kernel tap of the
    stride-2 depthwise is a static contiguous slice; no 9x HBM amplification."""
    B, H, W, C = x.shape
    Ho, Wo = H // 2, W // 2
    Hh, Wh = Ho + 1, Wo + 1
    xp = jnp.pad(x, ((0, 0), (1, 1), (1, 1), (0, 0)))                 # halo pad
    xph = xp.reshape(B, Hh, 2, Wh, 2, C).transpose(2, 4, 0, 1, 3, 5)
    xph = xph.reshape(4, B, Hh, Wh, C)                                # (phase,B,Hh,Wh,C)
    N = pw_w.shape[1]
    return pl.pallas_call(
        functools.partial(_dwpw_kernel, act=act),
        out_shape=jax.ShapeDtypeStruct((B, Ho, Wo, N), jnp.bfloat16),
        grid=(B,),
        in_specs=[
            pl.BlockSpec((4, 1, Hh, Wh, C), lambda i: (0, i, 0, 0, 0)),
            pl.BlockSpec((9, 1, C), lambda i: (0, 0, 0)),
            pl.BlockSpec((1, C), lambda i: (0, 0)),
            pl.BlockSpec((C, N), lambda i: (0, 0)),
            pl.BlockSpec((1, N), lambda i: (0, 0)),
        ],
        out_specs=pl.BlockSpec((1, Ho, Wo, N), lambda i: (i, 0, 0, 0)),
        compiler_params=pltpu.CompilerParams(dimension_semantics=("parallel",)),
    )(xph, dw_w, dw_b, pw_w, pw_b)


# ------------------------------------------- fused halo 3x3 conv (stride 1)
def _conv3_kernel(x_ref, w_ref, b_ref, o_ref, *, act):
    """3x3/s1/p1 conv: per-tap MXU matmul over the REAL input channels only."""
    _, H, W, N = o_ref.shape
    cin = x_ref.shape[-1]
    acc = jnp.zeros((H * W, N), jnp.float32)
    for k in range(9):
        dy, dx = k // 3, k % 3
        t = x_ref[0, dy:dy + H, dx:dx + W, :].reshape(H * W, cin)
        acc = acc + jnp.dot(t, w_ref[k], preferred_element_type=jnp.float32)
    o_ref[...] = _apply_act(acc + b_ref[...], act).reshape(1, H, W, N).astype(o_ref.dtype)


def _conv3_head_kernel(x_ref, w_ref, b_ref, w2_ref, b2_ref, o_ref):
    """RPN: shared 3x3 conv (+ReLU) and fused cls|bbox 1x1 head in ONE kernel."""
    _, H, W, N2 = o_ref.shape
    cin = x_ref.shape[-1]
    N1 = w_ref.shape[-1]
    acc = jnp.zeros((H * W, N1), jnp.float32)
    for k in range(9):
        dy, dx = k // 3, k % 3
        t = x_ref[0, dy:dy + H, dx:dx + W, :].reshape(H * W, cin)
        acc = acc + jnp.dot(t, w_ref[k], preferred_element_type=jnp.float32)
    t2 = jnp.maximum(acc + b_ref[...], 0.0).astype(jnp.bfloat16)
    out = jnp.dot(t2, w2_ref[...], preferred_element_type=jnp.float32) + b2_ref[...]
    o_ref[...] = out.reshape(1, H, W, N2).astype(o_ref.dtype)


def conv3x3_s1(x, w, b, act="none", cin=FPN_CH):
    B, H, W, Cs = x.shape
    if Cs > cin:
        x = x[..., :cin]                      # drop lane padding -> no K zeros on the MXU
    xp = jnp.pad(x.astype(jnp.bfloat16), ((0, 0), (1, 1), (1, 1), (0, 0)))
    N = w.shape[-1]
    return pl.pallas_call(
        functools.partial(_conv3_kernel, act=act),
        out_shape=jax.ShapeDtypeStruct((B, H, W, N), jnp.bfloat16),
        grid=(B,),
        in_specs=[
            pl.BlockSpec((1, H + 2, W + 2, cin), lambda i: (i, 0, 0, 0)),
            pl.BlockSpec((9, cin, N), lambda i: (0, 0, 0)),
            pl.BlockSpec((1, N), lambda i: (0, 0)),
        ],
        out_specs=pl.BlockSpec((1, H, W, N), lambda i: (i, 0, 0, 0)),
        compiler_params=pltpu.CompilerParams(dimension_semantics=("parallel",)),
    )(xp, w, b)


def rpn_head_level(x, conv_w, conv_b, head_w, head_b, cin=FPN_CH):
    B, H, W, Cs = x.shape
    if Cs > cin:
        x = x[..., :cin]
    xp = jnp.pad(x.astype(jnp.bfloat16), ((0, 0), (1, 1), (1, 1), (0, 0)))
    N1, N2 = conv_w.shape[-1], head_w.shape[-1]
    return pl.pallas_call(
        _conv3_head_kernel,
        out_shape=jax.ShapeDtypeStruct((B, H, W, N2), jnp.float32),
        grid=(B,),
        in_specs=[
            pl.BlockSpec((1, H + 2, W + 2, cin), lambda i: (i, 0, 0, 0)),
            pl.BlockSpec((9, cin, N1), lambda i: (0, 0, 0)),
            pl.BlockSpec((1, N1), lambda i: (0, 0)),
            pl.BlockSpec((N1, N2), lambda i: (0, 0)),
            pl.BlockSpec((1, N2), lambda i: (0, 0)),
        ],
        out_specs=pl.BlockSpec((1, H, W, N2), lambda i: (i, 0, 0, 0)),
        compiler_params=pltpu.CompilerParams(dimension_semantics=("parallel",)),
    )(xp, conv_w, conv_b, head_w, head_b)


# ------------------------------------------------ fused RoI heads (one call)
def _roi_heads_kernel(x_ref, w6_ref, b6_ref, w7_ref, b7_ref, wp_ref, bp_ref, o_ref):
    h = jnp.dot(x_ref[...], w6_ref[...], preferred_element_type=jnp.float32) + b6_ref[...]
    h = jnp.maximum(h, 0.0).astype(jnp.bfloat16)
    h = jnp.dot(h, w7_ref[...], preferred_element_type=jnp.float32) + b7_ref[...]
    h = jnp.maximum(h, 0.0).astype(jnp.bfloat16)
    o_ref[...] = jnp.dot(h, wp_ref[...], preferred_element_type=jnp.float32) + bp_ref[...]


def roi_heads_fused(flat, p):
    """TwoMLPHead (fc6 -> fc7) + FastRCNNPredictor (cls|bbox fused) in ONE call;
    at M = B*R rows per-call overhead would dominate three separate matmuls."""
    M, K = flat.shape
    Mp = _round_up(M, 8)
    x = flat.astype(jnp.bfloat16)
    if Mp != M:
        x = jnp.pad(x, ((0, Mp - M), (0, 0)))
    out = pl.pallas_call(
        _roi_heads_kernel,
        out_shape=jax.ShapeDtypeStruct((Mp, CP), jnp.float32),
        grid=(1,),
        in_specs=[
            pl.BlockSpec((Mp, K), lambda i: (0, 0)),
            pl.BlockSpec((K, CP), lambda i: (0, 0)),
            pl.BlockSpec((1, CP), lambda i: (0, 0)),
            pl.BlockSpec((CP, CP), lambda i: (0, 0)),
            pl.BlockSpec((1, CP), lambda i: (0, 0)),
            pl.BlockSpec((CP, CP), lambda i: (0, 0)),
            pl.BlockSpec((1, CP), lambda i: (0, 0)),
        ],
        out_specs=pl.BlockSpec((Mp, CP), lambda i: (0, 0)),
    )(x, p["fc6_w"], p["fc6_b"], p["fc7_w"], p["fc7_b"], p["pred_w"], p["pred_b"])
    return out[:M] if Mp != M else out


# ------------------------------------------------------------- stem im2col
def _im2col(x, kh, kw, stride, padding):
    """Used only for the stride-2 stem (K = 72, narrow channels -> tiny)."""
    B, H, W, C = x.shape
    xp = jnp.pad(x, ((0, 0), (padding, padding), (padding, padding), (0, 0)))
    Ho = (H + 2 * padding - kh) // stride + 1
    Wo = (W + 2 * padding - kw) // stride + 1
    cols = [xp[:, dy:dy + stride * Ho:stride, dx:dx + stride * Wo:stride, :]
            for dy in range(kh) for dx in range(kw)]
    return jnp.concatenate(cols, axis=-1), Ho, Wo


# --------------------------------------------------- detection-specific glue
def generate_proposals(obj_logits, num_proposals, half=3.0):
    """Top-k objectness locations -> fixed windows in feature coordinates.
    # TODO(synk): real RPN anchor generation, delta decoding and NMS
    # (rpn_nms_thresh=0.7) have no clean Pallas equivalent."""
    B, H, W, A = obj_logits.shape
    scores = jnp.max(obj_logits.astype(jnp.float32), axis=-1).reshape(B, H * W)
    _, top_idx = jax.lax.top_k(scores, num_proposals)
    ys = (top_idx // W).astype(jnp.float32)
    xs = (top_idx % W).astype(jnp.float32)
    y0 = jnp.clip(ys - half, 0.0, H - 1.0)
    y1 = jnp.clip(ys + half, 0.0, H - 1.0)
    x0 = jnp.clip(xs - half, 0.0, W - 1.0)
    x1 = jnp.clip(xs + half, 0.0, W - 1.0)
    return jnp.stack([y0, x0, y1, x1], axis=-1)  # (B, R, 4)


def roi_pool(feat, boxes, out_size=POOL_SIZE):
    """Nearest-neighbour RoI pooling (gather) in plain JAX.
    # TODO(synk): at real proposal counts (400 RoIs) this should be a
    # PrefetchScalarGridSpec DMA-gather kernel with a double-buffered staging
    # tile; bilinear MultiScaleRoIAlign is approximated by nearest sampling."""
    B, H, W, C = feat.shape
    t = jnp.linspace(0.0, 1.0, out_size)
    y0, x0, y1, x1 = (boxes[..., i] for i in range(4))
    yy = y0[..., None] + (y1 - y0)[..., None] * t
    xx = x0[..., None] + (x1 - x0)[..., None] * t
    iy = jnp.clip(jnp.round(yy).astype(jnp.int32), 0, H - 1)
    ix = jnp.clip(jnp.round(xx).astype(jnp.int32), 0, W - 1)
    b_idx = jnp.arange(B)[:, None, None, None]
    return feat[b_idx, iy[:, :, :, None], ix[:, :, None, :], :]  # (B,R,S,S,C)


# -------------------------------------------------------------------- params
def init_params(key):
    """Logical (torchvision-shaped) random weights. 3x3 weights keep the REAL
    input channel count (no K padding); outputs are lane-padded to CP=128."""
    keys = iter(jax.random.split(key, 64))

    def rnd(shape):
        return 0.1 * jax.random.normal(next(keys), shape, jnp.float32)

    def bias(c_real):
        return _pad_to(rnd((c_real,)), (CP,)).reshape(1, CP).astype(jnp.float32)

    def pw_w(cin_real, cout_real):
        return _pad_to(rnd((cin_real, cout_real)), (CP, CP)).astype(jnp.bfloat16)

    def conv3_w(cin_real, cout_real):
        w = _pad_to(rnd((3, 3, cin_real, cout_real)), (3, 3, cin_real, CP))
        return w.reshape(9, cin_real, CP).astype(jnp.bfloat16)

    def dw_w(c_real):
        return _pad_to(rnd((3, 3, c_real)), (3, 3, CP)).reshape(9, 1, CP).astype(jnp.bfloat16)

    p = {}
    # simplified MobileNetV3-Large backbone (hardswish blocks, no SE / BN folded)
    stem = _pad_to(rnd((3, 3, 3, 8)), (3, 3, 8, CP))         # Cin padded 3 -> 8 (aligned K=72)
    p["stem_w"] = stem.reshape(72, CP).astype(jnp.bfloat16); p["stem_b"] = bias(8)
    p["b1_dw_w"] = dw_w(8);        p["b1_dw_b"] = bias(8)
    p["b1_pw_w"] = pw_w(8, 16);    p["b1_pw_b"] = bias(16)
    p["b2_dw_w"] = dw_w(16);       p["b2_dw_b"] = bias(16)
    p["b2_pw_w"] = pw_w(16, 24);   p["b2_pw_b"] = bias(24)
    # FPN
    p["fpn_inner0_w"] = pw_w(16, FPN_CH);      p["fpn_inner0_b"] = bias(FPN_CH)
    p["fpn_inner1_w"] = pw_w(24, FPN_CH);      p["fpn_inner1_b"] = bias(FPN_CH)
    p["fpn_layer0_w"] = conv3_w(FPN_CH, FPN_CH); p["fpn_layer0_b"] = bias(FPN_CH)
    p["fpn_layer1_w"] = conv3_w(FPN_CH, FPN_CH); p["fpn_layer1_b"] = bias(FPN_CH)
    # RPN: shared 3x3 conv + FUSED (cls | bbox) 1x1 head, consumed in one kernel
    p["rpn_conv_w"] = conv3_w(FPN_CH, FPN_CH); p["rpn_conv_b"] = bias(FPN_CH)
    head_w = jnp.concatenate([rnd((FPN_CH, NUM_ANCHORS)),
                              rnd((FPN_CH, 4 * NUM_ANCHORS))], axis=1)
    p["rpn_head_w"] = _pad_to(head_w, (CP, CP)).astype(jnp.bfloat16)
    head_b = jnp.concatenate([rnd((NUM_ANCHORS,)), rnd((4 * NUM_ANCHORS,))])
    p["rpn_head_b"] = _pad_to(head_b, (CP,)).reshape(1, CP).astype(jnp.float32)
    # RoI heads: TwoMLPHead + FastRCNNPredictor (cls|bbox fused), one kernel
    p["fc6_w"] = _pad_to(rnd((POOL_SIZE * POOL_SIZE * FPN_CH, REPR_SIZE)),
                         (POOL_SIZE * POOL_SIZE * FPN_CH, CP)).astype(jnp.bfloat16)
    p["fc6_b"] = bias(REPR_SIZE)
    p["fc7_w"] = _pad_to(rnd((REPR_SIZE, REPR_SIZE)), (CP, CP)).astype(jnp.bfloat16)
    p["fc7_b"] = bias(REPR_SIZE)
    pred_w = jnp.concatenate([rnd((REPR_SIZE, NUM_CLASSES)),
                              rnd((REPR_SIZE, 4 * NUM_CLASSES))], axis=1)
    p["pred_w"] = _pad_to(pred_w, (CP, CP)).astype(jnp.bfloat16)
    pred_b = jnp.concatenate([rnd((NUM_CLASSES,)), rnd((4 * NUM_CLASSES,))])
    p["pred_b"] = _pad_to(pred_b, (CP,)).reshape(1, CP).astype(jnp.float32)
    return p


# ------------------------------------------------------------------- forward
def forward(params, images_nchw):
    # TODO(synk): GeneralizedRCNNTransform (resize + per-channel normalize) skipped.
    B = images_nchw.shape[0]
    x = jnp.transpose(images_nchw, (0, 2, 3, 1))                      # NCHW -> NHWC
    x = jnp.pad(x, ((0, 0), (0, 0), (0, 0), (0, 5))).astype(jnp.bfloat16)   # Cin 3 -> 8

    # ---------------- backbone (MobileNetV3-style, simplified, no SE blocks) ----
    patches, Ho, Wo = _im2col(x, 3, 3, 2, 1)                          # stem only (K=72)
    stem = matmul_bias_act(patches.reshape(B * Ho * Wo, 72),
                           params["stem_w"], params["stem_b"], act="hardswish")
    stem = stem.reshape(B, Ho, Wo, CP)                                # (B,16,16,128)
    c0 = dw_pw_block(stem, params["b1_dw_w"], params["b1_dw_b"],
                     params["b1_pw_w"], params["b1_pw_b"])            # (B,8,8,128) stride-4
    c1 = dw_pw_block(c0, params["b2_dw_w"], params["b2_dw_b"],
                     params["b2_pw_w"], params["b2_pw_b"])            # (B,4,4,128) stride-8

    # ---------------- FPN -------------------------------------------------------
    inner1 = pointwise_conv2d(c1, params["fpn_inner1_w"], params["fpn_inner1_b"])
    inner0 = pointwise_conv2d(c0, params["fpn_inner0_w"], params["fpn_inner0_b"])
    p1 = conv3x3_s1(inner1, params["fpn_layer1_w"], params["fpn_layer1_b"])
    # x2 nearest upsample + add + channel-slice + halo pad fuse into ONE XLA
    # producer feeding the fpn_layer0 kernel (no separate `up`/`sum` HBM tensors).
    h1, w1 = inner1.shape[1:3]
    up = jnp.broadcast_to(inner1[..., :FPN_CH][:, :, None, :, None, :],
                          (B, h1, 2, w1, 2, FPN_CH)).reshape(B, 2 * h1, 2 * w1, FPN_CH)
    p0 = conv3x3_s1(inner0[..., :FPN_CH] + up,
                    params["fpn_layer0_w"], params["fpn_layer0_b"])
    ppool = p1[:, ::2, ::2, :]                        # LastLevelMaxPool(kernel=1, stride=2)
    feats = [p0, p1, ppool]

    # ------- RPN: per level, shared 3x3 conv + fused cls|bbox head, ONE call ----
    heads = [rpn_head_level(f, params["rpn_conv_w"], params["rpn_conv_b"],
                            params["rpn_head_w"], params["rpn_head_b"]) for f in feats]
    # TODO(synk): only level-0 objectness feeds the simplified proposal generator.
    obj0 = heads[0][..., :NUM_ANCHORS]

    boxes = generate_proposals(obj0, NUM_PROPOSALS)                   # (B, R, 4)
    pooled = roi_pool(p0[..., :FPN_CH], boxes)                        # (B,R,7,7,FPN_CH)
    R = pooled.shape[1]
    flat = pooled.reshape(B * R, POOL_SIZE * POOL_SIZE * FPN_CH)

    # ---------------- RoI heads: fc6 -> fc7 -> predictor (one fused call) -------
    pred = roi_heads_fused(flat, params)                              # (B*R, 128) f32
    cls_logits = pred[:, :NUM_CLASSES]
    box_deltas = pred[:, NUM_CLASSES:NUM_CLASSES + 4 * NUM_CLASSES]

    probs = jax.nn.softmax(cls_logits, axis=-1)
    # TODO(synk): per-class box decoding + NMS (box_score_thresh=0.01,
    # box_nms_thresh=0.3, max 400 dets) not expressible as a Pallas kernel.
    scores = probs[:, 1:].max(axis=-1).reshape(B, R)
    labels = (probs[:, 1:].argmax(axis=-1) + 1).reshape(B, R)
    return {
        "boxes": boxes,
        "scores": scores,
        "labels": labels,
        "cls_logits": cls_logits.reshape(B, R, NUM_CLASSES),
        "box_deltas": box_deltas.reshape(B, R, 4 * NUM_CLASSES),
    }


# ---------------------------------------------------------------------- main
if __name__ == "__main__":
    key = jax.random.PRNGKey(0)
    pkey, xkey = jax.random.split(key)
    params = init_params(pkey)
    images = jax.random.normal(xkey, (2, 3, 32, 32), jnp.float32)  # NCHW, like PyTorch

    out = jax.jit(forward)(params, images)
    jax.block_until_ready(out)

    assert out["boxes"].shape == (2, NUM_PROPOSALS, 4)
    assert out["scores"].shape == (2, NUM_PROPOSALS)
    assert out["labels"].shape == (2, NUM_PROPOSALS)
    assert out["cls_logits"].shape == (2, NUM_PROPOSALS, NUM_CLASSES)
    assert out["box_deltas"].shape == (2, NUM_PROPOSALS, 4 * NUM_CLASSES)
    print("KERNEL_OK")
</pallas_src>

<mosaic_0001>
module attributes {stable_mosaic.version = 11 : i64} {
  func.func @_mm_kernel(%arg0: i32, %arg1: i32, %arg2: memref<256x72xbf16, #tpu.memory_space<vmem>>, %arg3: memref<72x128xbf16, #tpu.memory_space<vmem>>, %arg4: memref<1x128xf32, #tpu.memory_space<vmem>>, %arg5: memref<256x128xbf16, #tpu.memory_space<vmem>>, %arg6: memref<256x128xf32, #tpu.memory_space<vmem>>) attributes {dimension_semantics = [#tpu.dimension_semantics<parallel>, #tpu.dimension_semantics<arbitrary>], iteration_bounds = array<i64: 2, 1>, scalar_prefetch = 0 : i64, scratch_operands = 1 : i64, tpu.core_type = #tpu.core_type<tc>, window_params = [{transform_indices = @transform_0, window_bounds = array<i64: 256, 72>}, {transform_indices = @transform_1, window_bounds = array<i64: 72, 128>}, {pipeline_mode = #tpu.pipeline_mode<synchronous>, transform_indices = @transform_2, window_bounds = array<i64: 1, 128>}, {transform_indices = @transform_3, window_bounds = array<i64: 256, 128>}]} {
    %c0_i32 = arith.constant 0 : i32
    %0 = arith.cmpi eq, %arg1, %c0_i32 : i32
    %1 = arith.extui %0 : i1 to i32
    %c0_i32_0 = arith.constant 0 : i32
    %2 = arith.cmpi ne, %1, %c0_i32_0 : i32
    scf.if %2 {
      %cst_10 = arith.constant 0.000000e+00 : f32
      %12 = vector.broadcast %cst_10 : f32 to vector<256x128xf32>
      %c0_11 = arith.constant 0 : index
      %c0_12 = arith.constant 0 : index
      %13 = vector.load %arg6[%c0_11, %c0_12] : memref<256x128xf32, #tpu.memory_space<vmem>>, vector<256x128xf32>
      tpu.vector_store %arg6[%c0_11, %c0_12], %12 {strides = array<i32>} : memref<256x128xf32, #tpu.memory_space<vmem>>, vector<256x128xf32>,
    } else {
    }
    %c0 = arith.constant 0 : index
    %c0_1 = arith.constant 0 : index
    %3 = vector.load %arg6[%c0, %c0_1] : memref<256x128xf32, #tpu.memory_space<vmem>>, vector<256x128xf32>
    %c0_2 = arith.constant 0 : index
    %c0_3 = arith.constant 0 : index
    %4 = vector.load %arg2[%c0_2, %c0_3] : memref<256x72xbf16, #tpu.memory_space<vmem>>, vector<256x72xbf16>
    %c0_4 = arith.constant 0 : index
    %c0_5 = arith.constant 0 : index
    %5 = vector.load %arg3[%c0_4, %c0_5] : memref<72x128xbf16, #tpu.memory_space<vmem>>, vector<72x128xbf16>
    %cst = arith.constant dense<0.000000e+00> : vector<256x128xf32>
    %6 = tpu.matmul %4, %5, %cst {dimension_numbers = #tpu.dot_dimension_numbers<[1], [0], [0], [1], [0, 0, 1, 1], [], []>} : vector<256x72xbf16>, vector<72x128xbf16>, vector<256x128xf32> -> vector<256x128xf32>
    %7 = arith.addf %3, %6 : vector<256x128xf32>
    %c0_6 = arith.constant 0 : index
    %c0_7 = arith.constant 0 : index
    %8 = vector.load %arg6[%c0_6, %c0_7] : memref<256x128xf32, #tpu.memory_space<vmem>>, vector<256x128xf32>
    tpu.vector_store %arg6[%c0_6, %c0_7], %7 {strides = array<i32>} : memref<256x128xf32, #tpu.memory_space<vmem>>, vector<256x128xf32>,
    %c0_i32_8 = arith.constant 0 : i32
    %9 = arith.cmpi eq, %arg1, %c0_i32_8 : i32
    %10 = arith.extui %9 : i1 to i32
    %c0_i32_9 = arith.constant 0 : i32
    %11 = arith.cmpi ne, %10, %c0_i32_9 : i32
    scf.if %11 {
      %c0_10 = arith.constant 0 : index
      %c0_11 = arith.constant 0 : index
      %12 = vector.load %arg6[%c0_10, %c0_11] : memref<256x128xf32, #tpu.memory_space<vmem>>, vector<256x128xf32>
      %c0_12 = arith.constant 0 : index
      %c0_13 = arith.constant 0 : index
      %13 = vector.load %arg4[%c0_12, %c0_13] : memref<1x128xf32, #tpu.memory_space<vmem>>, vector<1x128xf32>
      %14 = vector.broadcast %13 : vector<1x128xf32> to vector<256x128xf32>
      %15 = arith.addf %12, %14 : vector<256x128xf32>
      %cst_14 = arith.constant 3.000000e+00 : f32
      %16 = vector.broadcast %cst_14 : f32 to vector<256x128xf32>
      %17 = arith.addf %15, %16 : vector<256x128xf32>
      %cst_15 = arith.constant 0.000000e+00 : f32
      %cst_16 = arith.constant 6.000000e+00 : f32
      %18 = vector.broadcast %cst_15 : f32 to vector<256x128xf32>
      %19 = arith.maximumf %18, %17 : vector<256x128xf32>
      %20 = vector.broadcast %cst_16 : f32 to vector<256x128xf32>
      %21 = arith.minimumf %20, %19 : vector<256x128xf32>
      %22 = arith.mulf %15, %21 : vector<256x128xf32>
      %cst_17 = arith.constant 0.166666672 : f32
      %23 = vector.broadcast %cst_17 : f32 to vector<256x128xf32>
      %24 = arith.mulf %22, %23 : vector<256x128xf32>
      %25 = arith.truncf %24 : vector<256x128xf32> to vector<256x128xbf16>
      %c0_18 = arith.constant 0 : index
      %c0_19 = arith.constant 0 : index
      %26 = vector.load %arg5[%c0_18, %c0_19] : memref<256x128xbf16, #tpu.memory_space<vmem>>, vector<256x128xbf16>
      tpu.vector_store %arg5[%c0_18, %c0_19], %25 {strides = array<i32>} : memref<256x128xbf16, #tpu.memory_space<vmem>>, vector<256x128xbf16>,
    } else {
    }
    return
  }
  func.func @transform_0(%arg0: i32, %arg1: i32) -> (i32, i32) {
    %c0_i32 = arith.constant 0 : i32
    return %arg0, %arg1 : i32, i32
  }
  func.func @transform_1(%arg0: i32, %arg1: i32) -> (i32, i32) {
    %c0_i32 = arith.constant 0 : i32
    %c0_i32_0 = arith.constant 0 : i32
    return %arg1, %c0_i32 : i32, i32
  }
  func.func @transform_2(%arg0: i32, %arg1: i32) -> (i32, i32) {
    %c0_i32 = arith.constant 0 : i32
    %c0_i32_0 = arith.constant 0 : i32
    %c0_i32_1 = arith.constant 0 : i32
    return %c0_i32, %c0_i32_0 : i32, i32
  }
  func.func @transform_3(%arg0: i32, %arg1: i32) -> (i32, i32) {
    %c0_i32 = arith.constant 0 : i32
    %c0_i32_0 = arith.constant 0 : i32
    return %arg0, %c0_i32 : i32, i32
  }
}

module attributes {stable_mosaic.version = 11 : i64} {
  func.func @_dwpw_kernel(%arg0: i32, %arg1: memref<4x1x9x9x128xbf16, #tpu.memory_space<vmem>>, %arg2: memref<9x1x128xbf16, #tpu.memory_space<vmem>>, %arg3: memref<1x128xf32, #tpu.memory_space<vmem>>, %arg4: memref<128x128xbf16, #tpu.memory_space<vmem>>, %arg5: memref<1x128xf32, #tpu.memory_space<vmem>>, %arg6: memref<1x8x8x128xbf16, #tpu.memory_space<vmem>>) attributes {dimension_semantics = [#tpu.dimension_semantics<parallel>], iteration_bounds = array<i64: 2>, scalar_prefetch = 0 : i64, scratch_operands = 0 : i64, tpu.core_type = #tpu.core_type<tc>, window_params = [{transform_indices = @transform_0, window_bounds = array<i64: 4, 1, 9, 9, 128>}, {pipeline_mode = #tpu.pipeline_mode<synchronous>, transform_indices = @transform_1, window_bounds = array<i64: 9, 1, 128>}, {pipeline_mode = #tpu.pipeline_mode<synchronous>, transform_indices = @transform_2, window_bounds = array<i64: 1, 128>}, {pipeline_mode = #tpu.pipeline_mode<synchronous>, transform_indices = @transform_3, window_bounds = array<i64: 128, 128>}, {pipeline_mode = #tpu.pipeline_mode<synchronous>, transform_indices = @transform_4, window_bounds = array<i64: 1, 128>}, {transform_indices = @transform_5, window_bounds = array<i64: 1, 8, 8, 128>}]} {
    %cst = arith.constant 0.000000e+00 : f32
    %0 = vector.broadcast %cst : f32 to vector<8x8x128xf32>
    %c0 = arith.constant 0 : index
    %c0_0 = arith.constant 0 : index
    %c0_1 = arith.constant 0 : index
    %c0_2 = arith.constant 0 : index
    %c0_3 = arith.constant 0 : index
    %1 = vector.load %arg1[%c0, %c0_0, %c0_1, %c0_2, %c0_3] : memref<4x1x9x9x128xbf16, #tpu.memory_space<vmem>>, vector<1x1x8x8x128xbf16>
    %2 = vector.shape_cast %1 : vector<1x1x8x8x128xbf16> to vector<8x8x128xbf16>
    %3 = arith.extf %2 : vector<8x8x128xbf16> to vector<8x8x128xf32>
    %c0_4 = arith.constant 0 : index
    %c0_5 = arith.constant 0 : index
    %c0_6 = arith.constant 0 : index
    %4 = vector.load %arg2[%c0_4, %c0_5, %c0_6] : memref<9x1x128xbf16, #tpu.memory_space<vmem>>, vector<1x1x128xbf16>
    %5 = vector.shape_cast %4 : vector<1x1x128xbf16> to vector<1x128xbf16>
    %6 = arith.extf %5 : vector<1x128xbf16> to vector<1x128xf32>
    %7 = vector.shape_cast %6 : vector<1x128xf32> to vector<1x1x128xf32>
    %8 = vector.broadcast %7 : vector<1x1x128xf32> to vector<8x8x128xf32>
    %9 = arith.mulf %3, %8 : vector<8x8x128xf32>
    %10 = arith.addf %0, %9 : vector<8x8x128xf32>
    %c1 = arith.constant 1 : index
    %c0_7 = arith.constant 0 : index
    %c0_8 = arith.constant 0 : index
    %c0_9 = arith.constant 0 : index
    %c0_10 = arith.constant 0 : index
    %11 = vector.load %arg1[%c1, %c0_7, %c0_8, %c0_9, %c0_10] : memref<4x1x9x9x128xbf16, #tpu.memory_space<vmem>>, vector<1x1x8x8x128xbf16>
    %12 = vector.shape_cast %11 : vector<1x1x8x8x128xbf16> to vector<8x8x128xbf16>
    %13 = arith.extf %12 : vector<8x8x128xbf16> to vector<8x8x128xf32>
    %c1_11 = arith.constant 1 : index
    %c0_12 = arith.constant 0 : index
    %c0_13 = arith.constant 0 : index
    %14 = vector.load %arg2[%c1_11, %c0_12, %c0_13] : memref<9x1x128xbf16, #tpu.memory_space<vmem>>, vector<1x1x128xbf16>
    %15 = vector.shape_cast %14 : vector<1x1x128xbf16> to vector<1x128xbf16>
    %16 = arith.extf %15 : vector<1x128xbf16> to vector<1x128xf32>
    %17 = vector.shape_cast %16 : vector<1x128xf32> to vector<1x1x128xf32>
    %18 = vector.broadcast %17 : vector<1x1x128xf32> to vector<8x8x128xf32>
    %19 = arith.mulf %13, %18 : vector<8x8x128xf32>
    %20 = arith.addf %10, %19 : vector<8x8x128xf32>
    %c0_14 = arith.constant 0 : index
    %c0_15 = arith.constant 0 : index
    %c0_16 = arith.constant 0 : index
    %c1_17 = arith.constant 1 : index
    %c0_18 = arith.constant 0 : index
    %21 = vector.load %arg1[%c0_14, %c0_15, %c0_16, %c1_17, %c0_18] : memref<4x1x9x9x128xbf16, #tpu.memory_space<vmem>>, vector<1x1x8x8x128xbf16>
    %22 = vector.shape_cast %21 : vector<1x1x8x8x128xbf16> to vector<8x8x128xbf16>
    %23 = arith.extf %22 : vector<8x8x128xbf16> to vector<8x8x128xf32>
    %c2 = arith.constant 2 : index
    %c0_19 = arith.constant 0 : index
    %c0_20 = arith.constant 0 : index
    %24 = vector.load %arg2[%c2, %c0_19, %c0_20] : memref<9x1x128xbf16, #tpu.memory_space<vmem>>, vector<1x1x128xbf16>
    %25 = vector.shape_cast %24 : vector<1x1x128xbf16> to vector<1x128xbf16>
    %26 = arith.extf %25 : vector<1x128xbf16> to vector<1x128xf32>
    %27 = vector.shape_cast %26 : vector<1x128xf32> to vector<1x1x128xf32>
    %28 = vector.broadcast %27 : vector<1x1x128xf32> to vector<8x8x128xf32>
    %29 = arith.mulf %23, %28 : vector<8x8x128xf32>
    %30 = arith.addf %20, %29 : vector<8x8x128xf32>
    %c2_21 = arith.constant 2 : index
    %c0_22 = arith.constant 0 : index
    %c0_23 = arith.constant 0 : index
    %c0_24 = arith.constant 0 : index
    %c0_25 = arith.constant 0 : index
    %31 = vector.load %arg1[%c2_21, %c0_22, %c0_23, %c0_24, %c0_25] : memref<4x1x9x9x128xbf16, #tpu.memory_space<vmem>>, vector<1x1x8x8x128xbf16>
    %32 = vector.shape_cast %31 : vector<1x1x8x8x128xbf16> to vector<8x8x128xbf16>
    %33 = arith.extf %32 : vector<8x8x128xbf16> to vector<8x8x128xf32>
    %c3 = arith.constant 3 : index
    %c0_26 = arith.constant 0 : index
    %c0_27 = arith.constant 0 : index
    %34 = vector.load %arg2[%c3, %c0_26, %c0_27] : memref<9x1x128xbf16, #tpu.memory_space<vmem>>, vector<1x1x128xbf16>
    %35 = vector.shape_cast %34 : vector<1x1x128xbf16> to vector<1x128xbf16>
    %36 = arith.extf %35 : vector<1x128xbf16> to vector<1x128xf32>
    %37 = vector.shape_cast %36 : vector<1x128xf32> to vector<1x1x128xf32>
    %38 = vector.broadcast %37 : vector<1x1x128xf32> to vector<8x8x128xf32>
    %39 = arith.mulf %33, %38 : vector<8x8x128xf32>
    %40 = arith.addf %30, %39 : vector<8x8x128xf32>
    %c3_28 = arith.constant 3 : index
    %c0_29 = arith.constant 0 : index
    %c0_30 = arith.constant 0 : index
    %c0_31 = arith.constant 0 : index
    %c0_32 = arith.constant 0 : index
    %41 = vector.load %arg1[%c3_28, %c0_29, %c0_30, %c0_31, %c0_32] : memref<4x1x9x9x128xbf16, #tpu.memory_space<vmem>>, vector<1x1x8x8x128xbf16>
    %42 = vector.shape_cast %41 : vector<1x1x8x8x128xbf16> to vector<8x8x128xbf16>
    %43 = arith.extf %42 : vector<8x8x128xbf16> to vector<8x8x128xf32>
    %c4 = arith.constant 4 : index
    %c0_33 = arith.constant 0 : index
    %c0_34 = arith.constant 0 : index
    %44 = vector.load %arg2[%c4, %c0_33, %c0_34] : memref<9x1x128xbf16, #tpu.memory_space<vmem>>, vector<1x1x128xbf16>
    %45 = vector.shape_cast %44 : vector<1x1x128xbf16> to vector<1x128xbf16>
    %46 = arith.extf %45 : vector<1x128xbf16> to vector<1x128xf32>
    %47 = vector.shape_cast %46 : vector<1x128xf32> to vector<1x1x128xf32>
    %48 = vector.broadcast %47 : vector<1x1x128xf32> to vector<8x8x128xf32>
    %49 = arith.mulf %43, %48 : vector<8x8x128xf32>
    %50 = arith.addf %40, %49 : vector<8x8x128xf32>
    %c2_35 = arith.constant 2 : index
    %c0_36 = arith.constant 0 : index
    %c0_37 = arith.constant 0 : index
    %c1_38 = arith.constant 1 : index
    %c0_39 = arith.constant 0 : index
    %51 = vector.load %arg1[%c2_35, %c0_36, %c0_37, %c1_38, %c0_39] : memref<4x1x9x9x128xbf16, #tpu.memory_space<vmem>>, vector<1x1x8x8x128xbf16>
    %52 = vector.shape_cast %51 : vector<1x1x8x8x128xbf16> to vector<8x8x128xbf16>
    %53 = arith.extf %52 : vector<8x8x128xbf16> to vector<8x8x128xf32>
    %c5 = arith.constant 5 : index
    %c0_40 = arith.constant 0 : index
    %c0_41 = arith.constant 0 : index
    %54 = vector.load %arg2[%c5, %c0_40, %c0_41] : memref<9x1x128xbf16, #tpu.memory_space<vmem>>, vector<1x1x128xbf16>
    %55 = vector.shape_cast %54 : vector<1x1x128xbf16> to vector<1x128xbf16>
    %56 = arith.extf %55 : vector<1x128xbf16> to vector<1x128xf32>
    %57 = vector.shape_cast %56 : vector<1x128xf32> to vector<1x1x128xf32>
    %58 = vector.broadcast %57 : vector<1x1x128xf32> to vector<8x8x128xf32>
    %59 = arith.mulf %53, %58 : vector<8x8x128xf32>
    %60 = arith.addf %50, %59 : vector<8x8x128xf32>
    %c0_42 = arith.constant 0 : index
    %c0_43 = arith.constant 0 : index
    %c1_44 = arith.constant 1 : index
    %c0_45 = arith.constant 0 : index
    %c0_46 = arith.constant 0 : index
    %61 = vector.load %arg1[%c0_42, %c0_43, %c1_44, %c0_45, %c0_46] : memref<4x1x9x9x128xbf16, #tpu.memory_space<vmem>>, vector<1x1x8x8x128xbf16>
    %62 = vector.shape_cast %61 : vector<1x1x8x8x128xbf16> to vector<8x8x128xbf16>
    %63 = arith.extf %62 : vector<8x8x128xbf16> to vector<8x8x128xf32>
    %c6 = arith.constant 6 : index
    %c0_47 = arith.constant 0 : index
    %c0_48 = arith.constant 0 : index
    %64 = vector.load %arg2[%c6, %c0_47, %c0_48] : memref<9x1x128xbf16, #tpu.memory_space<vmem>>, vector<1x1x128xbf16>
    %65 = vector.shape_cast %64 : vector<1x1x128xbf16> to vector<1x128xbf16>
    %66 = arith.extf %65 : vector<1x128xbf16> to vector<1x128xf32>
    %67 = vector.shape_cast %66 : vector<1x128xf32> to vector<1x1x128xf32>
    %68 = vector.broadcast %67 : vector<1x1x128xf32> to vector<8x8x128xf32>
    %69 = arith.mulf %63, %68 : vector<8x8x128xf32>
    %70 = arith.addf %60, %69 : vector<8x8x128xf32>
    %c1_49 = arith.constant 1 : index
    %c0_50 = arith.constant 0 : index
    %c1_51 = arith.constant 1 : index
    %c0_52 = arith.constant 0 : index
    %c0_53 = arith.constant 0 : index
    %71 = vector.load %arg1[%c1_49, %c0_50, %c1_51, %c0_52, %c0_53] : memref<4x1x9x9x128xbf16, #tpu.memory_space<vmem>>, vector<1x1x8x8x128xbf16>
    %72 = vector.shape_cast %71 : vector<1x1x8x8x128xbf16> to vector<8x8x128xbf16>
    %73 = arith.extf %72 : vector<8x8x128xbf16> to vector<8x8x128xf32>
    %c7 = arith.constant 7 : index
    %c0_54 = arith.constant 0 : index
    %c0_55 = arith.constant 0 : index
    %74 = vector.load %arg2[%c7, %c0_54, %c0_55] : memref<9x1x128xbf16, #tpu.memory_space<vmem>>, vector<1x1x128xbf16>
    %75 = vector.shape_cast %74 : vector<1x1x128xbf16> to vector<1x128xbf16>
    %76 = arith.extf %75 : vector<1x128xbf16> to vector<1x128xf32>
    %77 = vector.shape_cast %76 : vector<1x128xf32> to vector<1x1x128xf32>
    %78 = vector.broadcast %77 : vector<1x1x128xf32> to vector<8x8x128xf32>
    %79 = arith.mulf %73, %78 : vector<8x8x128xf32>
    %80 = arith.addf %70, %79 : vector<8x8x128xf32>
    %c0_56 = arith.constant 0 : index
    %c0_57 = arith.constant 0 : index
    %c1_58 = arith.constant 1 : index
    %c1_59 = arith.constant 1 : index
    %c0_60 = arith.constant 0 : index
    %81 = vector.load %arg1[%c0_56, %c0_57, %c1_58, %c1_59, %c0_60] : memref<4x1x9x9x128xbf16, #tpu.memory_space<vmem>>, vector<1x1x8x8x128xbf16>
    %82 = vector.shape_cast %81 : vector<1x1x8x8x128xbf16> to vector<8x8x128xbf16>
    %83 = arith.extf %82 : vector<8x8x128xbf16> to vector<8x8x128xf32>
    %c8 = arith.constant 8 : index
    %c0_61 = arith.constant 0 : index
    %c0_62 = arith.constant 0 : index
    %84 = vector.load %arg2[%c8, %c0_61, %c0_62] : memref<9x1x128xbf16, #tpu.memory_space<vmem>>, vector<1x1x128xbf16>
    %85 = vector.shape_cast %84 : vector<1x1x128xbf16> to vector<1x128xbf16>
    %86 = arith.extf %85 : vector<1x128xbf16> to vector<1x128xf32>
    %87 = vector.shape_cast %86 : vector<1x128xf32> to vector<1x1x128xf32>
    %88 = vector.broadcast %87 : vector<1x1x128xf32> to vector<8x8x128xf32>
    %89 = arith.mulf %83, %88 : vector<8x8x128xf32>
    %90 = arith.addf %80, %89 : vector<8x8x128xf32>
    %c0_63 = arith.constant 0 : index
    %c0_64 = arith.constant 0 : index
    %91 = vector.load %arg3[%c0_63, %c0_64] : memref<1x128xf32, #tpu.memory_space<vmem>>, vector<1x128xf32>
    %92 = vector.shape_cast %91 : vector<1x128xf32> to vector<1x1x128xf32>
    %93 = vector.broadcast %92 : vector<1x1x128xf32> to vector<8x8x128xf32>
    %94 = arith.addf %90, %93 : vector<8x8x128xf32>
    %cst_65 = arith.constant 3.000000e+00 : f32
    %95 = vector.broadcast %cst_65 : f32 to vector<8x8x128xf32>
    %96 = arith.addf %94, %95 : vector<8x8x128xf32>
    %cst_66 = arith.constant 0.000000e+00 : f32
    %cst_67 = arith.constant 6.000000e+00 : f32
    %97 = vector.broadcast %cst_66 : f32 to vector<8x8x128xf32>
    %98 = arith.maximumf %97, %96 : vector<8x8x128xf32>
    %99 = vector.broadcast %cst_67 : f32 to vector<8x8x128xf32>
    %100 = arith.minimumf %99, %98 : vector<8x8x128xf32>
    %101 = arith.mulf %94, %100 : vector<8x8x128xf32>
    %cst_68 = arith.constant 0.166666672 : f32
    %102 = vector.broadcast %cst_68 : f32 to vector<8x8x128xf32>
    %103 = arith.mulf %101, %102 : vector<8x8x128xf32>
    %104 = arith.truncf %103 : vector<8x8x128xf32> to vector<8x8x128xbf16>
    %105 = vector.shape_cast %104 : vector<8x8x128xbf16> to vector<64x128xbf16>
    %c0_69 = arith.constant 0 : index
    %c0_70 = arith.constant 0 : index
    %106 = vector.load %arg4[%c0_69, %c0_70] : memref<128x128xbf16, #tpu.memory_space<vmem>>, vector<128x128xbf16>
    %cst_71 = arith.constant dense<0.000000e+00> : vector<64x128xf32>
    %107 = tpu.matmul %105, %106, %cst_71 {dimension_numbers = #tpu.dot_dimension_numbers<[1], [0], [0], [1], [0, 0, 1, 1], [], []>} : vector<64x128xbf16>, vector<128x128xbf16>, vector<64x128xf32> -> vector<64x128xf32>
    %c0_72 = arith.constant 0 : index
    %c0_73 = arith.constant 0 : index
    %108 = vector.load %arg5[%c0_72, %c0_73] : memref<1x128xf32, #tpu.memory_space<vmem>>, vector<1x128xf32>
    %109 = vector.broadcast %108 : vector<1x128xf32> to vector<64x128xf32>
    %110 = arith.addf %107, %109 : vector<64x128xf32>
    %cst_74 = arith.constant 3.000000e+00 : f32
    %111 = vector.broadcast %cst_74 : f32 to vector<64x128xf32>
    %112 = arith.addf %110, %111 : vector<64x128xf32>
    %cst_75 = arith.constant 0.000000e+00 : f32
    %cst_76 = arith.constant 6.000000e+00 : f32
    %113 = vector.broadcast %cst_75 : f32 to vector<64x128xf32>
    %114 = arith.maximumf %113, %112 : vector<64x128xf32>
    %115 = vector.broadcast %cst_76 : f32 to vector<64x128xf32>
    %116 = arith.minimumf %115, %114 : vector<64x128xf32>
    %117 = arith.mulf %110, %116 : vector<64x128xf32>
    %cst_77 = arith.constant 0.166666672 : f32
    %118 = vector.broadcast %cst_77 : f32 to vector<64x128xf32>
    %119 = arith.mulf %117, %118 : vector<64x128xf32>
    %120 = vector.shape_cast %119 : vector<64x128xf32> to vector<1x8x8x128xf32>
    %121 = arith.truncf %120 : vector<1x8x8x128xf32> to vector<1x8x8x128xbf16>
    %c0_78 = arith.constant 0 : index
    %c0_79 = arith.constant 0 : index
    %c0_80 = arith.constant 0 : index
    %c0_81 = arith.constant 0 : index
    %122 = vector.load %arg6[%c0_78, %c0_79, %c0_80, %c0_81] : memref<1x8x8x128xbf16, #tpu.memory_space<vmem>>, vector<1x8x8x128xbf16>
    tpu.vector_store %arg6[%c0_78, %c0_79, %c0_80, %c0_81], %121 {strides = array<i32>} : memref<1x8x8x128xbf16, #tpu.memory_space<vmem>>, vector<1x8x8x128xbf16>,
    return
  }
  func.func @transform_0(%arg0: i32) -> (i32, i32, i32, i32, i32) {
    %c0_i32 = arith.constant 0 : i32
    %c0_i32_0 = arith.constant 0 : i32
    %c0_i32_1 = arith.constant 0 : i32
    %c0_i32_2 = arith.constant 0 : i32
    %c0_i32_3 = arith.constant 0 : i32
    return %c0_i32, %arg0, %c0_i32_0, %c0_i32_1, %c0_i32_2 : i32, i32, i32, i32, i32
  }
  func.func @transform_1(%arg0: i32) -> (i32, i32, i32) {
    %c0_i32 = arith.constant 0 : i32
    %c0_i32_0 = arith.constant 0 : i32
    %c0_i32_1 = arith.constant 0 : i32
    %c0_i32_2 = arith.constant 0 : i32
    return %c0_i32, %c0_i32_0, %c0_i32_1 : i32, i32, i32
  }
  func.func @transform_2(%arg0: i32) -> (i32, i32) {
    %c0_i32 = arith.constant 0 : i32
    %c0_i32_0 = arith.constant 0 : i32
    %c0_i32_1 = arith.constant 0 : i32
    return %c0_i32, %c0_i32_0 : i32, i32
  }
  func.func @transform_3(%arg0: i32) -> (i32, i32) {
    %c0_i32 = arith.constant 0 : i32
    %c0_i32_0 = arith.constant 0 : i32
    %c0_i32_1 = arith.constant 0 : i32
    return %c0_i32, %c0_i32_0 : i32, i32
  }
  func.func @transform_4(%arg0: i32) -> (i32, i32) {
    %c0_i32 = arith.constant 0 : i32
    %c0_i32_0 = arith.constant 0 : i32
    %c0_i32_1 = arith.constant 0 : i32
    return %c0_i32, %c0_i32_0 : i32, i32
  }
  func.func @transform_5(%arg0: i32) -> (i32, i32, i32, i32) {
    %c0_i32 = arith.constant 0 : i32
    %c0_i32_0 = arith.constant 0 : i32
    %c0_i32_1 = arith.constant 0 : i32
    %c0_i32_2 = arith.constant 0 : i32
    return %arg0, %c0_i32, %c0_i32_0, %c0_i32_1 : i32, i32, i32, i32
  }
}

module attributes {stable_mosaic.version = 11 : i64} {
  func.func @_mm_kernel(%arg0: i32, %arg1: i32, %arg2: memref<32x128xbf16, #tpu.memory_space<vmem>>, %arg3: memref<128x128xbf16, #tpu.memory_space<vmem>>, %arg4: memref<1x128xf32, #tpu.memory_space<vmem>>, %arg5: memref<32x128xbf16, #tpu.memory_space<vmem>>, %arg6: memref<32x128xf32, #tpu.memory_space<vmem>>) attributes {dimension_semantics = [#tpu.dimension_semantics<parallel>, #tpu.dimension_semantics<arbitrary>], iteration_bounds = array<i64: 1, 1>, scalar_prefetch = 0 : i64, scratch_operands = 1 : i64, tpu.core_type = #tpu.core_type<tc>, window_params = [{transform_indices = @transform_0, window_bounds = array<i64: 32, 128>}, {transform_indices = @transform_1, window_bounds = array<i64: 128, 128>}, {pipeline_mode = #tpu.pipeline_mode<synchronous>, transform_indices = @transform_2, window_bounds = array<i64: 1, 128>}, {transform_indices = @transform_3, window_bounds = array<i64: 32, 128>}]} {
    %c0_i32 = arith.constant 0 : i32
    %0 = arith.cmpi eq, %arg1, %c0_i32 : i32
    %1 = arith.extui %0 : i1 to i32
    %c0_i32_0 = arith.constant 0 : i32
    %2 = arith.cmpi ne, %1, %c0_i32_0 : i32
    scf.if %2 {
      %cst_10 = arith.constant 0.000000e+00 : f32
      %12 = vector.broadcast %cst_10 : f32 to vector<32x128xf32>
      %c0_11 = arith.constant 0 : index
      %c0_12 = arith.constant 0 : index
      %13 = vector.load %arg6[%c0_11, %c0_12] : memref<32x128xf32, #tpu.memory_space<vmem>>, vector<32x128xf32>
      tpu.vector_store %arg6[%c0_11, %c0_12], %12 {strides = array<i32>} : memref<32x128xf32, #tpu.memory_space<vmem>>, vector<32x128xf32>,
    } else {
    }
    %c0 = arith.constant 0 : index
    %c0_1 = arith.constant 0 : index
    %3 = vector.load %arg6[%c0, %c0_1] : memref<32x128xf32, #tpu.memory_space<vmem>>, vector<32x128xf32>
    %c0_2 = arith.constant 0 : index
    %c0_3 = arith.constant 0 : index
    %4 = vector.load %arg2[%c0_2, %c0_3] : memref<32x128xbf16, #tpu.memory_space<vmem>>, vector<32x128xbf16>
    %c0_4 = arith.constant 0 : index
    %c0_5 = arith.constant 0 : index
    %5 = vector.load %arg3[%c0_4, %c0_5] : memref<128x128xbf16, #tpu.memory_space<vmem>>, vector<128x128xbf16>
    %cst = arith.constant dense<0.000000e+00> : vector<32x128xf32>
    %6 = tpu.matmul %4, %5, %cst {dimension_numbers = #tpu.dot_dimension_numbers<[1], [0], [0], [1], [0, 0, 1, 1], [], []>} : vector<32x128xbf16>, vector<128x128xbf16>, vector<32x128xf32> -> vector<32x128xf32>
    %7 = arith.addf %3, %6 : vector<32x128xf32>
    %c0_6 = arith.constant 0 : index
    %c0_7 = arith.constant 0 : index
    %8 = vector.load %arg6[%c0_6, %c0_7] : memref<32x128xf32, #tpu.memory_space<vmem>>, vector<32x128xf32>
    tpu.vector_store %arg6[%c0_6, %c0_7], %7 {strides = array<i32>} : memref<32x128xf32, #tpu.memory_space<vmem>>, vector<32x128xf32>,
    %c0_i32_8 = arith.constant 0 : i32
    %9 = arith.cmpi eq, %arg1, %c0_i32_8 : i32
    %10 = arith.extui %9 : i1 to i32
    %c0_i32_9 = arith.constant 0 : i32
    %11 = arith.cmpi ne, %10, %c0_i32_9 : i32
    scf.if %11 {
      %c0_10 = arith.constant 0 : index
      %c0_11 = arith.constant 0 : index
      %12 = vector.load %arg6[%c0_10, %c0_11] : memref<32x128xf32, #tpu.memory_space<vmem>>, vector<32x128xf32>
      %c0_12 = arith.constant 0 : index
      %c0_13 = arith.constant 0 : index
      %13 = vector.load %arg4[%c0_12, %c0_13] : memref<1x128xf32, #tpu.memory_space<vmem>>, vector<1x128xf32>
      %14 = vector.broadcast %13 : vector<1x128xf32> to vector<32x128xf32>
      %15 = arith.addf %12, %14 : vector<32x128xf32>
      %16 = arith.truncf %15 : vector<32x128xf32> to vector<32x128xbf16>
      %c0_14 = arith.constant 0 : index
      %c0_15 = arith.constant 0 : index
      %17 = vector.load %arg5[%c0_14, %c0_15] : memref<32x128xbf16, #tpu.memory_space<vmem>>, vector<32x128xbf16>
      tpu.vector_store %arg5[%c0_14, %c0_15], %16 {strides = array<i32>} : memref<32x128xbf16, #tpu.memory_space<vmem>>, vector<32x128xbf16>,
    } else {
    }
    return
  }
  func.func @transform_0(%arg0: i32, %arg1: i32) -> (i32, i32) {
    %c0_i32 = arith.constant 0 : i32
    return %arg0, %arg1 : i32, i32
  }
  func.func @transform_1(%arg0: i32, %arg1: i32) -> (i32, i32) {
    %c0_i32 = arith.constant 0 : i32
    %c0_i32_0 = arith.constant 0 : i32
    return %arg1, %c0_i32 : i32, i32
  }
  func.func @transform_2(%arg0: i32, %arg1: i32) -> (i32, i32) {
    %c0_i32 = arith.constant 0 : i32
    %c0_i32_0 = arith.constant 0 : i32
    %c0_i32_1 = arith.constant 0 : i32
    return %c0_i32, %c0_i32_0 : i32, i32
  }
  func.func @transform_3(%arg0: i32, %arg1: i32) -> (i32, i32) {
    %c0_i32 = arith.constant 0 : i32
    %c0_i32_0 = arith.constant 0 : i32
    return %arg0, %c0_i32 : i32, i32
  }
}

module attributes {stable_mosaic.version = 11 : i64} {
  func.func @_dwpw_kernel(%arg0: i32, %arg1: memref<4x1x5x5x128xbf16, #tpu.memory_space<vmem>>, %arg2: memref<9x1x128xbf16, #tpu.memory_space<vmem>>, %arg3: memref<1x128xf32, #tpu.memory_space<vmem>>, %arg4: memref<128x128xbf16, #tpu.memory_space<vmem>>, %arg5: memref<1x128xf32, #tpu.memory_space<vmem>>, %arg6: memref<1x4x4x128xbf16, #tpu.memory_space<vmem>>) attributes {dimension_semantics = [#tpu.dimension_semantics<parallel>], iteration_bounds = array<i64: 2>, scalar_prefetch = 0 : i64, scratch_operands = 0 : i64, tpu.core_type = #tpu.core_type<tc>, window_params = [{transform_indices = @transform_0, window_bounds = array<i64: 4, 1, 5, 5, 128>}, {pipeline_mode = #tpu.pipeline_mode<synchronous>, transform_indices = @transform_1, window_bounds = array<i64: 9, 1, 128>}, {pipeline_mode = #tpu.pipeline_mode<synchronous>, transform_indices = @transform_2, window_bounds = array<i64: 1, 128>}, {pipeline_mode = #tpu.pipeline_mode<synchronous>, transform_indices = @transform_3, window_bounds = array<i64: 128, 128>}, {pipeline_mode = #tpu.pipeline_mode<synchronous>, transform_indices = @transform_4, window_bounds = array<i64: 1, 128>}, {transform_indices = @transform_5, window_bounds = array<i64: 1, 4, 4, 128>}]} {
    %cst = arith.constant 0.000000e+00 : f32
    %0 = vector.broadcast %cst : f32 to vector<4x4x128xf32>
    %c0 = arith.constant 0 : index
    %c0_0 = arith.constant 0 : index
    %c0_1 = arith.constant 0 : index
    %c0_2 = arith.constant 0 : index
    %c0_3 = arith.constant 0 : index
    %1 = vector.load %arg1[%c0, %c0_0, %c0_1, %c0_2, %c0_3] : memref<4x1x5x5x128xbf16, #tpu.memory_space<vmem>>, vector<1x1x4x4x128xbf16>
    %2 = vector.shape_cast %1 : vector<1x1x4x4x128xbf16> to vector<4x4x128xbf16>
    %3 = arith.extf %2 : vector<4x4x128xbf16> to vector<4x4x128xf32>
    %c0_4 = arith.constant 0 : index
    %c0_5 = arith.constant 0 : index
    %c0_6 = arith.constant 0 : index
    %4 = vector.load %arg2[%c0_4, %c0_5, %c0_6] : memref<9x1x128xbf16, #tpu.memory_space<vmem>>, vector<1x1x128xbf16>
    %5 = vector.shape_cast %4 : vector<1x1x128xbf16> to vector<1x128xbf16>
    %6 = arith.extf %5 : vector<1x128xbf16> to vector<1x128xf32>
    %7 = vector.shape_cast %6 : vector<1x128xf32> to vector<1x1x128xf32>
    %8 = vector.broadcast %7 : vector<1x1x128xf32> to vector<4x4x128xf32>
    %9 = arith.mulf %3, %8 : vector<4x4x128xf32>
    %10 = arith.addf %0, %9 : vector<4x4x128xf32>
    %c1 = arith.constant 1 : index
    %c0_7 = arith.constant 0 : index
    %c0_8 = arith.constant 0 : index
    %c0_9 = arith.constant 0 : index
    %c0_10 = arith.constant 0 : index
    %11 = vector.load %arg1[%c1, %c0_7, %c0_8, %c0_9, %c0_10] : memref<4x1x5x5x128xbf16, #tpu.memory_space<vmem>>, vector<1x1x4x4x128xbf16>
    %12 = vector.shape_cast %11 : vector<1x1x4x4x128xbf16> to vector<4x4x128xbf16>
    %13 = arith.extf %12 : vector<4x4x128xbf16> to vector<4x4x128xf32>
    %c1_11 = arith.constant 1 : index
    %c0_12 = arith.constant 0 : index
    %c0_13 = arith.constant 0 : index
    %14 = vector.load %arg2[%c1_11, %c0_12, %c0_13] : memref<9x1x128xbf16, #tpu.memory_space<vmem>>, vector<1x1x128xbf16>
    %15 = vector.shape_cast %14 : vector<1x1x128xbf16> to vector<1x128xbf16>
    %16 = arith.extf %15 : vector<1x128xbf16> to vector<1x128xf32>
    %17 = vector.shape_cast %16 : vector<1x128xf32> to vector<1x1x128xf32>
    %18 = vector.broadcast %17 : vector<1x1x128xf32> to vector<4x4x128xf32>
    %19 = arith.mulf %13, %18 : vector<4x4x128xf32>
    %20 = arith.addf %10, %19 : vector<4x4x128xf32>
    %c0_14 = arith.constant 0 : index
    %c0_15 = arith.constant 0 : index
    %c0_16 = arith.constant 0 : index
    %c1_17 = arith.constant 1 : index
    %c0_18 = arith.constant 0 : index
    %21 = vector.load %arg1[%c0_14, %c0_15, %c0_16, %c1_17, %c0_18] : memref<4x1x5x5x128xbf16, #tpu.memory_space<vmem>>, vector<1x1x4x4x128xbf16>
    %22 = vector.shape_cast %21 : vector<1x1x4x4x128xbf16> to vector<4x4x128xbf16>
    %23 = arith.extf %22 : vector<4x4x128xbf16> to vector<4x4x128xf32>
    %c2 = arith.constant 2 : index
    %c0_19 = arith.constant 0 : index
    %c0_20 = arith.constant 0 : index
    %24 = vector.load %arg2[%c2, %c0_19, %c0_20] : memref<9x1x128xbf16, #tpu.memory_space<vmem>>, vector<1x1x128xbf16>
    %25 = vector.shape_cast %24 : vector<1x1x128xbf16> to vector<1x128xbf16>
    %26 = arith.extf %25 : vector<1x128xbf16> to vector<1x128xf32>
    %27 = vector.shape_cast %26 : vector<1x128xf32> to vector<1x1x128xf32>
    %28 = vector.broadcast %27 : vector<1x1x128xf32> to vector<4x4x128xf32>
    %29 = arith.mulf %23, %28 : vector<4x4x128xf32>
    %30 = arith.addf %20, %29 : vector<4x4x128xf32>
    %c2_21 = arith.constant 2 : index
    %c0_22 = arith.constant 0 : index
    %c0_23 = arith.constant 0 : index
    %c0_24 = arith.constant 0 : index
    %c0_25 = arith.constant 0 : index
    %31 = vector.load %arg1[%c2_21, %c0_22, %c0_23, %c0_24, %c0_25] : memref<4x1x5x5x128xbf16, #tpu.memory_space<vmem>>, vector<1x1x4x4x128xbf16>
    %32 = vector.shape_cast %31 : vector<1x1x4x4x128xbf16> to vector<4x4x128xbf16>
    %33 = arith.extf %32 : vector<4x4x128xbf16> to vector<4x4x128xf32>
    %c3 = arith.constant 3 : index
    %c0_26 = arith.constant 0 : index
    %c0_27 = arith.constant 0 : index
    %34 = vector.load %arg2[%c3, %c0_26, %c0_27] : memref<9x1x128xbf16, #tpu.memory_space<vmem>>, vector<1x1x128xbf16>
    %35 = vector.shape_cast %34 : vector<1x1x128xbf16> to vector<1x128xbf16>
    %36 = arith.extf %35 : vector<1x128xbf16> to vector<1x128xf32>
    %37 = vector.shape_cast %36 : vector<1x128xf32> to vector<1x1x128xf32>
    %38 = vector.broadcast %37 : vector<1x1x128xf32> to vector<4x4x128xf32>
    %39 = arith.mulf %33, %38 : vector<4x4x128xf32>
    %40 = arith.addf %30, %39 : vector<4x4x128xf32>
    %c3_28 = arith.constant 3 : index
    %c0_29 = arith.constant 0 : index
    %c0_30 = arith.constant 0 : index
    %c0_31 = arith.constant 0 : index
    %c0_32 = arith.constant 0 : index
    %41 = vector.load %arg1[%c3_28, %c0_29, %c0_30, %c0_31, %c0_32] : memref<4x1x5x5x128xbf16, #tpu.memory_space<vmem>>, vector<1x1x4x4x128xbf16>
    %42 = vector.shape_cast %41 : vector<1x1x4x4x128xbf16> to vector<4x4x128xbf16>
    %43 = arith.extf %42 : vector<4x4x128xbf16> to vector<4x4x128xf32>
    %c4 = arith.constant 4 : index
    %c0_33 = arith.constant 0 : index
    %c0_34 = arith.constant 0 : index
    %44 = vector.load %arg2[%c4, %c0_33, %c0_34] : memref<9x1x128xbf16, #tpu.memory_space<vmem>>, vector<1x1x128xbf16>
    %45 = vector.shape_cast %44 : vector<1x1x128xbf16> to vector<1x128xbf16>
    %46 = arith.extf %45 : vector<1x128xbf16> to vector<1x128xf32>
    %47 = vector.shape_cast %46 : vector<1x128xf32> to vector<1x1x128xf32>
    %48 = vector.broadcast %47 : vector<1x1x128xf32> to vector<4x4x128xf32>
    %49 = arith.mulf %43, %48 : vector<4x4x128xf32>
    %50 = arith.addf %40, %49 : vector<4x4x128xf32>
    %c2_35 = arith.constant 2 : index
    %c0_36 = arith.constant 0 : index
    %c0_37 = arith.constant 0 : index
    %c1_38 = arith.constant 1 : index
    %c0_39 = arith.constant 0 : index
    %51 = vector.load %arg1[%c2_35, %c0_36, %c0_37, %c1_38, %c0_39] : memref<4x1x5x5x128xbf16, #tpu.memory_space<vmem>>, vector<1x1x4x4x128xbf16>
    %52 = vector.shape_cast %51 : vector<1x1x4x4x128xbf16> to vector<4x4x128xbf16>
    %53 = arith.extf %52 : vector<4x4x128xbf16> to vector<4x4x128xf32>
    %c5 = arith.constant 5 : index
    %c0_40 = arith.constant 0 : index
    %c0_41 = arith.constant 0 : index
    %54 = vector.load %arg2[%c5, %c0_40, %c0_41] : memref<9x1x128xbf16, #tpu.memory_space<vmem>>, vector<1x1x128xbf16>
    %55 = vector.shape_cast %54 : vector<1x1x128xbf16> to vector<1x128xbf16>
    %56 = arith.extf %55 : vector<1x128xbf16> to vector<1x128xf32>
    %57 = vector.shape_cast %56 : vector<1x128xf32> to vector<1x1x128xf32>
    %58 = vector.broadcast %57 : vector<1x1x128xf32> to vector<4x4x128xf32>
    %59 = arith.mulf %53, %58 : vector<4x4x128xf32>
    %60 = arith.addf %50, %59 : vector<4x4x128xf32>
    %c0_42 = arith.constant 0 : index
    %c0_43 = arith.constant 0 : index
    %c1_44 = arith.constant 1 : index
    %c0_45 = arith.constant 0 : index
    %c0_46 = arith.constant 0 : index
    %61 = vector.load %arg1[%c0_42, %c0_43, %c1_44, %c0_45, %c0_46] : memref<4x1x5x5x128xbf16, #tpu.memory_space<vmem>>, vector<1x1x4x4x128xbf16>
    %62 = vector.shape_cast %61 : vector<1x1x4x4x128xbf16> to vector<4x4x128xbf16>
    %63 = arith.extf %62 : vector<4x4x128xbf16> to vector<4x4x128xf32>
    %c6 = arith.constant 6 : index
    %c0_47 = arith.constant 0 : index
    %c0_48 = arith.constant 0 : index
    %64 = vector.load %arg2[%c6, %c0_47, %c0_48] : memref<9x1x128xbf16, #tpu.memory_space<vmem>>, vector<1x1x128xbf16>
    %65 = vector.shape_cast %64 : vector<1x1x128xbf16> to vector<1x128xbf16>
    %66 = arith.extf %65 : vector<1x128xbf16> to vector<1x128xf32>
    %67 = vector.shape_cast %66 : vector<1x128xf32> to vector<1x1x128xf32>
    %68 = vector.broadcast %67 : vector<1x1x128xf32> to vector<4x4x128xf32>
    %69 = arith.mulf %63, %68 : vector<4x4x128xf32>
    %70 = arith.addf %60, %69 : vector<4x4x128xf32>
    %c1_49 = arith.constant 1 : index
    %c0_50 = arith.constant 0 : index
    %c1_51 = arith.constant 1 : index
    %c0_52 = arith.constant 0 : index
    %c0_53 = arith.constant 0 : index
    %71 = vector.load %arg1[%c1_49, %c0_50, %c1_51, %c0_52, %c0_53] : memref<4x1x5x5x128xbf16, #tpu.memory_space<vmem>>, vector<1x1x4x4x128xbf16>
    %72 = vector.shape_cast %71 : vector<1x1x4x4x128xbf16> to vector<4x4x128xbf16>
    %73 = arith.extf %72 : vector<4x4x128xbf16> to vector<4x4x128xf32>
    %c7 = arith.constant 7 : index
    %c0_54 = arith.constant 0 : index
    %c0_55 = arith.constant 0 : index
    %74 = vector.load %arg2[%c7, %c0_54, %c0_55] : memref<9x1x128xbf16, #tpu.memory_space<vmem>>, vector<1x1x128xbf16>
    %75 = vector.shape_cast %74 : vector<1x1x128xbf16> to vector<1x128xbf16>
    %76 = arith.extf %75 : vector<1x128xbf16> to vector<1x128xf32>
    %77 = vector.shape_cast %76 : vector<1x128xf32> to vector<1x1x128xf32>
    %78 = vector.broadcast %77 : vector<1x1x128xf32> to vector<4x4x128xf32>
    %79 = arith.mulf %73, %78 : vector<4x4x128xf32>
    %80 = arith.addf %70, %79 : vector<4x4x128xf32>
    %c0_56 = arith.constant 0 : index
    %c0_57 = arith.constant 0 : index
    %c1_58 = arith.constant 1 : index
    %c1_59 = arith.constant 1 : index
    %c0_60 = arith.constant 0 : index
    %81 = vector.load %arg1[%c0_56, %c0_57, %c1_58, %c1_59, %c0_60] : memref<4x1x5x5x128xbf16, #tpu.memory_space<vmem>>, vector<1x1x4x4x128xbf16>
    %82 = vector.shape_cast %81 : vector<1x1x4x4x128xbf16> to vector<4x4x128xbf16>
    %83 = arith.extf %82 : vector<4x4x128xbf16> to vector<4x4x128xf32>
    %c8 = arith.constant 8 : index
    %c0_61 = arith.constant 0 : index
    %c0_62 = arith.constant 0 : index
    %84 = vector.load %arg2[%c8, %c0_61, %c0_62] : memref<9x1x128xbf16, #tpu.memory_space<vmem>>, vector<1x1x128xbf16>
    %85 = vector.shape_cast %84 : vector<1x1x128xbf16> to vector<1x128xbf16>
    %86 = arith.extf %85 : vector<1x128xbf16> to vector<1x128xf32>
    %87 = vector.shape_cast %86 : vector<1x128xf32> to vector<1x1x128xf32>
    %88 = vector.broadcast %87 : vector<1x1x128xf32> to vector<4x4x128xf32>
    %89 = arith.mulf %83, %88 : vector<4x4x128xf32>
    %90 = arith.addf %80, %89 : vector<4x4x128xf32>
    %c0_63 = arith.constant 0 : index
    %c0_64 = arith.constant 0 : index
    %91 = vector.load %arg3[%c0_63, %c0_64] : memref<1x128xf32, #tpu.memory_space<vmem>>, vector<1x128xf32>
    %92 = vector.shape_cast %91 : vector<1x128xf32> to vector<1x1x128xf32>
    %93 = vector.broadcast %92 : vector<1x1x128xf32> to vector<4x4x128xf32>
    %94 = arith.addf %90, %93 : vector<4x4x128xf32>
    %cst_65 = arith.constant 3.000000e+00 : f32
    %95 = vector.broadcast %cst_65 : f32 to vector<4x4x128xf32>
    %96 = arith.addf %94, %95 : vector<4x4x128xf32>
    %cst_66 = arith.constant 0.000000e+00 : f32
    %cst_67 = arith.constant 6.000000e+00 : f32
    %97 = vector.broadcast %cst_66 : f32 to vector<4x4x128xf32>
    %98 = arith.maximumf %97, %96 : vector<4x4x128xf32>
    %99 = vector.broadcast %cst_67 : f32 to vector<4x4x128xf32>
    %100 = arith.minimumf %99, %98 : vector<4x4x128xf32>
    %101 = arith.mulf %94, %100 : vector<4x4x128xf32>
    %cst_68 = arith.constant 0.166666672 : f32
    %102 = vector.broadcast %cst_68 : f32 to vector<4x4x128xf32>
    %103 = arith.mulf %101, %102 : vector<4x4x128xf32>
    %104 = arith.truncf %103 : vector<4x4x128xf32> to vector<4x4x128xbf16>
    %105 = vector.shape_cast %104 : vector<4x4x128xbf16> to vector<16x128xbf16>
    %c0_69 = arith.constant 0 : index
    %c0_70 = arith.constant 0 : index
    %106 = vector.load %arg4[%c0_69, %c0_70] : memref<128x128xbf16, #tpu.memory_space<vmem>>, vector<128x128xbf16>
    %cst_71 = arith.constant dense<0.000000e+00> : vector<16x128xf32>
    %107 = tpu.matmul %105, %106, %cst_71 {dimension_numbers = #tpu.dot_dimension_numbers<[1], [0], [0], [1], [0, 0, 1, 1], [], []>} : vector<16x128xbf16>, vector<128x128xbf16>, vector<16x128xf32> -> vector<16x128xf32>
    %c0_72 = arith.constant 0 : index
    %c0_73 = arith.constant 0 : index
    %108 = vector.load %arg5[%c0_72, %c0_73] : memref<1x128xf32, #tpu.memory_space<vmem>>, vector<1x128xf32>
    %109 = vector.broadcast %108 : vector<1x128xf32> to vector<16x128xf32>
    %110 = arith.addf %107, %109 : vector<16x128xf32>
    %cst_74 = arith.constant 3.000000e+00 : f32
    %111 = vector.broadcast %cst_74 : f32 to vector<16x128xf32>
    %112 = arith.addf %110, %111 : vector<16x128xf32>
    %cst_75 = arith.constant 0.000000e+00 : f32
    %cst_76 = arith.constant 6.000000e+00 : f32
    %113 = vector.broadcast %cst_75 : f32 to vector<16x128xf32>
    %114 = arith.maximumf %113, %112 : vector<16x128xf32>
    %115 = vector.broadcast %cst_76 : f32 to vector<16x128xf32>
    %116 = arith.minimumf %115, %114 : vector<16x128xf32>
    %117 = arith.mulf %110, %116 : vector<16x128xf32>
    %cst_77 = arith.constant 0.166666672 : f32
    %118 = vector.broadcast %cst_77 : f32 to vector<16x128xf32>
    %119 = arith.mulf %117, %118 : vector<16x128xf32>
    %120 = vector.shape_cast %119 : vector<16x128xf32> to vector<1x4x4x128xf32>
    %121 = arith.truncf %120 : vector<1x4x4x128xf32> to vector<1x4x4x128xbf16>
    %c0_78 = arith.constant 0 : index
    %c0_79 = arith.constant 0 : index
    %c0_80 = arith.constant 0 : index
    %c0_81 = arith.constant 0 : index
    %122 = vector.load %arg6[%c0_78, %c0_79, %c0_80, %c0_81] : memref<1x4x4x128xbf16, #tpu.memory_space<vmem>>, vector<1x4x4x128xbf16>
    tpu.vector_store %arg6[%c0_78, %c0_79, %c0_80, %c0_81], %121 {strides = array<i32>} : memref<1x4x4x128xbf16, #tpu.memory_space<vmem>>, vector<1x4x4x128xbf16>,
    return
  }
  func.func @transform_0(%arg0: i32) -> (i32, i32, i32, i32, i32) {
    %c0_i32 = arith.constant 0 : i32
    %c0_i32_0 = arith.constant 0 : i32
    %c0_i32_1 = arith.constant 0 : i32
    %c0_i32_2 = arith.constant 0 : i32
    %c0_i32_3 = arith.constant 0 : i32
    return %c0_i32, %arg0, %c0_i32_0, %c0_i32_1, %c0_i32_2 : i32, i32, i32, i32, i32
  }
  func.func @transform_1(%arg0: i32) -> (i32, i32, i32) {
    %c0_i32 = arith.constant 0 : i32
    %c0_i32_0 = arith.constant 0 : i32
    %c0_i32_1 = arith.constant 0 : i32
    %c0_i32_2 = arith.constant 0 : i32
    return %c0_i32, %c0_i32_0, %c0_i32_1 : i32, i32, i32
  }
  func.func @transform_2(%arg0: i32) -> (i32, i32) {
    %c0_i32 = arith.constant 0 : i32
    %c0_i32_0 = arith.constant 0 : i32
    %c0_i32_1 = arith.constant 0 : i32
    return %c0_i32, %c0_i32_0 : i32, i32
  }
  func.func @transform_3(%arg0: i32) -> (i32, i32) {
    %c0_i32 = arith.constant 0 : i32
    %c0_i32_0 = arith.constant 0 : i32
    %c0_i32_1 = arith.constant 0 : i32
    return %c0_i32, %c0_i32_0 : i32, i32
  }
  func.func @transform_4(%arg0: i32) -> (i32, i32) {
    %c0_i32 = arith.constant 0 : i32
    %c0_i32_0 = arith.constant 0 : i32
    %c0_i32_1 = arith.constant 0 : i32
    return %c0_i32, %c0_i32_0 : i32, i32
  }
  func.func @transform_5(%arg0: i32) -> (i32, i32, i32, i32) {
    %c0_i32 = arith.constant 0 : i32
    %c0_i32_0 = arith.constant 0 : i32
    %c0_i32_1 = arith.constant 0 : i32
    %c0_i32_2 = arith.constant 0 : i32
    return %arg0, %c0_i32, %c0_i32_0, %c0_i32_1 : i32, i32, i32, i32
  }
}

module attributes {stable_mosaic.version = 11 : i64} {
  func.func @_mm_kernel(%arg0: i32, %arg1: i32, %arg2: memref<128x128xbf16, #tpu.memory_space<vmem>>, %arg3: memref<128x128xbf16, #tpu.memory_space<vmem>>, %arg4: memref<1x128xf32, #tpu.memory_space<vmem>>, %arg5: memref<128x128xbf16, #tpu.memory_space<vmem>>, %arg6: memref<128x128xf32, #tpu.memory_space<vmem>>) attributes {dimension_semantics = [#tpu.dimension_semantics<parallel>, #tpu.dimension_semantics<arbitrary>], iteration_bounds = array<i64: 1, 1>, scalar_prefetch = 0 : i64, scratch_operands = 1 : i64, tpu.core_type = #tpu.core_type<tc>, window_params = [{transform_indices = @transform_0, window_bounds = array<i64: 128, 128>}, {transform_indices = @transform_1, window_bounds = array<i64: 128, 128>}, {pipeline_mode = #tpu.pipeline_mode<synchronous>, transform_indices = @transform_2, window_bounds = array<i64: 1, 128>}, {transform_indices = @transform_3, window_bounds = array<i64: 128, 128>}]} {
    %c0_i32 = arith.constant 0 : i32
    %0 = arith.cmpi eq, %arg1, %c0_i32 : i32
    %1 = arith.extui %0 : i1 to i32
    %c0_i32_0 = arith.constant 0 : i32
    %2 = arith.cmpi ne, %1, %c0_i32_0 : i32
    scf.if %2 {
      %cst_10 = arith.constant 0.000000e+00 : f32
      %12 = vector.broadcast %cst_10 : f32 to vector<128x128xf32>
      %c0_11 = arith.constant 0 : index
      %c0_12 = arith.constant 0 : index
      %13 = vector.load %arg6[%c0_11, %c0_12] : memref<128x128xf32, #tpu.memory_space<vmem>>, vector<128x128xf32>
      tpu.vector_store %arg6[%c0_11, %c0_12], %12 {strides = array<i32>} : memref<128x128xf32, #tpu.memory_space<vmem>>, vector<128x128xf32>,
    } else {
    }
    %c0 = arith.constant 0 : index
    %c0_1 = arith.constant 0 : index
    %3 = vector.load %arg6[%c0, %c0_1] : memref<128x128xf32, #tpu.memory_space<vmem>>, vector<128x128xf32>
    %c0_2 = arith.constant 0 : index
    %c0_3 = arith.constant 0 : index
    %4 = vector.load %arg2[%c0_2, %c0_3] : memref<128x128xbf16, #tpu.memory_space<vmem>>, vector<128x128xbf16>
    %c0_4 = arith.constant 0 : index
    %c0_5 = arith.constant 0 : index
    %5 = vector.load %arg3[%c0_4, %c0_5] : memref<128x128xbf16, #tpu.memory_space<vmem>>, vector<128x128xbf16>
    %cst = arith.constant dense<0.000000e+00> : vector<128x128xf32>
    %6 = tpu.matmul %4, %5, %cst {dimension_numbers = #tpu.dot_dimension_numbers<[1], [0], [0], [1], [0, 0, 1, 1], [], []>} : vector<128x128xbf16>, vector<128x128xbf16>, vector<128x128xf32> -> vector<128x128xf32>
    %7 = arith.addf %3, %6 : vector<128x128xf32>
    %c0_6 = arith.constant 0 : index
    %c0_7 = arith.constant 0 : index
    %8 = vector.load %arg6[%c0_6, %c0_7] : memref<128x128xf32, #tpu.memory_space<vmem>>, vector<128x128xf32>
    tpu.vector_store %arg6[%c0_6, %c0_7], %7 {strides = array<i32>} : memref<128x128xf32, #tpu.memory_space<vmem>>, vector<128x128xf32>,
    %c0_i32_8 = arith.constant 0 : i32
    %9 = arith.cmpi eq, %arg1, %c0_i32_8 : i32
    %10 = arith.extui %9 : i1 to i32
    %c0_i32_9 = arith.constant 0 : i32
    %11 = arith.cmpi ne, %10, %c0_i32_9 : i32
    scf.if %11 {
      %c0_10 = arith.constant 0 : index
      %c0_11 = arith.constant 0 : index
      %12 = vector.load %arg6[%c0_10, %c0_11] : memref<128x128xf32, #tpu.memory_space<vmem>>, vector<128x128xf32>
      %c0_12 = arith.constant 0 : index
      %c0_13 = arith.constant 0 : index
      %13 = vector.load %arg4[%c0_12, %c0_13] : memref<1x128xf32, #tpu.memory_space<vmem>>, vector<1x128xf32>
      %14 = vector.broadcast %13 : vector<1x128xf32> to vector<128x128xf32>
      %15 = arith.addf %12, %14 : vector<128x128xf32>
      %16 = arith.truncf %15 : vector<128x128xf32> to vector<128x128xbf16>
      %c0_14 = arith.constant 0 : index
      %c0_15 = arith.constant 0 : index
      %17 = vector.load %arg5[%c0_14, %c0_15] : memref<128x128xbf16, #tpu.memory_space<vmem>>, vector<128x128xbf16>
      tpu.vector_store %arg5[%c0_14, %c0_15], %16 {strides = array<i32>} : memref<128x128xbf16, #tpu.memory_space<vmem>>, vector<128x128xbf16>,
    } else {
    }
    return
  }
  func.func @transform_0(%arg0: i32, %arg1: i32) -> (i32, i32) {
    %c0_i32 = arith.constant 0 : i32
    return %arg0, %arg1 : i32, i32
  }
  func.func @transform_1(%arg0: i32, %arg1: i32) -> (i32, i32) {
    %c0_i32 = arith.constant 0 : i32
    %c0_i32_0 = arith.constant 0 : i32
    return %arg1, %c0_i32 : i32, i32
  }
  func.func @transform_2(%arg0: i32, %arg1: i32) -> (i32, i32) {
    %c0_i32 = arith.constant 0 : i32
    %c0_i32_0 = arith.constant 0 : i32
    %c0_i32_1 = arith.constant 0 : i32
    return %c0_i32, %c0_i32_0 : i32, i32
  }
  func.func @transform_3(%arg0: i32, %arg1: i32) -> (i32, i32) {
    %c0_i32 = arith.constant 0 : i32
    %c0_i32_0 = arith.constant 0 : i32
    return %arg0, %c0_i32 : i32, i32
  }
}

module attributes {stable_mosaic.version = 11 : i64} {
  func.func @_conv3_kernel(%arg0: i32, %arg1: memref<1x10x10x16xbf16, #tpu.memory_space<vmem>>, %arg2: memref<9x16x128xbf16, #tpu.memory_space<vmem>>, %arg3: memref<1x128xf32, #tpu.memory_space<vmem>>, %arg4: memref<1x8x8x128xbf16, #tpu.memory_space<vmem>>) attributes {dimension_semantics = [#tpu.dimension_semantics<parallel>], iteration_bounds = array<i64: 2>, scalar_prefetch = 0 : i64, scratch_operands = 0 : i64, tpu.core_type = #tpu.core_type<tc>, window_params = [{transform_indices = @transform_0, window_bounds = array<i64: 1, 10, 10, 16>}, {pipeline_mode = #tpu.pipeline_mode<synchronous>, transform_indices = @transform_1, window_bounds = array<i64: 9, 16, 128>}, {pipeline_mode = #tpu.pipeline_mode<synchronous>, transform_indices = @transform_2, window_bounds = array<i64: 1, 128>}, {transform_indices = @transform_3, window_bounds = array<i64: 1, 8, 8, 128>}]} {
    %cst = arith.constant 0.000000e+00 : f32
    %0 = vector.broadcast %cst : f32 to vector<64x128xf32>
    %c0 = arith.constant 0 : index
    %c0_0 = arith.constant 0 : index
    %c0_1 = arith.constant 0 : index
    %c0_2 = arith.constant 0 : index
    %1 = vector.load %arg1[%c0, %c0_0, %c0_1, %c0_2] : memref<1x10x10x16xbf16, #tpu.memory_space<vmem>>, vector<1x8x8x16xbf16>
    %2 = vector.shape_cast %1 : vector<1x8x8x16xbf16> to vector<8x8x16xbf16>
    %3 = vector.shape_cast %2 : vector<8x8x16xbf16> to vector<64x16xbf16>
    %c0_3 = arith.constant 0 : index
    %c0_4 = arith.constant 0 : index
    %c0_5 = arith.constant 0 : index
    %4 = vector.load %arg2[%c0_3, %c0_4, %c0_5] : memref<9x16x128xbf16, #tpu.memory_space<vmem>>, vector<1x16x128xbf16>
    %5 = vector.shape_cast %4 : vector<1x16x128xbf16> to vector<16x128xbf16>
    %cst_6 = arith.constant dense<0.000000e+00> : vector<64x128xf32>
    %6 = tpu.matmul %3, %5, %cst_6 {dimension_numbers = #tpu.dot_dimension_numbers<[1], [0], [0], [1], [0, 0, 1, 1], [], []>} : vector<64x16xbf16>, vector<16x128xbf16>, vector<64x128xf32> -> vector<64x128xf32>
    %7 = arith.addf %0, %6 : vector<64x128xf32>
    %c0_7 = arith.constant 0 : index
    %c0_8 = arith.constant 0 : index
    %c1 = arith.constant 1 : index
    %c0_9 = arith.constant 0 : index
    %8 = vector.load %arg1[%c0_7, %c0_8, %c1, %c0_9] : memref<1x10x10x16xbf16, #tpu.memory_space<vmem>>, vector<1x8x8x16xbf16>
    %9 = vector.shape_cast %8 : vector<1x8x8x16xbf16> to vector<8x8x16xbf16>
    %10 = vector.shape_cast %9 : vector<8x8x16xbf16> to vector<64x16xbf16>
    %c1_10 = arith.constant 1 : index
    %c0_11 = arith.constant 0 : index
    %c0_12 = arith.constant 0 : index
    %11 = vector.load %arg2[%c1_10, %c0_11, %c0_12] : memref<9x16x128xbf16, #tpu.memory_space<vmem>>, vector<1x16x128xbf16>
    %12 = vector.shape_cast %11 : vector<1x16x128xbf16> to vector<16x128xbf16>
    %cst_13 = arith.constant dense<0.000000e+00> : vector<64x128xf32>
    %13 = tpu.matmul %10, %12, %cst_13 {dimension_numbers = #tpu.dot_dimension_numbers<[1], [0], [0], [1], [0, 0, 1, 1], [], []>} : vector<64x16xbf16>, vector<16x128xbf16>, vector<64x128xf32> -> vector<64x128xf32>
    %14 = arith.addf %7, %13 : vector<64x128xf32>
    %c0_14 = arith.constant 0 : index
    %c0_15 = arith.constant 0 : index
    %c2 = arith.constant 2 : index
    %c0_16 = arith.constant 0 : index
    %15 = vector.load %arg1[%c0_14, %c0_15, %c2, %c0_16] : memref<1x10x10x16xbf16, #tpu.memory_space<vmem>>, vector<1x8x8x16xbf16>
    %16 = vector.shape_cast %15 : vector<1x8x8x16xbf16> to vector<8x8x16xbf16>
    %17 = vector.shape_cast %16 : vector<8x8x16xbf16> to vector<64x16xbf16>
    %c2_17 = arith.constant 2 : index
    %c0_18 = arith.constant 0 : index
    %c0_19 = arith.constant 0 : index
    %18 = vector.load %arg2[%c2_17, %c0_18, %c0_19] : memref<9x16x128xbf16, #tpu.memory_space<vmem>>, vector<1x16x128xbf16>
    %19 = vector.shape_cast %18 : vector<1x16x128xbf16> to vector<16x128xbf16>
    %cst_20 = arith.constant dense<0.000000e+00> : vector<64x128xf32>
    %20 = tpu.matmul %17, %19, %cst_20 {dimension_numbers = #tpu.dot_dimension_numbers<[1], [0], [0], [1], [0, 0, 1, 1], [], []>} : vector<64x16xbf16>, vector<16x128xbf16>, vector<64x128xf32> -> vector<64x128xf32>
    %21 = arith.addf %14, %20 : vector<64x128xf32>
    %c0_21 = arith.constant 0 : index
    %c1_22 = arith.constant 1 : index
    %c0_23 = arith.constant 0 : index
    %c0_24 = arith.constant 0 : index
    %22 = vector.load %arg1[%c0_21, %c1_22, %c0_23, %c0_24] : memref<1x10x10x16xbf16, #tpu.memory_space<vmem>>, vector<1x8x8x16xbf16>
    %23 = vector.shape_cast %22 : vector<1x8x8x16xbf16> to vector<8x8x16xbf16>
    %24 = vector.shape_cast %23 : vector<8x8x16xbf16> to vector<64x16xbf16>
    %c3 = arith.constant 3 : index
    %c0_25 = arith.constant 0 : index
    %c0_26 = arith.constant 0 : index
    %25 = vector.load %arg2[%c3, %c0_25, %c0_26] : memref<9x16x128xbf16, #tpu.memory_space<vmem>>, vector<1x16x128xbf16>
    %26 = vector.shape_cast %25 : vector<1x16x128xbf16> to vector<16x128xbf16>
    %cst_27 = arith.constant dense<0.000000e+00> : vector<64x128xf32>
    %27 = tpu.matmul %24, %26, %cst_27 {dimension_numbers = #tpu.dot_dimension_numbers<[1], [0], [0], [1], [0, 0, 1, 1], [], []>} : vector<64x16xbf16>, vector<16x128xbf16>, vector<64x128xf32> -> vector<64x128xf32>
    %28 = arith.addf %21, %27 : vector<64x128xf32>
    %c0_28 = arith.constant 0 : index
    %c1_29 = arith.constant 1 : index
    %c1_30 = arith.constant 1 : index
    %c0_31 = arith.constant 0 : index
    %29 = vector.load %arg1[%c0_28, %c1_29, %c1_30, %c0_31] : memref<1x10x10x16xbf16, #tpu.memory_space<vmem>>, vector<1x8x8x16xbf16>
    %30 = vector.shape_cast %29 : vector<1x8x8x16xbf16> to vector<8x8x16xbf16>
    %31 = vector.shape_cast %30 : vector<8x8x16xbf16> to vector<64x16xbf16>
    %c4 = arith.constant 4 : index
    %c0_32 = arith.constant 0 : index
    %c0_33 = arith.constant 0 : index
    %32 = vector.load %arg2[%c4, %c0_32, %c0_33] : memref<9x16x128xbf16, #tpu.memory_space<vmem>>, vector<1x16x128xbf16>
    %33 = vector.shape_cast %32 : vector<1x16x128xbf16> to vector<16x128xbf16>
    %cst_34 = arith.constant dense<0.000000e+00> : vector<64x128xf32>
    %34 = tpu.matmul %31, %33, %cst_34 {dimension_numbers = #tpu.dot_dimension_numbers<[1], [0], [0], [1], [0, 0, 1, 1], [], []>} : vector<64x16xbf16>, vector<16x128xbf16>, vector<64x128xf32> -> vector<64x128xf32>
    %35 = arith.addf %28, %34 : vector<64x128xf32>
    %c0_35 = arith.constant 0 : index
    %c1_36 = arith.constant 1 : index
    %c2_37 = arith.constant 2 : index
    %c0_38 = arith.constant 0 : index
    %36 = vector.load %arg1[%c0_35, %c1_36, %c2_37, %c0_38] : memref<1x10x10x16xbf16, #tpu.memory_space<vmem>>, vector<1x8x8x16xbf16>
    %37 = vector.shape_cast %36 : vector<1x8x8x16xbf16> to vector<8x8x16xbf16>
    %38 = vector.shape_cast %37 : vector<8x8x16xbf16> to vector<64x16xbf16>
    %c5 = arith.constant 5 : index
    %c0_39 = arith.constant 0 : index
    %c0_40 = arith.constant 0 : index
    %39 = vector.load %arg2[%c5, %c0_39, %c0_40] : memref<9x16x128xbf16, #tpu.memory_space<vmem>>, vector<1x16x128xbf16>
    %40 = vector.shape_cast %39 : vector<1x16x128xbf16> to vector<16x128xbf16>
    %cst_41 = arith.constant dense<0.000000e+00> : vector<64x128xf32>
    %41 = tpu.matmul %38, %40, %cst_41 {dimension_numbers = #tpu.dot_dimension_numbers<[1], [0], [0], [1], [0, 0, 1, 1], [], []>} : vector<64x16xbf16>, vector<16x128xbf16>, vector<64x128xf32> -> vector<64x128xf32>
    %42 = arith.addf %35, %41 : vector<64x128xf32>
    %c0_42 = arith.constant 0 : index
    %c2_43 = arith.constant 2 : index
    %c0_44 = arith.constant 0 : index
    %c0_45 = arith.constant 0 : index
    %43 = vector.load %arg1[%c0_42, %c2_43, %c0_44, %c0_45] : memref<1x10x10x16xbf16, #tpu.memory_space<vmem>>, vector<1x8x8x16xbf16>
    %44 = vector.shape_cast %43 : vector<1x8x8x16xbf16> to vector<8x8x16xbf16>
    %45 = vector.shape_cast %44 : vector<8x8x16xbf16> to vector<64x16xbf16>
    %c6 = arith.constant 6 : index
    %c0_46 = arith.constant 0 : index
    %c0_47 = arith.constant 0 : index
    %46 = vector.load %arg2[%c6, %c0_46, %c0_47] : memref<9x16x128xbf16, #tpu.memory_space<vmem>>, vector<1x16x128xbf16>
    %47 = vector.shape_cast %46 : vector<1x16x128xbf16> to vector<16x128xbf16>
    %cst_48 = arith.constant dense<0.000000e+00> : vector<64x128xf32>
    %48 = tpu.matmul %45, %47, %cst_48 {dimension_numbers = #tpu.dot_dimension_numbers<[1], [0], [0], [1], [0, 0, 1, 1], [], []>} : vector<64x16xbf16>, vector<16x128xbf16>, vector<64x128xf32> -> vector<64x128xf32>
    %49 = arith.addf %42, %48 : vector<64x128xf32>
    %c0_49 = arith.constant 0 : index
    %c2_50 = arith.constant 2 : index
    %c1_51 = arith.constant 1 : index
    %c0_52 = arith.constant 0 : index
    %50 = vector.load %arg1[%c0_49, %c2_50, %c1_51, %c0_52] : memref<1x10x10x16xbf16, #tpu.memory_space<vmem>>, vector<1x8x8x16xbf16>
    %51 = vector.shape_cast %50 : vector<1x8x8x16xbf16> to vector<8x8x16xbf16>
    %52 = vector.shape_cast %51 : vector<8x8x16xbf16> to vector<64x16xbf16>
    %c7 = arith.constant 7 : index
    %c0_53 = arith.constant 0 : index
    %c0_54 = arith.constant 0 : index
    %53 = vector.load %arg2[%c7, %c0_53, %c0_54] : memref<9x16x128xbf16, #tpu.memory_space<vmem>>, vector<1x16x128xbf16>
    %54 = vector.shape_cast %53 : vector<1x16x128xbf16> to vector<16x128xbf16>
    %cst_55 = arith.constant dense<0.000000e+00> : vector<64x128xf32>
    %55 = tpu.matmul %52, %54, %cst_55 {dimension_numbers = #tpu.dot_dimension_numbers<[1], [0], [0], [1], [0, 0, 1, 1], [], []>} : vector<64x16xbf16>, vector<16x128xbf16>, vector<64x128xf32> -> vector<64x128xf32>
    %56 = arith.addf %49, %55 : vector<64x128xf32>
    %c0_56 = arith.constant 0 : index
    %c2_57 = arith.constant 2 : index
    %c2_58 = arith.constant 2 : index
    %c0_59 = arith.constant 0 : index
    %57 = vector.load %arg1[%c0_56, %c2_57, %c2_58, %c0_59] : memref<1x10x10x16xbf16, #tpu.memory_space<vmem>>, vector<1x8x8x16xbf16>
    %58 = vector.shape_cast %57 : vector<1x8x8x16xbf16> to vector<8x8x16xbf16>
    %59 = vector.shape_cast %58 : vector<8x8x16xbf16> to vector<64x16xbf16>
    %c8 = arith.constant 8 : index
    %c0_60 = arith.constant 0 : index
    %c0_61 = arith.constant 0 : index
    %60 = vector.load %arg2[%c8, %c0_60, %c0_61] : memref<9x16x128xbf16, #tpu.memory_space<vmem>>, vector<1x16x128xbf16>
    %61 = vector.shape_cast %60 : vector<1x16x128xbf16> to vector<16x128xbf16>
    %cst_62 = arith.constant dense<0.000000e+00> : vector<64x128xf32>
    %62 = tpu.matmul %59, %61, %cst_62 {dimension_numbers = #tpu.dot_dimension_numbers<[1], [0], [0], [1], [0, 0, 1, 1], [], []>} : vector<64x16xbf16>, vector<16x128xbf16>, vector<64x128xf32> -> vector<64x128xf32>
    %63 = arith.addf %56, %62 : vector<64x128xf32>
    %c0_63 = arith.constant 0 : index
    %c0_64 = arith.constant 0 : index
    %64 = vector.load %arg3[%c0_63, %c0_64] : memref<1x128xf32, #tpu.memory_space<vmem>>, vector<1x128xf32>
    %65 = vector.broadcast %64 : vector<1x128xf32> to vector<64x128xf32>
    %66 = arith.addf %63, %65 : vector<64x128xf32>
    %67 = vector.shape_cast %66 : vector<64x128xf32> to vector<1x8x8x128xf32>
    %68 = arith.truncf %67 : vector<1x8x8x128xf32> to vector<1x8x8x128xbf16>
    %c0_65 = arith.constant 0 : index
    %c0_66 = arith.constant 0 : index
    %c0_67 = arith.constant 0 : index
    %c0_68 = arith.constant 0 : index
    %69 = vector.load %arg4[%c0_65, %c0_66, %c0_67, %c0_68] : memref<1x8x8x128xbf16, #tpu.memory_space<vmem>>, vector<1x8x8x128xbf16>
    tpu.vector_store %arg4[%c0_65, %c0_66, %c0_67, %c0_68], %68 {strides = array<i32>} : memref<1x8x8x128xbf16, #tpu.memory_space<vmem>>, vector<1x8x8x128xbf16>,
    return
  }
  func.func @transform_0(%arg0: i32) -> (i32, i32, i32, i32) {
    %c0_i32 = arith.constant 0 : i32
    %c0_i32_0 = arith.constant 0 : i32
    %c0_i32_1 = arith.constant 0 : i32
    %c0_i32_2 = arith.constant 0 : i32
    return %arg0, %c0_i32, %c0_i32_0, %c0_i32_1 : i32, i32, i32, i32
  }
  func.func @transform_1(%arg0: i32) -> (i32, i32, i32) {
    %c0_i32 = arith.constant 0 : i32
    %c0_i32_0 = arith.constant 0 : i32
    %c0_i32_1 = arith.constant 0 : i32
    %c0_i32_2 = arith.constant 0 : i32
    return %c0_i32, %c0_i32_0, %c0_i32_1 : i32, i32, i32
  }
  func.func @transform_2(%arg0: i32) -> (i32, i32) {
    %c0_i32 = arith.constant 0 : i32
    %c0_i32_0 = arith.constant 0 : i32
    %c0_i32_1 = arith.constant 0 : i32
    return %c0_i32, %c0_i32_0 : i32, i32
  }
  func.func @transform_3(%arg0: i32) -> (i32, i32, i32, i32) {
    %c0_i32 = arith.constant 0 : i32
    %c0_i32_0 = arith.constant 0 : i32
    %c0_i32_1 = arith.constant 0 : i32
    %c0_i32_2 = arith.constant 0 : i32
    return %arg0, %c0_i32, %c0_i32_0, %c0_i32_1 : i32, i32, i32, i32
  }
}

module attributes {stable_mosaic.version = 11 : i64} {
  func.func @_conv3_head_kernel(%arg0: i32, %arg1: memref<1x10x10x16xbf16, #tpu.memory_space<vmem>>, %arg2: memref<9x16x128xbf16, #tpu.memory_space<vmem>>, %arg3: memref<1x128xf32, #tpu.memory_space<vmem>>, %arg4: memref<128x128xbf16, #tpu.memory_space<vmem>>, %arg5: memref<1x128xf32, #tpu.memory_space<vmem>>, %arg6: memref<1x8x8x128xf32, #tpu.memory_space<vmem>>) attributes {dimension_semantics = [#tpu.dimension_semantics<parallel>], iteration_bounds = array<i64: 2>, scalar_prefetch = 0 : i64, scratch_operands = 0 : i64, tpu.core_type = #tpu.core_type<tc>, window_params = [{transform_indices = @transform_0, window_bounds = array<i64: 1, 10, 10, 16>}, {pipeline_mode = #tpu.pipeline_mode<synchronous>, transform_indices = @transform_1, window_bounds = array<i64: 9, 16, 128>}, {pipeline_mode = #tpu.pipeline_mode<synchronous>, transform_indices = @transform_2, window_bounds = array<i64: 1, 128>}, {pipeline_mode = #tpu.pipeline_mode<synchronous>, transform_indices = @transform_3, window_bounds = array<i64: 128, 128>}, {pipeline_mode = #tpu.pipeline_mode<synchronous>, transform_indices = @transform_4, window_bounds = array<i64: 1, 128>}, {transform_indices = @transform_5, window_bounds = array<i64: 1, 8, 8, 128>}]} {
    %cst = arith.constant 0.000000e+00 : f32
    %0 = vector.broadcast %cst : f32 to vector<64x128xf32>
    %c0 = arith.constant 0 : index
    %c0_0 = arith.constant 0 : index
    %c0_1 = arith.constant 0 : index
    %c0_2 = arith.constant 0 : index
    %1 = vector.load %arg1[%c0, %c0_0, %c0_1, %c0_2] : memref<1x10x10x16xbf16, #tpu.memory_space<vmem>>, vector<1x8x8x16xbf16>
    %2 = vector.shape_cast %1 : vector<1x8x8x16xbf16> to vector<8x8x16xbf16>
    %3 = vector.shape_cast %2 : vector<8x8x16xbf16> to vector<64x16xbf16>
    %c0_3 = arith.constant 0 : index
    %c0_4 = arith.constant 0 : index
    %c0_5 = arith.constant 0 : index
    %4 = vector.load %arg2[%c0_3, %c0_4, %c0_5] : memref<9x16x128xbf16, #tpu.memory_space<vmem>>, vector<1x16x128xbf16>
    %5 = vector.shape_cast %4 : vector<1x16x128xbf16> to vector<16x128xbf16>
    %cst_6 = arith.constant dense<0.000000e+00> : vector<64x128xf32>
    %6 = tpu.matmul %3, %5, %cst_6 {dimension_numbers = #tpu.dot_dimension_numbers<[1], [0], [0], [1], [0, 0, 1, 1], [], []>} : vector<64x16xbf16>, vector<16x128xbf16>, vector<64x128xf32> -> vector<64x128xf32>
    %7 = arith.addf %0, %6 : vector<64x128xf32>
    %c0_7 = arith.constant 0 : index
    %c0_8 = arith.constant 0 : index
    %c1 = arith.constant 1 : index
    %c0_9 = arith.constant 0 : index
    %8 = vector.load %arg1[%c0_7, %c0_8, %c1, %c0_9] : memref<1x10x10x16xbf16, #tpu.memory_space<vmem>>, vector<1x8x8x16xbf16>
    %9 = vector.shape_cast %8 : vector<1x8x8x16xbf16> to vector<8x8x16xbf16>
    %10 = vector.shape_cast %9 : vector<8x8x16xbf16> to vector<64x16xbf16>
    %c1_10 = arith.constant 1 : index
    %c0_11 = arith.constant 0 : index
    %c0_12 = arith.constant 0 : index
    %11 = vector.load %arg2[%c1_10, %c0_11, %c0_12] : memref<9x16x128xbf16, #tpu.memory_space<vmem>>, vector<1x16x128xbf16>
    %12 = vector.shape_cast %11 : vector<1x16x128xbf16> to vector<16x128xbf16>
    %cst_13 = arith.constant dense<0.000000e+00> : vector<64x128xf32>
    %13 = tpu.matmul %10, %12, %cst_13 {dimension_numbers = #tpu.dot_dimension_numbers<[1], [0], [0], [1], [0, 0, 1, 1], [], []>} : vector<64x16xbf16>, vector<16x128xbf16>, vector<64x128xf32> -> vector<64x128xf32>
    %14 = arith.addf %7, %13 : vector<64x128xf32>
    %c0_14 = arith.constant 0 : index
    %c0_15 = arith.constant 0 : index
    %c2 = arith.constant 2 : index
    %c0_16 = arith.constant 0 : index
    %15 = vector.load %arg1[%c0_14, %c0_15, %c2, %c0_16] : memref<1x10x10x16xbf16, #tpu.memory_space<vmem>>, vector<1x8x8x16xbf16>
    %16 = vector.shape_cast %15 : vector<1x8x8x16xbf16> to vector<8x8x16xbf16>
    %17 = vector.shape_cast %16 : vector<8x8x16xbf16> to vector<64x16xbf16>
    %c2_17 = arith.constant 2 : index
    %c0_18 = arith.constant 0 : index
    %c0_19 = arith.constant 0 : index
    %18 = vector.load %arg2[%c2_17, %c0_18, %c0_19] : memref<9x16x128xbf16, #tpu.memory_space<vmem>>, vector<1x16x128xbf16>
    %19 = vector.shape_cast %18 : vector<1x16x128xbf16> to vector<16x128xbf16>
    %cst_20 = arith.constant dense<0.000000e+00> : vector<64x128xf32>
    %20 = tpu.matmul %17, %19, %cst_20 {dimension_numbers = #tpu.dot_dimension_numbers<[1], [0], [0], [1], [0, 0, 1, 1], [], []>} : vector<64x16xbf16>, vector<16x128xbf16>, vector<64x128xf32> -> vector<64x128xf32>
    %21 = arith.addf %14, %20 : vector<64x128xf32>
    %c0_21 = arith.constant 0 : index
    %c1_22 = arith.constant 1 : index
    %c0_23 = arith.constant 0 : index
    %c0_24 = arith.constant 0 : index
    %22 = vector.load %arg1[%c0_21, %c1_22, %c0_23, %c0_24] : memref<1x10x10x16xbf16, #tpu.memory_space<vmem>>, vector<1x8x8x16xbf16>
    %23 = vector.shape_cast %22 : vector<1x8x8x16xbf16> to vector<8x8x16xbf16>
    %24 = vector.shape_cast %23 : vector<8x8x16xbf16> to vector<64x16xbf16>
    %c3 = arith.constant 3 : index
    %c0_25 = arith.constant 0 : index
    %c0_26 = arith.constant 0 : index
    %25 = vector.load %arg2[%c3, %c0_25, %c0_26] : memref<9x16x128xbf16, #tpu.memory_space<vmem>>, vector<1x16x128xbf16>
    %26 = vector.shape_cast %25 : vector<1x16x128xbf16> to vector<16x128xbf16>
    %cst_27 = arith.constant dense<0.000000e+00> : vector<64x128xf32>
    %27 = tpu.matmul %24, %26, %cst_27 {dimension_numbers = #tpu.dot_dimension_numbers<[1], [0], [0], [1], [0, 0, 1, 1], [], []>} : vector<64x16xbf16>, vector<16x128xbf16>, vector<64x128xf32> -> vector<64x128xf32>
    %28 = arith.addf %21, %27 : vector<64x128xf32>
    %c0_28 = arith.constant 0 : index
    %c1_29 = arith.constant 1 : index
    %c1_30 = arith.constant 1 : index
    %c0_31 = arith.constant 0 : index
    %29 = vector.load %arg1[%c0_28, %c1_29, %c1_30, %c0_31] : memref<1x10x10x16xbf16, #tpu.memory_space<vmem>>, vector<1x8x8x16xbf16>
    %30 = vector.shape_cast %29 : vector<1x8x8x16xbf16> to vector<8x8x16xbf16>
    %31 = vector.shape_cast %30 : vector<8x8x16xbf16> to vector<64x16xbf16>
    %c4 = arith.constant 4 : index
    %c0_32 = arith.constant 0 : index
    %c0_33 = arith.constant 0 : index
    %32 = vector.load %arg2[%c4, %c0_32, %c0_33] : memref<9x16x128xbf16, #tpu.memory_space<vmem>>, vector<1x16x128xbf16>
    %33 = vector.shape_cast %32 : vector<1x16x128xbf16> to vector<16x128xbf16>
    %cst_34 = arith.constant dense<0.000000e+00> : vector<64x128xf32>
    %34 = tpu.matmul %31, %33, %cst_34 {dimension_numbers = #tpu.dot_dimension_numbers<[1], [0], [0], [1], [0, 0, 1, 1], [], []>} : vector<64x16xbf16>, vector<16x128xbf16>, vector<64x128xf32> -> vector<64x128xf32>
    %35 = arith.addf %28, %34 : vector<64x128xf32>
    %c0_35 = arith.constant 0 : index
    %c1_36 = arith.constant 1 : index
    %c2_37 = arith.constant 2 : index
    %c0_38 = arith.constant 0 : index
    %36 = vector.load %arg1[%c0_35, %c1_36, %c2_37, %c0_38] : memref<1x10x10x16xbf16, #tpu.memory_space<vmem>>, vector<1x8x8x16xbf16>
    %37 = vector.shape_cast %36 : vector<1x8x8x16xbf16> to vector<8x8x16xbf16>
    %38 = vector.shape_cast %37 : vector<8x8x16xbf16> to vector<64x16xbf16>
    %c5 = arith.constant 5 : index
    %c0_39 = arith.constant 0 : index
    %c0_40 = arith.constant 0 : index
    %39 = vector.load %arg2[%c5, %c0_39, %c0_40] : memref<9x16x128xbf16, #tpu.memory_space<vmem>>, vector<1x16x128xbf16>
    %40 = vector.shape_cast %39 : vector<1x16x128xbf16> to vector<16x128xbf16>
    %cst_41 = arith.constant dense<0.000000e+00> : vector<64x128xf32>
    %41 = tpu.matmul %38, %40, %cst_41 {dimension_numbers = #tpu.dot_dimension_numbers<[1], [0], [0], [1], [0, 0, 1, 1], [], []>} : vector<64x16xbf16>, vector<16x128xbf16>, vector<64x128xf32> -> vector<64x128xf32>
    %42 = arith.addf %35, %41 : vector<64x128xf32>
    %c0_42 = arith.constant 0 : index
    %c2_43 = arith.constant 2 : index
    %c0_44 = arith.constant 0 : index
    %c0_45 = arith.constant 0 : index
    %43 = vector.load %arg1[%c0_42, %c2_43, %c0_44, %c0_45] : memref<1x10x10x16xbf16, #tpu.memory_space<vmem>>, vector<1x8x8x16xbf16>
    %44 = vector.shape_cast %43 : vector<1x8x8x16xbf16> to vector<8x8x16xbf16>
    %45 = vector.shape_cast %44 : vector<8x8x16xbf16> to vector<64x16xbf16>
    %c6 = arith.constant 6 : index
    %c0_46 = arith.constant 0 : index
    %c0_47 = arith.constant 0 : index
    %46 = vector.load %arg2[%c6, %c0_46, %c0_47] : memref<9x16x128xbf16, #tpu.memory_space<vmem>>, vector<1x16x128xbf16>
    %47 = vector.shape_cast %46 : vector<1x16x128xbf16> to vector<16x128xbf16>
    %cst_48 = arith.constant dense<0.000000e+00> : vector<64x128xf32>
    %48 = tpu.matmul %45, %47, %cst_48 {dimension_numbers = #tpu.dot_dimension_numbers<[1], [0], [0], [1], [0, 0, 1, 1], [], []>} : vector<64x16xbf16>, vector<16x128xbf16>, vector<64x128xf32> -> vector<64x128xf32>
    %49 = arith.addf %42, %48 : vector<64x128xf32>
    %c0_49 = arith.constant 0 : index
    %c2_50 = arith.constant 2 : index
    %c1_51 = arith.constant 1 : index
    %c0_52 = arith.constant 0 : index
    %50 = vector.load %arg1[%c0_49, %c2_50, %c1_51, %c0_52] : memref<1x10x10x16xbf16, #tpu.memory_space<vmem>>, vector<1x8x8x16xbf16>
    %51 = vector.shape_cast %50 : vector<1x8x8x16xbf16> to vector<8x8x16xbf16>
    %52 = vector.shape_cast %51 : vector<8x8x16xbf16> to vector<64x16xbf16>
    %c7 = arith.constant 7 : index
    %c0_53 = arith.constant 0 : index
    %c0_54 = arith.constant 0 : index
    %53 = vector.load %arg2[%c7, %c0_53, %c0_54] : memref<9x16x128xbf16, #tpu.memory_space<vmem>>, vector<1x16x128xbf16>
    %54 = vector.shape_cast %53 : vector<1x16x128xbf16> to vector<16x128xbf16>
    %cst_55 = arith.constant dense<0.000000e+00> : vector<64x128xf32>
    %55 = tpu.matmul %52, %54, %cst_55 {dimension_numbers = #tpu.dot_dimension_numbers<[1], [0], [0], [1], [0, 0, 1, 1], [], []>} : vector<64x16xbf16>, vector<16x128xbf16>, vector<64x128xf32> -> vector<64x128xf32>
    %56 = arith.addf %49, %55 : vector<64x128xf32>
    %c0_56 = arith.constant 0 : index
    %c2_57 = arith.constant 2 : index
    %c2_58 = arith.constant 2 : index
    %c0_59 = arith.constant 0 : index
    %57 = vector.load %arg1[%c0_56, %c2_57, %c2_58, %c0_59] : memref<1x10x10x16xbf16, #tpu.memory_space<vmem>>, vector<1x8x8x16xbf16>
    %58 = vector.shape_cast %57 : vector<1x8x8x16xbf16> to vector<8x8x16xbf16>
    %59 = vector.shape_cast %58 : vector<8x8x16xbf16> to vector<64x16xbf16>
    %c8 = arith.constant 8 : index
    %c0_60 = arith.constant 0 : index
    %c0_61 = arith.constant 0 : index
    %60 = vector.load %arg2[%c8, %c0_60, %c0_61] : memref<9x16x128xbf16, #tpu.memory_space<vmem>>, vector<1x16x128xbf16>
    %61 = vector.shape_cast %60 : vector<1x16x128xbf16> to vector<16x128xbf16>
    %cst_62 = arith.constant dense<0.000000e+00> : vector<64x128xf32>
    %62 = tpu.matmul %59, %61, %cst_62 {dimension_numbers = #tpu.dot_dimension_numbers<[1], [0], [0], [1], [0, 0, 1, 1], [], []>} : vector<64x16xbf16>, vector<16x128xbf16>, vector<64x128xf32> -> vector<64x128xf32>
    %63 = arith.addf %56, %62 : vector<64x128xf32>
    %c0_63 = arith.constant 0 : index
    %c0_64 = arith.constant 0 : index
    %64 = vector.load %arg3[%c0_63, %c0_64] : memref<1x128xf32, #tpu.memory_space<vmem>>, vector<1x128xf32>
    %65 = vector.broadcast %64 : vector<1x128xf32> to vector<64x128xf32>
    %66 = arith.addf %63, %65 : vector<64x128xf32>
    %cst_65 = arith.constant 0.000000e+00 : f32
    %67 = vector.broadcast %cst_65 : f32 to vector<64x128xf32>
    %68 = arith.maximumf %66, %67 : vector<64x128xf32>
    %69 = arith.truncf %68 : vector<64x128xf32> to vector<64x128xbf16>
    %c0_66 = arith.constant 0 : index
    %c0_67 = arith.constant 0 : index
    %70 = vector.load %arg4[%c0_66, %c0_67] : memref<128x128xbf16, #tpu.memory_space<vmem>>, vector<128x128xbf16>
    %cst_68 = arith.constant dense<0.000000e+00> : vector<64x128xf32>
    %71 = tpu.matmul %69, %70, %cst_68 {dimension_numbers = #tpu.dot_dimension_numbers<[1], [0], [0], [1], [0, 0, 1, 1], [], []>} : vector<64x128xbf16>, vector<128x128xbf16>, vector<64x128xf32> -> vector<64x128xf32>
    %c0_69 = arith.constant 0 : index
    %c0_70 = arith.constant 0 : index
    %72 = vector.load %arg5[%c0_69, %c0_70] : memref<1x128xf32, #tpu.memory_space<vmem>>, vector<1x128xf32>
    %73 = vector.broadcast %72 : vector<1x128xf32> to vector<64x128xf32>
    %74 = arith.addf %71, %73 : vector<64x128xf32>
    %75 = vector.shape_cast %74 : vector<64x128xf32> to vector<1x8x8x128xf32>
    %c0_71 = arith.constant 0 : index
    %c0_72 = arith.constant 0 : index
    %c0_73 = arith.constant 0 : index
    %c0_74 = arith.constant 0 : index
    %76 = vector.load %arg6[%c0_71, %c0_72, %c0_73, %c0_74] : memref<1x8x8x128xf32, #tpu.memory_space<vmem>>, vector<1x8x8x128xf32>
    tpu.vector_store %arg6[%c0_71, %c0_72, %c0_73, %c0_74], %75 {strides = array<i32>} : memref<1x8x8x128xf32, #tpu.memory_space<vmem>>, vector<1x8x8x128xf32>,
    return
  }
  func.func @transform_0(%arg0: i32) -> (i32, i32, i32, i32) {
    %c0_i32 = arith.constant 0 : i32
    %c0_i32_0 = arith.constant 0 : i32
    %c0_i32_1 = arith.constant 0 : i32
    %c0_i32_2 = arith.constant 0 : i32
    return %arg0, %c0_i32, %c0_i32_0, %c0_i32_1 : i32, i32, i32, i32
  }
  func.func @transform_1(%arg0: i32) -> (i32, i32, i32) {
    %c0_i32 = arith.constant 0 : i32
    %c0_i32_0 = arith.constant 0 : i32
    %c0_i32_1 = arith.constant 0 : i32
    %c0_i32_2 = arith.constant 0 : i32
    return %c0_i32, %c0_i32_0, %c0_i32_1 : i32, i32, i32
  }
  func.func @transform_2(%arg0: i32) -> (i32, i32) {
    %c0_i32 = arith.constant 0 : i32
    %c0_i32_0 = arith.constant 0 : i32
    %c0_i32_1 = arith.constant 0 : i32
    return %c0_i32, %c0_i32_0 : i32, i32
  }
  func.func @transform_3(%arg0: i32) -> (i32, i32) {
    %c0_i32 = arith.constant 0 : i32
    %c0_i32_0 = arith.constant 0 : i32
    %c0_i32_1 = arith.constant 0 : i32
    return %c0_i32, %c0_i32_0 : i32, i32
  }
  func.func @transform_4(%arg0: i32) -> (i32, i32) {
    %c0_i32 = arith.constant 0 : i32
    %c0_i32_0 = arith.constant 0 : i32
    %c0_i32_1 = arith.constant 0 : i32
    return %c0_i32, %c0_i32_0 : i32, i32
  }
  func.func @transform_5(%arg0: i32) -> (i32, i32, i32, i32) {
    %c0_i32 = arith.constant 0 : i32
    %c0_i32_0 = arith.constant 0 : i32
    %c0_i32_1 = arith.constant 0 : i32
    %c0_i32_2 = arith.constant 0 : i32
    return %arg0, %c0_i32, %c0_i32_0, %c0_i32_1 : i32, i32, i32, i32
  }
}

module attributes {stable_mosaic.version = 11 : i64} {
  func.func @_roi_heads_kernel(%arg0: i32, %arg1: memref<16x784xbf16, #tpu.memory_space<vmem>>, %arg2: memref<784x128xbf16, #tpu.memory_space<vmem>>, %arg3: memref<1x128xf32, #tpu.memory_space<vmem>>, %arg4: memref<128x128xbf16, #tpu.memory_space<vmem>>, %arg5: memref<1x128xf32, #tpu.memory_space<vmem>>, %arg6: memref<128x128xbf16, #tpu.memory_space<vmem>>, %arg7: memref<1x128xf32, #tpu.memory_space<vmem>>, %arg8: memref<16x128xf32, #tpu.memory_space<vmem>>) attributes {dimension_semantics = [#tpu.dimension_semantics<arbitrary>], iteration_bounds = array<i64: 1>, scalar_prefetch = 0 : i64, scratch_operands = 0 : i64, tpu.core_type = #tpu.core_type<tc>, window_params = [{pipeline_mode = #tpu.pipeline_mode<synchronous>, transform_indices = @transform_0, window_bounds = array<i64: 16, 784>}, {pipeline_mode = #tpu.pipeline_mode<synchronous>, transform_indices = @transform_1, window_bounds = array<i64: 784, 128>}, {pipeline_mode = #tpu.pipeline_mode<synchronous>, transform_indices = @transform_2, window_bounds = array<i64: 1, 128>}, {pipeline_mode = #tpu.pipeline_mode<synchronous>, transform_indices = @transform_3, window_bounds = array<i64: 128, 128>}, {pipeline_mode = #tpu.pipeline_mode<synchronous>, transform_indices = @transform_4, window_bounds = array<i64: 1, 128>}, {pipeline_mode = #tpu.pipeline_mode<synchronous>, transform_indices = @transform_5, window_bounds = array<i64: 128, 128>}, {pipeline_mode = #tpu.pipeline_mode<synchronous>, transform_indices = @transform_6, window_bounds = array<i64: 1, 128>}, {pipeline_mode = #tpu.pipeline_mode<synchronous>, transform_indices = @transform_7, window_bounds = array<i64: 16, 128>}]} {
    %c0 = arith.constant 0 : index
    %c0_0 = arith.constant 0 : index
    %0 = vector.load %arg1[%c0, %c0_0] : memref<16x784xbf16, #tpu.memory_space<vmem>>, vector<16x784xbf16>
    %c0_1 = arith.constant 0 : index
    %c0_2 = arith.constant 0 : index
    %1 = vector.load %arg2[%c0_1, %c0_2] : memref<784x128xbf16, #tpu.memory_space<vmem>>, vector<784x128xbf16>
    %cst = arith.constant dense<0.000000e+00> : vector<16x128xf32>
    %2 = tpu.matmul %0, %1, %cst {dimension_numbers = #tpu.dot_dimension_numbers<[1], [0], [0], [1], [0, 0, 1, 1], [], []>} : vector<16x784xbf16>, vector<784x128xbf16>, vector<16x128xf32> -> vector<16x128xf32>
    %c0_3 = arith.constant 0 : index
    %c0_4 = arith.constant 0 : index
    %3 = vector.load %arg3[%c0_3, %c0_4] : memref<1x128xf32, #tpu.memory_space<vmem>>, vector<1x128xf32>
    %4 = vector.broadcast %3 : vector<1x128xf32> to vector<16x128xf32>
    %5 = arith.addf %2, %4 : vector<16x128xf32>
    %cst_5 = arith.constant 0.000000e+00 : f32
    %6 = vector.broadcast %cst_5 : f32 to vector<16x128xf32>
    %7 = arith.maximumf %5, %6 : vector<16x128xf32>
    %8 = arith.truncf %7 : vector<16x128xf32> to vector<16x128xbf16>
    %c0_6 = arith.constant 0 : index
    %c0_7 = arith.constant 0 : index
    %9 = vector.load %arg4[%c0_6, %c0_7] : memref<128x128xbf16, #tpu.memory_space<vmem>>, vector<128x128xbf16>
    %cst_8 = arith.constant dense<0.000000e+00> : vector<16x128xf32>
    %10 = tpu.matmul %8, %9, %cst_8 {dimension_numbers = #tpu.dot_dimension_numbers<[1], [0], [0], [1], [0, 0, 1, 1], [], []>} : vector<16x128xbf16>, vector<128x128xbf16>, vector<16x128xf32> -> vector<16x128xf32>
    %c0_9 = arith.constant 0 : index
    %c0_10 = arith.constant 0 : index
    %11 = vector.load %arg5[%c0_9, %c0_10] : memref<1x128xf32, #tpu.memory_space<vmem>>, vector<1x128xf32>
    %12 = vector.broadcast %11 : vector<1x128xf32> to vector<16x128xf32>
    %13 = arith.addf %10, %12 : vector<16x128xf32>
    %cst_11 = arith.constant 0.000000e+00 : f32
    %14 = vector.broadcast %cst_11 : f32 to vector<16x128xf32>
    %15 = arith.maximumf %13, %14 : vector<16x128xf32>
    %16 = arith.truncf %15 : vector<16x128xf32> to vector<16x128xbf16>
    %c0_12 = arith.constant 0 : index
    %c0_13 = arith.constant 0 : index
    %17 = vector.load %arg6[%c0_12, %c0_13] : memref<128x128xbf16, #tpu.memory_space<vmem>>, vector<128x128xbf16>
    %cst_14 = arith.constant dense<0.000000e+00> : vector<16x128xf32>
    %18 = tpu.matmul %16, %17, %cst_14 {dimension_numbers = #tpu.dot_dimension_numbers<[1], [0], [0], [1], [0, 0, 1, 1], [], []>} : vector<16x128xbf16>, vector<128x128xbf16>, vector<16x128xf32> -> vector<16x128xf32>
    %c0_15 = arith.constant 0 : index
    %c0_16 = arith.constant 0 : index
    %19 = vector.load %arg7[%c0_15, %c0_16] : memref<1x128xf32, #tpu.memory_space<vmem>>, vector<1x128xf32>
    %20 = vector.broadcast %19 : vector<1x128xf32> to vector<16x128xf32>
    %21 = arith.addf %18, %20 : vector<16x128xf32>
    %c0_17 = arith.constant 0 : index
    %c0_18 = arith.constant 0 : index
    %22 = vector.load %arg8[%c0_17, %c0_18] : memref<16x128xf32, #tpu.memory_space<vmem>>, vector<16x128xf32>
    tpu.vector_store %arg8[%c0_17, %c0_18], %21 {strides = array<i32>} : memref<16x128xf32, #tpu.memory_space<vmem>>, vector<16x128xf32>,
    return
  }
  func.func @transform_0(%arg0: i32) -> (i32, i32) {
    %c0_i32 = arith.constant 0 : i32
    %c0_i32_0 = arith.constant 0 : i32
    %c0_i32_1 = arith.constant 0 : i32
    return %c0_i32, %c0_i32_0 : i32, i32
  }
  func.func @transform_1(%arg0: i32) -> (i32, i32) {
    %c0_i32 = arith.constant 0 : i32
    %c0_i32_0 = arith.constant 0 : i32
    %c0_i32_1 = arith.constant 0 : i32
    return %c0_i32, %c0_i32_0 : i32, i32
  }
  func.func @transform_2(%arg0: i32) -> (i32, i32) {
    %c0_i32 = arith.constant 0 : i32
    %c0_i32_0 = arith.constant 0 : i32
    %c0_i32_1 = arith.constant 0 : i32
    return %c0_i32, %c0_i32_0 : i32, i32
  }
  func.func @transform_3(%arg0: i32) -> (i32, i32) {
    %c0_i32 = arith.constant 0 : i32
    %c0_i32_0 = arith.constant 0 : i32
    %c0_i32_1 = arith.constant 0 : i32
    return %c0_i32, %c0_i32_0 : i32, i32
  }
  func.func @transform_4(%arg0: i32) -> (i32, i32) {
    %c0_i32 = arith.constant 0 : i32
    %c0_i32_0 = arith.constant 0 : i32
    %c0_i32_1 = arith.constant 0 : i32
    return %c0_i32, %c0_i32_0 : i32, i32
  }
  func.func @transform_5(%arg0: i32) -> (i32, i32) {
    %c0_i32 = arith.constant 0 : i32
    %c0_i32_0 = arith.constant 0 : i32
    %c0_i32_1 = arith.constant 0 : i32
    return %c0_i32, %c0_i32_0 : i32, i32
  }
  func.func @transform_6(%arg0: i32) -> (i32, i32) {
    %c0_i32 = arith.constant 0 : i32
    %c0_i32_0 = arith.constant 0 : i32
    %c0_i32_1 = arith.constant 0 : i32
    return %c0_i32, %c0_i32_0 : i32, i32
  }
  func.func @transform_7(%arg0: i32) -> (i32, i32) {
    %c0_i32 = arith.constant 0 : i32
    %c0_i32_0 = arith.constant 0 : i32
    %c0_i32_1 = arith.constant 0 : i32
    return %c0_i32, %c0_i32_0 : i32, i32
  }
}

</mosaic_0001>

<llo_original>
// kernel: forward.8
$region0: #{forward.8}
  #allocation0 [shape = 'u32[]', space=smem, size = 0x4, offset = 0x4, fixed_abs, tag = 'smem constant byte address 0x4 - core index']
  #allocation1 [shape = 'u32[144,128]{1,0:T(1,128)}', space=vmem, size = 0x12000, scoped, tag = 'internal scratch']
  #allocation2 [shape = 'f32[256,128]{1,0:T(8,128)}', space=vmem, size = 0x20000, scoped, tag = 'scratch operand']
  %s0 = inlined_call_operand.vmem [shape: bf16[512,72], index: 0, kind: input, shape index: {}]
  %s1 = inlined_call_operand.vmem [shape: bf16[72,128], index: 1, kind: input, shape index: {}]
  %s2 = inlined_call_operand.vmem [shape: f32[1,128], index: 2, kind: input, shape index: {}]
  %s3 = inlined_call_operand.vmem [shape: bf16[512,128], index: 3, kind: output, shape index: {}]
  %s4 = sld [smem:[#allocation0]]
  $region53: #{forward.8} parent=0
    _
  %s6 = ssub.s32 1, %s4
  %s7 = scalar_select 0, %s6, %s4
  loop: start=0, step=1, limit=4
  $region2: #{forward.8} parent=0 // loop_pre_header
    _
  $region3: #{forward.8} parent=0 // loop_header
    %s9 = sphi 0, %s13
    %p10 = scmp.ge.s32.totalorder %s9, 4
    %s16 = sphi 0, %s28
    %s17 = sphi 0, %s24
    %s18 = sphi 0, %s16
    %s19 = sphi 0, %s17
    %s20 = sphi 0, %s18
    %s21 = sphi 0, %s19
    %s33 = sphi 0, %s35
    %s36 = sphi 0, %s33
    %s37 = sphi 0, %s36
    %s53 = sphi 0, %s37
    %s59 = sphi 0, %s61
    %s62 = sphi 0, %s59
    %s63 = sphi 0, %s62
    %s79 = sphi 0, %s63
    %s83 = sphi 0, %s83
    %s85 = sphi 0, %s83
    %s86 = sphi 0, %s85
    %s100 = sphi 0, %s86
    %s106 = sphi 0, %s108
    %s109 = sphi 0, %s106
    %s110 = sphi 0, %s109
    %s126 = sphi 0, %s110
  $region4: #{forward.8} parent=0 // loop_header_branch
    %12 = sbr.rel (%p10) target = $region8
  $region5: #{forward.8} parent=0 // loop_body
    %s14 = ssub.s32 %s9, 1
    %s15 = ssub.s32 %s9, 2
    %s22 = sadd.s32 1, %s17
    %p23 = scmp.ge.s32.totalorder %s22, 1
    %s24 = scalar_select %p23, 0, %s22
    %s25 = sadd.s32 1, %s16
    %s26 = scalar_select %p23, %s25, %s16
    %p27 = scmp.ge.s32.totalorder %s26, 2
    %s28 = scalar_select %p27, 0, %s26
    %s29 = ssub.s32 %s16, %s28
    %s30 = ssub.s32 %s17, %s24
    %s31 = sor.u32 %s29, %s30
    %p32 = scmp.eq.s32.totalorder %s31, 0
    %s34 = sadd.s32 %s33, 1
    %s35 = scalar_select %p32, %s33, %s34
    %p38 = pneg %p32
    %p39 = scmp.eq.s32.totalorder %s9, 1
    %p40 = por %p38, %p39
    %p41 = scmp.ne.s32.totalorder %s33, %s36
    %p42 = scmp.eq.s32.totalorder %s9, 0
    %p43 = por %p41, %p42
    %p44 = scmp.ne.s32.totalorder %s33, %s36
    %p45 = scmp.eq.s32.totalorder %s14, 1
    %p46 = por %p44, %p45
    %p47 = scmp.ne.s32.totalorder %s36, %s37
    %p48 = scmp.eq.s32.totalorder %s14, 0
    %p49 = por %p47, %p48
    %p50 = scmp.ne.s32.totalorder %s36, %s37
    %p51 = scmp.eq.s32.totalorder %s15, 1
    %p52 = por %p50, %p51
    %p54 = scmp.ne.s32.totalorder %s37, %s53
    %p55 = scmp.eq.s32.totalorder %s15, 0
    %p56 = por %p54, %p55
    %s57 = ssub.s32 %s17, %s24
    %p58 = scmp.eq.s32.totalorder %s57, 0
    %s60 = sadd.s32 %s59, 1
    %s61 = scalar_select %p58, %s59, %s60
    %p64 = pneg %p58
    %p65 = scmp.eq.s32.totalorder %s9, 1
    %p66 = por %p64, %p65
    %p67 = scmp.ne.s32.totalorder %s59, %s62
    %p68 = scmp.eq.s32.totalorder %s9, 0
    %p69 = por %p67, %p68
    %p70 = scmp.ne.s32.totalorder %s59, %s62
    %p71 = scmp.eq.s32.totalorder %s14, 1
    %p72 = por %p70, %p71
    %p73 = scmp.ne.s32.totalorder %s62, %s63
    %p74 = scmp.eq.s32.totalorder %s14, 0
    %p75 = por %p73, %p74
    %p76 = scmp.ne.s32.totalorder %s62, %s63
    %p77 = scmp.eq.s32.totalorder %s15, 1
    %p78 = por %p76, %p77
    %p80 = scmp.ne.s32.totalorder %s63, %s79
    %p81 = scmp.eq.s32.totalorder %s15, 0
    %p82 = por %p80, %p81
    %s84 = sadd.s32 %s83, 1
    %p87 = scmp.eq.s32.totalorder %s9, 1
    %p88 = scmp.ne.s32.totalorder %s83, %s85
    %p89 = scmp.eq.s32.totalorder %s9, 0
    %p90 = por %p88, %p89
    %p91 = scmp.ne.s32.totalorder %s83, %s85
    %p92 = scmp.eq.s32.totalorder %s14, 1
    %p93 = por %p91, %p92
    %p94 = scmp.ne.s32.totalorder %s85, %s86
    %p95 = scmp.eq.s32.totalorder %s14, 0
    %p96 = por %p94, %p95
    %p97 = scmp.ne.s32.totalorder %s85, %s86
    %p98 = scmp.eq.s32.totalorder %s15, 1
    %p99 = por %p97, %p98
    %p101 = scmp.ne.s32.totalorder %s86, %s100
    %p102 = scmp.eq.s32.totalorder %s15, 0
    %p103 = por %p101, %p102
    %s104 = ssub.s32 %s16, %s28
    %p105 = scmp.eq.s32.totalorder %s104, 0
    %s107 = sadd.s32 %s106, 1
    %s108 = scalar_select %p105, %s106, %s107
    %p111 = pneg %p105
    %p112 = scmp.eq.s32.totalorder %s9, 1
    %p113 = por %p111, %p112
    %p114 = scmp.ne.s32.totalorder %s106, %s109
    %p115 = scmp.eq.s32.totalorder %s9, 0
    %p116 = por %p114, %p115
    %p117 = scmp.ne.s32.totalorder %s106, %s109
    %p118 = scmp.eq.s32.totalorder %s14, 1
    %p119 = por %p117, %p118
    %p120 = scmp.ne.s32.totalorder %s109, %s110
    %p121 = scmp.eq.s32.totalorder %s14, 0
    %p122 = por %p120, %p121
    %p123 = scmp.ne.s32.totalorder %s109, %s110
    %p124 = scmp.eq.s32.totalorder %s15, 1
    %p125 = por %p123, %p124
    %p127 = scmp.ne.s32.totalorder %s110, %s126
    %p128 = scmp.eq.s32.totalorder %s15, 0
    %p129 = por %p127, %p128
    %p130 = scmp.le.s32.totalorder 1, %s9
    %p131 = scmp.lt.s32.totalorder %s9, 3
    %p132 = pnand %p130, %p131
    %p133 = pneg %p132
    // Predicated region
    $region9: #{forward.8} parent=5 // pred_check
      _
    $region10: #{forward.8} parent=5 // pred_check_branch
      %135 = sbr.rel (%p132) target = $region12
    $region11: #{forward.8} parent=5 // pred_region
      %s136 = ssub.s32 %s9, 1
      // Predicated region
      $region13: #{forward.8} parent=11 // pred_check
        %p137 = pneg %p75
      $region14: #{forward.8} parent=11 // pred_check_branch
        %139 = sbr.rel (%p137) target = $region16
      $region15: #{forward.8} parent=11 // pred_region
        %s140 = smul.u32 9, %s19
        %p141 = scmp.lt.s32.totalorder %s140, 8
        %s142 = scalar_select %p141, %s140, 8
        %s143 = smul.addr %s142, 4
        %s144 = scalar_lea.vmem %s1, %s143
        %s145 = smul.u32 9, %s19
      $region16: #{forward.8} parent=11 // pred_fallthru
        _
      // Predicated region
      $region17: #{forward.8} parent=11 // pred_check
        %p146 = pneg %p96
      $region18: #{forward.8} parent=11 // pred_check_branch
        %148 = sbr.rel (%p146) target = $region20
      $region19: #{forward.8} parent=11 // pred_region
        _
      $region20: #{forward.8} parent=11 // pred_fallthru
        _
    $region12: #{forward.8} parent=5 // pred_fallthru
      _
    %p149 = scmp.lt.s32.totalorder %s9, 2
    // Predicated region
    $region21: #{forward.8} parent=5 // pred_check
      %p150 = pneg %p149
    $region22: #{forward.8} parent=5 // pred_check_branch
      %152 = sbr.rel (%p150) target = $region24
    $region23: #{forward.8} parent=5 // pred_region
      // Predicated region
      $region25: #{forward.8} parent=23 // pred_check
        %p153 = pneg %p43
      $region26: #{forward.8} parent=23 // pred_check_branch
        %155 = sbr.rel (%p153) target = $region28
      $region27: #{forward.8} parent=23 // pred_region
        %s156 = smul.u32 32, %s16
        %p157 = scmp.lt.s32.totalorder %s156, 63
        %s158 = scalar_select %p157, %s156, 63
        %p159 = scmp.lt.s32.totalorder %s17, 0
        %s160 = scalar_select %p159, %s17, 0
        %s161 = sadd.s32 %s160, %s158
        %s162 = smul.addr %s161, 4
        %s163 = scalar_lea.vmem %s0, %s162
        %s164 = smul.u32 32, %s16
      $region28: #{forward.8} parent=23 // pred_fallthru
        _
    $region24: #{forward.8} parent=5 // pred_fallthru
      _
    %p165 = scmp.le.s32.totalorder 1, %s9
    %p166 = scmp.lt.s32.totalorder %s9, 3
    %p167 = pnand %p165, %p166
    %p168 = pneg %p167
    // Predicated region
    $region29: #{forward.8} parent=5 // pred_check
      _
    $region30: #{forward.8} parent=5 // pred_check_branch
      %170 = sbr.rel (%p167) target = $region32
    $region31: #{forward.8} parent=5 // pred_region
      %s171 = ssub.s32 %s9, 1
      %s172 = smul.u32 32, %s18
      %p173 = scmp.lt.s32.totalorder %s172, 63
      %s174 = scalar_select %p173, %s172, 63
      %p175 = scmp.lt.s32.totalorder %s19, 0
      %s176 = scalar_select %p175, %s19, 0
      %s177 = sadd.s32 %s176, %s174
      %s178 = smul.addr %s177, 4
      %s179 = scalar_lea.vmem %s0, %s178
      %p180 = pneg %p49
      %p181 = pneg %p46
      %s182 = smul.u32 9, %s19
      %p183 = scmp.lt.s32.totalorder %s182, 8
      %s184 = scalar_select %p183, %s182, 8
      %s185 = smul.addr %s184, 4
      %s186 = scalar_lea.vmem %s1, %s185
      %p187 = pneg %p75
      %p188 = pneg %p72
      %p189 = pneg %p96
      %p190 = pneg %p93
      %p191 = pneg %p122
      %p192 = pneg %p119
      %s193 = smul.u32 32, %s18
      %p194 = scmp.lt.s32.totalorder %s193, 63
      %s195 = scalar_select %p194, %s193, 63
      %s196 = smul.addr %s195, 4
      %s197 = scalar_lea.vmem %s3, %s196
      %s198 = smul.u32 32, %s18
      %p199 = scmp.lt.s32.totalorder %s198, 63
      %s200 = scalar_select %p199, %s198, 63
      %p201 = scmp.lt.s32.totalorder %s19, 0
      %s202 = scalar_select %p201, %s19, 0
      %s203 = sadd.s32 %s202, %s200
      %s204 = smul.addr %s203, 4
      %s205 = scalar_lea.vmem %s0, %s204
      %s206 = smul.u32 32, %s18
      %s207 = smul.u32 9, %s19
      %p208 = scmp.lt.s32.totalorder %s207, 8
      %s209 = scalar_select %p208, %s207, 8
      %s210 = smul.addr %s209, 4
      %s211 = scalar_lea.vmem %s1, %s210
      %s212 = smul.u32 9, %s19
      %s213 = smul.u32 32, %s18
      %p214 = scmp.lt.s32.totalorder %s213, 63
      %s215 = scalar_select %p214, %s213, 63
      %s216 = smul.addr %s215, 4
      %s217 = scalar_lea.vmem %s3, %s216
      %s218 = smul.u32 32, %s18
      %p220 = scmp.eq.s32.totalorder %s19, 0
      // Predicated region
      $region33: #{forward.8} parent=31 // pred_check
        %p221 = pneg %p220
      $region34: #{forward.8} parent=31 // pred_check_branch
        %223 = sbr.rel (%p221) target = $region36
      $region35: #{forward.8} parent=31 // pred_region
        %224 = vst [vmem:[#allocation2] sm:$0xff] 0.0
        %225 = vst [vmem:[#allocation2 + $0x8] sm:$0xff] 0.0
        %226 = vst [vmem:[#allocation2 + $0x10] sm:$0xff] 0.0
        %227 = vst [vmem:[#allocation2 + $0x18] sm:$0xff] 0.0
        %228 = vst [vmem:[#allocation2 + $0x20] sm:$0xff] 0.0
        %229 = vst [vmem:[#allocation2 + $0x28] sm:$0xff] 0.0
        %230 = vst [vmem:[#allocation2 + $0x30] sm:$0xff] 0.0
        %231 = vst [vmem:[#allocation2 + $0x38] sm:$0xff] 0.0
        %232 = vst [vmem:[#allocation2 + $0x40] sm:$0xff] 0.0
        %233 = vst [vmem:[#allocation2 + $0x48] sm:$0xff] 0.0
        %234 = vst [vmem:[#allocation2 + $0x50] sm:$0xff] 0.0
        %235 = vst [vmem:[#allocation2 + $0x58] sm:$0xff] 0.0
        %236 = vst [vmem:[#allocation2 + $0x60] sm:$0xff] 0.0
        %237 = vst [vmem:[#allocation2 + $0x68] sm:$0xff] 0.0
        %238 = vst [vmem:[#allocation2 + $0x70] sm:$0xff] 0.0
        %239 = vst [vmem:[#allocation2 + $0x78] sm:$0xff] 0.0
        %240 = vst [vmem:[#allocation2 + $0x80] sm:$0xff] 0.0
        %241 = vst [vmem:[#allocation2 + $0x88] sm:$0xff] 0.0
        %242 = vst [vmem:[#allocation2 + $0x90] sm:$0xff] 0.0
        %243 = vst [vmem:[#allocation2 + $0x98] sm:$0xff] 0.0
        %244 = vst [vmem:[#allocation2 + $0xa0] sm:$0xff] 0.0
        %245 = vst [vmem:[#allocation2 + $0xa8] sm:$0xff] 0.0
        %246 = vst [vmem:[#allocation2 + $0xb0] sm:$0xff] 0.0
        %247 = vst [vmem:[#allocation2 + $0xb8] sm:$0xff] 0.0
        %248 = vst [vmem:[#allocation2 + $0xc0] sm:$0xff] 0.0
        %249 = vst [vmem:[#allocation2 + $0xc8] sm:$0xff] 0.0
        %250 = vst [vmem:[#allocation2 + $0xd0] sm:$0xff] 0.0
        %251 = vst [vmem:[#allocation2 + $0xd8] sm:$0xff] 0.0
        %252 = vst [vmem:[#allocation2 + $0xe0] sm:$0xff] 0.0
        %253 = vst [vmem:[#allocation2 + $0xe8] sm:$0xff] 0.0
        %254 = vst [vmem:[#allocation2 + $0xf0] sm:$0xff] 0.0
        %255 = vst [vmem:[#allocation2 + $0xf8] sm:$0xff] 0.0
      $region36: #{forward.8} parent=31 // pred_fallthru
        _
      %v256 = vld [vmem:[#allocation2] sm:$0xff]
      %v257 = vld [vmem:[#allocation2 + $0x8] sm:$0xff]
      %v258 = vld [vmem:[#allocation2 + $0x10] sm:$0xff]
      %v259 = vld [vmem:[#allocation2 + $0x18] sm:$0xff]
      %v260 = vld [vmem:[#allocation2 + $0x20] sm:$0xff]
      %v261 = vld [vmem:[#allocation2 + $0x28] sm:$0xff]
      %v262 = vld [vmem:[#allocation2 + $0x30] sm:$0xff]
      %v263 = vld [vmem:[#allocation2 + $0x38] sm:$0xff]
      %v264 = vld [vmem:[#allocation2 + $0x40] sm:$0xff]
      %v265 = vld [vmem:[#allocation2 + $0x48] sm:$0xff]
      %v266 = vld [vmem:[#allocation2 + $0x50] sm:$0xff]
      %v267 = vld [vmem:[#allocation2 + $0x58] sm:$0xff]
      %v268 = vld [vmem:[#allocation2 + $0x60] sm:$0xff]
      %v269 = vld [vmem:[#allocation2 + $0x68] sm:$0xff]
      %v270 = vld [vmem:[#allocation2 + $0x70] sm:$0xff]
      %v271 = vld [vmem:[#allocation2 + $0x78] sm:$0xff]
      %v272 = vld [vmem:[#allocation2 + $0x80] sm:$0xff]
      %v273 = vld [vmem:[#allocation2 + $0x88] sm:$0xff]
      %v274 = vld [vmem:[#allocation2 + $0x90] sm:$0xff]
      %v275 = vld [vmem:[#allocation2 + $0x98] sm:$0xff]
      %v276 = vld [vmem:[#allocation2 + $0xa0] sm:$0xff]
      %v277 = vld [vmem:[#allocation2 + $0xa8] sm:$0xff]
      %v278 = vld [vmem:[#allocation2 + $0xb0] sm:$0xff]
      %v279 = vld [vmem:[#allocation2 + $0xb8] sm:$0xff]
      %v280 = vld [vmem:[#allocation2 + $0xc0] sm:$0xff]
      %v281 = vld [vmem:[#allocation2 + $0xc8] sm:$0xff]
      %v282 = vld [vmem:[#allocation2 + $0xd0] sm:$0xff]
      %v283 = vld [vmem:[#allocation2 + $0xd8] sm:$0xff]
      %v284 = vld [vmem:[#allocation2 + $0xe0] sm:$0xff]
      %v285 = vld [vmem:[#allocation2 + $0xe8] sm:$0xff]
      %v286 = vld [vmem:[#allocation2 + $0xf0] sm:$0xff]
      %v287 = vld [vmem:[#allocation2 + $0xf8] sm:$0xff]
      %v288 = vld [vmem:[%s205] sm:$0xf]
      %v289 = vld [vmem:[%s205 + $0x4] sm:$0xf]
      %v290 = vld [vmem:[%s205 + $0x8] sm:$0xf]
      %v291 = vld [vmem:[%s205 + $0xc] sm:$0xf]
      %v292 = vld [vmem:[%s205 + $0x10] sm:$0xf]
      %v293 = vld [vmem:[%s205 + $0x14] sm:$0xf]
      %v294 = vld [vmem:[%s205 + $0x18] sm:$0xf]
      %v295 = vld [vmem:[%s205 + $0x1c] sm:$0xf]
      %v296 = vld [vmem:[%s205 + $0x20] sm:$0xf]
      %v297 = vld [vmem:[%s205 + $0x24] sm:$0xf]
      %v298 = vld [vmem:[%s205 + $0x28] sm:$0xf]
      %v299 = vld [vmem:[%s205 + $0x2c] sm:$0xf]
      %v300 = vld [vmem:[%s205 + $0x30] sm:$0xf]
      %v301 = vld [vmem:[%s205 + $0x34] sm:$0xf]
      %v302 = vld [vmem:[%s205 + $0x38] sm:$0xf]
      %v303 = vld [vmem:[%s205 + $0x3c] sm:$0xf]
      %v304 = vld [vmem:[%s205 + $0x40] sm:$0xf]
      %v305 = vld [vmem:[%s205 + $0x44] sm:$0xf]
      %v306 = vld [vmem:[%s205 + $0x48] sm:$0xf]
      %v307 = vld [vmem:[%s205 + $0x4c] sm:$0xf]
      %v308 = vld [vmem:[%s205 + $0x50] sm:$0xf]
      %v309 = vld [vmem:[%s205 + $0x54] sm:$0xf]
      %v310 = vld [vmem:[%s205 + $0x58] sm:$0xf]
      %v311 = vld [vmem:[%s205 + $0x5c] sm:$0xf]
      %v312 = vld [vmem:[%s205 + $0x60] sm:$0xf]
      %v313 = vld [vmem:[%s205 + $0x64] sm:$0xf]
      %v314 = vld [vmem:[%s205 + $0x68] sm:$0xf]
      %v315 = vld [vmem:[%s205 + $0x6c] sm:$0xf]
      %v316 = vld [vmem:[%s205 + $0x70] sm:$0xf]
      %v317 = vld [vmem:[%s205 + $0x74] sm:$0xf]
      %v318 = vld [vmem:[%s205 + $0x78] sm:$0xf]
      %v319 = vld [vmem:[%s205 + $0x7c] sm:$0xf]
      %v320 = vld [vmem:[%s211] sm:$0xf]
      %v321 = vld [vmem:[%s211 + $0x4] sm:$0xf]
      %v322 = vld [vmem:[%s211 + $0x8] sm:$0xf]
      %v323 = vld [vmem:[%s211 + $0xc] sm:$0xf]
      %v324 = vld [vmem:[%s211 + $0x10] sm:$0xf]
      %v325 = vld [vmem:[%s211 + $0x14] sm:$0xf]
      %v326 = vld [vmem:[%s211 + $0x18] sm:$0xf]
      %v327 = vld [vmem:[%s211 + $0x1c] sm:$0xf]
      %v328 = vld [vmem:[%s211 + $0x20] sm:$0xf]
      %v361 = vunpack.c.l.b16 %v288
      %v362 = vunpack.c.l.b16 %v289
      %v363 = vunpack.c.l.b16 %v290
      %v364 = vunpack.c.l.b16 %v291
      %v365 = vunpack.c.l.b16 %v292
      %v366 = vunpack.c.l.b16 %v293
      %v367 = vunpack.c.l.b16 %v294
      %v368 = vunpack.c.l.b16 %v295
      %v369 = vunpack.c.l.b16 %v296
      %v370 = vunpack.c.l.b16 %v297
      %v371 = vunpack.c.l.b16 %v298
      %v372 = vunpack.c.l.b16 %v299
      %v373 = vunpack.c.l.b16 %v300
      %v374 = vunpack.c.l.b16 %v301
      %v375 = vunpack.c.l.b16 %v302
      %v376 = vunpack.c.l.b16 %v303
      %v377 = vunpack.c.l.b16 %v304
      %v378 = vunpack.c.l.b16 %v305
      %v379 = vunpack.c.l.b16 %v306
      %v380 = vunpack.c.l.b16 %v307
      %v381 = vunpack.c.l.b16 %v308
      %v382 = vunpack.c.l.b16 %v309
      %v383 = vunpack.c.l.b16 %v310
      %v384 = vunpack.c.l.b16 %v311
      %v385 = vunpack.c.l.b16 %v312
      %v386 = vunpack.c.l.b16 %v313
      %v387 = vunpack.c.l.b16 %v314
      %v388 = vunpack.c.l.b16 %v315
      %v389 = vunpack.c.l.b16 %v316
      %v390 = vunpack.c.l.b16 %v317
      %v391 = vunpack.c.l.b16 %v318
      %v392 = vunpack.c.l.b16 %v319
      %v393 = vpack.c.b16 %v362, %v361
      %v394 = vpack.c.b16 %v364, %v363
      %v395 = vpack.c.b16 %v366, %v365
      %v396 = vpack.c.b16 %v368, %v367
      %v397 = vpack.c.b16 %v370, %v369
      %v398 = vpack.c.b16 %v372, %v371
      %v399 = vpack.c.b16 %v374, %v373
      %v400 = vpack.c.b16 %v376, %v375
      %v401 = vpack.c.b16 %v378, %v377
      %v402 = vpack.c.b16 %v380, %v379
      %v403 = vpack.c.b16 %v382, %v381
      %v404 = vpack.c.b16 %v384, %v383
      %v405 = vpack.c.b16 %v386, %v385
      %v406 = vpack.c.b16 %v388, %v387
      %v407 = vpack.c.b16 %v390, %v389
      %v408 = vpack.c.b16 %v392, %v391
      %v418 = vunpack.c.l.b16 %v320
      %v419 = vunpack.c.l.b16 %v321
      %v420 = vunpack.c.l.b16 %v322
      %v421 = vunpack.c.l.b16 %v323
      %v422 = vunpack.c.l.b16 %v324
      %v423 = vunpack.c.l.b16 %v325
      %v424 = vunpack.c.l.b16 %v326
      %v425 = vunpack.c.l.b16 %v327
      %v426 = vunpack.c.l.b16 %v328
      %v427 = vpack.c.b16 %v419, %v418
      %v428 = vpack.c.b16 %v421, %v420
      %v429 = vpack.c.b16 %v423, %v422
      %v430 = vpack.c.b16 %v425, %v424
      %v431 = vpack.c.b16 %v426, %v426
      %vm436 = vcmask 588800
      %v438 = vsel %vm436, %v393, 0
      %v441 = vsel %vm436, %v394, 0
      %v444 = vsel %vm436, %v395, 0
      %v447 = vsel %vm436, %v396, 0
      %v450 = vsel %vm436, %v397, 0
      %v453 = vsel %vm436, %v398, 0
      %v456 = vsel %vm436, %v399, 0
      %v459 = vsel %vm436, %v400, 0
      %v462 = vsel %vm436, %v401, 0
      %v465 = vsel %vm436, %v402, 0
      %v468 = vsel %vm436, %v403, 0
      %v471 = vsel %vm436, %v404, 0
      %v474 = vsel %vm436, %v405, 0
      %v477 = vsel %vm436, %v406, 0
      %v480 = vsel %vm436, %v407, 0
      %v483 = vsel %vm436, %v408, 0
      %vm485 = vcmask 1043456
      %v487 = vsel %vm485, %v431, 0
      %489 = vmatprep.subr.bf16.mxu0 0
      %490 = vmatpush1.bf16.msra.mxu0 %v427
      %491 = vmatprep.subr.bf16.mxu0 0
      %492 = vmatpush1.bf16.msra.mxu0 %v428
      %493 = vmatprep.subr.bf16.mxu0 0
      %494 = vmatpush1.bf16.msra.mxu0 %v429
      %495 = vmatprep.subr.bf16.mxu0 0
      %496 = vmatpush1.bf16.msra.mxu0 %v430
      %497 = vmatprep.subr.bf16.mxu0 0
      %498 = vmatpush1.bf16.msra.mxu0 %v487
      %499 = vmatprep.subr.bf16.mxu0 0
      %500 = vmatpush1.bf16.msra.mxu0 0
      %501 = vmatprep.subr.bf16.mxu0 0
      %502 = vmatpush1.bf16.msra.mxu0 0
      %503 = vmatprep.subr.bf16.mxu0 0
      %504 = vmatpush1.bf16.msra.mxu0 0
      %505 = vmatprep.subr.bf16.mxu0 0
      %506 = vmatpush1.bf16.msra.mxu0 0
      %507 = vmatprep.subr.bf16.mxu0 0
      %508 = vmatpush1.bf16.msra.mxu0 0
      %509 = vmatprep.subr.bf16.mxu0 0
      %510 = vmatpush1.bf16.msra.mxu0 0
      %511 = vmatprep.subr.bf16.mxu0 0
      %512 = vmatpush1.bf16.msra.mxu0 0
      %513 = vmatprep.subr.bf16.mxu0 0
      %514 = vmatpush1.bf16.msra.mxu0 0
      %515 = vmatprep.subr.bf16.mxu0 0
      %516 = vmatpush1.bf16.msra.mxu0 0
      %517 = vmatprep.subr.bf16.mxu0 0
      %518 = vmatpush1.bf16.msra.mxu0 0
      %519 = vmatprep.subr.bf16.mxu0 0
      %520 = vmatpush1.bf16.msra.mxu0 0
      %521 = vmatprep.mubr.bf16.mxu0 0
      %522 = vmatmul.mubr.bf16.gmra.mrb[0].mxu0 %v438
      %v523 = vpop.f32.mrb[0].mxu0
      %v524 = vadd.f32 0.0, %v523
      %v525 = vpop.f32.mrb[0].mxu0
      %v526 = vpop.f32.mrb[0].mxu0
      %v527 = vadd.f32 0.0, %v526
      %v528 = vpop.f32.mrb[0].mxu0
      %529 = vmatprep.mubr.bf16.mxu0 0
      %530 = vmatmul.mubr.bf16.gmra.mrb[0].mxu0 %v441
      %v531 = vpop.f32.mrb[0].mxu0
      %v532 = vadd.f32 0.0, %v531
      %v533 = vpop.f32.mrb[0].mxu0
      %v534 = vpop.f32.mrb[0].mxu0
      %v535 = vadd.f32 0.0, %v534
      %v536 = vpop.f32.mrb[0].mxu0
      %537 = vmatprep.mubr.bf16.mxu0 0
      %538 = vmatmul.mubr.bf16.gmra.mrb[0].mxu0 %v444
      %v539 = vpop.f32.mrb[0].mxu0
      %v540 = vadd.f32 0.0, %v539
      %v541 = vpop.f32.mrb[0].mxu0
      %v542 = vpop.f32.mrb[0].mxu0
      %v543 = vadd.f32 0.0, %v542
      %v544 = vpop.f32.mrb[0].mxu0
      %545 = vmatprep.mubr.bf16.mxu0 0
      %546 = vmatmul.mubr.bf16.gmra.mrb[0].mxu0 %v447
      %v547 = vpop.f32.mrb[0].mxu0
      %v548 = vadd.f32 0.0, %v547
      %v549 = vpop.f32.mrb[0].mxu0
      %v550 = vpop.f32.mrb[0].mxu0
      %v551 = vadd.f32 0.0, %v550
      %v552 = vpop.f32.mrb[0].mxu0
      %553 = vmatprep.mubr.bf16.mxu0 0
      %554 = vmatmul.mubr.bf16.gmra.mrb[0].mxu0 %v450
      %v555 = vpop.f32.mrb[0].mxu0
      %v556 = vadd.f32 0.0, %v555
      %v557 = vpop.f32.mrb[0].mxu0
      %v558 = vpop.f32.mrb[0].mxu0
      %v559 = vadd.f32 0.0, %v558
      %v560 = vpop.f32.mrb[0].mxu0
      %561 = vmatprep.mubr.bf16.mxu0 0
      %562 = vmatmul.mubr.bf16.gmra.mrb[0].mxu0 %v453
      %v563 = vpop.f32.mrb[0].mxu0
      %v564 = vadd.f32 0.0, %v563
      %v565 = vpop.f32.mrb[0].mxu0
      %v566 = vpop.f32.mrb[0].mxu0
      %v567 = vadd.f32 0.0, %v566
      %v568 = vpop.f32.mrb[0].mxu0
      %569 = vmatprep.mubr.bf16.mxu0 0
      %570 = vmatmul.mubr.bf16.gmra.mrb[0].mxu0 %v456
      %v571 = vpop.f32.mrb[0].mxu0
      %v572 = vadd.f32 0.0, %v571
      %v573 = vpop.f32.mrb[0].mxu0
      %v574 = vpop.f32.mrb[0].mxu0
      %v575 = vadd.f32 0.0, %v574
      %v576 = vpop.f32.mrb[0].mxu0
      %577 = vmatprep.mubr.bf16.mxu0 0
      %578 = vmatmul.mubr.bf16.gmra.mrb[0].mxu0 %v459
      %v579 = vpop.f32.mrb[0].mxu0
      %v580 = vadd.f32 0.0, %v579
      %v581 = vpop.f32.mrb[0].mxu0
      %v582 = vpop.f32.mrb[0].mxu0
      %v583 = vadd.f32 0.0, %v582
      %v584 = vpop.f32.mrb[0].mxu0
      %585 = vmatprep.mubr.bf16.mxu0 0
      %586 = vmatmul.mubr.bf16.gmra.mrb[0].mxu0 %v462
      %v587 = vpop.f32.mrb[0].mxu0
      %v588 = vadd.f32 0.0, %v587
      %v589 = vpop.f32.mrb[0].mxu0
      %v590 = vpop.f32.mrb[0].mxu0
      %v591 = vadd.f32 0.0, %v590
      %v592 = vpop.f32.mrb[0].mxu0
      %593 = vmatprep.mubr.bf16.mxu0 0
      %594 = vmatmul.mubr.bf16.gmra.mrb[0].mxu0 %v465
      %v595 = vpop.f32.mrb[0].mxu0
      %v596 = vadd.f32 0.0, %v595
      %v597 = vpop.f32.mrb[0].mxu0
      %v598 = vpop.f32.mrb[0].mxu0
      %v599 = vadd.f32 0.0, %v598
      %v600 = vpop.f32.mrb[0].mxu0
      %601 = vmatprep.mubr.bf16.mxu0 0
      %602 = vmatmul.mubr.bf16.gmra.mrb[0].mxu0 %v468
      %v603 = vpop.f32.mrb[0].mxu0
      %v604 = vadd.f32 0.0, %v603
      %v605 = vpop.f32.mrb[0].mxu0
      %v606 = vpop.f32.mrb[0].mxu0
      %v607 = vadd.f32 0.0, %v606
      %v608 = vpop.f32.mrb[0].mxu0
      %609 = vmatprep.mubr.bf16.mxu0 0
      %610 = vmatmul.mubr.bf16.gmra.mrb[0].mxu0 %v471
      %v611 = vpop.f32.mrb[0].mxu0
      %v612 = vadd.f32 0.0, %v611
      %v613 = vpop.f32.mrb[0].mxu0
      %v614 = vpop.f32.mrb[0].mxu0
      %v615 = vadd.f32 0.0, %v614
      %v616 = vpop.f32.mrb[0].mxu0
      %617 = vmatprep.mubr.bf16.mxu0 0
      %618 = vmatmul.mubr.bf16.gmra.mrb[0].mxu0 %v474
      %v619 = vpop.f32.mrb[0].mxu0
      %v620 = vadd.f32 0.0, %v619
      %v621 = vpop.f32.mrb[0].mxu0
      %v622 = vpop.f32.mrb[0].mxu0
      %v623 = vadd.f32 0.0, %v622
      %v624 = vpop.f32.mrb[0].mxu0
      %625 = vmatprep.mubr.bf16.mxu0 0
      %626 = vmatmul.mubr.bf16.gmra.mrb[0].mxu0 %v477
      %v627 = vpop.f32.mrb[0].mxu0
      %v628 = vadd.f32 0.0, %v627
      %v629 = vpop.f32.mrb[0].mxu0
      %v630 = vpop.f32.mrb[0].mxu0
      %v631 = vadd.f32 0.0, %v630
      %v632 = vpop.f32.mrb[0].mxu0
      %633 = vmatprep.mubr.bf16.mxu0 0
      %634 = vmatmul.mubr.bf16.gmra.mrb[0].mxu0 %v480
      %v635 = vpop.f32.mrb[0].mxu0
      %v636 = vadd.f32 0.0, %v635
      %v637 = vpop.f32.mrb[0].mxu0
      %v638 = vpop.f32.mrb[0].mxu0
      %v639 = vadd.f32 0.0, %v638
      %v640 = vpop.f32.mrb[0].mxu0
      %641 = vmatprep.mubr.bf16.mxu0 0
      %642 = vmatmul.mubr.bf16.gmra.mrb[0].mxu0 %v483
      %v643 = vpop.f32.mrb[0].mxu0
      %v644 = vadd.f32 0.0, %v643
      %v645 = vpop.f32.mrb[0].mxu0
      %v646 = vpop.f32.mrb[0].mxu0
      %v647 = vadd.f32 0.0, %v646
      %v648 = vpop.f32.mrb[0].mxu0
      %649 = vdwg.mxu0
      %v650 = vadd.f32 %v256, %v524
      %v651 = vadd.f32 %v257, %v527
      %v652 = vadd.f32 %v258, %v532
      %v653 = vadd.f32 %v259, %v535
      %v654 = vadd.f32 %v260, %v540
      %v655 = vadd.f32 %v261, %v543
      %v656 = vadd.f32 %v262, %v548
      %v657 = vadd.f32 %v263, %v551
      %v658 = vadd.f32 %v264, %v556
      %v659 = vadd.f32 %v265, %v559
      %v660 = vadd.f32 %v266, %v564
      %v661 = vadd.f32 %v267, %v567
      %v662 = vadd.f32 %v268, %v572
      %v663 = vadd.f32 %v269, %v575
      %v664 = vadd.f32 %v270, %v580
      %v665 = vadd.f32 %v271, %v583
      %v666 = vadd.f32 %v272, %v588
      %v667 = vadd.f32 %v273, %v591
      %v668 = vadd.f32 %v274, %v596
      %v669 = vadd.f32 %v275, %v599
      %v670 = vadd.f32 %v276, %v604
      %v671 = vadd.f32 %v277, %v607
      %v672 = vadd.f32 %v278, %v612
      %v673 = vadd.f32 %v279, %v615
      %v674 = vadd.f32 %v280, %v620
      %v675 = vadd.f32 %v281, %v623
      %v676 = vadd.f32 %v282, %v628
      %v677 = vadd.f32 %v283, %v631
      %v678 = vadd.f32 %v284, %v636
      %v679 = vadd.f32 %v285, %v639
      %v680 = vadd.f32 %v286, %v644
      %v681 = vadd.f32 %v287, %v647
      %682 = vst [vmem:[#allocation2] sm:$0xff] %v650
      %683 = vst [vmem:[#allocation2 + $0x8] sm:$0xff] %v651
      %684 = vst [vmem:[#allocation2 + $0x10] sm:$0xff] %v652
      %685 = vst [vmem:[#allocation2 + $0x18] sm:$0xff] %v653
      %686 = vst [vmem:[#allocation2 + $0x20] sm:$0xff] %v654
      %687 = vst [vmem:[#allocation2 + $0x28] sm:$0xff] %v655
      %688 = vst [vmem:[#allocation2 + $0x30] sm:$0xff] %v656
      %689 = vst [vmem:[#allocation2 + $0x38] sm:$0xff] %v657
      %690 = vst [vmem:[#allocation2 + $0x40] sm:$0xff] %v658
      %691 = vst [vmem:[#allocation2 + $0x48] sm:$0xff] %v659
      %692 = vst [vmem:[#allocation2 + $0x50] sm:$0xff] %v660
      %693 = vst [vmem:[#allocation2 + $0x58] sm:$0xff] %v661
      %694 = vst [vmem:[#allocation2 + $0x60] sm:$0xff] %v662
      %695 = vst [vmem:[#allocation2 + $0x68] sm:$0xff] %v663
      %696 = vst [vmem:[#allocation2 + $0x70] sm:$0xff] %v664
      %697 = vst [vmem:[#allocation2 + $0x78] sm:$0xff] %v665
      %698 = vst [vmem:[#allocation2 + $0x80] sm:$0xff] %v666
      %699 = vst [vmem:[#allocation2 + $0x88] sm:$0xff] %v667
      %700 = vst [vmem:[#allocation2 + $0x90] sm:$0xff] %v668
      %701 = vst [vmem:[#allocation2 + $0x98] sm:$0xff] %v669
      %702 = vst [vmem:[#allocation2 + $0xa0] sm:$0xff] %v670
      %703 = vst [vmem:[#allocation2 + $0xa8] sm:$0xff] %v671
      %704 = vst [vmem:[#allocation2 + $0xb0] sm:$0xff] %v672
      %705 = vst [vmem:[#allocation2 + $0xb8] sm:$0xff] %v673
      %706 = vst [vmem:[#allocation2 + $0xc0] sm:$0xff] %v674
      %707 = vst [vmem:[#allocation2 + $0xc8] sm:$0xff] %v675
      %708 = vst [vmem:[#allocation2 + $0xd0] sm:$0xff] %v676
      %709 = vst [vmem:[#allocation2 + $0xd8] sm:$0xff] %v677
      %710 = vst [vmem:[#allocation2 + $0xe0] sm:$0xff] %v678
      %711 = vst [vmem:[#allocation2 + $0xe8] sm:$0xff] %v679
      %712 = vst [vmem:[#allocation2 + $0xf0] sm:$0xff] %v680
      %713 = vst [vmem:[#allocation2 + $0xf8] sm:$0xff] %v681
      // Predicated region
      $region37: #{forward.8} parent=31 // pred_check
        %p714 = pneg %p220
      $region38: #{forward.8} parent=31 // pred_check_branch
        %716 = sbr.rel (%p714) target = $region40
      $region39: #{forward.8} parent=31 // pred_region
        %v717 = vld [vmem:[#allocation2] sm:$0xff]
        %v718 = vld [vmem:[#allocation2 + $0x8] sm:$0xff]
        %v719 = vld [vmem:[#allocation2 + $0x10] sm:$0xff]
        %v720 = vld [vmem:[#allocation2 + $0x18] sm:$0xff]
        %v721 = vld [vmem:[#allocation2 + $0x20] sm:$0xff]
        %v722 = vld [vmem:[#allocation2 + $0x28] sm:$0xff]
        %v723 = vld [vmem:[#allocation2 + $0x30] sm:$0xff]
        %v724 = vld [vmem:[#allocation2 + $0x38] sm:$0xff]
        %v725 = vld [vmem:[#allocation2 + $0x40] sm:$0xff]
        %v726 = vld [vmem:[#allocation2 + $0x48] sm:$0xff]
        %v727 = vld [vmem:[#allocation2 + $0x50] sm:$0xff]
        %v728 = vld [vmem:[#allocation2 + $0x58] sm:$0xff]
        %v729 = vld [vmem:[#allocation2 + $0x60] sm:$0xff]
        %v730 = vld [vmem:[#allocation2 + $0x68] sm:$0xff]
        %v731 = vld [vmem:[#allocation2 + $0x70] sm:$0xff]
        %v732 = vld [vmem:[#allocation2 + $0x78] sm:$0xff]
        %v733 = vld [vmem:[#allocation2 + $0x80] sm:$0xff]
        %v734 = vld [vmem:[#allocation2 + $0x88] sm:$0xff]
        %v735 = vld [vmem:[#allocation2 + $0x90] sm:$0xff]
        %v736 = vld [vmem:[#allocation2 + $0x98] sm:$0xff]
        %v737 = vld [vmem:[#allocation2 + $0xa0] sm:$0xff]
        %v738 = vld [vmem:[#allocation2 + $0xa8] sm:$0xff]
        %v739 = vld [vmem:[#allocation2 + $0xb0] sm:$0xff]
        %v740 = vld [vmem:[#allocation2 + $0xb8] sm:$0xff]
        %v741 = vld [vmem:[#allocation2 + $0xc0] sm:$0xff]
        %v742 = vld [vmem:[#allocation2 + $0xc8] sm:$0xff]
        %v743 = vld [vmem:[#allocation2 + $0xd0] sm:$0xff]
        %v744 = vld [vmem:[#allocation2 + $0xd8] sm:$0xff]
        %v745 = vld [vmem:[#allocation2 + $0xe0] sm:$0xff]
        %v746 = vld [vmem:[#allocation2 + $0xe8] sm:$0xff]
        %v747 = vld [vmem:[#allocation2 + $0xf0] sm:$0xff]
        %v748 = vld [vmem:[#allocation2 + $0xf8] sm:$0xff]
        %v749 = vld [vmem:[%s2] sm:$0x1]
        %v751 = vlaneseq
        %v752 = vshrl.u32 %v751, 7
        %v753 = vsub.s32 0, %v752
        %v754 = vrot.slane %v749, %v753
        %v756 = vadd.f32 %v717, %v754
        %v757 = vadd.f32 %v718, %v754
        %v758 = vadd.f32 %v719, %v754
        %v759 = vadd.f32 %v720, %v754
        %v760 = vadd.f32 %v721, %v754
        %v761 = vadd.f32 %v722, %v754
        %v762 = vadd.f32 %v723, %v754
        %v763 = vadd.f32 %v724, %v754
        %v764 = vadd.f32 %v725, %v754
        %v765 = vadd.f32 %v726, %v754
        %v766 = vadd.f32 %v727, %v754
        %v767 = vadd.f32 %v728, %v754
        %v768 = vadd.f32 %v729, %v754
        %v769 = vadd.f32 %v730, %v754
        %v770 = vadd.f32 %v731, %v754
        %v771 = vadd.f32 %v732, %v754
        %v772 = vadd.f32 %v733, %v754
        %v773 = vadd.f32 %v734, %v754
        %v774 = vadd.f32 %v735, %v754
        %v775 = vadd.f32 %v736, %v754
        %v776 = vadd.f32 %v737, %v754
        %v777 = vadd.f32 %v738, %v754
        %v778 = vadd.f32 %v739, %v754
        %v779 = vadd.f32 %v740, %v754
        %v780 = vadd.f32 %v741, %v754
        %v781 = vadd.f32 %v742, %v754
        %v782 = vadd.f32 %v743, %v754
        %v783 = vadd.f32 %v744, %v754
        %v784 = vadd.f32 %v745, %v754
        %v785 = vadd.f32 %v746, %v754
        %v786 = vadd.f32 %v747, %v754
        %v787 = vadd.f32 %v748, %v754
        %v788 = vadd.f32 %v756, 3.0
        %v789 = vadd.f32 %v757, 3.0
        %v790 = vadd.f32 %v758, 3.0
        %v791 = vadd.f32 %v759, 3.0
        %v792 = vadd.f32 %v760, 3.0
        %v793 = vadd.f32 %v761, 3.0
        %v794 = vadd.f32 %v762, 3.0
        %v795 = vadd.f32 %v763, 3.0
        %v796 = vadd.f32 %v764, 3.0
        %v797 = vadd.f32 %v765, 3.0
        %v798 = vadd.f32 %v766, 3.0
        %v799 = vadd.f32 %v767, 3.0
        %v800 = vadd.f32 %v768, 3.0
        %v801 = vadd.f32 %v769, 3.0
        %v802 = vadd.f32 %v770, 3.0
        %v803 = vadd.f32 %v771, 3.0
        %v804 = vadd.f32 %v772, 3.0
        %v805 = vadd.f32 %v773, 3.0
        %v806 = vadd.f32 %v774, 3.0
        %v807 = vadd.f32 %v775, 3.0
        %v808 = vadd.f32 %v776, 3.0
        %v809 = vadd.f32 %v777, 3.0
        %v810 = vadd.f32 %v778, 3.0
        %v811 = vadd.f32 %v779, 3.0
        %v812 = vadd.f32 %v780, 3.0
        %v813 = vadd.f32 %v781, 3.0
        %v814 = vadd.f32 %v782, 3.0
        %v815 = vadd.f32 %v783, 3.0
        %v816 = vadd.f32 %v784, 3.0
        %v817 = vadd.f32 %v785, 3.0
        %v818 = vadd.f32 %v786, 3.0
        %v819 = vadd.f32 %v787, 3.0
        %v820 = vmax.f32 %v788, 0.0
        %v821 = vmax.f32 %v789, 0.0
        %v822 = vmax.f32 %v790, 0.0
        %v823 = vmax.f32 %v791, 0.0
        %v824 = vmax.f32 %v792, 0.0
        %v825 = vmax.f32 %v793, 0.0
        %v826 = vmax.f32 %v794, 0.0
        %v827 = vmax.f32 %v795, 0.0
        %v828 = vmax.f32 %v796, 0.0
        %v829 = vmax.f32 %v797, 0.0
        %v830 = vmax.f32 %v798, 0.0
        %v831 = vmax.f32 %v799, 0.0
        %v832 = vmax.f32 %v800, 0.0
        %v833 = vmax.f32 %v801, 0.0
        %v834 = vmax.f32 %v802, 0.0
        %v835 = vmax.f32 %v803, 0.0
        %v836 = vmax.f32 %v804, 0.0
        %v837 = vmax.f32 %v805, 0.0
        %v838 = vmax.f32 %v806, 0.0
        %v839 = vmax.f32 %v807, 0.0
        %v840 = vmax.f32 %v808, 0.0
        %v841 = vmax.f32 %v809, 0.0
        %v842 = vmax.f32 %v810, 0.0
        %v843 = vmax.f32 %v811, 0.0
        %v844 = vmax.f32 %v812, 0.0
        %v845 = vmax.f32 %v813, 0.0
        %v846 = vmax.f32 %v814, 0.0
        %v847 = vmax.f32 %v815, 0.0
        %v848 = vmax.f32 %v816, 0.0
        %v849 = vmax.f32 %v817, 0.0
        %v850 = vmax.f32 %v818, 0.0
        %v851 = vmax.f32 %v819, 0.0
        %v852 = vmin.f32 %v820, 6.0
        %v853 = vmin.f32 %v821, 6.0
        %v854 = vmin.f32 %v822, 6.0
        %v855 = vmin.f32 %v823, 6.0
        %v856 = vmin.f32 %v824, 6.0
        %v857 = vmin.f32 %v825, 6.0
        %v858 = vmin.f32 %v826, 6.0
        %v859 = vmin.f32 %v827, 6.0
        %v860 = vmin.f32 %v828, 6.0
        %v861 = vmin.f32 %v829, 6.0
        %v862 = vmin.f32 %v830, 6.0
        %v863 = vmin.f32 %v831, 6.0
        %v864 = vmin.f32 %v832, 6.0
        %v865 = vmin.f32 %v833, 6.0
        %v866 = vmin.f32 %v834, 6.0
        %v867 = vmin.f32 %v835, 6.0
        %v868 = vmin.f32 %v836, 6.0
        %v869 = vmin.f32 %v837, 6.0
        %v870 = vmin.f32 %v838, 6.0
        %v871 = vmin.f32 %v839, 6.0
        %v872 = vmin.f32 %v840, 6.0
        %v873 = vmin.f32 %v841, 6.0
        %v874 = vmin.f32 %v842, 6.0
        %v875 = vmin.f32 %v843, 6.0
        %v876 = vmin.f32 %v844, 6.0
        %v877 = vmin.f32 %v845, 6.0
        %v878 = vmin.f32 %v846, 6.0
        %v879 = vmin.f32 %v847, 6.0
        %v880 = vmin.f32 %v848, 6.0
        %v881 = vmin.f32 %v849, 6.0
        %v882 = vmin.f32 %v850, 6.0
        %v883 = vmin.f32 %v851, 6.0
        %v884 = vmul.f32 %v756, %v852
        %v885 = vmul.f32 %v757, %v853
        %v886 = vmul.f32 %v758, %v854
        %v887 = vmul.f32 %v759, %v855
        %v888 = vmul.f32 %v760, %v856
        %v889 = vmul.f32 %v761, %v857
        %v890 = vmul.f32 %v762, %v858
        %v891 = vmul.f32 %v763, %v859
        %v892 = vmul.f32 %v764, %v860
        %v893 = vmul.f32 %v765, %v861
        %v894 = vmul.f32 %v766, %v862
        %v895 = vmul.f32 %v767, %v863
        %v896 = vmul.f32 %v768, %v864
        %v897 = vmul.f32 %v769, %v865
        %v898 = vmul.f32 %v770, %v866
        %v899 = vmul.f32 %v771, %v867
        %v900 = vmul.f32 %v772, %v868
        %v901 = vmul.f32 %v773, %v869
        %v902 = vmul.f32 %v774, %v870
        %v903 = vmul.f32 %v775, %v871
        %v904 = vmul.f32 %v776, %v872
        %v905 = vmul.f32 %v777, %v873
        %v906 = vmul.f32 %v778, %v874
        %v907 = vmul.f32 %v779, %v875
        %v908 = vmul.f32 %v780, %v876
        %v909 = vmul.f32 %v781, %v877
        %v910 = vmul.f32 %v782, %v878
        %v911 = vmul.f32 %v783, %v879
        %v912 = vmul.f32 %v784, %v880
        %v913 = vmul.f32 %v785, %v881
        %v914 = vmul.f32 %v786, %v882
        %v915 = vmul.f32 %v787, %v883
        %v916 = vmul.f32 %v884, 0.16666667
        %v917 = vmul.f32 %v885, 0.16666667
        %v918 = vmul.f32 %v886, 0.16666667
        %v919 = vmul.f32 %v887, 0.16666667
        %v920 = vmul.f32 %v888, 0.16666667
        %v921 = vmul.f32 %v889, 0.16666667
        %v922 = vmul.f32 %v890, 0.16666667
        %v923 = vmul.f32 %v891, 0.16666667
        %v924 = vmul.f32 %v892, 0.16666667
        %v925 = vmul.f32 %v893, 0.16666667
        %v926 = vmul.f32 %v894, 0.16666667
        %v927 = vmul.f32 %v895, 0.16666667
        %v928 = vmul.f32 %v896, 0.16666667
        %v929 = vmul.f32 %v897, 0.16666667
        %v930 = vmul.f32 %v898, 0.16666667
        %v931 = vmul.f32 %v899, 0.16666667
        %v932 = vmul.f32 %v900, 0.16666667
        %v933 = vmul.f32 %v901, 0.16666667
        %v934 = vmul.f32 %v902, 0.16666667
        %v935 = vmul.f32 %v903, 0.16666667
        %v936 = vmul.f32 %v904, 0.16666667
        %v937 = vmul.f32 %v905, 0.16666667
        %v938 = vmul.f32 %v906, 0.16666667
        %v939 = vmul.f32 %v907, 0.16666667
        %v940 = vmul.f32 %v908, 0.16666667
        %v941 = vmul.f32 %v909, 0.16666667
        %v942 = vmul.f32 %v910, 0.16666667
        %v943 = vmul.f32 %v911, 0.16666667
        %v944 = vmul.f32 %v912, 0.16666667
        %v945 = vmul.f32 %v913, 0.16666667
        %v946 = vmul.f32 %v914, 0.16666667
        %v947 = vmul.f32 %v915, 0.16666667
        %v948 = vpack.c.bf16 %v917, %v916
        %v949 = vpack.c.bf16 %v919, %v918
        %v950 = vpack.c.bf16 %v921, %v920
        %v951 = vpack.c.bf16 %v923, %v922
        %v952 = vpack.c.bf16 %v925, %v924
        %v953 = vpack.c.bf16 %v927, %v926
        %v954 = vpack.c.bf16 %v929, %v928
        %v955 = vpack.c.bf16 %v931, %v930
        %v956 = vpack.c.bf16 %v933, %v932
        %v957 = vpack.c.bf16 %v935, %v934
        %v958 = vpack.c.bf16 %v937, %v936
        %v959 = vpack.c.bf16 %v939, %v938
        %v960 = vpack.c.bf16 %v941, %v940
        %v961 = vpack.c.bf16 %v943, %v942
        %v962 = vpack.c.bf16 %v945, %v944
        %v963 = vpack.c.bf16 %v947, %v946
        %v980 = vunpack.c.l.b16 %v948
        %v981 = vunpack.c.h.b16 %v948
        %v982 = vunpack.c.l.b16 %v949
        %v983 = vunpack.c.h.b16 %v949
        %v984 = vunpack.c.l.b16 %v950
        %v985 = vunpack.c.h.b16 %v950
        %v986 = vunpack.c.l.b16 %v951
        %v987 = vunpack.c.h.b16 %v951
        %v988 = vunpack.c.l.b16 %v952
        %v989 = vunpack.c.h.b16 %v952
        %v990 = vunpack.c.l.b16 %v953
        %v991 = vunpack.c.h.b16 %v953
        %v992 = vunpack.c.l.b16 %v954
        %v993 = vunpack.c.h.b16 %v954
        %v994 = vunpack.c.l.b16 %v955
        %v995 = vunpack.c.h.b16 %v955
        %v996 = vunpack.c.l.b16 %v956
        %v997 = vunpack.c.h.b16 %v956
        %v998 = vunpack.c.l.b16 %v957
        %v999 = vunpack.c.h.b16 %v957
        %v1000 = vunpack.c.l.b16 %v958
        %v1001 = vunpack.c.h.b16 %v958
        %v1002 = vunpack.c.l.b16 %v959
        %v1003 = vunpack.c.h.b16 %v959
        %v1004 = vunpack.c.l.b16 %v960
        %v1005 = vunpack.c.h.b16 %v960
        %v1006 = vunpack.c.l.b16 %v961
        %v1007 = vunpack.c.h.b16 %v961
        %v1008 = vunpack.c.l.b16 %v962
        %v1009 = vunpack.c.h.b16 %v962
        %v1010 = vunpack.c.l.b16 %v963
        %v1011 = vunpack.c.h.b16 %v963
        %v1012 = vpack.c.b16 %v980, %v980
        %v1013 = vpack.c.b16 %v981, %v981
        %v1014 = vpack.c.b16 %v982, %v982
        %v1015 = vpack.c.b16 %v983, %v983
        %v1016 = vpack.c.b16 %v984, %v984
        %v1017 = vpack.c.b16 %v985, %v985
        %v1018 = vpack.c.b16 %v986, %v986
        %v1019 = vpack.c.b16 %v987, %v987
        %v1020 = vpack.c.b16 %v988, %v988
        %v1021 = vpack.c.b16 %v989, %v989
        %v1022 = vpack.c.b16 %v990, %v990
        %v1023 = vpack.c.b16 %v991, %v991
        %v1024 = vpack.c.b16 %v992, %v992
        %v1025 = vpack.c.b16 %v993, %v993
        %v1026 = vpack.c.b16 %v994, %v994
        %v1027 = vpack.c.b16 %v995, %v995
        %v1028 = vpack.c.b16 %v996, %v996
        %v1029 = vpack.c.b16 %v997, %v997
        %v1030 = vpack.c.b16 %v998, %v998
        %v1031 = vpack.c.b16 %v999, %v999
        %v1032 = vpack.c.b16 %v1000, %v1000
        %v1033 = vpack.c.b16 %v1001, %v1001
        %v1034 = vpack.c.b16 %v1002, %v1002
        %v1035 = vpack.c.b16 %v1003, %v1003
        %v1036 = vpack.c.b16 %v1004, %v1004
        %v1037 = vpack.c.b16 %v1005, %v1005
        %v1038 = vpack.c.b16 %v1006, %v1006
        %v1039 = vpack.c.b16 %v1007, %v1007
        %v1040 = vpack.c.b16 %v1008, %v1008
        %v1041 = vpack.c.b16 %v1009, %v1009
        %v1042 = vpack.c.b16 %v1010, %v1010
        %v1043 = vpack.c.b16 %v1011, %v1011
        %1076 = vst [vmem:[%s217] sm:$0xf] %v1012
        %1077 = vst [vmem:[%s217 + $0x4] sm:$0xf] %v1013
        %1078 = vst [vmem:[%s217 + $0x8] sm:$0xf] %v1014
        %1079 = vst [vmem:[%s217 + $0xc] sm:$0xf] %v1015
        %1080 = vst [vmem:[%s217 + $0x10] sm:$0xf] %v1016
        %1081 = vst [vmem:[%s217 + $0x14] sm:$0xf] %v1017
        %1082 = vst [vmem:[%s217 + $0x18] sm:$0xf] %v1018
        %1083 = vst [vmem:[%s217 + $0x1c] sm:$0xf] %v1019
        %1084 = vst [vmem:[%s217 + $0x20] sm:$0xf] %v1020
        %1085 = vst [vmem:[%s217 + $0x24] sm:$0xf] %v1021
        %1086 = vst [vmem:[%s217 + $0x28] sm:$0xf] %v1022
        %1087 = vst [vmem:[%s217 + $0x2c] sm:$0xf] %v1023
        %1088 = vst [vmem:[%s217 + $0x30] sm:$0xf] %v1024
        %1089 = vst [vmem:[%s217 + $0x34] sm:$0xf] %v1025
        %1090 = vst [vmem:[%s217 + $0x38] sm:$0xf] %v1026
        %1091 = vst [vmem:[%s217 + $0x3c] sm:$0xf] %v1027
        %1092 = vst [vmem:[%s217 + $0x40] sm:$0xf] %v1028
        %1093 = vst [vmem:[%s217 + $0x44] sm:$0xf] %v1029
        %1094 = vst [vmem:[%s217 + $0x48] sm:$0xf] %v1030
        %1095 = vst [vmem:[%s217 + $0x4c] sm:$0xf] %v1031
        %1096 = vst [vmem:[%s217 + $0x50] sm:$0xf] %v1032
        %1097 = vst [vmem:[%s217 + $0x54] sm:$0xf] %v1033
        %1098 = vst [vmem:[%s217 + $0x58] sm:$0xf] %v1034
        %1099 = vst [vmem:[%s217 + $0x5c] sm:$0xf] %v1035
        %1100 = vst [vmem:[%s217 + $0x60] sm:$0xf] %v1036
        %1101 = vst [vmem:[%s217 + $0x64] sm:$0xf] %v1037
        %1102 = vst [vmem:[%s217 + $0x68] sm:$0xf] %v1038
        %1103 = vst [vmem:[%s217 + $0x6c] sm:$0xf] %v1039
        %1104 = vst [vmem:[%s217 + $0x70] sm:$0xf] %v1040
        %1105 = vst [vmem:[%s217 + $0x74] sm:$0xf] %v1041
        %1106 = vst [vmem:[%s217 + $0x78] sm:$0xf] %v1042
        %1107 = vst [vmem:[%s217 + $0x7c] sm:$0xf] %v1043
      $region40: #{forward.8} parent=31 // pred_fallthru
        _
      %s1108 = smul.u32 32, %s18
      %p1109 = scmp.lt.s32.totalorder %s1108, 63
      %s1110 = scalar_select %p1109, %s1108, 63
      %s1111 = smul.addr %s1110, 4
      %s1112 = scalar_lea.vmem %s3, %s1111
      // Predicated region
      $region41: #{forward.8} parent=31 // pred_check
        %p1113 = pneg %p119
      $region42: #{forward.8} parent=31 // pred_check_branch
        %1115 = sbr.rel (%p1113) target = $region44
      $region43: #{forward.8} parent=31 // pred_region
        %s1116 = smul.u32 32, %s18
      $region44: #{forward.8} parent=31 // pred_fallthru
        _
    $region32: #{forward.8} parent=5 // pred_fallthru
      _
    %p1117 = scmp.le.s32.totalorder 2, %s9
    // Predicated region
    $region45: #{forward.8} parent=5 // pred_check
      %p1118 = pneg %p1117
    $region46: #{forward.8} parent=5 // pred_check_branch
      %1120 = sbr.rel (%p1118) target = $region48
    $region47: #{forward.8} parent=5 // pred_region
      %s1121 = ssub.s32 %s9, 2
      // Predicated region
      $region49: #{forward.8} parent=47 // pred_check
        %p1122 = pneg %p125
      $region50: #{forward.8} parent=47 // pred_check_branch
        %1124 = sbr.rel (%p1122) target = $region52
      $region51: #{forward.8} parent=47 // pred_region
        %s1125 = smul.u32 32, %s20
        %p1126 = scmp.lt.s32.totalorder %s1125, 63
        %s1127 = scalar_select %p1126, %s1125, 63
        %s1128 = smul.addr %s1127, 4
        %s1129 = scalar_lea.vmem %s3, %s1128
      $region52: #{forward.8} parent=47 // pred_fallthru
        _
    $region48: #{forward.8} parent=5 // pred_fallthru
      _
  $region6: #{forward.8} parent=0 // loop_footer
    %s13 = sadd.s32 1, %s9
  $region7: #{forward.8} parent=0 // loop_footer_branch
    %8 = sbr.rel target = $region3
  $region8: #{forward.8} parent=0 // loop_exit
    _

// kernel: forward.11
$region0: #{forward.11}
  #allocation0 [shape = 'u32[]', space=smem, size = 0x4, offset = 0x4, fixed_abs, tag = 'smem constant byte address 0x4 - core index']
  #allocation1 [shape = 'u32[144,128]{1,0:T(1,128)}', space=vmem, size = 0x12000, scoped, tag = 'internal scratch']
  #allocation2 [shape = 'f32[32,128]{1,0:T(8,128)}', space=vmem, size = 0x4000, scoped, tag = 'scratch operand']
  %s0 = inlined_call_operand.vmem [shape: bf16[32,128], index: 0, kind: input, shape index: {}]
  %s1 = inlined_call_operand.vmem [shape: bf16[128,128], index: 1, kind: input, shape index: {}]
  %s2 = inlined_call_operand.vmem [shape: f32[1,128], index: 2, kind: input, shape index: {}]
  %s3 = inlined_call_operand.vmem [shape: bf16[32,128], index: 3, kind: output, shape index: {}]
  %s4 = sld [smem:[#allocation0]]
  $region30: #{forward.11} parent=0
    _
  %s6 = ssub.s32 1, %s4
  %s7 = scalar_select 0, %s6, %s4
  // Predicated region
  $region2: #{forward.11} parent=0 // pred_check
    _
  $region3: #{forward.11} parent=0 // pred_check_branch
    %9 = sbr.rel (0) target = $region5
  $region4: #{forward.11} parent=0 // pred_region
    _
  $region5: #{forward.11} parent=0 // pred_fallthru
    _
  // Predicated region
  $region6: #{forward.11} parent=0 // pred_check
    _
  $region7: #{forward.11} parent=0 // pred_check_branch
    %11 = sbr.rel (0) target = $region9
  $region8: #{forward.11} parent=0 // pred_region
    _
  $region9: #{forward.11} parent=0 // pred_fallthru
    _
  // Predicated region
  $region10: #{forward.11} parent=0 // pred_check
    _
  $region11: #{forward.11} parent=0 // pred_check_branch
    %13 = sbr.rel (0) target = $region13
  $region12: #{forward.11} parent=0 // pred_region
    _
  $region13: #{forward.11} parent=0 // pred_fallthru
    _
  %p15 = scmp.eq.s32.totalorder 0, 0
  // Predicated region
  $region14: #{forward.11} parent=0 // pred_check
    %p16 = pneg %p15
  $region15: #{forward.11} parent=0 // pred_check_branch
    %18 = sbr.rel (%p16) target = $region17
  $region16: #{forward.11} parent=0 // pred_region
    %19 = vst [vmem:[#allocation2] sm:$0xff] 0.0
    %20 = vst [vmem:[#allocation2 + $0x8] sm:$0xff] 0.0
    %21 = vst [vmem:[#allocation2 + $0x10] sm:$0xff] 0.0
    %22 = vst [vmem:[#allocation2 + $0x18] sm:$0xff] 0.0
  $region17: #{forward.11} parent=0 // pred_fallthru
    _
  %v23 = vld [vmem:[#allocation2] sm:$0xff]
  %v24 = vld [vmem:[#allocation2 + $0x8] sm:$0xff]
  %v25 = vld [vmem:[#allocation2 + $0x10] sm:$0xff]
  %v26 = vld [vmem:[#allocation2 + $0x18] sm:$0xff]
  %v27 = vld [vmem:[%s0] sm:$0xf]
  %v28 = vld [vmem:[%s0 + $0x4] sm:$0xf]
  %v29 = vld [vmem:[%s0 + $0x8] sm:$0xf]
  %v30 = vld [vmem:[%s0 + $0xc] sm:$0xf]
  %v31 = vld [vmem:[%s1] sm:$0xf]
  %v32 = vld [vmem:[%s1 + $0x4] sm:$0xf]
  %v33 = vld [vmem:[%s1 + $0x8] sm:$0xf]
  %v34 = vld [vmem:[%s1 + $0xc] sm:$0xf]
  %v35 = vld [vmem:[%s1 + $0x10] sm:$0xf]
  %v36 = vld [vmem:[%s1 + $0x14] sm:$0xf]
  %v37 = vld [vmem:[%s1 + $0x18] sm:$0xf]
  %v38 = vld [vmem:[%s1 + $0x1c] sm:$0xf]
  %v39 = vld [vmem:[%s1 + $0x20] sm:$0xf]
  %v40 = vld [vmem:[%s1 + $0x24] sm:$0xf]
  %v41 = vld [vmem:[%s1 + $0x28] sm:$0xf]
  %v42 = vld [vmem:[%s1 + $0x2c] sm:$0xf]
  %v43 = vld [vmem:[%s1 + $0x30] sm:$0xf]
  %v44 = vld [vmem:[%s1 + $0x34] sm:$0xf]
  %v45 = vld [vmem:[%s1 + $0x38] sm:$0xf]
  %v46 = vld [vmem:[%s1 + $0x3c] sm:$0xf]
  %v51 = vunpack.c.l.b16 %v27
  %v52 = vunpack.c.l.b16 %v28
  %v53 = vunpack.c.l.b16 %v29
  %v54 = vunpack.c.l.b16 %v30
  %v55 = vpack.c.b16 %v52, %v51
  %v56 = vpack.c.b16 %v54, %v53
  %v75 = vunpack.c.l.b16 %v31
  %v76 = vunpack.c.l.b16 %v32
  %v77 = vunpack.c.l.b16 %v33
  %v78 = vunpack.c.l.b16 %v34
  %v79 = vunpack.c.l.b16 %v35
  %v80 = vunpack.c.l.b16 %v36
  %v81 = vunpack.c.l.b16 %v37
  %v82 = vunpack.c.l.b16 %v38
  %v83 = vunpack.c.l.b16 %v39
  %v84 = vunpack.c.l.b16 %v40
  %v85 = vunpack.c.l.b16 %v41
  %v86 = vunpack.c.l.b16 %v42
  %v87 = vunpack.c.l.b16 %v43
  %v88 = vunpack.c.l.b16 %v44
  %v89 = vunpack.c.l.b16 %v45
  %v90 = vunpack.c.l.b16 %v46
  %v91 = vpack.c.b16 %v76, %v75
  %v92 = vpack.c.b16 %v78, %v77
  %v93 = vpack.c.b16 %v80, %v79
  %v94 = vpack.c.b16 %v82, %v81
  %v95 = vpack.c.b16 %v84, %v83
  %v96 = vpack.c.b16 %v86, %v85
  %v97 = vpack.c.b16 %v88, %v87
  %v98 = vpack.c.b16 %v90, %v89
  %107 = vmatprep.subr.bf16.mxu0 0
  %108 = vmatpush1.bf16.msra.mxu0 %v91
  %109 = vmatprep.subr.bf16.mxu0 0
  %110 = vmatpush1.bf16.msra.mxu0 %v92
  %111 = vmatprep.subr.bf16.mxu0 0
  %112 = vmatpush1.bf16.msra.mxu0 %v93
  %113 = vmatprep.subr.bf16.mxu0 0
  %114 = vmatpush1.bf16.msra.mxu0 %v94
  %115 = vmatprep.subr.bf16.mxu0 0
  %116 = vmatpush1.bf16.msra.mxu0 %v95
  %117 = vmatprep.subr.bf16.mxu0 0
  %118 = vmatpush1.bf16.msra.mxu0 %v96
  %119 = vmatprep.subr.bf16.mxu0 0
  %120 = vmatpush1.bf16.msra.mxu0 %v97
  %121 = vmatprep.subr.bf16.mxu0 0
  %122 = vmatpush1.bf16.msra.mxu0 %v98
  %123 = vmatprep.subr.bf16.mxu0 0
  %124 = vmatpush1.bf16.msra.mxu0 0
  %125 = vmatprep.subr.bf16.mxu0 0
  %126 = vmatpush1.bf16.msra.mxu0 0
  %127 = vmatprep.subr.bf16.mxu0 0
  %128 = vmatpush1.bf16.msra.mxu0 0
  %129 = vmatprep.subr.bf16.mxu0 0
  %130 = vmatpush1.bf16.msra.mxu0 0
  %131 = vmatprep.subr.bf16.mxu0 0
  %132 = vmatpush1.bf16.msra.mxu0 0
  %133 = vmatprep.subr.bf16.mxu0 0
  %134 = vmatpush1.bf16.msra.mxu0 0
  %135 = vmatprep.subr.bf16.mxu0 0
  %136 = vmatpush1.bf16.msra.mxu0 0
  %137 = vmatprep.subr.bf16.mxu0 0
  %138 = vmatpush1.bf16.msra.mxu0 0
  %139 = vmatprep.mubr.bf16.mxu0 0
  %140 = vmatmul.mubr.bf16.gmra.mrb[0].mxu0 %v55
  %v141 = vpop.f32.mrb[0].mxu0
  %v142 = vadd.f32 0.0, %v141
  %v143 = vpop.f32.mrb[0].mxu0
  %v144 = vpop.f32.mrb[0].mxu0
  %v145 = vadd.f32 0.0, %v144
  %v146 = vpop.f32.mrb[0].mxu0
  %147 = vmatprep.mubr.bf16.mxu0 0
  %148 = vmatmul.mubr.bf16.gmra.mrb[0].mxu0 %v56
  %v149 = vpop.f32.mrb[0].mxu0
  %v150 = vadd.f32 0.0, %v149
  %v151 = vpop.f32.mrb[0].mxu0
  %v152 = vpop.f32.mrb[0].mxu0
  %v153 = vadd.f32 0.0, %v152
  %v154 = vpop.f32.mrb[0].mxu0
  %155 = vdwg.mxu0
  %v156 = vadd.f32 %v23, %v142
  %v157 = vadd.f32 %v24, %v145
  %v158 = vadd.f32 %v25, %v150
  %v159 = vadd.f32 %v26, %v153
  %160 = vst [vmem:[#allocation2] sm:$0xff] %v156
  %161 = vst [vmem:[#allocation2 + $0x8] sm:$0xff] %v157
  %162 = vst [vmem:[#allocation2 + $0x10] sm:$0xff] %v158
  %163 = vst [vmem:[#allocation2 + $0x18] sm:$0xff] %v159
  // Predicated region
  $region18: #{forward.11} parent=0 // pred_check
    %p164 = pneg %p15
  $region19: #{forward.11} parent=0 // pred_check_branch
    %166 = sbr.rel (%p164) target = $region21
  $region20: #{forward.11} parent=0 // pred_region
    %v167 = vld [vmem:[#allocation2] sm:$0xff]
    %v168 = vld [vmem:[#allocation2 + $0x8] sm:$0xff]
    %v169 = vld [vmem:[#allocation2 + $0x10] sm:$0xff]
    %v170 = vld [vmem:[#allocation2 + $0x18] sm:$0xff]
    %v171 = vld [vmem:[%s2] sm:$0x1]
    %v173 = vlaneseq
    %v174 = vshrl.u32 %v173, 7
    %v175 = vsub.s32 0, %v174
    %v176 = vrot.slane %v171, %v175
    %v178 = vadd.f32 %v167, %v176
    %v179 = vadd.f32 %v168, %v176
    %v180 = vadd.f32 %v169, %v176
    %v181 = vadd.f32 %v170, %v176
    %v182 = vpack.c.bf16 %v179, %v178
    %v183 = vpack.c.bf16 %v181, %v180
    %v186 = vunpack.c.l.b16 %v182
    %v187 = vunpack.c.h.b16 %v182
    %v188 = vunpack.c.l.b16 %v183
    %v189 = vunpack.c.h.b16 %v183
    %v190 = vpack.c.b16 %v186, %v186
    %v191 = vpack.c.b16 %v187, %v187
    %v192 = vpack.c.b16 %v188, %v188
    %v193 = vpack.c.b16 %v189, %v189
    %198 = vst [vmem:[%s3] sm:$0xf] %v190
    %199 = vst [vmem:[%s3 + $0x4] sm:$0xf] %v191
    %200 = vst [vmem:[%s3 + $0x8] sm:$0xf] %v192
    %201 = vst [vmem:[%s3 + $0xc] sm:$0xf] %v193
  $region21: #{forward.11} parent=0 // pred_fallthru
    _
  // Predicated region
  $region22: #{forward.11} parent=0 // pred_check
    _
  $region23: #{forward.11} parent=0 // pred_check_branch
    %203 = sbr.rel (0) target = $region25
  $region24: #{forward.11} parent=0 // pred_region
    _
  $region25: #{forward.11} parent=0 // pred_fallthru
    _
  // Predicated region
  $region26: #{forward.11} parent=0 // pred_check
    _
  $region27: #{forward.11} parent=0 // pred_check_branch
    %205 = sbr.rel (0) target = $region29
  $region28: #{forward.11} parent=0 // pred_region
    _
  $region29: #{forward.11} parent=0 // pred_fallthru
    _

// kernel: forward.9
$region0: #{forward.9}
  #allocation0 [shape = 'u32[]', space=smem, size = 0x4, offset = 0x4, fixed_abs, tag = 'smem constant byte address 0x4 - core index']
  #allocation1 [shape = 'u32[144,128]{1,0:T(1,128)}', space=vmem, size = 0x12000, scoped, tag = 'internal scratch']
  %s0 = inlined_call_operand.vmem [shape: bf16[4,2,9,9,128], index: 0, kind: input, shape index: {}]
  %s1 = inlined_call_operand.vmem [shape: bf16[9,1,128], index: 1, kind: input, shape index: {}]
  %s2 = inlined_call_operand.vmem [shape: f32[1,128], index: 2, kind: input, shape index: {}]
  %s3 = inlined_call_operand.vmem [shape: bf16[128,128], index: 3, kind: input, shape index: {}]
  %s4 = inlined_call_operand.vmem [shape: f32[1,128], index: 4, kind: input, shape index: {}]
  %s5 = inlined_call_operand.vmem [shape: bf16[2,8,8,128], index: 5, kind: output, shape index: {}]
  %s6 = sld [smem:[#allocation0]]
  $region94: #{forward.9} parent=0
    _
  %s8 = ssub.s32 1, %s6
  %s9 = scalar_select 0, %s8, %s6
  $region1: #{forward.9} parent=0
    #allocation2 [shape = 'u8[294912]{0}', space=vmem, size = 0x48000, scoped, tag = 'input window, operand 0']
    loop: start=0, step=1, limit=4
    $region2: #{forward.9} parent=1 // loop_pre_header
      _
    $region3: #{forward.9} parent=1 // loop_header
      %s11 = sphi 0, %s15
      %p12 = scmp.ge.s32.totalorder %s11, 4
      %s21 = sphi 0, %s23
      %s24 = sphi 0, %s21
      %s25 = sphi 0, %s24
      %s41 = sphi 0, %s25
      %s45 = sphi 0, %s45
      %s47 = sphi 0, %s45
      %s48 = sphi 0, %s47
      %s62 = sphi 0, %s48
      %s66 = sphi 0, %s66
      %s68 = sphi 0, %s66
      %s69 = sphi 0, %s68
      %s83 = sphi 0, %s69
      %s87 = sphi 0, %s87
      %s89 = sphi 0, %s87
      %s90 = sphi 0, %s89
      %s104 = sphi 0, %s90
      %s108 = sphi 0, %s108
      %s110 = sphi 0, %s108
      %s111 = sphi 0, %s110
      %s125 = sphi 0, %s111
      %s131 = sphi 0, %s133
      %s134 = sphi 0, %s131
      %s135 = sphi 0, %s134
      %s151 = sphi 0, %s135
    $region4: #{forward.9} parent=1 // loop_header_branch
      %14 = sbr.rel (%p12) target = $region8
    $region5: #{forward.9} parent=1 // loop_body
      %s16 = ssub.s32 %s11, 1
      %s17 = ssub.s32 %s11, 2
      %s18 = sadd.s32 %s11, 1
      %s19 = ssub.s32 %s11, %s18
      %p20 = scmp.eq.s32.totalorder %s19, 0
      %s22 = sadd.s32 %s21, 1
      %s23 = scalar_select %p20, %s21, %s22
      %p26 = pneg %p20
      %p27 = scmp.eq.s32.totalorder %s11, 1
      %p28 = por %p26, %p27
      %p29 = scmp.ne.s32.totalorder %s21, %s24
      %p30 = scmp.eq.s32.totalorder %s11, 0
      %p31 = por %p29, %p30
      %p32 = scmp.ne.s32.totalorder %s21, %s24
      %p33 = scmp.eq.s32.totalorder %s16, 1
      %p34 = por %p32, %p33
      %p35 = scmp.ne.s32.totalorder %s24, %s25
      %p36 = scmp.eq.s32.totalorder %s16, 0
      %p37 = por %p35, %p36
      %p38 = scmp.ne.s32.totalorder %s24, %s25
      %p39 = scmp.eq.s32.totalorder %s17, 1
      %p40 = por %p38, %p39
      %p42 = scmp.ne.s32.totalorder %s25, %s41
      %p43 = scmp.eq.s32.totalorder %s17, 0
      %p44 = por %p42, %p43
      %s46 = sadd.s32 %s45, 1
      %p49 = scmp.eq.s32.totalorder %s11, 1
      %p50 = scmp.ne.s32.totalorder %s45, %s47
      %p51 = scmp.eq.s32.totalorder %s11, 0
      %p52 = por %p50, %p51
      %p53 = scmp.ne.s32.totalorder %s45, %s47
      %p54 = scmp.eq.s32.totalorder %s16, 1
      %p55 = por %p53, %p54
      %p56 = scmp.ne.s32.totalorder %s47, %s48
      %p57 = scmp.eq.s32.totalorder %s16, 0
      %p58 = por %p56, %p57
      %p59 = scmp.ne.s32.totalorder %s47, %s48
      %p60 = scmp.eq.s32.totalorder %s17, 1
      %p61 = por %p59, %p60
      %p63 = scmp.ne.s32.totalorder %s48, %s62
      %p64 = scmp.eq.s32.totalorder %s17, 0
      %p65 = por %p63, %p64
      %s67 = sadd.s32 %s66, 1
      %p70 = scmp.eq.s32.totalorder %s11, 1
      %p71 = scmp.ne.s32.totalorder %s66, %s68
      %p72 = scmp.eq.s32.totalorder %s11, 0
      %p73 = por %p71, %p72
      %p74 = scmp.ne.s32.totalorder %s66, %s68
      %p75 = scmp.eq.s32.totalorder %s16, 1
      %p76 = por %p74, %p75
      %p77 = scmp.ne.s32.totalorder %s68, %s69
      %p78 = scmp.eq.s32.totalorder %s16, 0
      %p79 = por %p77, %p78
      %p80 = scmp.ne.s32.totalorder %s68, %s69
      %p81 = scmp.eq.s32.totalorder %s17, 1
      %p82 = por %p80, %p81
      %p84 = scmp.ne.s32.totalorder %s69, %s83
      %p85 = scmp.eq.s32.totalorder %s17, 0
      %p86 = por %p84, %p85
      %s88 = sadd.s32 %s87, 1
      %p91 = scmp.eq.s32.totalorder %s11, 1
      %p92 = scmp.ne.s32.totalorder %s87, %s89
      %p93 = scmp.eq.s32.totalorder %s11, 0
      %p94 = por %p92, %p93
      %p95 = scmp.ne.s32.totalorder %s87, %s89
      %p96 = scmp.eq.s32.totalorder %s16, 1
      %p97 = por %p95, %p96
      %p98 = scmp.ne.s32.totalorder %s89, %s90
      %p99 = scmp.eq.s32.totalorder %s16, 0
      %p100 = por %p98, %p99
      %p101 = scmp.ne.s32.totalorder %s89, %s90
      %p102 = scmp.eq.s32.totalorder %s17, 1
      %p103 = por %p101, %p102
      %p105 = scmp.ne.s32.totalorder %s90, %s104
      %p106 = scmp.eq.s32.totalorder %s17, 0
      %p107 = por %p105, %p106
      %s109 = sadd.s32 %s108, 1
      %p112 = scmp.eq.s32.totalorder %s11, 1
      %p113 = scmp.ne.s32.totalorder %s108, %s110
      %p114 = scmp.eq.s32.totalorder %s11, 0
      %p115 = por %p113, %p114
      %p116 = scmp.ne.s32.totalorder %s108, %s110
      %p117 = scmp.eq.s32.totalorder %s16, 1
      %p118 = por %p116, %p117
      %p119 = scmp.ne.s32.totalorder %s110, %s111
      %p120 = scmp.eq.s32.totalorder %s16, 0
      %p121 = por %p119, %p120
      %p122 = scmp.ne.s32.totalorder %s110, %s111
      %p123 = scmp.eq.s32.totalorder %s17, 1
      %p124 = por %p122, %p123
      %p126 = scmp.ne.s32.totalorder %s111, %s125
      %p127 = scmp.eq.s32.totalorder %s17, 0
      %p128 = por %p126, %p127
      %s129 = ssub.s32 %s11, %s18
      %p130 = scmp.eq.s32.totalorder %s129, 0
      %s132 = sadd.s32 %s131, 1
      %s133 = scalar_select %p130, %s131, %s132
      %p136 = pneg %p130
      %p137 = scmp.eq.s32.totalorder %s11, 1
      %p138 = por %p136, %p137
      %p139 = scmp.ne.s32.totalorder %s131, %s134
      %p140 = scmp.eq.s32.totalorder %s11, 0
      %p141 = por %p139, %p140
      %p142 = scmp.ne.s32.totalorder %s131, %s134
      %p143 = scmp.eq.s32.totalorder %s16, 1
      %p144 = por %p142, %p143
      %p145 = scmp.ne.s32.totalorder %s134, %s135
      %p146 = scmp.eq.s32.totalorder %s16, 0
      %p147 = por %p145, %p146
      %p148 = scmp.ne.s32.totalorder %s134, %s135
      %p149 = scmp.eq.s32.totalorder %s17, 1
      %p150 = por %p148, %p149
      %p152 = scmp.ne.s32.totalorder %s135, %s151
      %p153 = scmp.eq.s32.totalorder %s17, 0
      %p154 = por %p152, %p153
      %p155 = scmp.le.s32.totalorder 1, %s11
      %p156 = scmp.lt.s32.totalorder %s11, 3
      %p157 = pnand %p155, %p156
      %p158 = pneg %p157
      // Predicated region
      $region9: #{forward.9} parent=5 // pred_check
        _
      $region10: #{forward.9} parent=5 // pred_check_branch
        %160 = sbr.rel (%p157) target = $region12
      $region11: #{forward.9} parent=5 // pred_region
        %s161 = ssub.s32 %s11, 1
        // Predicated region
        $region13: #{forward.9} parent=11 // pred_check
          %p162 = pneg %p58
        $region14: #{forward.9} parent=11 // pred_check_branch
          %164 = sbr.rel (%p162) target = $region16
        $region15: #{forward.9} parent=11 // pred_region
          _
        $region16: #{forward.9} parent=11 // pred_fallthru
          _
        // Predicated region
        $region17: #{forward.9} parent=11 // pred_check
          %p165 = pneg %p79
        $region18: #{forward.9} parent=11 // pred_check_branch
          %167 = sbr.rel (%p165) target = $region20
        $region19: #{forward.9} parent=11 // pred_region
          _
        $region20: #{forward.9} parent=11 // pred_fallthru
          _
        // Predicated region
        $region21: #{forward.9} parent=11 // pred_check
          %p168 = pneg %p100
        $region22: #{forward.9} parent=11 // pred_check_branch
          %170 = sbr.rel (%p168) target = $region24
        $region23: #{forward.9} parent=11 // pred_region
          _
        $region24: #{forward.9} parent=11 // pred_fallthru
          _
        // Predicated region
        $region25: #{forward.9} parent=11 // pred_check
          %p171 = pneg %p121
        $region26: #{forward.9} parent=11 // pred_check_branch
          %173 = sbr.rel (%p171) target = $region28
        $region27: #{forward.9} parent=11 // pred_region
          _
        $region28: #{forward.9} parent=11 // pred_fallthru
          _
      $region12: #{forward.9} parent=5 // pred_fallthru
        _
      %p174 = scmp.lt.s32.totalorder %s11, 2
      // Predicated region
      $region29: #{forward.9} parent=5 // pred_check
        %p175 = pneg %p174
      $region30: #{forward.9} parent=5 // pred_check_branch
        %177 = sbr.rel (%p175) target = $region32
      $region31: #{forward.9} parent=5 // pred_region
        // Predicated region
        $region33: #{forward.9} parent=31 // pred_check
          %p178 = pneg %p31
        $region34: #{forward.9} parent=31 // pred_check_branch
          %180 = sbr.rel (%p178) target = $region36
        $region35: #{forward.9} parent=31 // pred_region
          %s181 = sand.u32 %s21, 1
          %s182 = sand.u32 %s21, 1
          %s183 = smul.addr %s182, 288
          %s184 = scalar_lea.vmem [#allocation2], %s183
          %s185 = smul.addr %s11, 18
          %s186 = smul.addr %s185, 4
          %s187 = scalar_lea.vmem %s0, %s186
          // Predicated region
          $region37: #{forward.9} parent=35 // pred_check
            _
          $region38: #{forward.9} parent=35 // pred_check_branch
            %189 = sbr.rel (0) target = $region40
          $region39: #{forward.9} parent=35 // pred_region
            // Predicated region
            $region41: #{forward.9} parent=39 // pred_check
              _
            $region42: #{forward.9} parent=39 // pred_check_branch
              %191 = sbr.rel target = $region44
            $region43: #{forward.9} parent=39 // pred_region
              // Predicated region
              $region56: #{forward.9} parent=43 // pred_check
                _
              $region57: #{forward.9} parent=43 // pred_check_branch
                %348 = sbr.rel (0) target = $region59
              $region58: #{forward.9} parent=43 // pred_region
                loop: start=0, step=1, limit=1
                $region60: #{forward.9} parent=58 // loop_pre_header
                  _
                $region61: #{forward.9} parent=58 // loop_header
                  %s350 = sphi 0, %s354
                  %p351 = scmp.ge.s32.totalorder %s350, 1
                  %s355 = sphi %s187, %s187
                  %s356 = sphi %s184, %s184
                $region62: #{forward.9} parent=58 // loop_header_branch
                  %353 = sbr.rel (%p351) target = $region66
                $region63: #{forward.9} parent=58 // loop_body
                  _
                $region64: #{forward.9} parent=58 // loop_footer
                  %s354 = sadd.s32 1, %s350
                $region65: #{forward.9} parent=58 // loop_footer_branch
                  %349 = sbr.rel target = $region61
                $region66: #{forward.9} parent=58 // loop_exit
                  _
                loop: start=0, step=1, limit=1
                $region67: #{forward.9} parent=58 // loop_pre_header
                  _
                $region68: #{forward.9} parent=58 // loop_header
                  %s359 = sphi 0, %s363
                  %p360 = scmp.ge.s32.totalorder %s359, 1
                  %s364 = sphi %s187, %s187
                  %s365 = sphi %s184, %s184
                $region69: #{forward.9} parent=58 // loop_header_branch
                  %362 = sbr.rel (%p360) target = $region73
                $region70: #{forward.9} parent=58 // loop_body
                  %v366 = vld [vmem:[%s364] sm:$0xf]
                  %367 = vst [vmem:[%s365] sm:$0xf] %v366
                  %v368 = vld [vmem:[%s364 + $0x4] sm:$0xf]
                  %369 = vst [vmem:[%s365 + $0x4] sm:$0xf] %v368
                  %v370 = vld [vmem:[%s364 + $0x8] sm:$0xf]
                  %371 = vst [vmem:[%s365 + $0x8] sm:$0xf] %v370
                  %v372 = vld [vmem:[%s364 + $0xc] sm:$0xf]
                  %373 = vst [vmem:[%s365 + $0xc] sm:$0xf] %v372
                  %v374 = vld [vmem:[%s364 + $0x10] sm:$0xf]
                  %375 = vst [vmem:[%s365 + $0x10] sm:$0xf] %v374
                  %v376 = vld [vmem:[%s364 + $0x14] sm:$0xf]
                  %377 = vst [vmem:[%s365 + $0x14] sm:$0xf] %v376
                  %v378 = vld [vmem:[%s364 + $0x18] sm:$0xf]
                  %379 = vst [vmem:[%s365 + $0x18] sm:$0xf] %v378
                  %v380 = vld [vmem:[%s364 + $0x1c] sm:$0xf]
                  %381 = vst [vmem:[%s365 + $0x1c] sm:$0xf] %v380
                  %v382 = vld [vmem:[%s364 + $0x20] sm:$0xf]
                  %383 = vst [vmem:[%s365 + $0x20] sm:$0xf] %v382
                  %v384 = vld [vmem:[%s364 + $0x24] sm:$0xf]
                  %385 = vst [vmem:[%s365 + $0x24] sm:$0xf] %v384
                  %v386 = vld [vmem:[%s364 + $0x28] sm:$0xf]
                  %387 = vst [vmem:[%s365 + $0x28] sm:$0xf] %v386
                  %v388 = vld [vmem:[%s364 + $0x2c] sm:$0xf]
                  %389 = vst [vmem:[%s365 + $0x2c] sm:$0xf] %v388
                  %v390 = vld [vmem:[%s364 + $0x30] sm:$0xf]
                  %391 = vst [vmem:[%s365 + $0x30] sm:$0xf] %v390
                  %v392 = vld [vmem:[%s364 + $0x34] sm:$0xf]
                  %393 = vst [vmem:[%s365 + $0x34] sm:$0xf] %v392
                  %v394 = vld [vmem:[%s364 + $0x38] sm:$0xf]
                  %395 = vst [vmem:[%s365 + $0x38] sm:$0xf] %v394
                  %v396 = vld [vmem:[%s364 + $0x3c] sm:$0xf]
                  %397 = vst [vmem:[%s365 + $0x3c] sm:$0xf] %v396
                  %v398 = vld [vmem:[%s364 + $0x40] sm:$0xf]
                  %399 = vst [vmem:[%s365 + $0x40] sm:$0xf] %v398
                  %v400 = vld [vmem:[%s364 + $0x44] sm:$0xf]
                  %401 = vst [vmem:[%s365 + $0x44] sm:$0xf] %v400
                  %v402 = vld [vmem:[%s364 + $0x90] sm:$0xf]
                  %403 = vst [vmem:[%s365 + $0x48] sm:$0xf] %v402
                  %v404 = vld [vmem:[%s364 + $0x94] sm:$0xf]
                  %405 = vst [vmem:[%s365 + $0x4c] sm:$0xf] %v404
                  %v406 = vld [vmem:[%s364 + $0x98] sm:$0xf]
                  %407 = vst [vmem:[%s365 + $0x50] sm:$0xf] %v406
                  %v408 = vld [vmem:[%s364 + $0x9c] sm:$0xf]
                  %409 = vst [vmem:[%s365 + $0x54] sm:$0xf] %v408
                  %v410 = vld [vmem:[%s364 + $0xa0] sm:$0xf]
                  %411 = vst [vmem:[%s365 + $0x58] sm:$0xf] %v410
                  %v412 = vld [vmem:[%s364 + $0xa4] sm:$0xf]
                  %413 = vst [vmem:[%s365 + $0x5c] sm:$0xf] %v412
                  %v414 = vld [vmem:[%s364 + $0xa8] sm:$0xf]
                  %415 = vst [vmem:[%s365 + $0x60] sm:$0xf] %v414
                  %v416 = vld [vmem:[%s364 + $0xac] sm:$0xf]
                  %417 = vst [vmem:[%s365 + $0x64] sm:$0xf] %v416
                  %v418 = vld [vmem:[%s364 + $0xb0] sm:$0xf]
                  %419 = vst [vmem:[%s365 + $0x68] sm:$0xf] %v418
                  %v420 = vld [vmem:[%s364 + $0xb4] sm:$0xf]
                  %421 = vst [vmem:[%s365 + $0x6c] sm:$0xf] %v420
                  %v422 = vld [vmem:[%s364 + $0xb8] sm:$0xf]
                  %423 = vst [vmem:[%s365 + $0x70] sm:$0xf] %v422
                  %v424 = vld [vmem:[%s364 + $0xbc] sm:$0xf]
                  %425 = vst [vmem:[%s365 + $0x74] sm:$0xf] %v424
                  %v426 = vld [vmem:[%s364 + $0xc0] sm:$0xf]
                  %427 = vst [vmem:[%s365 + $0x78] sm:$0xf] %v426
                  %v428 = vld [vmem:[%s364 + $0xc4] sm:$0xf]
                  %429 = vst [vmem:[%s365 + $0x7c] sm:$0xf] %v428
                  %v430 = vld [vmem:[%s364 + $0xc8] sm:$0xf]
                  %431 = vst [vmem:[%s365 + $0x80] sm:$0xf] %v430
                  %v432 = vld [vmem:[%s364 + $0xcc] sm:$0xf]
                  %433 = vst [vmem:[%s365 + $0x84] sm:$0xf] %v432
                  %v434 = vld [vmem:[%s364 + $0xd0] sm:$0xf]
                  %435 = vst [vmem:[%s365 + $0x88] sm:$0xf] %v434
                  %v436 = vld [vmem:[%s364 + $0xd4] sm:$0xf]
                  %437 = vst [vmem:[%s365 + $0x8c] sm:$0xf] %v436
                  %v438 = vld [vmem:[%s364 + $0x120] sm:$0xf]
                  %439 = vst [vmem:[%s365 + $0x90] sm:$0xf] %v438
                  %v440 = vld [vmem:[%s364 + $0x124] sm:$0xf]
                  %441 = vst [vmem:[%s365 + $0x94] sm:$0xf] %v440
                  %v442 = vld [vmem:[%s364 + $0x128] sm:$0xf]
                  %443 = vst [vmem:[%s365 + $0x98] sm:$0xf] %v442
                  %v444 = vld [vmem:[%s364 + $0x12c] sm:$0xf]
                  %445 = vst [vmem:[%s365 + $0x9c] sm:$0xf] %v444
                  %v446 = vld [vmem:[%s364 + $0x130] sm:$0xf]
                  %447 = vst [vmem:[%s365 + $0xa0] sm:$0xf] %v446
                  %v448 = vld [vmem:[%s364 + $0x134] sm:$0xf]
                  %449 = vst [vmem:[%s365 + $0xa4] sm:$0xf] %v448
                  %v450 = vld [vmem:[%s364 + $0x138] sm:$0xf]
                  %451 = vst [vmem:[%s365 + $0xa8] sm:$0xf] %v450
                  %v452 = vld [vmem:[%s364 + $0x13c] sm:$0xf]
                  %453 = vst [vmem:[%s365 + $0xac] sm:$0xf] %v452
                  %v454 = vld [vmem:[%s364 + $0x140] sm:$0xf]
                  %455 = vst [vmem:[%s365 + $0xb0] sm:$0xf] %v454
                  %v456 = vld [vmem:[%s364 + $0x144] sm:$0xf]
                  %457 = vst [vmem:[%s365 + $0xb4] sm:$0xf] %v456
                  %v458 = vld [vmem:[%s364 + $0x148] sm:$0xf]
                  %459 = vst [vmem:[%s365 + $0xb8] sm:$0xf] %v458
                  %v460 = vld [vmem:[%s364 + $0x14c] sm:$0xf]
                  %461 = vst [vmem:[%s365 + $0xbc] sm:$0xf] %v460
                  %v462 = vld [vmem:[%s364 + $0x150] sm:$0xf]
                  %463 = vst [vmem:[%s365 + $0xc0] sm:$0xf] %v462
                  %v464 = vld [vmem:[%s364 + $0x154] sm:$0xf]
                  %465 = vst [vmem:[%s365 + $0xc4] sm:$0xf] %v464
                  %v466 = vld [vmem:[%s364 + $0x158] sm:$0xf]
                  %467 = vst [vmem:[%s365 + $0xc8] sm:$0xf] %v466
                  %v468 = vld [vmem:[%s364 + $0x15c] sm:$0xf]
                  %469 = vst [vmem:[%s365 + $0xcc] sm:$0xf] %v468
                  %v470 = vld [vmem:[%s364 + $0x160] sm:$0xf]
                  %471 = vst [vmem:[%s365 + $0xd0] sm:$0xf] %v470
                  %v472 = vld [vmem:[%s364 + $0x164] sm:$0xf]
                  %473 = vst [vmem:[%s365 + $0xd4] sm:$0xf] %v472
                  %v474 = vld [vmem:[%s364 + $0x1b0] sm:$0xf]
                  %475 = vst [vmem:[%s365 + $0xd8] sm:$0xf] %v474
                  %v476 = vld [vmem:[%s364 + $0x1b4] sm:$0xf]
                  %477 = vst [vmem:[%s365 + $0xdc] sm:$0xf] %v476
                  %v478 = vld [vmem:[%s364 + $0x1b8] sm:$0xf]
                  %479 = vst [vmem:[%s365 + $0xe0] sm:$0xf] %v478
                  %v480 = vld [vmem:[%s364 + $0x1bc] sm:$0xf]
                  %481 = vst [vmem:[%s365 + $0xe4] sm:$0xf] %v480
                  %v482 = vld [vmem:[%s364 + $0x1c0] sm:$0xf]
                  %483 = vst [vmem:[%s365 + $0xe8] sm:$0xf] %v482
                  %v484 = vld [vmem:[%s364 + $0x1c4] sm:$0xf]
                  %485 = vst [vmem:[%s365 + $0xec] sm:$0xf] %v484
                  %v486 = vld [vmem:[%s364 + $0x1c8] sm:$0xf]
                  %487 = vst [vmem:[%s365 + $0xf0] sm:$0xf] %v486
                  %v488 = vld [vmem:[%s364 + $0x1cc] sm:$0xf]
                  %489 = vst [vmem:[%s365 + $0xf4] sm:$0xf] %v488
                  %v490 = vld [vmem:[%s364 + $0x1d0] sm:$0xf]
                  %491 = vst [vmem:[%s365 + $0xf8] sm:$0xf] %v490
                  %v492 = vld [vmem:[%s364 + $0x1d4] sm:$0xf]
                  %493 = vst [vmem:[%s365 + $0xfc] sm:$0xf] %v492
                  %v494 = vld [vmem:[%s364 + $0x1d8] sm:$0xf]
                  %495 = vst [vmem:[%s365 + $0x100] sm:$0xf] %v494
                  %v496 = vld [vmem:[%s364 + $0x1dc] sm:$0xf]
                  %497 = vst [vmem:[%s365 + $0x104] sm:$0xf] %v496
                  %v498 = vld [vmem:[%s364 + $0x1e0] sm:$0xf]
                  %499 = vst [vmem:[%s365 + $0x108] sm:$0xf] %v498
                  %v500 = vld [vmem:[%s364 + $0x1e4] sm:$0xf]
                  %501 = vst [vmem:[%s365 + $0x10c] sm:$0xf] %v500
                  %v502 = vld [vmem:[%s364 + $0x1e8] sm:$0xf]
                  %503 = vst [vmem:[%s365 + $0x110] sm:$0xf] %v502
                  %v504 = vld [vmem:[%s364 + $0x1ec] sm:$0xf]
                  %505 = vst [vmem:[%s365 + $0x114] sm:$0xf] %v504
                  %v506 = vld [vmem:[%s364 + $0x1f0] sm:$0xf]
                  %507 = vst [vmem:[%s365 + $0x118] sm:$0xf] %v506
                  %v508 = vld [vmem:[%s364 + $0x1f4] sm:$0xf]
                  %509 = vst [vmem:[%s365 + $0x11c] sm:$0xf] %v508
                $region71: #{forward.9} parent=58 // loop_footer
                  %s363 = sadd.s32 1, %s359
                $region72: #{forward.9} parent=58 // loop_footer_branch
                  %358 = sbr.rel target = $region68
                $region73: #{forward.9} parent=58 // loop_exit
                  _
              $region59: #{forward.9} parent=43 // pred_fallthru
                _
            $region44: #{forward.9} parent=39 // pred_fallthru
              _
            // Predicated region
            $region45: #{forward.9} parent=39 // pred_check
              _
            $region46: #{forward.9} parent=39 // pred_check_branch
              %193 = sbr.rel (0) target = $region48
            $region47: #{forward.9} parent=39 // pred_region
              loop: start=0, step=1, limit=1
              $region49: #{forward.9} parent=47 // loop_pre_header
                _
              $region50: #{forward.9} parent=47 // loop_header
                %s196 = sphi 0, %s200
                %p197 = scmp.ge.s32.totalorder %s196, 1
                %s201 = sphi %s187, %s187
                %s202 = sphi %s184, %s184
              $region51: #{forward.9} parent=47 // loop_header_branch
                %199 = sbr.rel (%p197) target = $region55
              $region52: #{forward.9} parent=47 // loop_body
                %v203 = vld [vmem:[%s201] sm:$0xf]
                %204 = vst [vmem:[%s202] sm:$0xf] %v203
                %v205 = vld [vmem:[%s201 + $0x4] sm:$0xf]
                %206 = vst [vmem:[%s202 + $0x4] sm:$0xf] %v205
                %v207 = vld [vmem:[%s201 + $0x8] sm:$0xf]
                %208 = vst [vmem:[%s202 + $0x8] sm:$0xf] %v207
                %v209 = vld [vmem:[%s201 + $0xc] sm:$0xf]
                %210 = vst [vmem:[%s202 + $0xc] sm:$0xf] %v209
                %v211 = vld [vmem:[%s201 + $0x10] sm:$0xf]
                %212 = vst [vmem:[%s202 + $0x10] sm:$0xf] %v211
                %v213 = vld [vmem:[%s201 + $0x14] sm:$0xf]
                %214 = vst [vmem:[%s202 + $0x14] sm:$0xf] %v213
                %v215 = vld [vmem:[%s201 + $0x18] sm:$0xf]
                %216 = vst [vmem:[%s202 + $0x18] sm:$0xf] %v215
                %v217 = vld [vmem:[%s201 + $0x1c] sm:$0xf]
                %218 = vst [vmem:[%s202 + $0x1c] sm:$0xf] %v217
                %v219 = vld [vmem:[%s201 + $0x20] sm:$0xf]
                %220 = vst [vmem:[%s202 + $0x20] sm:$0xf] %v219
                %v221 = vld [vmem:[%s201 + $0x24] sm:$0xf]
                %222 = vst [vmem:[%s202 + $0x24] sm:$0xf] %v221
                %v223 = vld [vmem:[%s201 + $0x28] sm:$0xf]
                %224 = vst [vmem:[%s202 + $0x28] sm:$0xf] %v223
                %v225 = vld [vmem:[%s201 + $0x2c] sm:$0xf]
                %226 = vst [vmem:[%s202 + $0x2c] sm:$0xf] %v225
                %v227 = vld [vmem:[%s201 + $0x30] sm:$0xf]
                %228 = vst [vmem:[%s202 + $0x30] sm:$0xf] %v227
                %v229 = vld [vmem:[%s201 + $0x34] sm:$0xf]
                %230 = vst [vmem:[%s202 + $0x34] sm:$0xf] %v229
                %v231 = vld [vmem:[%s201 + $0x38] sm:$0xf]
                %232 = vst [vmem:[%s202 + $0x38] sm:$0xf] %v231
                %v233 = vld [vmem:[%s201 + $0x3c] sm:$0xf]
                %234 = vst [vmem:[%s202 + $0x3c] sm:$0xf] %v233
                %v235 = vld [vmem:[%s201 + $0x40] sm:$0xf]
                %236 = vst [vmem:[%s202 + $0x40] sm:$0xf] %v235
                %v237 = vld [vmem:[%s201 + $0x44] sm:$0xf]
                %238 = vst [vmem:[%s202 + $0x44] sm:$0xf] %v237
                %v239 = vld [vmem:[%s201 + $0x90] sm:$0xf]
                %240 = vst [vmem:[%s202 + $0x48] sm:$0xf] %v239
                %v241 = vld [vmem:[%s201 + $0x94] sm:$0xf]
                %242 = vst [vmem:[%s202 + $0x4c] sm:$0xf] %v241
                %v243 = vld [vmem:[%s201 + $0x98] sm:$0xf]
                %244 = vst [vmem:[%s202 + $0x50] sm:$0xf] %v243
                %v245 = vld [vmem:[%s201 + $0x9c] sm:$0xf]
                %246 = vst [vmem:[%s202 + $0x54] sm:$0xf] %v245
                %v247 = vld [vmem:[%s201 + $0xa0] sm:$0xf]
                %248 = vst [vmem:[%s202 + $0x58] sm:$0xf] %v247
                %v249 = vld [vmem:[%s201 + $0xa4] sm:$0xf]
                %250 = vst [vmem:[%s202 + $0x5c] sm:$0xf] %v249
                %v251 = vld [vmem:[%s201 + $0xa8] sm:$0xf]
                %252 = vst [vmem:[%s202 + $0x60] sm:$0xf] %v251
                %v253 = vld [vmem:[%s201 + $0xac] sm:$0xf]
                %254 = vst [vmem:[%s202 + $0x64] sm:$0xf] %v253
                %v255 = vld [vmem:[%s201 + $0xb0] sm:$0xf]
                %256 = vst [vmem:[%s202 + $0x68] sm:$0xf] %v255
                %v257 = vld [vmem:[%s201 + $0xb4] sm:$0xf]
                %258 = vst [vmem:[%s202 + $0x6c] sm:$0xf] %v257
                %v259 = vld [vmem:[%s201 + $0xb8] sm:$0xf]
                %260 = vst [vmem:[%s202 + $0x70] sm:$0xf] %v259
                %v261 = vld [vmem:[%s201 + $0xbc] sm:$0xf]
                %262 = vst [vmem:[%s202 + $0x74] sm:$0xf] %v261
                %v263 = vld [vmem:[%s201 + $0xc0] sm:$0xf]
                %264 = vst [vmem:[%s202 + $0x78] sm:$0xf] %v263
                %v265 = vld [vmem:[%s201 + $0xc4] sm:$0xf]
                %266 = vst [vmem:[%s202 + $0x7c] sm:$0xf] %v265
                %v267 = vld [vmem:[%s201 + $0xc8] sm:$0xf]
                %268 = vst [vmem:[%s202 + $0x80] sm:$0xf] %v267
                %v269 = vld [vmem:[%s201 + $0xcc] sm:$0xf]
                %270 = vst [vmem:[%s202 + $0x84] sm:$0xf] %v269
                %v271 = vld [vmem:[%s201 + $0xd0] sm:$0xf]
                %272 = vst [vmem:[%s202 + $0x88] sm:$0xf] %v271
                %v273 = vld [vmem:[%s201 + $0xd4] sm:$0xf]
                %274 = vst [vmem:[%s202 + $0x8c] sm:$0xf] %v273
                %v275 = vld [vmem:[%s201 + $0x120] sm:$0xf]
                %276 = vst [vmem:[%s202 + $0x90] sm:$0xf] %v275
                %v277 = vld [vmem:[%s201 + $0x124] sm:$0xf]
                %278 = vst [vmem:[%s202 + $0x94] sm:$0xf] %v277
                %v279 = vld [vmem:[%s201 + $0x128] sm:$0xf]
                %280 = vst [vmem:[%s202 + $0x98] sm:$0xf] %v279
                %v281 = vld [vmem:[%s201 + $0x12c] sm:$0xf]
                %282 = vst [vmem:[%s202 + $0x9c] sm:$0xf] %v281
                %v283 = vld [vmem:[%s201 + $0x130] sm:$0xf]
                %284 = vst [vmem:[%s202 + $0xa0] sm:$0xf] %v283
                %v285 = vld [vmem:[%s201 + $0x134] sm:$0xf]
                %286 = vst [vmem:[%s202 + $0xa4] sm:$0xf] %v285
                %v287 = vld [vmem:[%s201 + $0x138] sm:$0xf]
                %288 = vst [vmem:[%s202 + $0xa8] sm:$0xf] %v287
                %v289 = vld [vmem:[%s201 + $0x13c] sm:$0xf]
                %290 = vst [vmem:[%s202 + $0xac] sm:$0xf] %v289
                %v291 = vld [vmem:[%s201 + $0x140] sm:$0xf]
                %292 = vst [vmem:[%s202 + $0xb0] sm:$0xf] %v291
                %v293 = vld [vmem:[%s201 + $0x144] sm:$0xf]
                %294 = vst [vmem:[%s202 + $0xb4] sm:$0xf] %v293
                %v295 = vld [vmem:[%s201 + $0x148] sm:$0xf]
                %296 = vst [vmem:[%s202 + $0xb8] sm:$0xf] %v295
                %v297 = vld [vmem:[%s201 + $0x14c] sm:$0xf]
                %298 = vst [vmem:[%s202 + $0xbc] sm:$0xf] %v297
                %v299 = vld [vmem:[%s201 + $0x150] sm:$0xf]
                %300 = vst [vmem:[%s202 + $0xc0] sm:$0xf] %v299
                %v301 = vld [vmem:[%s201 + $0x154] sm:$0xf]
                %302 = vst [vmem:[%s202 + $0xc4] sm:$0xf] %v301
                %v303 = vld [vmem:[%s201 + $0x158] sm:$0xf]
                %304 = vst [vmem:[%s202 + $0xc8] sm:$0xf] %v303
                %v305 = vld [vmem:[%s201 + $0x15c] sm:$0xf]
                %306 = vst [vmem:[%s202 + $0xcc] sm:$0xf] %v305
                %v307 = vld [vmem:[%s201 + $0x160] sm:$0xf]
                %308 = vst [vmem:[%s202 + $0xd0] sm:$0xf] %v307
                %v309 = vld [vmem:[%s201 + $0x164] sm:$0xf]
                %310 = vst [vmem:[%s202 + $0xd4] sm:$0xf] %v309
                %v311 = vld [vmem:[%s201 + $0x1b0] sm:$0xf]
                %312 = vst [vmem:[%s202 + $0xd8] sm:$0xf] %v311
                %v313 = vld [vmem:[%s201 + $0x1b4] sm:$0xf]
                %314 = vst [vmem:[%s202 + $0xdc] sm:$0xf] %v313
                %v315 = vld [vmem:[%s201 + $0x1b8] sm:$0xf]
                %316 = vst [vmem:[%s202 + $0xe0] sm:$0xf] %v315
                %v317 = vld [vmem:[%s201 + $0x1bc] sm:$0xf]
                %318 = vst [vmem:[%s202 + $0xe4] sm:$0xf] %v317
                %v319 = vld [vmem:[%s201 + $0x1c0] sm:$0xf]
                %320 = vst [vmem:[%s202 + $0xe8] sm:$0xf] %v319
                %v321 = vld [vmem:[%s201 + $0x1c4] sm:$0xf]
                %322 = vst [vmem:[%s202 + $0xec] sm:$0xf] %v321
                %v323 = vld [vmem:[%s201 + $0x1c8] sm:$0xf]
                %324 = vst [vmem:[%s202 + $0xf0] sm:$0xf] %v323
                %v325 = vld [vmem:[%s201 + $0x1cc] sm:$0xf]
                %326 = vst [vmem:[%s202 + $0xf4] sm:$0xf] %v325
                %v327 = vld [vmem:[%s201 + $0x1d0] sm:$0xf]
                %328 = vst [vmem:[%s202 + $0xf8] sm:$0xf] %v327
                %v329 = vld [vmem:[%s201 + $0x1d4] sm:$0xf]
                %330 = vst [vmem:[%s202 + $0xfc] sm:$0xf] %v329
                %v331 = vld [vmem:[%s201 + $0x1d8] sm:$0xf]
                %332 = vst [vmem:[%s202 + $0x100] sm:$0xf] %v331
                %v333 = vld [vmem:[%s201 + $0x1dc] sm:$0xf]
                %334 = vst [vmem:[%s202 + $0x104] sm:$0xf] %v333
                %v335 = vld [vmem:[%s201 + $0x1e0] sm:$0xf]
                %336 = vst [vmem:[%s202 + $0x108] sm:$0xf] %v335
                %v337 = vld [vmem:[%s201 + $0x1e4] sm:$0xf]
                %338 = vst [vmem:[%s202 + $0x10c] sm:$0xf] %v337
                %v339 = vld [vmem:[%s201 + $0x1e8] sm:$0xf]
                %340 = vst [vmem:[%s202 + $0x110] sm:$0xf] %v339
                %v341 = vld [vmem:[%s201 + $0x1ec] sm:$0xf]
                %342 = vst [vmem:[%s202 + $0x114] sm:$0xf] %v341
                %v343 = vld [vmem:[%s201 + $0x1f0] sm:$0xf]
                %344 = vst [vmem:[%s202 + $0x118] sm:$0xf] %v343
                %v345 = vld [vmem:[%s201 + $0x1f4] sm:$0xf]
                %346 = vst [vmem:[%s202 + $0x11c] sm:$0xf] %v345
              $region53: #{forward.9} parent=47 // loop_footer
                %s200 = sadd.s32 1, %s196
              $region54: #{forward.9} parent=47 // loop_footer_branch
                %195 = sbr.rel target = $region50
              $region55: #{forward.9} parent=47 // loop_exit
                _
            $region48: #{forward.9} parent=39 // pred_fallthru
              _
          $region40: #{forward.9} parent=35 // pred_fallthru
            _
          %510 = vnop
        $region36: #{forward.9} parent=31 // pred_fallthru
          _
      $region32: #{forward.9} parent=5 // pred_fallthru
        _
      %p511 = scmp.le.s32.totalorder 1, %s11
      %p512 = scmp.lt.s32.totalorder %s11, 3
      %p513 = pnand %p511, %p512
      %p514 = pneg %p513
      // Predicated region
      $region74: #{forward.9} parent=5 // pred_check
        _
      $region75: #{forward.9} parent=5 // pred_check_branch
        %516 = sbr.rel (%p513) target = $region77
      $region76: #{forward.9} parent=5 // pred_region
        %s517 = ssub.s32 %s11, 1
        %s518 = sand.u32 %s24, 1
        %s519 = sand.u32 %s24, 1
        %s520 = smul.addr %s519, 288
        %s521 = scalar_lea.vmem [#allocation2], %s520
        // Predicated region
        $region78: #{forward.9} parent=76 // pred_check
          %p522 = pneg %p37
        $region79: #{forward.9} parent=76 // pred_check_branch
          %524 = sbr.rel (%p522) target = $region81
        $region80: #{forward.9} parent=76 // pred_region
          _
        $region81: #{forward.9} parent=76 // pred_fallthru
          _
        %s525 = sand.u32 %s24, 1
        %s526 = sand.u32 %s24, 1
        %s527 = smul.addr %s526, 288
        %s528 = scalar_lea.vmem [#allocation2], %s527
        %p529 = pneg %p37
        %p530 = pneg %p34
        %p531 = pneg %p58
        %p532 = pneg %p55
        %p533 = pneg %p79
        %p534 = pneg %p76
        %p535 = pneg %p100
        %p536 = pneg %p97
        %p537 = pneg %p121
        %p538 = pneg %p118
        %p539 = pneg %p147
        %p540 = pneg %p144
        %p541 = scmp.lt.s32.totalorder %s16, 1
        %s542 = scalar_select %p541, %s16, 1
        %s543 = smul.addr %s542, 8
        %s544 = smul.addr %s543, 4
        %s545 = scalar_lea.vmem %s5, %s544
        %p546 = scmp.lt.s32.totalorder %s16, 1
        %s547 = scalar_select %p546, %s16, 1
        %s548 = smul.addr %s547, 8
        %s549 = smul.addr %s548, 4
        %s550 = scalar_lea.vmem %s5, %s549
        %v552 = vld [vmem:[%s521] sm:$0xf]
        %v553 = vld [vmem:[%s521 + $0x8] sm:$0xf]
        %v554 = vld [vmem:[%s521 + $0x10] sm:$0xf]
        %v555 = vld [vmem:[%s521 + $0x18] sm:$0xf]
        %v556 = vld [vmem:[%s521 + $0x20] sm:$0xf]
        %v557 = vld [vmem:[%s521 + $0x28] sm:$0xf]
        %v558 = vld [vmem:[%s521 + $0x30] sm:$0xf]
        %v559 = vld [vmem:[%s521 + $0x38] sm:$0xf]
        %v560 = vunpack.c.l.bf16 %v552
        %v561 = vunpack.c.l.bf16 %v553
        %v562 = vunpack.c.l.bf16 %v554
        %v563 = vunpack.c.l.bf16 %v555
        %v564 = vunpack.c.l.bf16 %v556
        %v565 = vunpack.c.l.bf16 %v557
        %v566 = vunpack.c.l.bf16 %v558
        %v567 = vunpack.c.l.bf16 %v559
        %v568 = vld [vmem:[%s1] sm:$0x1]
        %v569 = vunpack.c.l.bf16 %v568
        %v570 = vlaneseq
        %v571 = vshrl.u32 %v570, 7
        %v572 = vsub.s32 0, %v571
        %v573 = vrot.slane %v569, %v572
        %v574 = vmul.f32 %v560, %v573
        %v575 = vmul.f32 %v561, %v573
        %v576 = vmul.f32 %v562, %v573
        %v577 = vmul.f32 %v563, %v573
        %v578 = vmul.f32 %v564, %v573
        %v579 = vmul.f32 %v565, %v573
        %v580 = vmul.f32 %v566, %v573
        %v581 = vmul.f32 %v567, %v573
        %v582 = vadd.f32 %v574, 0.0
        %v583 = vadd.f32 %v575, 0.0
        %v584 = vadd.f32 %v576, 0.0
        %v585 = vadd.f32 %v577, 0.0
        %v586 = vadd.f32 %v578, 0.0
        %v587 = vadd.f32 %v579, 0.0
        %v588 = vadd.f32 %v580, 0.0
        %v589 = vadd.f32 %v581, 0.0
        %s590 = scalar_lea.vmem %s521, 72 [#allocation2]
        %v591 = vld [vmem:[%s590] sm:$0xf]
        %v592 = vld [vmem:[%s590 + $0x8] sm:$0xf]
        %v593 = vld [vmem:[%s590 + $0x10] sm:$0xf]
        %v594 = vld [vmem:[%s590 + $0x18] sm:$0xf]
        %v595 = vld [vmem:[%s590 + $0x20] sm:$0xf]
        %v596 = vld [vmem:[%s590 + $0x28] sm:$0xf]
        %v597 = vld [vmem:[%s590 + $0x30] sm:$0xf]
        %v598 = vld [vmem:[%s590 + $0x38] sm:$0xf]
        %v599 = vunpack.c.l.bf16 %v591
        %v600 = vunpack.c.l.bf16 %v592
        %v601 = vunpack.c.l.bf16 %v593
        %v602 = vunpack.c.l.bf16 %v594
        %v603 = vunpack.c.l.bf16 %v595
        %v604 = vunpack.c.l.bf16 %v596
        %v605 = vunpack.c.l.bf16 %v597
        %v606 = vunpack.c.l.bf16 %v598
        %s607 = scalar_lea.vmem %s1, 1
        %v608 = vld [vmem:[%s607] sm:$0x1]
        %v609 = vunpack.c.l.bf16 %v608
        %v610 = vlaneseq
        %v611 = vshrl.u32 %v610, 7
        %v612 = vsub.s32 0, %v611
        %v613 = vrot.slane %v609, %v612
        %v614 = vmul.f32 %v599, %v613
        %v615 = vmul.f32 %v600, %v613
        %v616 = vmul.f32 %v601, %v613
        %v617 = vmul.f32 %v602, %v613
        %v618 = vmul.f32 %v603, %v613
        %v619 = vmul.f32 %v604, %v613
        %v620 = vmul.f32 %v605, %v613
        %v621 = vmul.f32 %v606, %v613
        %v622 = vadd.f32 %v582, %v614
        %v623 = vadd.f32 %v583, %v615
        %v624 = vadd.f32 %v584, %v616
        %v625 = vadd.f32 %v585, %v617
        %v626 = vadd.f32 %v586, %v618
        %v627 = vadd.f32 %v587, %v619
        %v628 = vadd.f32 %v588, %v620
        %v629 = vadd.f32 %v589, %v621
        %v630 = vld [vmem:[%s521 + $0x4] sm:$0x1]
        %v631 = vld [vmem:[%s521 + $0xc] sm:$0x1]
        %v632 = vld [vmem:[%s521 + $0x14] sm:$0x1]
        %v633 = vld [vmem:[%s521 + $0x1c] sm:$0x1]
        %v634 = vld [vmem:[%s521 + $0x24] sm:$0x1]
        %v635 = vld [vmem:[%s521 + $0x2c] sm:$0x1]
        %v636 = vld [vmem:[%s521 + $0x34] sm:$0x1]
        %v637 = vld [vmem:[%s521 + $0x3c] sm:$0x1]
        %v638 = vunpack.c.l.bf16 %v630
        %v639 = vunpack.c.l.bf16 %v631
        %v640 = vunpack.c.l.bf16 %v632
        %v641 = vunpack.c.l.bf16 %v633
        %v642 = vunpack.c.l.bf16 %v634
        %v643 = vunpack.c.l.bf16 %v635
        %v644 = vunpack.c.l.bf16 %v636
        %v645 = vunpack.c.l.bf16 %v637
        %s646 = scalar_lea.vmem %s1, 2
        %v647 = vld [vmem:[%s646] sm:$0x1]
        %v648 = vunpack.c.l.bf16 %v647
        %v649 = vlaneseq
        %v650 = vshrl.u32 %v649, 7
        %v651 = vsub.s32 0, %v650
        %v652 = vrot.slane %v648, %v651
        %v653 = vmul.f32 %v560, %v652
        %v654 = vmul.f32 %v638, %v652
        %v655 = vmul.f32 %v561, %v652
        %v656 = vmul.f32 %v639, %v652
        %v657 = vmul.f32 %v562, %v652
        %v658 = vmul.f32 %v640, %v652
        %v659 = vmul.f32 %v563, %v652
        %v660 = vmul.f32 %v641, %v652
        %v661 = vmul.f32 %v564, %v652
        %v662 = vmul.f32 %v642, %v652
        %v663 = vmul.f32 %v565, %v652
        %v664 = vmul.f32 %v643, %v652
        %v665 = vmul.f32 %v566, %v652
        %v666 = vmul.f32 %v644, %v652
        %v667 = vmul.f32 %v567, %v652
        %v668 = vmul.f32 %v645, %v652
        %vm685 = vcmask 1046528
        %v686 = vrot.slane %v653, 1
        %v687 = vrot.slane %v654, 1
        %v688 = vsel %vm685, %v686, %v687
        %v689 = vrot.slane %v655, 1
        %v690 = vrot.slane %v656, 1
        %v691 = vsel %vm685, %v689, %v690
        %v692 = vrot.slane %v657, 1
        %v693 = vrot.slane %v658, 1
        %v694 = vsel %vm685, %v692, %v693
        %v695 = vrot.slane %v659, 1
        %v696 = vrot.slane %v660, 1
        %v697 = vsel %vm685, %v695, %v696
        %v698 = vrot.slane %v661, 1
        %v699 = vrot.slane %v662, 1
        %v700 = vsel %vm685, %v698, %v699
        %v701 = vrot.slane %v663, 1
        %v702 = vrot.slane %v664, 1
        %v703 = vsel %vm685, %v701, %v702
        %v704 = vrot.slane %v665, 1
        %v705 = vrot.slane %v666, 1
        %v706 = vsel %vm685, %v704, %v705
        %v707 = vrot.slane %v667, 1
        %v708 = vrot.slane %v668, 1
        %v709 = vsel %vm685, %v707, %v708
        %v718 = vadd.f32 %v622, %v688
        %v719 = vadd.f32 %v623, %v691
        %v720 = vadd.f32 %v624, %v694
        %v721 = vadd.f32 %v625, %v697
        %v722 = vadd.f32 %v626, %v700
        %v723 = vadd.f32 %v627, %v703
        %v724 = vadd.f32 %v628, %v706
        %v725 = vadd.f32 %v629, %v709
        %s726 = scalar_lea.vmem %s521, 144 [#allocation2]
        %v727 = vld [vmem:[%s726] sm:$0xf]
        %v728 = vld [vmem:[%s726 + $0x8] sm:$0xf]
        %v729 = vld [vmem:[%s726 + $0x10] sm:$0xf]
        %v730 = vld [vmem:[%s726 + $0x18] sm:$0xf]
        %v731 = vld [vmem:[%s726 + $0x20] sm:$0xf]
        %v732 = vld [vmem:[%s726 + $0x28] sm:$0xf]
        %v733 = vld [vmem:[%s726 + $0x30] sm:$0xf]
        %v734 = vld [vmem:[%s726 + $0x38] sm:$0xf]
        %v735 = vunpack.c.l.bf16 %v727
        %v736 = vunpack.c.l.bf16 %v728
        %v737 = vunpack.c.l.bf16 %v729
        %v738 = vunpack.c.l.bf16 %v730
        %v739 = vunpack.c.l.bf16 %v731
        %v740 = vunpack.c.l.bf16 %v732
        %v741 = vunpack.c.l.bf16 %v733
        %v742 = vunpack.c.l.bf16 %v734
        %s743 = scalar_lea.vmem %s1, 3
        %v744 = vld [vmem:[%s743] sm:$0x1]
        %v745 = vunpack.c.l.bf16 %v744
        %v746 = vlaneseq
        %v747 = vshrl.u32 %v746, 7
        %v748 = vsub.s32 0, %v747
        %v749 = vrot.slane %v745, %v748
        %v750 = vmul.f32 %v735, %v749
        %v751 = vmul.f32 %v736, %v749
        %v752 = vmul.f32 %v737, %v749
        %v753 = vmul.f32 %v738, %v749
        %v754 = vmul.f32 %v739, %v749
        %v755 = vmul.f32 %v740, %v749
        %v756 = vmul.f32 %v741, %v749
        %v757 = vmul.f32 %v742, %v749
        %v758 = vadd.f32 %v718, %v750
        %v759 = vadd.f32 %v719, %v751
        %v760 = vadd.f32 %v720, %v752
        %v761 = vadd.f32 %v721, %v753
        %v762 = vadd.f32 %v722, %v754
        %v763 = vadd.f32 %v723, %v755
        %v764 = vadd.f32 %v724, %v756
        %v765 = vadd.f32 %v725, %v757
        %s766 = scalar_lea.vmem %s521, 216 [#allocation2]
        %v767 = vld [vmem:[%s766] sm:$0xf]
        %v768 = vld [vmem:[%s766 + $0x8] sm:$0xf]
        %v769 = vld [vmem:[%s766 + $0x10] sm:$0xf]
        %v770 = vld [vmem:[%s766 + $0x18] sm:$0xf]
        %v771 = vld [vmem:[%s766 + $0x20] sm:$0xf]
        %v772 = vld [vmem:[%s766 + $0x28] sm:$0xf]
        %v773 = vld [vmem:[%s766 + $0x30] sm:$0xf]
        %v774 = vld [vmem:[%s766 + $0x38] sm:$0xf]
        %v775 = vunpack.c.l.bf16 %v767
        %v776 = vunpack.c.l.bf16 %v768
        %v777 = vunpack.c.l.bf16 %v769
        %v778 = vunpack.c.l.bf16 %v770
        %v779 = vunpack.c.l.bf16 %v771
        %v780 = vunpack.c.l.bf16 %v772
        %v781 = vunpack.c.l.bf16 %v773
        %v782 = vunpack.c.l.bf16 %v774
        %s783 = scalar_lea.vmem %s1, 4
        %v784 = vld [vmem:[%s783] sm:$0x1]
        %v785 = vunpack.c.l.bf16 %v784
        %v786 = vlaneseq
        %v787 = vshrl.u32 %v786, 7
        %v788 = vsub.s32 0, %v787
        %v789 = vrot.slane %v785, %v788
        %v790 = vmul.f32 %v775, %v789
        %v791 = vmul.f32 %v776, %v789
        %v792 = vmul.f32 %v777, %v789
        %v793 = vmul.f32 %v778, %v789
        %v794 = vmul.f32 %v779, %v789
        %v795 = vmul.f32 %v780, %v789
        %v796 = vmul.f32 %v781, %v789
        %v797 = vmul.f32 %v782, %v789
        %v798 = vadd.f32 %v758, %v790
        %v799 = vadd.f32 %v759, %v791
        %v800 = vadd.f32 %v760, %v792
        %v801 = vadd.f32 %v761, %v793
        %v802 = vadd.f32 %v762, %v794
        %v803 = vadd.f32 %v763, %v795
        %v804 = vadd.f32 %v764, %v796
        %v805 = vadd.f32 %v765, %v797
        %v806 = vld [vmem:[%s726 + $0x4] sm:$0x1]
        %v807 = vld [vmem:[%s726 + $0xc] sm:$0x1]
        %v808 = vld [vmem:[%s726 + $0x14] sm:$0x1]
        %v809 = vld [vmem:[%s726 + $0x1c] sm:$0x1]
        %v810 = vld [vmem:[%s726 + $0x24] sm:$0x1]
        %v811 = vld [vmem:[%s726 + $0x2c] sm:$0x1]
        %v812 = vld [vmem:[%s726 + $0x34] sm:$0x1]
        %v813 = vld [vmem:[%s726 + $0x3c] sm:$0x1]
        %v814 = vunpack.c.l.bf16 %v806
        %v815 = vunpack.c.l.bf16 %v807
        %v816 = vunpack.c.l.bf16 %v808
        %v817 = vunpack.c.l.bf16 %v809
        %v818 = vunpack.c.l.bf16 %v810
        %v819 = vunpack.c.l.bf16 %v811
        %v820 = vunpack.c.l.bf16 %v812
        %v821 = vunpack.c.l.bf16 %v813
        %s822 = scalar_lea.vmem %s1, 5
        %v823 = vld [vmem:[%s822] sm:$0x1]
        %v824 = vunpack.c.l.bf16 %v823
        %v825 = vlaneseq
        %v826 = vshrl.u32 %v825, 7
        %v827 = vsub.s32 0, %v826
        %v828 = vrot.slane %v824, %v827
        %v829 = vmul.f32 %v735, %v828
        %v830 = vmul.f32 %v814, %v828
        %v831 = vmul.f32 %v736, %v828
        %v832 = vmul.f32 %v815, %v828
        %v833 = vmul.f32 %v737, %v828
        %v834 = vmul.f32 %v816, %v828
        %v835 = vmul.f32 %v738, %v828
        %v836 = vmul.f32 %v817, %v828
        %v837 = vmul.f32 %v739, %v828
        %v838 = vmul.f32 %v818, %v828
        %v839 = vmul.f32 %v740, %v828
        %v840 = vmul.f32 %v819, %v828
        %v841 = vmul.f32 %v741, %v828
        %v842 = vmul.f32 %v820, %v828
        %v843 = vmul.f32 %v742, %v828
        %v844 = vmul.f32 %v821, %v828
        %v861 = vrot.slane %v829, 1
        %v862 = vrot.slane %v830, 1
        %v863 = vsel %vm685, %v861, %v862
        %v864 = vrot.slane %v831, 1
        %v865 = vrot.slane %v832, 1
        %v866 = vsel %vm685, %v864, %v865
        %v867 = vrot.slane %v833, 1
        %v868 = vrot.slane %v834, 1
        %v869 = vsel %vm685, %v867, %v868
        %v870 = vrot.slane %v835, 1
        %v871 = vrot.slane %v836, 1
        %v872 = vsel %vm685, %v870, %v871
        %v873 = vrot.slane %v837, 1
        %v874 = vrot.slane %v838, 1
        %v875 = vsel %vm685, %v873, %v874
        %v876 = vrot.slane %v839, 1
        %v877 = vrot.slane %v840, 1
        %v878 = vsel %vm685, %v876, %v877
        %v879 = vrot.slane %v841, 1
        %v880 = vrot.slane %v842, 1
        %v881 = vsel %vm685, %v879, %v880
        %v882 = vrot.slane %v843, 1
        %v883 = vrot.slane %v844, 1
        %v884 = vsel %vm685, %v882, %v883
        %v893 = vadd.f32 %v798, %v863
        %v894 = vadd.f32 %v799, %v866
        %v895 = vadd.f32 %v800, %v869
        %v896 = vadd.f32 %v801, %v872
        %v897 = vadd.f32 %v802, %v875
        %v898 = vadd.f32 %v803, %v878
        %v899 = vadd.f32 %v804, %v881
        %v900 = vadd.f32 %v805, %v884
        %s901 = scalar_lea.vmem %s521, 8 [#allocation2]
        %v902 = vld [vmem:[%s901] sm:$0xf]
        %v903 = vld [vmem:[%s901 + $0x8] sm:$0xf]
        %v904 = vld [vmem:[%s901 + $0x10] sm:$0xf]
        %v905 = vld [vmem:[%s901 + $0x18] sm:$0xf]
        %v906 = vld [vmem:[%s901 + $0x20] sm:$0xf]
        %v907 = vld [vmem:[%s901 + $0x28] sm:$0xf]
        %v908 = vld [vmem:[%s901 + $0x30] sm:$0xf]
        %v909 = vld [vmem:[%s901 + $0x38] sm:$0xf]
        %v910 = vunpack.c.l.bf16 %v902
        %v911 = vunpack.c.l.bf16 %v903
        %v912 = vunpack.c.l.bf16 %v904
        %v913 = vunpack.c.l.bf16 %v905
        %v914 = vunpack.c.l.bf16 %v906
        %v915 = vunpack.c.l.bf16 %v907
        %v916 = vunpack.c.l.bf16 %v908
        %v917 = vunpack.c.l.bf16 %v909
        %s918 = scalar_lea.vmem %s1, 6
        %v919 = vld [vmem:[%s918] sm:$0x1]
        %v920 = vunpack.c.l.bf16 %v919
        %v921 = vlaneseq
        %v922 = vshrl.u32 %v921, 7
        %v923 = vsub.s32 0, %v922
        %v924 = vrot.slane %v920, %v923
        %v925 = vmul.f32 %v910, %v924
        %v926 = vmul.f32 %v911, %v924
        %v927 = vmul.f32 %v912, %v924
        %v928 = vmul.f32 %v913, %v924
        %v929 = vmul.f32 %v914, %v924
        %v930 = vmul.f32 %v915, %v924
        %v931 = vmul.f32 %v916, %v924
        %v932 = vmul.f32 %v917, %v924
        %v933 = vadd.f32 %v893, %v925
        %v934 = vadd.f32 %v894, %v926
        %v935 = vadd.f32 %v895, %v927
        %v936 = vadd.f32 %v896, %v928
        %v937 = vadd.f32 %v897, %v929
        %v938 = vadd.f32 %v898, %v930
        %v939 = vadd.f32 %v899, %v931
        %v940 = vadd.f32 %v900, %v932
        %s941 = scalar_lea.vmem %s521, 80 [#allocation2]
        %v942 = vld [vmem:[%s941] sm:$0xf]
        %v943 = vld [vmem:[%s941 + $0x8] sm:$0xf]
        %v944 = vld [vmem:[%s941 + $0x10] sm:$0xf]
        %v945 = vld [vmem:[%s941 + $0x18] sm:$0xf]
        %v946 = vld [vmem:[%s941 + $0x20] sm:$0xf]
        %v947 = vld [vmem:[%s941 + $0x28] sm:$0xf]
        %v948 = vld [vmem:[%s941 + $0x30] sm:$0xf]
        %v949 = vld [vmem:[%s941 + $0x38] sm:$0xf]
        %v950 = vunpack.c.l.bf16 %v942
        %v951 = vunpack.c.l.bf16 %v943
        %v952 = vunpack.c.l.bf16 %v944
        %v953 = vunpack.c.l.bf16 %v945
        %v954 = vunpack.c.l.bf16 %v946
        %v955 = vunpack.c.l.bf16 %v947
        %v956 = vunpack.c.l.bf16 %v948
        %v957 = vunpack.c.l.bf16 %v949
        %s958 = scalar_lea.vmem %s1, 7
        %v959 = vld [vmem:[%s958] sm:$0x1]
        %v960 = vunpack.c.l.bf16 %v959
        %v961 = vlaneseq
        %v962 = vshrl.u32 %v961, 7
        %v963 = vsub.s32 0, %v962
        %v964 = vrot.slane %v960, %v963
        %v965 = vmul.f32 %v950, %v964
        %v966 = vmul.f32 %v951, %v964
        %v967 = vmul.f32 %v952, %v964
        %v968 = vmul.f32 %v953, %v964
        %v969 = vmul.f32 %v954, %v964
        %v970 = vmul.f32 %v955, %v964
        %v971 = vmul.f32 %v956, %v964
        %v972 = vmul.f32 %v957, %v964
        %v973 = vadd.f32 %v933, %v965
        %v974 = vadd.f32 %v934, %v966
        %v975 = vadd.f32 %v935, %v967
        %v976 = vadd.f32 %v936, %v968
        %v977 = vadd.f32 %v937, %v969
        %v978 = vadd.f32 %v938, %v970
        %v979 = vadd.f32 %v939, %v971
        %v980 = vadd.f32 %v940, %v972
        %v981 = vld [vmem:[%s901 + $0x4] sm:$0x1]
        %v982 = vld [vmem:[%s901 + $0xc] sm:$0x1]
        %v983 = vld [vmem:[%s901 + $0x14] sm:$0x1]
        %v984 = vld [vmem:[%s901 + $0x1c] sm:$0x1]
        %v985 = vld [vmem:[%s901 + $0x24] sm:$0x1]
        %v986 = vld [vmem:[%s901 + $0x2c] sm:$0x1]
        %v987 = vld [vmem:[%s901 + $0x34] sm:$0x1]
        %v988 = vld [vmem:[%s901 + $0x3c] sm:$0x1]
        %v989 = vunpack.c.l.bf16 %v981
        %v990 = vunpack.c.l.bf16 %v982
        %v991 = vunpack.c.l.bf16 %v983
        %v992 = vunpack.c.l.bf16 %v984
        %v993 = vunpack.c.l.bf16 %v985
        %v994 = vunpack.c.l.bf16 %v986
        %v995 = vunpack.c.l.bf16 %v987
        %v996 = vunpack.c.l.bf16 %v988
        %s997 = scalar_lea.vmem %s1, 8
        %v998 = vld [vmem:[%s997] sm:$0x1]
        %v999 = vunpack.c.l.bf16 %v998
        %v1000 = vlaneseq
        %v1001 = vshrl.u32 %v1000, 7
        %v1002 = vsub.s32 0, %v1001
        %v1003 = vrot.slane %v999, %v1002
        %v1004 = vmul.f32 %v910, %v1003
        %v1005 = vmul.f32 %v989, %v1003
        %v1006 = vmul.f32 %v911, %v1003
        %v1007 = vmul.f32 %v990, %v1003
        %v1008 = vmul.f32 %v912, %v1003
        %v1009 = vmul.f32 %v991, %v1003
        %v1010 = vmul.f32 %v913, %v1003
        %v1011 = vmul.f32 %v992, %v1003
        %v1012 = vmul.f32 %v914, %v1003
        %v1013 = vmul.f32 %v993, %v1003
        %v1014 = vmul.f32 %v915, %v1003
        %v1015 = vmul.f32 %v994, %v1003
        %v1016 = vmul.f32 %v916, %v1003
        %v1017 = vmul.f32 %v995, %v1003
        %v1018 = vmul.f32 %v917, %v1003
        %v1019 = vmul.f32 %v996, %v1003
        %v1036 = vrot.slane %v1004, 1
        %v1037 = vrot.slane %v1005, 1
        %v1038 = vsel %vm685, %v1036, %v1037
        %v1039 = vrot.slane %v1006, 1
        %v1040 = vrot.slane %v1007, 1
        %v1041 = vsel %vm685, %v1039, %v1040
        %v1042 = vrot.slane %v1008, 1
        %v1043 = vrot.slane %v1009, 1
        %v1044 = vsel %vm685, %v1042, %v1043
        %v1045 = vrot.slane %v1010, 1
        %v1046 = vrot.slane %v1011, 1
        %v1047 = vsel %vm685, %v1045, %v1046
        %v1048 = vrot.slane %v1012, 1
        %v1049 = vrot.slane %v1013, 1
        %v1050 = vsel %vm685, %v1048, %v1049
        %v1051 = vrot.slane %v1014, 1
        %v1052 = vrot.slane %v1015, 1
        %v1053 = vsel %vm685, %v1051, %v1052
        %v1054 = vrot.slane %v1016, 1
        %v1055 = vrot.slane %v1017, 1
        %v1056 = vsel %vm685, %v1054, %v1055
        %v1057 = vrot.slane %v1018, 1
        %v1058 = vrot.slane %v1019, 1
        %v1059 = vsel %vm685, %v1057, %v1058
        %v1068 = vadd.f32 %v973, %v1038
        %v1069 = vadd.f32 %v974, %v1041
        %v1070 = vadd.f32 %v975, %v1044
        %v1071 = vadd.f32 %v976, %v1047
        %v1072 = vadd.f32 %v977, %v1050
        %v1073 = vadd.f32 %v978, %v1053
        %v1074 = vadd.f32 %v979, %v1056
        %v1075 = vadd.f32 %v980, %v1059
        %v1076 = vld [vmem:[%s2] sm:$0x1]
        %v1078 = vlaneseq
        %v1079 = vshrl.u32 %v1078, 7
        %v1080 = vsub.s32 0, %v1079
        %v1081 = vrot.slane %v1076, %v1080
        %v1083 = vadd.f32 %v1068, %v1081
        %v1084 = vadd.f32 %v1069, %v1081
        %v1085 = vadd.f32 %v1070, %v1081
        %v1086 = vadd.f32 %v1071, %v1081
        %v1087 = vadd.f32 %v1072, %v1081
        %v1088 = vadd.f32 %v1073, %v1081
        %v1089 = vadd.f32 %v1074, %v1081
        %v1090 = vadd.f32 %v1075, %v1081
        %v1091 = vadd.f32 %v1083, 3.0
        %v1092 = vadd.f32 %v1084, 3.0
        %v1093 = vadd.f32 %v1085, 3.0
        %v1094 = vadd.f32 %v1086, 3.0
        %v1095 = vadd.f32 %v1087, 3.0
        %v1096 = vadd.f32 %v1088, 3.0
        %v1097 = vadd.f32 %v1089, 3.0
        %v1098 = vadd.f32 %v1090, 3.0
        %v1099 = vmax.f32 %v1091, 0.0
        %v1100 = vmax.f32 %v1092, 0.0
        %v1101 = vmax.f32 %v1093, 0.0
        %v1102 = vmax.f32 %v1094, 0.0
        %v1103 = vmax.f32 %v1095, 0.0
        %v1104 = vmax.f32 %v1096, 0.0
        %v1105 = vmax.f32 %v1097, 0.0
        %v1106 = vmax.f32 %v1098, 0.0
        %v1107 = vmin.f32 %v1099, 6.0
        %v1108 = vmin.f32 %v1100, 6.0
        %v1109 = vmin.f32 %v1101, 6.0
        %v1110 = vmin.f32 %v1102, 6.0
        %v1111 = vmin.f32 %v1103, 6.0
        %v1112 = vmin.f32 %v1104, 6.0
        %v1113 = vmin.f32 %v1105, 6.0
        %v1114 = vmin.f32 %v1106, 6.0
        %v1115 = vmul.f32 %v1083, %v1107
        %v1116 = vmul.f32 %v1084, %v1108
        %v1117 = vmul.f32 %v1085, %v1109
        %v1118 = vmul.f32 %v1086, %v1110
        %v1119 = vmul.f32 %v1087, %v1111
        %v1120 = vmul.f32 %v1088, %v1112
        %v1121 = vmul.f32 %v1089, %v1113
        %v1122 = vmul.f32 %v1090, %v1114
        %v1123 = vmul.f32 %v1115, 0.16666667
        %v1124 = vmul.f32 %v1116, 0.16666667
        %v1125 = vmul.f32 %v1117, 0.16666667
        %v1126 = vmul.f32 %v1118, 0.16666667
        %v1127 = vmul.f32 %v1119, 0.16666667
        %v1128 = vmul.f32 %v1120, 0.16666667
        %v1129 = vmul.f32 %v1121, 0.16666667
        %v1130 = vmul.f32 %v1122, 0.16666667
        %v1131 = vpack.c.bf16 %v1123, %v1123
        %v1132 = vpack.c.bf16 %v1124, %v1124
        %v1133 = vpack.c.bf16 %v1125, %v1125
        %v1134 = vpack.c.bf16 %v1126, %v1126
        %v1135 = vpack.c.bf16 %v1127, %v1127
        %v1136 = vpack.c.bf16 %v1128, %v1128
        %v1137 = vpack.c.bf16 %v1129, %v1129
        %v1138 = vpack.c.bf16 %v1130, %v1130
        %v1139 = vld [vmem:[%s3] sm:$0xf]
        %v1140 = vld [vmem:[%s3 + $0x4] sm:$0xf]
        %v1141 = vld [vmem:[%s3 + $0x8] sm:$0xf]
        %v1142 = vld [vmem:[%s3 + $0xc] sm:$0xf]
        %v1143 = vld [vmem:[%s3 + $0x10] sm:$0xf]
        %v1144 = vld [vmem:[%s3 + $0x14] sm:$0xf]
        %v1145 = vld [vmem:[%s3 + $0x18] sm:$0xf]
        %v1146 = vld [vmem:[%s3 + $0x1c] sm:$0xf]
        %v1147 = vld [vmem:[%s3 + $0x20] sm:$0xf]
        %v1148 = vld [vmem:[%s3 + $0x24] sm:$0xf]
        %v1149 = vld [vmem:[%s3 + $0x28] sm:$0xf]
        %v1150 = vld [vmem:[%s3 + $0x2c] sm:$0xf]
        %v1151 = vld [vmem:[%s3 + $0x30] sm:$0xf]
        %v1152 = vld [vmem:[%s3 + $0x34] sm:$0xf]
        %v1153 = vld [vmem:[%s3 + $0x38] sm:$0xf]
        %v1154 = vld [vmem:[%s3 + $0x3c] sm:$0xf]
        %v1155 = vld [vmem:[%s4] sm:$0x1]
        %v1157 = vlaneseq
        %v1158 = vshrl.u32 %v1157, 7
        %v1159 = vsub.s32 0, %v1158
        %v1160 = vrot.slane %v1155, %v1159
        %v1170 = vunpack.c.l.b16 %v1131
        %v1171 = vunpack.c.l.b16 %v1132
        %v1172 = vunpack.c.l.b16 %v1133
        %v1173 = vunpack.c.l.b16 %v1134
        %v1174 = vunpack.c.l.b16 %v1135
        %v1175 = vunpack.c.l.b16 %v1136
        %v1176 = vunpack.c.l.b16 %v1137
        %v1177 = vunpack.c.l.b16 %v1138
        %v1178 = vpack.c.b16 %v1171, %v1170
        %v1179 = vpack.c.b16 %v1173, %v1172
        %v1180 = vpack.c.b16 %v1175, %v1174
        %v1181 = vpack.c.b16 %v1177, %v1176
        %v1202 = vunpack.c.l.b16 %v1139
        %v1203 = vunpack.c.l.b16 %v1140
        %v1204 = vunpack.c.l.b16 %v1141
        %v1205 = vunpack.c.l.b16 %v1142
        %v1206 = vunpack.c.l.b16 %v1143
        %v1207 = vunpack.c.l.b16 %v1144
        %v1208 = vunpack.c.l.b16 %v1145
        %v1209 = vunpack.c.l.b16 %v1146
        %v1210 = vunpack.c.l.b16 %v1147
        %v1211 = vunpack.c.l.b16 %v1148
        %v1212 = vunpack.c.l.b16 %v1149
        %v1213 = vunpack.c.l.b16 %v1150
        %v1214 = vunpack.c.l.b16 %v1151
        %v1215 = vunpack.c.l.b16 %v1152
        %v1216 = vunpack.c.l.b16 %v1153
        %v1217 = vunpack.c.l.b16 %v1154
        %v1218 = vpack.c.b16 %v1203, %v1202
        %v1219 = vpack.c.b16 %v1205, %v1204
        %v1220 = vpack.c.b16 %v1207, %v1206
        %v1221 = vpack.c.b16 %v1209, %v1208
        %v1222 = vpack.c.b16 %v1211, %v1210
        %v1223 = vpack.c.b16 %v1213, %v1212
        %v1224 = vpack.c.b16 %v1215, %v1214
        %v1225 = vpack.c.b16 %v1217, %v1216
        %1234 = vmatprep.subr.bf16.mxu0 0
        %1235 = vmatpush1.bf16.msra.mxu0 %v1218
        %1236 = vmatprep.subr.bf16.mxu0 0
        %1237 = vmatpush1.bf16.msra.mxu0 %v1219
        %1238 = vmatprep.subr.bf16.mxu0 0
        %1239 = vmatpush1.bf16.msra.mxu0 %v1220
        %1240 = vmatprep.subr.bf16.mxu0 0
        %1241 = vmatpush1.bf16.msra.mxu0 %v1221
        %1242 = vmatprep.subr.bf16.mxu0 0
        %1243 = vmatpush1.bf16.msra.mxu0 %v1222
        %1244 = vmatprep.subr.bf16.mxu0 0
        %1245 = vmatpush1.bf16.msra.mxu0 %v1223
        %1246 = vmatprep.subr.bf16.mxu0 0
        %1247 = vmatpush1.bf16.msra.mxu0 %v1224
        %1248 = vmatprep.subr.bf16.mxu0 0
        %1249 = vmatpush1.bf16.msra.mxu0 %v1225
        %1250 = vmatprep.subr.bf16.mxu0 0
        %1251 = vmatpush1.bf16.msra.mxu0 0
        %1252 = vmatprep.subr.bf16.mxu0 0
        %1253 = vmatpush1.bf16.msra.mxu0 0
        %1254 = vmatprep.subr.bf16.mxu0 0
        %1255 = vmatpush1.bf16.msra.mxu0 0
        %1256 = vmatprep.subr.bf16.mxu0 0
        %1257 = vmatpush1.bf16.msra.mxu0 0
        %1258 = vmatprep.subr.bf16.mxu0 0
        %1259 = vmatpush1.bf16.msra.mxu0 0
        %1260 = vmatprep.subr.bf16.mxu0 0
        %1261 = vmatpush1.bf16.msra.mxu0 0
        %1262 = vmatprep.subr.bf16.mxu0 0
        %1263 = vmatpush1.bf16.msra.mxu0 0
        %1264 = vmatprep.subr.bf16.mxu0 0
        %1265 = vmatpush1.bf16.msra.mxu0 0
        %1266 = vmatprep.mubr.bf16.mxu0 0
        %1267 = vmatmul.mubr.bf16.gmra.mrb[0].mxu0 %v1178
        %v1268 = vpop.f32.mrb[0].mxu0
        %v1269 = vadd.f32 %v1160, %v1268
        %v1270 = vpop.f32.mrb[0].mxu0
        %v1271 = vpop.f32.mrb[0].mxu0
        %v1272 = vadd.f32 %v1160, %v1271
        %v1273 = vpop.f32.mrb[0].mxu0
        %1274 = vmatprep.mubr.bf16.mxu0 0
        %1275 = vmatmul.mubr.bf16.gmra.mrb[0].mxu0 %v1179
        %v1276 = vpop.f32.mrb[0].mxu0
        %v1277 = vadd.f32 %v1160, %v1276
        %v1278 = vpop.f32.mrb[0].mxu0
        %v1279 = vpop.f32.mrb[0].mxu0
        %v1280 = vadd.f32 %v1160, %v1279
        %v1281 = vpop.f32.mrb[0].mxu0
        %1282 = vmatprep.mubr.bf16.mxu0 0
        %1283 = vmatmul.mubr.bf16.gmra.mrb[0].mxu0 %v1180
        %v1284 = vpop.f32.mrb[0].mxu0
        %v1285 = vadd.f32 %v1160, %v1284
        %v1286 = vpop.f32.mrb[0].mxu0
        %v1287 = vpop.f32.mrb[0].mxu0
        %v1288 = vadd.f32 %v1160, %v1287
        %v1289 = vpop.f32.mrb[0].mxu0
        %1290 = vmatprep.mubr.bf16.mxu0 0
        %1291 = vmatmul.mubr.bf16.gmra.mrb[0].mxu0 %v1181
        %v1292 = vpop.f32.mrb[0].mxu0
        %v1293 = vadd.f32 %v1160, %v1292
        %v1294 = vpop.f32.mrb[0].mxu0
        %v1295 = vpop.f32.mrb[0].mxu0
        %v1296 = vadd.f32 %v1160, %v1295
        %v1297 = vpop.f32.mrb[0].mxu0
        %1298 = vdwg.mxu0
        %v1299 = vadd.f32 %v1269, 3.0
        %v1300 = vadd.f32 %v1272, 3.0
        %v1301 = vadd.f32 %v1277, 3.0
        %v1302 = vadd.f32 %v1280, 3.0
        %v1303 = vadd.f32 %v1285, 3.0
        %v1304 = vadd.f32 %v1288, 3.0
        %v1305 = vadd.f32 %v1293, 3.0
        %v1306 = vadd.f32 %v1296, 3.0
        %v1307 = vmax.f32 %v1299, 0.0
        %v1308 = vmax.f32 %v1300, 0.0
        %v1309 = vmax.f32 %v1301, 0.0
        %v1310 = vmax.f32 %v1302, 0.0
        %v1311 = vmax.f32 %v1303, 0.0
        %v1312 = vmax.f32 %v1304, 0.0
        %v1313 = vmax.f32 %v1305, 0.0
        %v1314 = vmax.f32 %v1306, 0.0
        %v1315 = vmin.f32 %v1307, 6.0
        %v1316 = vmin.f32 %v1308, 6.0
        %v1317 = vmin.f32 %v1309, 6.0
        %v1318 = vmin.f32 %v1310, 6.0
        %v1319 = vmin.f32 %v1311, 6.0
        %v1320 = vmin.f32 %v1312, 6.0
        %v1321 = vmin.f32 %v1313, 6.0
        %v1322 = vmin.f32 %v1314, 6.0
        %v1323 = vmul.f32 %v1269, %v1315
        %v1324 = vmul.f32 %v1272, %v1316
        %v1325 = vmul.f32 %v1277, %v1317
        %v1326 = vmul.f32 %v1280, %v1318
        %v1327 = vmul.f32 %v1285, %v1319
        %v1328 = vmul.f32 %v1288, %v1320
        %v1329 = vmul.f32 %v1293, %v1321
        %v1330 = vmul.f32 %v1296, %v1322
        %v1331 = vmul.f32 %v1323, 0.16666667
        %v1332 = vmul.f32 %v1324, 0.16666667
        %v1333 = vmul.f32 %v1325, 0.16666667
        %v1334 = vmul.f32 %v1326, 0.16666667
        %v1335 = vmul.f32 %v1327, 0.16666667
        %v1336 = vmul.f32 %v1328, 0.16666667
        %v1337 = vmul.f32 %v1329, 0.16666667
        %v1338 = vmul.f32 %v1330, 0.16666667
        %v1339 = vpack.c.bf16 %v1331, %v1331
        %v1340 = vpack.c.bf16 %v1332, %v1332
        %v1341 = vpack.c.bf16 %v1333, %v1333
        %v1342 = vpack.c.bf16 %v1334, %v1334
        %v1343 = vpack.c.bf16 %v1335, %v1335
        %v1344 = vpack.c.bf16 %v1336, %v1336
        %v1345 = vpack.c.bf16 %v1337, %v1337
        %v1346 = vpack.c.bf16 %v1338, %v1338
        %1347 = vst [vmem:[%s550] sm:$0xf] %v1339
        %1348 = vst [vmem:[%s550 + $0x4] sm:$0xf] %v1340
        %1349 = vst [vmem:[%s550 + $0x8] sm:$0xf] %v1341
        %1350 = vst [vmem:[%s550 + $0xc] sm:$0xf] %v1342
        %1351 = vst [vmem:[%s550 + $0x10] sm:$0xf] %v1343
        %1352 = vst [vmem:[%s550 + $0x14] sm:$0xf] %v1344
        %1353 = vst [vmem:[%s550 + $0x18] sm:$0xf] %v1345
        %1354 = vst [vmem:[%s550 + $0x1c] sm:$0xf] %v1346
        %p1355 = scmp.lt.s32.totalorder %s16, 1
        %s1356 = scalar_select %p1355, %s16, 1
        %s1357 = smul.addr %s1356, 8
        %s1358 = smul.addr %s1357, 4
        %s1359 = scalar_lea.vmem %s5, %s1358
        // Predicated region
        $region82: #{forward.9} parent=76 // pred_check
          %p1360 = pneg %p144
        $region83: #{forward.9} parent=76 // pred_check_branch
          %1362 = sbr.rel (%p1360) target = $region85
        $region84: #{forward.9} parent=76 // pred_region
          _
        $region85: #{forward.9} parent=76 // pred_fallthru
          _
      $region77: #{forward.9} parent=5 // pred_fallthru
        _
      %p1363 = scmp.le.s32.totalorder 2, %s11
      // Predicated region
      $region86: #{forward.9} parent=5 // pred_check
        %p1364 = pneg %p1363
      $region87: #{forward.9} parent=5 // pred_check_branch
        %1366 = sbr.rel (%p1364) target = $region89
      $region88: #{forward.9} parent=5 // pred_region
        %s1367 = ssub.s32 %s11, 2
        // Predicated region
        $region90: #{forward.9} parent=88 // pred_check
          %p1368 = pneg %p150
        $region91: #{forward.9} parent=88 // pred_check_branch
          %1370 = sbr.rel (%p1368) target = $region93
        $region92: #{forward.9} parent=88 // pred_region
          %p1371 = scmp.lt.s32.totalorder %s17, 1
          %s1372 = scalar_select %p1371, %s17, 1
          %s1373 = smul.addr %s1372, 8
          %s1374 = smul.addr %s1373, 4
          %s1375 = scalar_lea.vmem %s5, %s1374
        $region93: #{forward.9} parent=88 // pred_fallthru
          _
      $region89: #{forward.9} parent=5 // pred_fallthru
        _
    $region6: #{forward.9} parent=1 // loop_footer
      %s15 = sadd.s32 1, %s11
    $region7: #{forward.9} parent=1 // loop_footer_branch
      %10 = sbr.rel target = $region3
    $region8: #{forward.9} parent=1 // loop_exit
      _

// kernel: forward.10
$region0: #{forward.10}
  #allocation0 [shape = 'u32[]', space=smem, size = 0x4, offset = 0x4, fixed_abs, tag = 'smem constant byte address 0x4 - core index']
  #allocation1 [shape = 'u32[144,128]{1,0:T(1,128)}', space=vmem, size = 0x12000, scoped, tag = 'internal scratch']
  %s0 = inlined_call_operand.vmem [shape: bf16[4,2,5,5,128], index: 0, kind: input, shape index: {}]
  %s1 = inlined_call_operand.vmem [shape: bf16[9,1,128], index: 1, kind: input, shape index: {}]
  %s2 = inlined_call_operand.vmem [shape: f32[1,128], index: 2, kind: input, shape index: {}]
  %s3 = inlined_call_operand.vmem [shape: bf16[128,128], index: 3, kind: input, shape index: {}]
  %s4 = inlined_call_operand.vmem [shape: f32[1,128], index: 4, kind: input, shape index: {}]
  %s5 = inlined_call_operand.vmem [shape: bf16[2,4,4,128], index: 5, kind: output, shape index: {}]
  %s6 = sld [smem:[#allocation0]]
  $region94: #{forward.10} parent=0
    _
  %s8 = ssub.s32 1, %s6
  %s9 = scalar_select 0, %s8, %s6
  $region1: #{forward.10} parent=0
    #allocation2 [shape = 'u8[81920]{0}', space=vmem, size = 0x14000, scoped, tag = 'input window, operand 0']
    loop: start=0, step=1, limit=4
    $region2: #{forward.10} parent=1 // loop_pre_header
      _
    $region3: #{forward.10} parent=1 // loop_header
      %s11 = sphi 0, %s15
      %p12 = scmp.ge.s32.totalorder %s11, 4
      %s21 = sphi 0, %s23
      %s24 = sphi 0, %s21
      %s25 = sphi 0, %s24
      %s41 = sphi 0, %s25
      %s45 = sphi 0, %s45
      %s47 = sphi 0, %s45
      %s48 = sphi 0, %s47
      %s62 = sphi 0, %s48
      %s66 = sphi 0, %s66
      %s68 = sphi 0, %s66
      %s69 = sphi 0, %s68
      %s83 = sphi 0, %s69
      %s87 = sphi 0, %s87
      %s89 = sphi 0, %s87
      %s90 = sphi 0, %s89
      %s104 = sphi 0, %s90
      %s108 = sphi 0, %s108
      %s110 = sphi 0, %s108
      %s111 = sphi 0, %s110
      %s125 = sphi 0, %s111
      %s131 = sphi 0, %s133
      %s134 = sphi 0, %s131
      %s135 = sphi 0, %s134
      %s151 = sphi 0, %s135
    $region4: #{forward.10} parent=1 // loop_header_branch
      %14 = sbr.rel (%p12) target = $region8
    $region5: #{forward.10} parent=1 // loop_body
      %s16 = ssub.s32 %s11, 1
      %s17 = ssub.s32 %s11, 2
      %s18 = sadd.s32 %s11, 1
      %s19 = ssub.s32 %s11, %s18
      %p20 = scmp.eq.s32.totalorder %s19, 0
      %s22 = sadd.s32 %s21, 1
      %s23 = scalar_select %p20, %s21, %s22
      %p26 = pneg %p20
      %p27 = scmp.eq.s32.totalorder %s11, 1
      %p28 = por %p26, %p27
      %p29 = scmp.ne.s32.totalorder %s21, %s24
      %p30 = scmp.eq.s32.totalorder %s11, 0
      %p31 = por %p29, %p30
      %p32 = scmp.ne.s32.totalorder %s21, %s24
      %p33 = scmp.eq.s32.totalorder %s16, 1
      %p34 = por %p32, %p33
      %p35 = scmp.ne.s32.totalorder %s24, %s25
      %p36 = scmp.eq.s32.totalorder %s16, 0
      %p37 = por %p35, %p36
      %p38 = scmp.ne.s32.totalorder %s24, %s25
      %p39 = scmp.eq.s32.totalorder %s17, 1
      %p40 = por %p38, %p39
      %p42 = scmp.ne.s32.totalorder %s25, %s41
      %p43 = scmp.eq.s32.totalorder %s17, 0
      %p44 = por %p42, %p43
      %s46 = sadd.s32 %s45, 1
      %p49 = scmp.eq.s32.totalorder %s11, 1
      %p50 = scmp.ne.s32.totalorder %s45, %s47
      %p51 = scmp.eq.s32.totalorder %s11, 0
      %p52 = por %p50, %p51
      %p53 = scmp.ne.s32.totalorder %s45, %s47
      %p54 = scmp.eq.s32.totalorder %s16, 1
      %p55 = por %p53, %p54
      %p56 = scmp.ne.s32.totalorder %s47, %s48
      %p57 = scmp.eq.s32.totalorder %s16, 0
      %p58 = por %p56, %p57
      %p59 = scmp.ne.s32.totalorder %s47, %s48
      %p60 = scmp.eq.s32.totalorder %s17, 1
      %p61 = por %p59, %p60
      %p63 = scmp.ne.s32.totalorder %s48, %s62
      %p64 = scmp.eq.s32.totalorder %s17, 0
      %p65 = por %p63, %p64
      %s67 = sadd.s32 %s66, 1
      %p70 = scmp.eq.s32.totalorder %s11, 1
      %p71 = scmp.ne.s32.totalorder %s66, %s68
      %p72 = scmp.eq.s32.totalorder %s11, 0
      %p73 = por %p71, %p72
      %p74 = scmp.ne.s32.totalorder %s66, %s68
      %p75 = scmp.eq.s32.totalorder %s16, 1
      %p76 = por %p74, %p75
      %p77 = scmp.ne.s32.totalorder %s68, %s69
      %p78 = scmp.eq.s32.totalorder %s16, 0
      %p79 = por %p77, %p78
      %p80 = scmp.ne.s32.totalorder %s68, %s69
      %p81 = scmp.eq.s32.totalorder %s17, 1
      %p82 = por %p80, %p81
      %p84 = scmp.ne.s32.totalorder %s69, %s83
      %p85 = scmp.eq.s32.totalorder %s17, 0
      %p86 = por %p84, %p85
      %s88 = sadd.s32 %s87, 1
      %p91 = scmp.eq.s32.totalorder %s11, 1
      %p92 = scmp.ne.s32.totalorder %s87, %s89
      %p93 = scmp.eq.s32.totalorder %s11, 0
      %p94 = por %p92, %p93
      %p95 = scmp.ne.s32.totalorder %s87, %s89
      %p96 = scmp.eq.s32.totalorder %s16, 1
      %p97 = por %p95, %p96
      %p98 = scmp.ne.s32.totalorder %s89, %s90
      %p99 = scmp.eq.s32.totalorder %s16, 0
      %p100 = por %p98, %p99
      %p101 = scmp.ne.s32.totalorder %s89, %s90
      %p102 = scmp.eq.s32.totalorder %s17, 1
      %p103 = por %p101, %p102
      %p105 = scmp.ne.s32.totalorder %s90, %s104
      %p106 = scmp.eq.s32.totalorder %s17, 0
      %p107 = por %p105, %p106
      %s109 = sadd.s32 %s108, 1
      %p112 = scmp.eq.s32.totalorder %s11, 1
      %p113 = scmp.ne.s32.totalorder %s108, %s110
      %p114 = scmp.eq.s32.totalorder %s11, 0
      %p115 = por %p113, %p114
      %p116 = scmp.ne.s32.totalorder %s108, %s110
      %p117 = scmp.eq.s32.totalorder %s16, 1
      %p118 = por %p116, %p117
      %p119 = scmp.ne.s32.totalorder %s110, %s111
      %p120 = scmp.eq.s32.totalorder %s16, 0
      %p121 = por %p119, %p120
      %p122 = scmp.ne.s32.totalorder %s110, %s111
      %p123 = scmp.eq.s32.totalorder %s17, 1
      %p124 = por %p122, %p123
      %p126 = scmp.ne.s32.totalorder %s111, %s125
      %p127 = scmp.eq.s32.totalorder %s17, 0
      %p128 = por %p126, %p127
      %s129 = ssub.s32 %s11, %s18
      %p130 = scmp.eq.s32.totalorder %s129, 0
      %s132 = sadd.s32 %s131, 1
      %s133 = scalar_select %p130, %s131, %s132
      %p136 = pneg %p130
      %p137 = scmp.eq.s32.totalorder %s11, 1
      %p138 = por %p136, %p137
      %p139 = scmp.ne.s32.totalorder %s131, %s134
      %p140 = scmp.eq.s32.totalorder %s11, 0
      %p141 = por %p139, %p140
      %p142 = scmp.ne.s32.totalorder %s131, %s134
      %p143 = scmp.eq.s32.totalorder %s16, 1
      %p144 = por %p142, %p143
      %p145 = scmp.ne.s32.totalorder %s134, %s135
      %p146 = scmp.eq.s32.totalorder %s16, 0
      %p147 = por %p145, %p146
      %p148 = scmp.ne.s32.totalorder %s134, %s135
      %p149 = scmp.eq.s32.totalorder %s17, 1
      %p150 = por %p148, %p149
      %p152 = scmp.ne.s32.totalorder %s135, %s151
      %p153 = scmp.eq.s32.totalorder %s17, 0
      %p154 = por %p152, %p153
      %p155 = scmp.le.s32.totalorder 1, %s11
      %p156 = scmp.lt.s32.totalorder %s11, 3
      %p157 = pnand %p155, %p156
      %p158 = pneg %p157
      // Predicated region
      $region9: #{forward.10} parent=5 // pred_check
        _
      $region10: #{forward.10} parent=5 // pred_check_branch
        %160 = sbr.rel (%p157) target = $region12
      $region11: #{forward.10} parent=5 // pred_region
        %s161 = ssub.s32 %s11, 1
        // Predicated region
        $region13: #{forward.10} parent=11 // pred_check
          %p162 = pneg %p58
        $region14: #{forward.10} parent=11 // pred_check_branch
          %164 = sbr.rel (%p162) target = $region16
        $region15: #{forward.10} parent=11 // pred_region
          _
        $region16: #{forward.10} parent=11 // pred_fallthru
          _
        // Predicated region
        $region17: #{forward.10} parent=11 // pred_check
          %p165 = pneg %p79
        $region18: #{forward.10} parent=11 // pred_check_branch
          %167 = sbr.rel (%p165) target = $region20
        $region19: #{forward.10} parent=11 // pred_region
          _
        $region20: #{forward.10} parent=11 // pred_fallthru
          _
        // Predicated region
        $region21: #{forward.10} parent=11 // pred_check
          %p168 = pneg %p100
        $region22: #{forward.10} parent=11 // pred_check_branch
          %170 = sbr.rel (%p168) target = $region24
        $region23: #{forward.10} parent=11 // pred_region
          _
        $region24: #{forward.10} parent=11 // pred_fallthru
          _
        // Predicated region
        $region25: #{forward.10} parent=11 // pred_check
          %p171 = pneg %p121
        $region26: #{forward.10} parent=11 // pred_check_branch
          %173 = sbr.rel (%p171) target = $region28
        $region27: #{forward.10} parent=11 // pred_region
          _
        $region28: #{forward.10} parent=11 // pred_fallthru
          _
      $region12: #{forward.10} parent=5 // pred_fallthru
        _
      %p174 = scmp.lt.s32.totalorder %s11, 2
      // Predicated region
      $region29: #{forward.10} parent=5 // pred_check
        %p175 = pneg %p174
      $region30: #{forward.10} parent=5 // pred_check_branch
        %177 = sbr.rel (%p175) target = $region32
      $region31: #{forward.10} parent=5 // pred_region
        // Predicated region
        $region33: #{forward.10} parent=31 // pred_check
          %p178 = pneg %p31
        $region34: #{forward.10} parent=31 // pred_check_branch
          %180 = sbr.rel (%p178) target = $region36
        $region35: #{forward.10} parent=31 // pred_region
          %s181 = sand.u32 %s21, 1
          %s182 = sand.u32 %s21, 1
          %s183 = smul.addr %s182, 80
          %s184 = scalar_lea.vmem [#allocation2], %s183
          %s185 = smul.addr %s11, 5
          %s186 = smul.addr %s185, 4
          %s187 = scalar_lea.vmem %s0, %s186
          // Predicated region
          $region37: #{forward.10} parent=35 // pred_check
            _
          $region38: #{forward.10} parent=35 // pred_check_branch
            %189 = sbr.rel (0) target = $region40
          $region39: #{forward.10} parent=35 // pred_region
            // Predicated region
            $region41: #{forward.10} parent=39 // pred_check
              _
            $region42: #{forward.10} parent=39 // pred_check_branch
              %191 = sbr.rel target = $region44
            $region43: #{forward.10} parent=39 // pred_region
              // Predicated region
              $region56: #{forward.10} parent=43 // pred_check
                _
              $region57: #{forward.10} parent=43 // pred_check_branch
                %244 = sbr.rel (0) target = $region59
              $region58: #{forward.10} parent=43 // pred_region
                loop: start=0, step=1, limit=1
                $region60: #{forward.10} parent=58 // loop_pre_header
                  _
                $region61: #{forward.10} parent=58 // loop_header
                  %s246 = sphi 0, %s250
                  %p247 = scmp.ge.s32.totalorder %s246, 1
                  %s251 = sphi %s187, %s187
                  %s252 = sphi %s184, %s184
                $region62: #{forward.10} parent=58 // loop_header_branch
                  %249 = sbr.rel (%p247) target = $region66
                $region63: #{forward.10} parent=58 // loop_body
                  _
                $region64: #{forward.10} parent=58 // loop_footer
                  %s250 = sadd.s32 1, %s246
                $region65: #{forward.10} parent=58 // loop_footer_branch
                  %245 = sbr.rel target = $region61
                $region66: #{forward.10} parent=58 // loop_exit
                  _
                loop: start=0, step=1, limit=1
                $region67: #{forward.10} parent=58 // loop_pre_header
                  _
                $region68: #{forward.10} parent=58 // loop_header
                  %s255 = sphi 0, %s259
                  %p256 = scmp.ge.s32.totalorder %s255, 1
                  %s260 = sphi %s187, %s187
                  %s261 = sphi %s184, %s184
                $region69: #{forward.10} parent=58 // loop_header_branch
                  %258 = sbr.rel (%p256) target = $region73
                $region70: #{forward.10} parent=58 // loop_body
                  %v262 = vld [vmem:[%s260] sm:$0xf]
                  %263 = vst [vmem:[%s261] sm:$0xf] %v262
                  %v264 = vld [vmem:[%s260 + $0x4] sm:$0xf]
                  %265 = vst [vmem:[%s261 + $0x4] sm:$0xf] %v264
                  %v266 = vld [vmem:[%s260 + $0x8] sm:$0xf]
                  %267 = vst [vmem:[%s261 + $0x8] sm:$0xf] %v266
                  %v268 = vld [vmem:[%s260 + $0xc] sm:$0xf]
                  %269 = vst [vmem:[%s261 + $0xc] sm:$0xf] %v268
                  %v270 = vld [vmem:[%s260 + $0x10] sm:$0xf]
                  %271 = vst [vmem:[%s261 + $0x10] sm:$0xf] %v270
                  %v272 = vld [vmem:[%s260 + $0x28] sm:$0xf]
                  %273 = vst [vmem:[%s261 + $0x14] sm:$0xf] %v272
                  %v274 = vld [vmem:[%s260 + $0x2c] sm:$0xf]
                  %275 = vst [vmem:[%s261 + $0x18] sm:$0xf] %v274
                  %v276 = vld [vmem:[%s260 + $0x30] sm:$0xf]
                  %277 = vst [vmem:[%s261 + $0x1c] sm:$0xf] %v276
                  %v278 = vld [vmem:[%s260 + $0x34] sm:$0xf]
                  %279 = vst [vmem:[%s261 + $0x20] sm:$0xf] %v278
                  %v280 = vld [vmem:[%s260 + $0x38] sm:$0xf]
                  %281 = vst [vmem:[%s261 + $0x24] sm:$0xf] %v280
                  %v282 = vld [vmem:[%s260 + $0x50] sm:$0xf]
                  %283 = vst [vmem:[%s261 + $0x28] sm:$0xf] %v282
                  %v284 = vld [vmem:[%s260 + $0x54] sm:$0xf]
                  %285 = vst [vmem:[%s261 + $0x2c] sm:$0xf] %v284
                  %v286 = vld [vmem:[%s260 + $0x58] sm:$0xf]
                  %287 = vst [vmem:[%s261 + $0x30] sm:$0xf] %v286
                  %v288 = vld [vmem:[%s260 + $0x5c] sm:$0xf]
                  %289 = vst [vmem:[%s261 + $0x34] sm:$0xf] %v288
                  %v290 = vld [vmem:[%s260 + $0x60] sm:$0xf]
                  %291 = vst [vmem:[%s261 + $0x38] sm:$0xf] %v290
                  %v292 = vld [vmem:[%s260 + $0x78] sm:$0xf]
                  %293 = vst [vmem:[%s261 + $0x3c] sm:$0xf] %v292
                  %v294 = vld [vmem:[%s260 + $0x7c] sm:$0xf]
                  %295 = vst [vmem:[%s261 + $0x40] sm:$0xf] %v294
                  %v296 = vld [vmem:[%s260 + $0x80] sm:$0xf]
                  %297 = vst [vmem:[%s261 + $0x44] sm:$0xf] %v296
                  %v298 = vld [vmem:[%s260 + $0x84] sm:$0xf]
                  %299 = vst [vmem:[%s261 + $0x48] sm:$0xf] %v298
                  %v300 = vld [vmem:[%s260 + $0x88] sm:$0xf]
                  %301 = vst [vmem:[%s261 + $0x4c] sm:$0xf] %v300
                $region71: #{forward.10} parent=58 // loop_footer
                  %s259 = sadd.s32 1, %s255
                $region72: #{forward.10} parent=58 // loop_footer_branch
                  %254 = sbr.rel target = $region68
                $region73: #{forward.10} parent=58 // loop_exit
                  _
              $region59: #{forward.10} parent=43 // pred_fallthru
                _
            $region44: #{forward.10} parent=39 // pred_fallthru
              _
            // Predicated region
            $region45: #{forward.10} parent=39 // pred_check
              _
            $region46: #{forward.10} parent=39 // pred_check_branch
              %193 = sbr.rel (0) target = $region48
            $region47: #{forward.10} parent=39 // pred_region
              loop: start=0, step=1, limit=1
              $region49: #{forward.10} parent=47 // loop_pre_header
                _
              $region50: #{forward.10} parent=47 // loop_header
                %s196 = sphi 0, %s200
                %p197 = scmp.ge.s32.totalorder %s196, 1
                %s201 = sphi %s187, %s187
                %s202 = sphi %s184, %s184
              $region51: #{forward.10} parent=47 // loop_header_branch
                %199 = sbr.rel (%p197) target = $region55
              $region52: #{forward.10} parent=47 // loop_body
                %v203 = vld [vmem:[%s201] sm:$0xf]
                %204 = vst [vmem:[%s202] sm:$0xf] %v203
                %v205 = vld [vmem:[%s201 + $0x4] sm:$0xf]
                %206 = vst [vmem:[%s202 + $0x4] sm:$0xf] %v205
                %v207 = vld [vmem:[%s201 + $0x8] sm:$0xf]
                %208 = vst [vmem:[%s202 + $0x8] sm:$0xf] %v207
                %v209 = vld [vmem:[%s201 + $0xc] sm:$0xf]
                %210 = vst [vmem:[%s202 + $0xc] sm:$0xf] %v209
                %v211 = vld [vmem:[%s201 + $0x10] sm:$0xf]
                %212 = vst [vmem:[%s202 + $0x10] sm:$0xf] %v211
                %v213 = vld [vmem:[%s201 + $0x28] sm:$0xf]
                %214 = vst [vmem:[%s202 + $0x14] sm:$0xf] %v213
                %v215 = vld [vmem:[%s201 + $0x2c] sm:$0xf]
                %216 = vst [vmem:[%s202 + $0x18] sm:$0xf] %v215
                %v217 = vld [vmem:[%s201 + $0x30] sm:$0xf]
                %218 = vst [vmem:[%s202 + $0x1c] sm:$0xf] %v217
                %v219 = vld [vmem:[%s201 + $0x34] sm:$0xf]
                %220 = vst [vmem:[%s202 + $0x20] sm:$0xf] %v219
                %v221 = vld [vmem:[%s201 + $0x38] sm:$0xf]
                %222 = vst [vmem:[%s202 + $0x24] sm:$0xf] %v221
                %v223 = vld [vmem:[%s201 + $0x50] sm:$0xf]
                %224 = vst [vmem:[%s202 + $0x28] sm:$0xf] %v223
                %v225 = vld [vmem:[%s201 + $0x54] sm:$0xf]
                %226 = vst [vmem:[%s202 + $0x2c] sm:$0xf] %v225
                %v227 = vld [vmem:[%s201 + $0x58] sm:$0xf]
                %228 = vst [vmem:[%s202 + $0x30] sm:$0xf] %v227
                %v229 = vld [vmem:[%s201 + $0x5c] sm:$0xf]
                %230 = vst [vmem:[%s202 + $0x34] sm:$0xf] %v229
                %v231 = vld [vmem:[%s201 + $0x60] sm:$0xf]
                %232 = vst [vmem:[%s202 + $0x38] sm:$0xf] %v231
                %v233 = vld [vmem:[%s201 + $0x78] sm:$0xf]
                %234 = vst [vmem:[%s202 + $0x3c] sm:$0xf] %v233
                %v235 = vld [vmem:[%s201 + $0x7c] sm:$0xf]
                %236 = vst [vmem:[%s202 + $0x40] sm:$0xf] %v235
                %v237 = vld [vmem:[%s201 + $0x80] sm:$0xf]
                %238 = vst [vmem:[%s202 + $0x44] sm:$0xf] %v237
                %v239 = vld [vmem:[%s201 + $0x84] sm:$0xf]
                %240 = vst [vmem:[%s202 + $0x48] sm:$0xf] %v239
                %v241 = vld [vmem:[%s201 + $0x88] sm:$0xf]
                %242 = vst [vmem:[%s202 + $0x4c] sm:$0xf] %v241
              $region53: #{forward.10} parent=47 // loop_footer
                %s200 = sadd.s32 1, %s196
              $region54: #{forward.10} parent=47 // loop_footer_branch
                %195 = sbr.rel target = $region50
              $region55: #{forward.10} parent=47 // loop_exit
                _
            $region48: #{forward.10} parent=39 // pred_fallthru
              _
          $region40: #{forward.10} parent=35 // pred_fallthru
            _
          %302 = vnop
        $region36: #{forward.10} parent=31 // pred_fallthru
          _
      $region32: #{forward.10} parent=5 // pred_fallthru
        _
      %p303 = scmp.le.s32.totalorder 1, %s11
      %p304 = scmp.lt.s32.totalorder %s11, 3
      %p305 = pnand %p303, %p304
      %p306 = pneg %p305
      // Predicated region
      $region74: #{forward.10} parent=5 // pred_check
        _
      $region75: #{forward.10} parent=5 // pred_check_branch
        %308 = sbr.rel (%p305) target = $region77
      $region76: #{forward.10} parent=5 // pred_region
        %s309 = ssub.s32 %s11, 1
        %s310 = sand.u32 %s24, 1
        %s311 = sand.u32 %s24, 1
        %s312 = smul.addr %s311, 80
        %s313 = scalar_lea.vmem [#allocation2], %s312
        // Predicated region
        $region78: #{forward.10} parent=76 // pred_check
          %p314 = pneg %p37
        $region79: #{forward.10} parent=76 // pred_check_branch
          %316 = sbr.rel (%p314) target = $region81
        $region80: #{forward.10} parent=76 // pred_region
          _
        $region81: #{forward.10} parent=76 // pred_fallthru
          _
        %s317 = sand.u32 %s24, 1
        %s318 = sand.u32 %s24, 1
        %s319 = smul.addr %s318, 80
        %s320 = scalar_lea.vmem [#allocation2], %s319
        %p321 = pneg %p37
        %p322 = pneg %p34
        %p323 = pneg %p58
        %p324 = pneg %p55
        %p325 = pneg %p79
        %p326 = pneg %p76
        %p327 = pneg %p100
        %p328 = pneg %p97
        %p329 = pneg %p121
        %p330 = pneg %p118
        %p331 = pneg %p147
        %p332 = pneg %p144
        %p333 = scmp.lt.s32.totalorder %s16, 1
        %s334 = scalar_select %p333, %s16, 1
        %s335 = smul.addr %s334, 4
        %s336 = smul.addr %s335, 2
        %s337 = scalar_lea.vmem %s5, %s336
        %p338 = scmp.lt.s32.totalorder %s16, 1
        %s339 = scalar_select %p338, %s16, 1
        %s340 = smul.addr %s339, 4
        %s341 = smul.addr %s340, 2
        %s342 = scalar_lea.vmem %s5, %s341
        %v344 = vld [vmem:[%s313] sm:$0x3]
        %v345 = vld [vmem:[%s313 + $0x4] sm:$0x3]
        %v346 = vld [vmem:[%s313 + $0x8] sm:$0x3]
        %v347 = vld [vmem:[%s313 + $0xc] sm:$0x3]
        %v348 = vunpack.c.l.bf16 %v344
        %v349 = vunpack.c.l.bf16 %v345
        %v350 = vunpack.c.l.bf16 %v346
        %v351 = vunpack.c.l.bf16 %v347
        %v352 = vld [vmem:[%s1] sm:$0x1]
        %v353 = vunpack.c.l.bf16 %v352
        %v354 = vlaneseq
        %v355 = vshrl.u32 %v354, 7
        %v356 = vsub.s32 0, %v355
        %v357 = vrot.slane %v353, %v356
        %v358 = vmul.f32 %v348, %v357
        %v359 = vmul.f32 %v349, %v357
        %v360 = vmul.f32 %v350, %v357
        %v361 = vmul.f32 %v351, %v357
        %v362 = vadd.f32 %v358, 0.0
        %v363 = vadd.f32 %v359, 0.0
        %v364 = vadd.f32 %v360, 0.0
        %v365 = vadd.f32 %v361, 0.0
        %s366 = scalar_lea.vmem %s313, 20 [#allocation2]
        %v367 = vld [vmem:[%s366] sm:$0x3]
        %v368 = vld [vmem:[%s366 + $0x4] sm:$0x3]
        %v369 = vld [vmem:[%s366 + $0x8] sm:$0x3]
        %v370 = vld [vmem:[%s366 + $0xc] sm:$0x3]
        %v371 = vunpack.c.l.bf16 %v367
        %v372 = vunpack.c.l.bf16 %v368
        %v373 = vunpack.c.l.bf16 %v369
        %v374 = vunpack.c.l.bf16 %v370
        %s375 = scalar_lea.vmem %s1, 1
        %v376 = vld [vmem:[%s375] sm:$0x1]
        %v377 = vunpack.c.l.bf16 %v376
        %v378 = vlaneseq
        %v379 = vshrl.u32 %v378, 7
        %v380 = vsub.s32 0, %v379
        %v381 = vrot.slane %v377, %v380
        %v382 = vmul.f32 %v371, %v381
        %v383 = vmul.f32 %v372, %v381
        %v384 = vmul.f32 %v373, %v381
        %v385 = vmul.f32 %v374, %v381
        %v386 = vadd.f32 %v362, %v382
        %v387 = vadd.f32 %v363, %v383
        %v388 = vadd.f32 %v364, %v384
        %v389 = vadd.f32 %v365, %v385
        %v390 = vld [vmem:[%s313] sm:$0x7]
        %v391 = vld [vmem:[%s313 + $0x4] sm:$0x7]
        %v392 = vld [vmem:[%s313 + $0x8] sm:$0x7]
        %v393 = vld [vmem:[%s313 + $0xc] sm:$0x7]
        %v394 = vunpack.c.l.bf16 %v390
        %v395 = vunpack.c.l.bf16 %v391
        %v396 = vunpack.c.l.bf16 %v392
        %v397 = vunpack.c.l.bf16 %v393
        %s398 = scalar_lea.vmem %s1, 2
        %v399 = vld [vmem:[%s398] sm:$0x1]
        %v400 = vunpack.c.l.bf16 %v399
        %v401 = vlaneseq
        %v402 = vshrl.u32 %v401, 7
        %v403 = vsub.s32 0, %v402
        %v404 = vrot.slane %v400, %v403
        %v405 = vmul.f32 %v394, %v404
        %v406 = vmul.f32 %v395, %v404
        %v407 = vmul.f32 %v396, %v404
        %v408 = vmul.f32 %v397, %v404
        %v413 = vrot.slane %v405, 1
        %v414 = vrot.slane %v406, 1
        %v415 = vrot.slane %v407, 1
        %v416 = vrot.slane %v408, 1
        %v421 = vadd.f32 %v386, %v413
        %v422 = vadd.f32 %v387, %v414
        %v423 = vadd.f32 %v388, %v415
        %v424 = vadd.f32 %v389, %v416
        %s425 = scalar_lea.vmem %s313, 40 [#allocation2]
        %v426 = vld [vmem:[%s425] sm:$0x3]
        %v427 = vld [vmem:[%s425 + $0x4] sm:$0x3]
        %v428 = vld [vmem:[%s425 + $0x8] sm:$0x3]
        %v429 = vld [vmem:[%s425 + $0xc] sm:$0x3]
        %v430 = vunpack.c.l.bf16 %v426
        %v431 = vunpack.c.l.bf16 %v427
        %v432 = vunpack.c.l.bf16 %v428
        %v433 = vunpack.c.l.bf16 %v429
        %s434 = scalar_lea.vmem %s1, 3
        %v435 = vld [vmem:[%s434] sm:$0x1]
        %v436 = vunpack.c.l.bf16 %v435
        %v437 = vlaneseq
        %v438 = vshrl.u32 %v437, 7
        %v439 = vsub.s32 0, %v438
        %v440 = vrot.slane %v436, %v439
        %v441 = vmul.f32 %v430, %v440
        %v442 = vmul.f32 %v431, %v440
        %v443 = vmul.f32 %v432, %v440
        %v444 = vmul.f32 %v433, %v440
        %v445 = vadd.f32 %v421, %v441
        %v446 = vadd.f32 %v422, %v442
        %v447 = vadd.f32 %v423, %v443
        %v448 = vadd.f32 %v424, %v444
        %s449 = scalar_lea.vmem %s313, 60 [#allocation2]
        %v450 = vld [vmem:[%s449] sm:$0x3]
        %v451 = vld [vmem:[%s449 + $0x4] sm:$0x3]
        %v452 = vld [vmem:[%s449 + $0x8] sm:$0x3]
        %v453 = vld [vmem:[%s449 + $0xc] sm:$0x3]
        %v454 = vunpack.c.l.bf16 %v450
        %v455 = vunpack.c.l.bf16 %v451
        %v456 = vunpack.c.l.bf16 %v452
        %v457 = vunpack.c.l.bf16 %v453
        %s458 = scalar_lea.vmem %s1, 4
        %v459 = vld [vmem:[%s458] sm:$0x1]
        %v460 = vunpack.c.l.bf16 %v459
        %v461 = vlaneseq
        %v462 = vshrl.u32 %v461, 7
        %v463 = vsub.s32 0, %v462
        %v464 = vrot.slane %v460, %v463
        %v465 = vmul.f32 %v454, %v464
        %v466 = vmul.f32 %v455, %v464
        %v467 = vmul.f32 %v456, %v464
        %v468 = vmul.f32 %v457, %v464
        %v469 = vadd.f32 %v445, %v465
        %v470 = vadd.f32 %v446, %v466
        %v471 = vadd.f32 %v447, %v467
        %v472 = vadd.f32 %v448, %v468
        %v473 = vld [vmem:[%s425] sm:$0x7]
        %v474 = vld [vmem:[%s425 + $0x4] sm:$0x7]
        %v475 = vld [vmem:[%s425 + $0x8] sm:$0x7]
        %v476 = vld [vmem:[%s425 + $0xc] sm:$0x7]
        %v477 = vunpack.c.l.bf16 %v473
        %v478 = vunpack.c.l.bf16 %v474
        %v479 = vunpack.c.l.bf16 %v475
        %v480 = vunpack.c.l.bf16 %v476
        %s481 = scalar_lea.vmem %s1, 5
        %v482 = vld [vmem:[%s481] sm:$0x1]
        %v483 = vunpack.c.l.bf16 %v482
        %v484 = vlaneseq
        %v485 = vshrl.u32 %v484, 7
        %v486 = vsub.s32 0, %v485
        %v487 = vrot.slane %v483, %v486
        %v488 = vmul.f32 %v477, %v487
        %v489 = vmul.f32 %v478, %v487
        %v490 = vmul.f32 %v479, %v487
        %v491 = vmul.f32 %v480, %v487
        %v496 = vrot.slane %v488, 1
        %v497 = vrot.slane %v489, 1
        %v498 = vrot.slane %v490, 1
        %v499 = vrot.slane %v491, 1
        %v504 = vadd.f32 %v469, %v496
        %v505 = vadd.f32 %v470, %v497
        %v506 = vadd.f32 %v471, %v498
        %v507 = vadd.f32 %v472, %v499
        %s508 = scalar_lea.vmem %s313, 4 [#allocation2]
        %v509 = vld [vmem:[%s508] sm:$0x3]
        %v510 = vld [vmem:[%s508 + $0x4] sm:$0x3]
        %v511 = vld [vmem:[%s508 + $0x8] sm:$0x3]
        %v512 = vld [vmem:[%s508 + $0xc] sm:$0x3]
        %v513 = vunpack.c.l.bf16 %v509
        %v514 = vunpack.c.l.bf16 %v510
        %v515 = vunpack.c.l.bf16 %v511
        %v516 = vunpack.c.l.bf16 %v512
        %s517 = scalar_lea.vmem %s1, 6
        %v518 = vld [vmem:[%s517] sm:$0x1]
        %v519 = vunpack.c.l.bf16 %v518
        %v520 = vlaneseq
        %v521 = vshrl.u32 %v520, 7
        %v522 = vsub.s32 0, %v521
        %v523 = vrot.slane %v519, %v522
        %v524 = vmul.f32 %v513, %v523
        %v525 = vmul.f32 %v514, %v523
        %v526 = vmul.f32 %v515, %v523
        %v527 = vmul.f32 %v516, %v523
        %v528 = vadd.f32 %v504, %v524
        %v529 = vadd.f32 %v505, %v525
        %v530 = vadd.f32 %v506, %v526
        %v531 = vadd.f32 %v507, %v527
        %s532 = scalar_lea.vmem %s313, 24 [#allocation2]
        %v533 = vld [vmem:[%s532] sm:$0x3]
        %v534 = vld [vmem:[%s532 + $0x4] sm:$0x3]
        %v535 = vld [vmem:[%s532 + $0x8] sm:$0x3]
        %v536 = vld [vmem:[%s532 + $0xc] sm:$0x3]
        %v537 = vunpack.c.l.bf16 %v533
        %v538 = vunpack.c.l.bf16 %v534
        %v539 = vunpack.c.l.bf16 %v535
        %v540 = vunpack.c.l.bf16 %v536
        %s541 = scalar_lea.vmem %s1, 7
        %v542 = vld [vmem:[%s541] sm:$0x1]
        %v543 = vunpack.c.l.bf16 %v542
        %v544 = vlaneseq
        %v545 = vshrl.u32 %v544, 7
        %v546 = vsub.s32 0, %v545
        %v547 = vrot.slane %v543, %v546
        %v548 = vmul.f32 %v537, %v547
        %v549 = vmul.f32 %v538, %v547
        %v550 = vmul.f32 %v539, %v547
        %v551 = vmul.f32 %v540, %v547
        %v552 = vadd.f32 %v528, %v548
        %v553 = vadd.f32 %v529, %v549
        %v554 = vadd.f32 %v530, %v550
        %v555 = vadd.f32 %v531, %v551
        %v556 = vld [vmem:[%s508] sm:$0x7]
        %v557 = vld [vmem:[%s508 + $0x4] sm:$0x7]
        %v558 = vld [vmem:[%s508 + $0x8] sm:$0x7]
        %v559 = vld [vmem:[%s508 + $0xc] sm:$0x7]
        %v560 = vunpack.c.l.bf16 %v556
        %v561 = vunpack.c.l.bf16 %v557
        %v562 = vunpack.c.l.bf16 %v558
        %v563 = vunpack.c.l.bf16 %v559
        %s564 = scalar_lea.vmem %s1, 8
        %v565 = vld [vmem:[%s564] sm:$0x1]
        %v566 = vunpack.c.l.bf16 %v565
        %v567 = vlaneseq
        %v568 = vshrl.u32 %v567, 7
        %v569 = vsub.s32 0, %v568
        %v570 = vrot.slane %v566, %v569
        %v571 = vmul.f32 %v560, %v570
        %v572 = vmul.f32 %v561, %v570
        %v573 = vmul.f32 %v562, %v570
        %v574 = vmul.f32 %v563, %v570
        %v579 = vrot.slane %v571, 1
        %v580 = vrot.slane %v572, 1
        %v581 = vrot.slane %v573, 1
        %v582 = vrot.slane %v574, 1
        %v587 = vadd.f32 %v552, %v579
        %v588 = vadd.f32 %v553, %v580
        %v589 = vadd.f32 %v554, %v581
        %v590 = vadd.f32 %v555, %v582
        %v591 = vld [vmem:[%s2] sm:$0x1]
        %v593 = vlaneseq
        %v594 = vshrl.u32 %v593, 7
        %v595 = vsub.s32 0, %v594
        %v596 = vrot.slane %v591, %v595
        %v598 = vadd.f32 %v587, %v596
        %v599 = vadd.f32 %v588, %v596
        %v600 = vadd.f32 %v589, %v596
        %v601 = vadd.f32 %v590, %v596
        %v602 = vadd.f32 %v598, 3.0
        %v603 = vadd.f32 %v599, 3.0
        %v604 = vadd.f32 %v600, 3.0
        %v605 = vadd.f32 %v601, 3.0
        %v606 = vmax.f32 %v602, 0.0
        %v607 = vmax.f32 %v603, 0.0
        %v608 = vmax.f32 %v604, 0.0
        %v609 = vmax.f32 %v605, 0.0
        %v610 = vmin.f32 %v606, 6.0
        %v611 = vmin.f32 %v607, 6.0
        %v612 = vmin.f32 %v608, 6.0
        %v613 = vmin.f32 %v609, 6.0
        %v614 = vmul.f32 %v598, %v610
        %v615 = vmul.f32 %v599, %v611
        %v616 = vmul.f32 %v600, %v612
        %v617 = vmul.f32 %v601, %v613
        %v618 = vmul.f32 %v614, 0.16666667
        %v619 = vmul.f32 %v615, 0.16666667
        %v620 = vmul.f32 %v616, 0.16666667
        %v621 = vmul.f32 %v617, 0.16666667
        %v622 = vpack.c.bf16 %v618, %v618
        %v623 = vpack.c.bf16 %v619, %v619
        %v624 = vpack.c.bf16 %v620, %v620
        %v625 = vpack.c.bf16 %v621, %v621
        %v626 = vld [vmem:[%s3] sm:$0xf]
        %v627 = vld [vmem:[%s3 + $0x4] sm:$0xf]
        %v628 = vld [vmem:[%s3 + $0x8] sm:$0xf]
        %v629 = vld [vmem:[%s3 + $0xc] sm:$0xf]
        %v630 = vld [vmem:[%s3 + $0x10] sm:$0xf]
        %v631 = vld [vmem:[%s3 + $0x14] sm:$0xf]
        %v632 = vld [vmem:[%s3 + $0x18] sm:$0xf]
        %v633 = vld [vmem:[%s3 + $0x1c] sm:$0xf]
        %v634 = vld [vmem:[%s3 + $0x20] sm:$0xf]
        %v635 = vld [vmem:[%s3 + $0x24] sm:$0xf]
        %v636 = vld [vmem:[%s3 + $0x28] sm:$0xf]
        %v637 = vld [vmem:[%s3 + $0x2c] sm:$0xf]
        %v638 = vld [vmem:[%s3 + $0x30] sm:$0xf]
        %v639 = vld [vmem:[%s3 + $0x34] sm:$0xf]
        %v640 = vld [vmem:[%s3 + $0x38] sm:$0xf]
        %v641 = vld [vmem:[%s3 + $0x3c] sm:$0xf]
        %v642 = vld [vmem:[%s4] sm:$0x1]
        %v644 = vlaneseq
        %v645 = vshrl.u32 %v644, 7
        %v646 = vsub.s32 0, %v645
        %v647 = vrot.slane %v642, %v646
        %v653 = vcombine.low %v622, %v623
        %v654 = vcombine.low %v624, %v625
        %v656 = vunpack.c.l.s4 1983009808
        %v657 = vunpack.c.0.s8 %v656
        %v658 = vlaneseq
        %v659 = vshrl.u32 %v658, 7
        %v660 = vsub.s32 %v657, %v659
        %v661 = vrot.slane %v653, %v660
        %v663 = vunpack.c.l.s4 1983009808
        %v664 = vunpack.c.0.s8 %v663
        %v665 = vlaneseq
        %v666 = vshrl.u32 %v665, 7
        %v667 = vsub.s32 %v664, %v666
        %v668 = vrot.slane %v654, %v667
        %v669 = vcombine.low %v661, %v668
        %v687 = vunpack.c.l.b16 %v626
        %v688 = vunpack.c.l.b16 %v627
        %v689 = vunpack.c.l.b16 %v628
        %v690 = vunpack.c.l.b16 %v629
        %v691 = vunpack.c.l.b16 %v630
        %v692 = vunpack.c.l.b16 %v631
        %v693 = vunpack.c.l.b16 %v632
        %v694 = vunpack.c.l.b16 %v633
        %v695 = vunpack.c.l.b16 %v634
        %v696 = vunpack.c.l.b16 %v635
        %v697 = vunpack.c.l.b16 %v636
        %v698 = vunpack.c.l.b16 %v637
        %v699 = vunpack.c.l.b16 %v638
        %v700 = vunpack.c.l.b16 %v639
        %v701 = vunpack.c.l.b16 %v640
        %v702 = vunpack.c.l.b16 %v641
        %v703 = vpack.c.b16 %v688, %v687
        %v704 = vpack.c.b16 %v690, %v689
        %v705 = vpack.c.b16 %v692, %v691
        %v706 = vpack.c.b16 %v694, %v693
        %v707 = vpack.c.b16 %v696, %v695
        %v708 = vpack.c.b16 %v698, %v697
        %v709 = vpack.c.b16 %v700, %v699
        %v710 = vpack.c.b16 %v702, %v701
        %719 = vmatprep.subr.bf16.mxu0 0
        %720 = vmatpush1.bf16.msra.mxu0 %v703
        %721 = vmatprep.subr.bf16.mxu0 0
        %722 = vmatpush1.bf16.msra.mxu0 %v704
        %723 = vmatprep.subr.bf16.mxu0 0
        %724 = vmatpush1.bf16.msra.mxu0 %v705
        %725 = vmatprep.subr.bf16.mxu0 0
        %726 = vmatpush1.bf16.msra.mxu0 %v706
        %727 = vmatprep.subr.bf16.mxu0 0
        %728 = vmatpush1.bf16.msra.mxu0 %v707
        %729 = vmatprep.subr.bf16.mxu0 0
        %730 = vmatpush1.bf16.msra.mxu0 %v708
        %731 = vmatprep.subr.bf16.mxu0 0
        %732 = vmatpush1.bf16.msra.mxu0 %v709
        %733 = vmatprep.subr.bf16.mxu0 0
        %734 = vmatpush1.bf16.msra.mxu0 %v710
        %735 = vmatprep.subr.bf16.mxu0 0
        %736 = vmatpush1.bf16.msra.mxu0 0
        %737 = vmatprep.subr.bf16.mxu0 0
        %738 = vmatpush1.bf16.msra.mxu0 0
        %739 = vmatprep.subr.bf16.mxu0 0
        %740 = vmatpush1.bf16.msra.mxu0 0
        %741 = vmatprep.subr.bf16.mxu0 0
        %742 = vmatpush1.bf16.msra.mxu0 0
        %743 = vmatprep.subr.bf16.mxu0 0
        %744 = vmatpush1.bf16.msra.mxu0 0
        %745 = vmatprep.subr.bf16.mxu0 0
        %746 = vmatpush1.bf16.msra.mxu0 0
        %747 = vmatprep.subr.bf16.mxu0 0
        %748 = vmatpush1.bf16.msra.mxu0 0
        %749 = vmatprep.subr.bf16.mxu0 0
        %750 = vmatpush1.bf16.msra.mxu0 0
        %751 = vmatprep.mubr.bf16.mxu0 0
        %752 = vmatmul.mubr.bf16.gmra.mrb[0].mxu0 %v669
        %v753 = vpop.f32.mrb[0].mxu0
        %v754 = vadd.f32 %v647, %v753
        %v755 = vpop.f32.mrb[0].mxu0
        %v756 = vpop.f32.mrb[0].mxu0
        %v757 = vadd.f32 %v647, %v756
        %v758 = vpop.f32.mrb[0].mxu0
        %759 = vdwg.mxu0
        %v760 = vadd.f32 %v754, 3.0
        %v761 = vadd.f32 %v757, 3.0
        %v762 = vmax.f32 %v760, 0.0
        %v763 = vmax.f32 %v761, 0.0
        %v764 = vmin.f32 %v762, 6.0
        %v765 = vmin.f32 %v763, 6.0
        %v766 = vmul.f32 %v754, %v764
        %v767 = vmul.f32 %v757, %v765
        %v768 = vmul.f32 %v766, 0.16666667
        %v769 = vmul.f32 %v767, 0.16666667
        %v772 = vcombine.high %v768, %v768
        %v773 = vcombine.high %v769, %v769
        %v776 = vpack.c.bf16 %v768, %v768
        %v777 = vpack.c.bf16 %v772, %v772
        %v778 = vpack.c.bf16 %v769, %v769
        %v779 = vpack.c.bf16 %v773, %v773
        %780 = vst [vmem:[%s342] sm:$0x3] %v776
        %781 = vst [vmem:[%s342 + $0x2] sm:$0x3] %v777
        %782 = vst [vmem:[%s342 + $0x4] sm:$0x3] %v778
        %783 = vst [vmem:[%s342 + $0x6] sm:$0x3] %v779
        %p784 = scmp.lt.s32.totalorder %s16, 1
        %s785 = scalar_select %p784, %s16, 1
        %s786 = smul.addr %s785, 4
        %s787 = smul.addr %s786, 2
        %s788 = scalar_lea.vmem %s5, %s787
        // Predicated region
        $region82: #{forward.10} parent=76 // pred_check
          %p789 = pneg %p144
        $region83: #{forward.10} parent=76 // pred_check_branch
          %791 = sbr.rel (%p789) target = $region85
        $region84: #{forward.10} parent=76 // pred_region
          _
        $region85: #{forward.10} parent=76 // pred_fallthru
          _
      $region77: #{forward.10} parent=5 // pred_fallthru
        _
      %p792 = scmp.le.s32.totalorder 2, %s11
      // Predicated region
      $region86: #{forward.10} parent=5 // pred_check
        %p793 = pneg %p792
      $region87: #{forward.10} parent=5 // pred_check_branch
        %795 = sbr.rel (%p793) target = $region89
      $region88: #{forward.10} parent=5 // pred_region
        %s796 = ssub.s32 %s11, 2
        // Predicated region
        $region90: #{forward.10} parent=88 // pred_check
          %p797 = pneg %p150
        $region91: #{forward.10} parent=88 // pred_check_branch
          %799 = sbr.rel (%p797) target = $region93
        $region92: #{forward.10} parent=88 // pred_region
          %p800 = scmp.lt.s32.totalorder %s17, 1
          %s801 = scalar_select %p800, %s17, 1
          %s802 = smul.addr %s801, 4
          %s803 = smul.addr %s802, 2
          %s804 = scalar_lea.vmem %s5, %s803
        $region93: #{forward.10} parent=88 // pred_fallthru
          _
      $region89: #{forward.10} parent=5 // pred_fallthru
        _
    $region6: #{forward.10} parent=1 // loop_footer
      %s15 = sadd.s32 1, %s11
    $region7: #{forward.10} parent=1 // loop_footer_branch
      %10 = sbr.rel target = $region3
    $region8: #{forward.10} parent=1 // loop_exit
      _

// kernel: forward.12
$region0: #{forward.12}
  #allocation0 [shape = 'u32[]', space=smem, size = 0x4, offset = 0x4, fixed_abs, tag = 'smem constant byte address 0x4 - core index']
  #allocation1 [shape = 'u32[144,128]{1,0:T(1,128)}', space=vmem, size = 0x12000, scoped, tag = 'internal scratch']
  #allocation2 [shape = 'f32[128,128]{1,0:T(8,128)}', space=vmem, size = 0x10000, scoped, tag = 'scratch operand']
  %s0 = inlined_call_operand.vmem [shape: bf16[128,128], index: 0, kind: input, shape index: {}]
  %s1 = inlined_call_operand.vmem [shape: bf16[128,128], index: 1, kind: input, shape index: {}]
  %s2 = inlined_call_operand.vmem [shape: f32[1,128], index: 2, kind: input, shape index: {}]
  %s3 = inlined_call_operand.vmem [shape: bf16[128,128], index: 3, kind: output, shape index: {}]
  %s4 = sld [smem:[#allocation0]]
  $region30: #{forward.12} parent=0
    _
  %s6 = ssub.s32 1, %s4
  %s7 = scalar_select 0, %s6, %s4
  // Predicated region
  $region2: #{forward.12} parent=0 // pred_check
    _
  $region3: #{forward.12} parent=0 // pred_check_branch
    %9 = sbr.rel (0) target = $region5
  $region4: #{forward.12} parent=0 // pred_region
    _
  $region5: #{forward.12} parent=0 // pred_fallthru
    _
  // Predicated region
  $region6: #{forward.12} parent=0 // pred_check
    _
  $region7: #{forward.12} parent=0 // pred_check_branch
    %11 = sbr.rel (0) target = $region9
  $region8: #{forward.12} parent=0 // pred_region
    _
  $region9: #{forward.12} parent=0 // pred_fallthru
    _
  // Predicated region
  $region10: #{forward.12} parent=0 // pred_check
    _
  $region11: #{forward.12} parent=0 // pred_check_branch
    %13 = sbr.rel (0) target = $region13
  $region12: #{forward.12} parent=0 // pred_region
    _
  $region13: #{forward.12} parent=0 // pred_fallthru
    _
  %p15 = scmp.eq.s32.totalorder 0, 0
  // Predicated region
  $region14: #{forward.12} parent=0 // pred_check
    %p16 = pneg %p15
  $region15: #{forward.12} parent=0 // pred_check_branch
    %18 = sbr.rel (%p16) target = $region17
  $region16: #{forward.12} parent=0 // pred_region
    %19 = vst [vmem:[#allocation2] sm:$0xff] 0.0
    %20 = vst [vmem:[#allocation2 + $0x8] sm:$0xff] 0.0
    %21 = vst [vmem:[#allocation2 + $0x10] sm:$0xff] 0.0
    %22 = vst [vmem:[#allocation2 + $0x18] sm:$0xff] 0.0
    %23 = vst [vmem:[#allocation2 + $0x20] sm:$0xff] 0.0
    %24 = vst [vmem:[#allocation2 + $0x28] sm:$0xff] 0.0
    %25 = vst [vmem:[#allocation2 + $0x30] sm:$0xff] 0.0
    %26 = vst [vmem:[#allocation2 + $0x38] sm:$0xff] 0.0
    %27 = vst [vmem:[#allocation2 + $0x40] sm:$0xff] 0.0
    %28 = vst [vmem:[#allocation2 + $0x48] sm:$0xff] 0.0
    %29 = vst [vmem:[#allocation2 + $0x50] sm:$0xff] 0.0
    %30 = vst [vmem:[#allocation2 + $0x58] sm:$0xff] 0.0
    %31 = vst [vmem:[#allocation2 + $0x60] sm:$0xff] 0.0
    %32 = vst [vmem:[#allocation2 + $0x68] sm:$0xff] 0.0
    %33 = vst [vmem:[#allocation2 + $0x70] sm:$0xff] 0.0
    %34 = vst [vmem:[#allocation2 + $0x78] sm:$0xff] 0.0
  $region17: #{forward.12} parent=0 // pred_fallthru
    _
  %v35 = vld [vmem:[#allocation2] sm:$0xff]
  %v36 = vld [vmem:[#allocation2 + $0x8] sm:$0xff]
  %v37 = vld [vmem:[#allocation2 + $0x10] sm:$0xff]
  %v38 = vld [vmem:[#allocation2 + $0x18] sm:$0xff]
  %v39 = vld [vmem:[#allocation2 + $0x20] sm:$0xff]
  %v40 = vld [vmem:[#allocation2 + $0x28] sm:$0xff]
  %v41 = vld [vmem:[#allocation2 + $0x30] sm:$0xff]
  %v42 = vld [vmem:[#allocation2 + $0x38] sm:$0xff]
  %v43 = vld [vmem:[#allocation2 + $0x40] sm:$0xff]
  %v44 = vld [vmem:[#allocation2 + $0x48] sm:$0xff]
  %v45 = vld [vmem:[#allocation2 + $0x50] sm:$0xff]
  %v46 = vld [vmem:[#allocation2 + $0x58] sm:$0xff]
  %v47 = vld [vmem:[#allocation2 + $0x60] sm:$0xff]
  %v48 = vld [vmem:[#allocation2 + $0x68] sm:$0xff]
  %v49 = vld [vmem:[#allocation2 + $0x70] sm:$0xff]
  %v50 = vld [vmem:[#allocation2 + $0x78] sm:$0xff]
  %v51 = vld [vmem:[%s0] sm:$0xf]
  %v52 = vld [vmem:[%s0 + $0x4] sm:$0xf]
  %v53 = vld [vmem:[%s0 + $0x8] sm:$0xf]
  %v54 = vld [vmem:[%s0 + $0xc] sm:$0xf]
  %v55 = vld [vmem:[%s0 + $0x10] sm:$0xf]
  %v56 = vld [vmem:[%s0 + $0x14] sm:$0xf]
  %v57 = vld [vmem:[%s0 + $0x18] sm:$0xf]
  %v58 = vld [vmem:[%s0 + $0x1c] sm:$0xf]
  %v59 = vld [vmem:[%s0 + $0x20] sm:$0xf]
  %v60 = vld [vmem:[%s0 + $0x24] sm:$0xf]
  %v61 = vld [vmem:[%s0 + $0x28] sm:$0xf]
  %v62 = vld [vmem:[%s0 + $0x2c] sm:$0xf]
  %v63 = vld [vmem:[%s0 + $0x30] sm:$0xf]
  %v64 = vld [vmem:[%s0 + $0x34] sm:$0xf]
  %v65 = vld [vmem:[%s0 + $0x38] sm:$0xf]
  %v66 = vld [vmem:[%s0 + $0x3c] sm:$0xf]
  %v67 = vld [vmem:[%s1] sm:$0xf]
  %v68 = vld [vmem:[%s1 + $0x4] sm:$0xf]
  %v69 = vld [vmem:[%s1 + $0x8] sm:$0xf]
  %v70 = vld [vmem:[%s1 + $0xc] sm:$0xf]
  %v71 = vld [vmem:[%s1 + $0x10] sm:$0xf]
  %v72 = vld [vmem:[%s1 + $0x14] sm:$0xf]
  %v73 = vld [vmem:[%s1 + $0x18] sm:$0xf]
  %v74 = vld [vmem:[%s1 + $0x1c] sm:$0xf]
  %v75 = vld [vmem:[%s1 + $0x20] sm:$0xf]
  %v76 = vld [vmem:[%s1 + $0x24] sm:$0xf]
  %v77 = vld [vmem:[%s1 + $0x28] sm:$0xf]
  %v78 = vld [vmem:[%s1 + $0x2c] sm:$0xf]
  %v79 = vld [vmem:[%s1 + $0x30] sm:$0xf]
  %v80 = vld [vmem:[%s1 + $0x34] sm:$0xf]
  %v81 = vld [vmem:[%s1 + $0x38] sm:$0xf]
  %v82 = vld [vmem:[%s1 + $0x3c] sm:$0xf]
  %v99 = vunpack.c.l.b16 %v51
  %v100 = vunpack.c.l.b16 %v52
  %v101 = vunpack.c.l.b16 %v53
  %v102 = vunpack.c.l.b16 %v54
  %v103 = vunpack.c.l.b16 %v55
  %v104 = vunpack.c.l.b16 %v56
  %v105 = vunpack.c.l.b16 %v57
  %v106 = vunpack.c.l.b16 %v58
  %v107 = vunpack.c.l.b16 %v59
  %v108 = vunpack.c.l.b16 %v60
  %v109 = vunpack.c.l.b16 %v61
  %v110 = vunpack.c.l.b16 %v62
  %v111 = vunpack.c.l.b16 %v63
  %v112 = vunpack.c.l.b16 %v64
  %v113 = vunpack.c.l.b16 %v65
  %v114 = vunpack.c.l.b16 %v66
  %v115 = vpack.c.b16 %v100, %v99
  %v116 = vpack.c.b16 %v102, %v101
  %v117 = vpack.c.b16 %v104, %v103
  %v118 = vpack.c.b16 %v106, %v105
  %v119 = vpack.c.b16 %v108, %v107
  %v120 = vpack.c.b16 %v110, %v109
  %v121 = vpack.c.b16 %v112, %v111
  %v122 = vpack.c.b16 %v114, %v113
  %v147 = vunpack.c.l.b16 %v67
  %v148 = vunpack.c.l.b16 %v68
  %v149 = vunpack.c.l.b16 %v69
  %v150 = vunpack.c.l.b16 %v70
  %v151 = vunpack.c.l.b16 %v71
  %v152 = vunpack.c.l.b16 %v72
  %v153 = vunpack.c.l.b16 %v73
  %v154 = vunpack.c.l.b16 %v74
  %v155 = vunpack.c.l.b16 %v75
  %v156 = vunpack.c.l.b16 %v76
  %v157 = vunpack.c.l.b16 %v77
  %v158 = vunpack.c.l.b16 %v78
  %v159 = vunpack.c.l.b16 %v79
  %v160 = vunpack.c.l.b16 %v80
  %v161 = vunpack.c.l.b16 %v81
  %v162 = vunpack.c.l.b16 %v82
  %v163 = vpack.c.b16 %v148, %v147
  %v164 = vpack.c.b16 %v150, %v149
  %v165 = vpack.c.b16 %v152, %v151
  %v166 = vpack.c.b16 %v154, %v153
  %v167 = vpack.c.b16 %v156, %v155
  %v168 = vpack.c.b16 %v158, %v157
  %v169 = vpack.c.b16 %v160, %v159
  %v170 = vpack.c.b16 %v162, %v161
  %179 = vmatprep.subr.bf16.mxu0 0
  %180 = vmatpush1.bf16.msra.mxu0 %v163
  %181 = vmatprep.subr.bf16.mxu0 0
  %182 = vmatpush1.bf16.msra.mxu0 %v164
  %183 = vmatprep.subr.bf16.mxu0 0
  %184 = vmatpush1.bf16.msra.mxu0 %v165
  %185 = vmatprep.subr.bf16.mxu0 0
  %186 = vmatpush1.bf16.msra.mxu0 %v166
  %187 = vmatprep.subr.bf16.mxu0 0
  %188 = vmatpush1.bf16.msra.mxu0 %v167
  %189 = vmatprep.subr.bf16.mxu0 0
  %190 = vmatpush1.bf16.msra.mxu0 %v168
  %191 = vmatprep.subr.bf16.mxu0 0
  %192 = vmatpush1.bf16.msra.mxu0 %v169
  %193 = vmatprep.subr.bf16.mxu0 0
  %194 = vmatpush1.bf16.msra.mxu0 %v170
  %195 = vmatprep.subr.bf16.mxu0 0
  %196 = vmatpush1.bf16.msra.mxu0 0
  %197 = vmatprep.subr.bf16.mxu0 0
  %198 = vmatpush1.bf16.msra.mxu0 0
  %199 = vmatprep.subr.bf16.mxu0 0
  %200 = vmatpush1.bf16.msra.mxu0 0
  %201 = vmatprep.subr.bf16.mxu0 0
  %202 = vmatpush1.bf16.msra.mxu0 0
  %203 = vmatprep.subr.bf16.mxu0 0
  %204 = vmatpush1.bf16.msra.mxu0 0
  %205 = vmatprep.subr.bf16.mxu0 0
  %206 = vmatpush1.bf16.msra.mxu0 0
  %207 = vmatprep.subr.bf16.mxu0 0
  %208 = vmatpush1.bf16.msra.mxu0 0
  %209 = vmatprep.subr.bf16.mxu0 0
  %210 = vmatpush1.bf16.msra.mxu0 0
  %211 = vmatprep.mubr.bf16.mxu0 0
  %212 = vmatmul.mubr.bf16.gmra.mrb[0].mxu0 %v115
  %v213 = vpop.f32.mrb[0].mxu0
  %v214 = vadd.f32 0.0, %v213
  %v215 = vpop.f32.mrb[0].mxu0
  %v216 = vpop.f32.mrb[0].mxu0
  %v217 = vadd.f32 0.0, %v216
  %v218 = vpop.f32.mrb[0].mxu0
  %219 = vmatprep.mubr.bf16.mxu0 0
  %220 = vmatmul.mubr.bf16.gmra.mrb[0].mxu0 %v116
  %v221 = vpop.f32.mrb[0].mxu0
  %v222 = vadd.f32 0.0, %v221
  %v223 = vpop.f32.mrb[0].mxu0
  %v224 = vpop.f32.mrb[0].mxu0
  %v225 = vadd.f32 0.0, %v224
  %v226 = vpop.f32.mrb[0].mxu0
  %227 = vmatprep.mubr.bf16.mxu0 0
  %228 = vmatmul.mubr.bf16.gmra.mrb[0].mxu0 %v117
  %v229 = vpop.f32.mrb[0].mxu0
  %v230 = vadd.f32 0.0, %v229
  %v231 = vpop.f32.mrb[0].mxu0
  %v232 = vpop.f32.mrb[0].mxu0
  %v233 = vadd.f32 0.0, %v232
  %v234 = vpop.f32.mrb[0].mxu0
  %235 = vmatprep.mubr.bf16.mxu0 0
  %236 = vmatmul.mubr.bf16.gmra.mrb[0].mxu0 %v118
  %v237 = vpop.f32.mrb[0].mxu0
  %v238 = vadd.f32 0.0, %v237
  %v239 = vpop.f32.mrb[0].mxu0
  %v240 = vpop.f32.mrb[0].mxu0
  %v241 = vadd.f32 0.0, %v240
  %v242 = vpop.f32.mrb[0].mxu0
  %243 = vmatprep.mubr.bf16.mxu0 0
  %244 = vmatmul.mubr.bf16.gmra.mrb[0].mxu0 %v119
  %v245 = vpop.f32.mrb[0].mxu0
  %v246 = vadd.f32 0.0, %v245
  %v247 = vpop.f32.mrb[0].mxu0
  %v248 = vpop.f32.mrb[0].mxu0
  %v249 = vadd.f32 0.0, %v248
  %v250 = vpop.f32.mrb[0].mxu0
  %251 = vmatprep.mubr.bf16.mxu0 0
  %252 = vmatmul.mubr.bf16.gmra.mrb[0].mxu0 %v120
  %v253 = vpop.f32.mrb[0].mxu0
  %v254 = vadd.f32 0.0, %v253
  %v255 = vpop.f32.mrb[0].mxu0
  %v256 = vpop.f32.mrb[0].mxu0
  %v257 = vadd.f32 0.0, %v256
  %v258 = vpop.f32.mrb[0].mxu0
  %259 = vmatprep.mubr.bf16.mxu0 0
  %260 = vmatmul.mubr.bf16.gmra.mrb[0].mxu0 %v121
  %v261 = vpop.f32.mrb[0].mxu0
  %v262 = vadd.f32 0.0, %v261
  %v263 = vpop.f32.mrb[0].mxu0
  %v264 = vpop.f32.mrb[0].mxu0
  %v265 = vadd.f32 0.0, %v264
  %v266 = vpop.f32.mrb[0].mxu0
  %267 = vmatprep.mubr.bf16.mxu0 0
  %268 = vmatmul.mubr.bf16.gmra.mrb[0].mxu0 %v122
  %v269 = vpop.f32.mrb[0].mxu0
  %v270 = vadd.f32 0.0, %v269
  %v271 = vpop.f32.mrb[0].mxu0
  %v272 = vpop.f32.mrb[0].mxu0
  %v273 = vadd.f32 0.0, %v272
  %v274 = vpop.f32.mrb[0].mxu0
  %275 = vdwg.mxu0
  %v276 = vadd.f32 %v35, %v214
  %v277 = vadd.f32 %v36, %v217
  %v278 = vadd.f32 %v37, %v222
  %v279 = vadd.f32 %v38, %v225
  %v280 = vadd.f32 %v39, %v230
  %v281 = vadd.f32 %v40, %v233
  %v282 = vadd.f32 %v41, %v238
  %v283 = vadd.f32 %v42, %v241
  %v284 = vadd.f32 %v43, %v246
  %v285 = vadd.f32 %v44, %v249
  %v286 = vadd.f32 %v45, %v254
  %v287 = vadd.f32 %v46, %v257
  %v288 = vadd.f32 %v47, %v262
  %v289 = vadd.f32 %v48, %v265
  %v290 = vadd.f32 %v49, %v270
  %v291 = vadd.f32 %v50, %v273
  %292 = vst [vmem:[#allocation2] sm:$0xff] %v276
  %293 = vst [vmem:[#allocation2 + $0x8] sm:$0xff] %v277
  %294 = vst [vmem:[#allocation2 + $0x10] sm:$0xff] %v278
  %295 = vst [vmem:[#allocation2 + $0x18] sm:$0xff] %v279
  %296 = vst [vmem:[#allocation2 + $0x20] sm:$0xff] %v280
  %297 = vst [vmem:[#allocation2 + $0x28] sm:$0xff] %v281
  %298 = vst [vmem:[#allocation2 + $0x30] sm:$0xff] %v282
  %299 = vst [vmem:[#allocation2 + $0x38] sm:$0xff] %v283
  %300 = vst [vmem:[#allocation2 + $0x40] sm:$0xff] %v284
  %301 = vst [vmem:[#allocation2 + $0x48] sm:$0xff] %v285
  %302 = vst [vmem:[#allocation2 + $0x50] sm:$0xff] %v286
  %303 = vst [vmem:[#allocation2 + $0x58] sm:$0xff] %v287
  %304 = vst [vmem:[#allocation2 + $0x60] sm:$0xff] %v288
  %305 = vst [vmem:[#allocation2 + $0x68] sm:$0xff] %v289
  %306 = vst [vmem:[#allocation2 + $0x70] sm:$0xff] %v290
  %307 = vst [vmem:[#allocation2 + $0x78] sm:$0xff] %v291
  // Predicated region
  $region18: #{forward.12} parent=0 // pred_check
    %p308 = pneg %p15
  $region19: #{forward.12} parent=0 // pred_check_branch
    %310 = sbr.rel (%p308) target = $region21
  $region20: #{forward.12} parent=0 // pred_region
    %v311 = vld [vmem:[#allocation2] sm:$0xff]
    %v312 = vld [vmem:[#allocation2 + $0x8] sm:$0xff]
    %v313 = vld [vmem:[#allocation2 + $0x10] sm:$0xff]
    %v314 = vld [vmem:[#allocation2 + $0x18] sm:$0xff]
    %v315 = vld [vmem:[#allocation2 + $0x20] sm:$0xff]
    %v316 = vld [vmem:[#allocation2 + $0x28] sm:$0xff]
    %v317 = vld [vmem:[#allocation2 + $0x30] sm:$0xff]
    %v318 = vld [vmem:[#allocation2 + $0x38] sm:$0xff]
    %v319 = vld [vmem:[#allocation2 + $0x40] sm:$0xff]
    %v320 = vld [vmem:[#allocation2 + $0x48] sm:$0xff]
    %v321 = vld [vmem:[#allocation2 + $0x50] sm:$0xff]
    %v322 = vld [vmem:[#allocation2 + $0x58] sm:$0xff]
    %v323 = vld [vmem:[#allocation2 + $0x60] sm:$0xff]
    %v324 = vld [vmem:[#allocation2 + $0x68] sm:$0xff]
    %v325 = vld [vmem:[#allocation2 + $0x70] sm:$0xff]
    %v326 = vld [vmem:[#allocation2 + $0x78] sm:$0xff]
    %v327 = vld [vmem:[%s2] sm:$0x1]
    %v329 = vlaneseq
    %v330 = vshrl.u32 %v329, 7
    %v331 = vsub.s32 0, %v330
    %v332 = vrot.slane %v327, %v331
    %v334 = vadd.f32 %v311, %v332
    %v335 = vadd.f32 %v312, %v332
    %v336 = vadd.f32 %v313, %v332
    %v337 = vadd.f32 %v314, %v332
    %v338 = vadd.f32 %v315, %v332
    %v339 = vadd.f32 %v316, %v332
    %v340 = vadd.f32 %v317, %v332
    %v341 = vadd.f32 %v318, %v332
    %v342 = vadd.f32 %v319, %v332
    %v343 = vadd.f32 %v320, %v332
    %v344 = vadd.f32 %v321, %v332
    %v345 = vadd.f32 %v322, %v332
    %v346 = vadd.f32 %v323, %v332
    %v347 = vadd.f32 %v324, %v332
    %v348 = vadd.f32 %v325, %v332
    %v349 = vadd.f32 %v326, %v332
    %v350 = vpack.c.bf16 %v335, %v334
    %v351 = vpack.c.bf16 %v337, %v336
    %v352 = vpack.c.bf16 %v339, %v338
    %v353 = vpack.c.bf16 %v341, %v340
    %v354 = vpack.c.bf16 %v343, %v342
    %v355 = vpack.c.bf16 %v345, %v344
    %v356 = vpack.c.bf16 %v347, %v346
    %v357 = vpack.c.bf16 %v349, %v348
    %v366 = vunpack.c.l.b16 %v350
    %v367 = vunpack.c.h.b16 %v350
    %v368 = vunpack.c.l.b16 %v351
    %v369 = vunpack.c.h.b16 %v351
    %v370 = vunpack.c.l.b16 %v352
    %v371 = vunpack.c.h.b16 %v352
    %v372 = vunpack.c.l.b16 %v353
    %v373 = vunpack.c.h.b16 %v353
    %v374 = vunpack.c.l.b16 %v354
    %v375 = vunpack.c.h.b16 %v354
    %v376 = vunpack.c.l.b16 %v355
    %v377 = vunpack.c.h.b16 %v355
    %v378 = vunpack.c.l.b16 %v356
    %v379 = vunpack.c.h.b16 %v356
    %v380 = vunpack.c.l.b16 %v357
    %v381 = vunpack.c.h.b16 %v357
    %v382 = vpack.c.b16 %v366, %v366
    %v383 = vpack.c.b16 %v367, %v367
    %v384 = vpack.c.b16 %v368, %v368
    %v385 = vpack.c.b16 %v369, %v369
    %v386 = vpack.c.b16 %v370, %v370
    %v387 = vpack.c.b16 %v371, %v371
    %v388 = vpack.c.b16 %v372, %v372
    %v389 = vpack.c.b16 %v373, %v373
    %v390 = vpack.c.b16 %v374, %v374
    %v391 = vpack.c.b16 %v375, %v375
    %v392 = vpack.c.b16 %v376, %v376
    %v393 = vpack.c.b16 %v377, %v377
    %v394 = vpack.c.b16 %v378, %v378
    %v395 = vpack.c.b16 %v379, %v379
    %v396 = vpack.c.b16 %v380, %v380
    %v397 = vpack.c.b16 %v381, %v381
    %414 = vst [vmem:[%s3] sm:$0xf] %v382
    %415 = vst [vmem:[%s3 + $0x4] sm:$0xf] %v383
    %416 = vst [vmem:[%s3 + $0x8] sm:$0xf] %v384
    %417 = vst [vmem:[%s3 + $0xc] sm:$0xf] %v385
    %418 = vst [vmem:[%s3 + $0x10] sm:$0xf] %v386
    %419 = vst [vmem:[%s3 + $0x14] sm:$0xf] %v387
    %420 = vst [vmem:[%s3 + $0x18] sm:$0xf] %v388
    %421 = vst [vmem:[%s3 + $0x1c] sm:$0xf] %v389
    %422 = vst [vmem:[%s3 + $0x20] sm:$0xf] %v390
    %423 = vst [vmem:[%s3 + $0x24] sm:$0xf] %v391
    %424 = vst [vmem:[%s3 + $0x28] sm:$0xf] %v392
    %425 = vst [vmem:[%s3 + $0x2c] sm:$0xf] %v393
    %426 = vst [vmem:[%s3 + $0x30] sm:$0xf] %v394
    %427 = vst [vmem:[%s3 + $0x34] sm:$0xf] %v395
    %428 = vst [vmem:[%s3 + $0x38] sm:$0xf] %v396
    %429 = vst [vmem:[%s3 + $0x3c] sm:$0xf] %v397
  $region21: #{forward.12} parent=0 // pred_fallthru
    _
  // Predicated region
  $region22: #{forward.12} parent=0 // pred_check
    _
  $region23: #{forward.12} parent=0 // pred_check_branch
    %431 = sbr.rel (0) target = $region25
  $region24: #{forward.12} parent=0 // pred_region
    _
  $region25: #{forward.12} parent=0 // pred_fallthru
    _
  // Predicated region
  $region26: #{forward.12} parent=0 // pred_check
    _
  $region27: #{forward.12} parent=0 // pred_check_branch
    %433 = sbr.rel (0) target = $region29
  $region28: #{forward.12} parent=0 // pred_region
    _
  $region29: #{forward.12} parent=0 // pred_fallthru
    _

// kernel: forward.13
$region0: #{forward.13}
  #allocation0 [shape = 'u32[]', space=smem, size = 0x4, offset = 0x4, fixed_abs, tag = 'smem constant byte address 0x4 - core index']
  #allocation1 [shape = 'u32[144,128]{1,0:T(1,128)}', space=vmem, size = 0x12000, scoped, tag = 'internal scratch']
  %s0 = inlined_call_operand.vmem [shape: bf16[2,10,10,16], index: 0, kind: input, shape index: {}]
  %s1 = inlined_call_operand.vmem [shape: bf16[9,16,128], index: 1, kind: input, shape index: {}]
  %s2 = inlined_call_operand.vmem [shape: f32[1,128], index: 2, kind: input, shape index: {}]
  %s3 = inlined_call_operand.vmem [shape: bf16[2,8,8,128], index: 3, kind: output, shape index: {}]
  %s4 = sld [smem:[#allocation0]]
  $region45: #{forward.13} parent=0
    _
  %s6 = ssub.s32 1, %s4
  %s7 = scalar_select 0, %s6, %s4
  loop: start=0, step=1, limit=4
  $region2: #{forward.13} parent=0 // loop_pre_header
    _
  $region3: #{forward.13} parent=0 // loop_header
    %s9 = sphi 0, %s13
    %p10 = scmp.ge.s32.totalorder %s9, 4
    %s19 = sphi 0, %s21
    %s22 = sphi 0, %s19
    %s23 = sphi 0, %s22
    %s39 = sphi 0, %s23
    %s43 = sphi 0, %s43
    %s45 = sphi 0, %s43
    %s46 = sphi 0, %s45
    %s60 = sphi 0, %s46
    %s64 = sphi 0, %s64
    %s66 = sphi 0, %s64
    %s67 = sphi 0, %s66
    %s81 = sphi 0, %s67
    %s87 = sphi 0, %s89
    %s90 = sphi 0, %s87
    %s91 = sphi 0, %s90
    %s107 = sphi 0, %s91
  $region4: #{forward.13} parent=0 // loop_header_branch
    %12 = sbr.rel (%p10) target = $region8
  $region5: #{forward.13} parent=0 // loop_body
    %s14 = ssub.s32 %s9, 1
    %s15 = ssub.s32 %s9, 2
    %s16 = sadd.s32 %s9, 1
    %s17 = ssub.s32 %s9, %s16
    %p18 = scmp.eq.s32.totalorder %s17, 0
    %s20 = sadd.s32 %s19, 1
    %s21 = scalar_select %p18, %s19, %s20
    %p24 = pneg %p18
    %p25 = scmp.eq.s32.totalorder %s9, 1
    %p26 = por %p24, %p25
    %p27 = scmp.ne.s32.totalorder %s19, %s22
    %p28 = scmp.eq.s32.totalorder %s9, 0
    %p29 = por %p27, %p28
    %p30 = scmp.ne.s32.totalorder %s19, %s22
    %p31 = scmp.eq.s32.totalorder %s14, 1
    %p32 = por %p30, %p31
    %p33 = scmp.ne.s32.totalorder %s22, %s23
    %p34 = scmp.eq.s32.totalorder %s14, 0
    %p35 = por %p33, %p34
    %p36 = scmp.ne.s32.totalorder %s22, %s23
    %p37 = scmp.eq.s32.totalorder %s15, 1
    %p38 = por %p36, %p37
    %p40 = scmp.ne.s32.totalorder %s23, %s39
    %p41 = scmp.eq.s32.totalorder %s15, 0
    %p42 = por %p40, %p41
    %s44 = sadd.s32 %s43, 1
    %p47 = scmp.eq.s32.totalorder %s9, 1
    %p48 = scmp.ne.s32.totalorder %s43, %s45
    %p49 = scmp.eq.s32.totalorder %s9, 0
    %p50 = por %p48, %p49
    %p51 = scmp.ne.s32.totalorder %s43, %s45
    %p52 = scmp.eq.s32.totalorder %s14, 1
    %p53 = por %p51, %p52
    %p54 = scmp.ne.s32.totalorder %s45, %s46
    %p55 = scmp.eq.s32.totalorder %s14, 0
    %p56 = por %p54, %p55
    %p57 = scmp.ne.s32.totalorder %s45, %s46
    %p58 = scmp.eq.s32.totalorder %s15, 1
    %p59 = por %p57, %p58
    %p61 = scmp.ne.s32.totalorder %s46, %s60
    %p62 = scmp.eq.s32.totalorder %s15, 0
    %p63 = por %p61, %p62
    %s65 = sadd.s32 %s64, 1
    %p68 = scmp.eq.s32.totalorder %s9, 1
    %p69 = scmp.ne.s32.totalorder %s64, %s66
    %p70 = scmp.eq.s32.totalorder %s9, 0
    %p71 = por %p69, %p70
    %p72 = scmp.ne.s32.totalorder %s64, %s66
    %p73 = scmp.eq.s32.totalorder %s14, 1
    %p74 = por %p72, %p73
    %p75 = scmp.ne.s32.totalorder %s66, %s67
    %p76 = scmp.eq.s32.totalorder %s14, 0
    %p77 = por %p75, %p76
    %p78 = scmp.ne.s32.totalorder %s66, %s67
    %p79 = scmp.eq.s32.totalorder %s15, 1
    %p80 = por %p78, %p79
    %p82 = scmp.ne.s32.totalorder %s67, %s81
    %p83 = scmp.eq.s32.totalorder %s15, 0
    %p84 = por %p82, %p83
    %s85 = ssub.s32 %s9, %s16
    %p86 = scmp.eq.s32.totalorder %s85, 0
    %s88 = sadd.s32 %s87, 1
    %s89 = scalar_select %p86, %s87, %s88
    %p92 = pneg %p86
    %p93 = scmp.eq.s32.totalorder %s9, 1
    %p94 = por %p92, %p93
    %p95 = scmp.ne.s32.totalorder %s87, %s90
    %p96 = scmp.eq.s32.totalorder %s9, 0
    %p97 = por %p95, %p96
    %p98 = scmp.ne.s32.totalorder %s87, %s90
    %p99 = scmp.eq.s32.totalorder %s14, 1
    %p100 = por %p98, %p99
    %p101 = scmp.ne.s32.totalorder %s90, %s91
    %p102 = scmp.eq.s32.totalorder %s14, 0
    %p103 = por %p101, %p102
    %p104 = scmp.ne.s32.totalorder %s90, %s91
    %p105 = scmp.eq.s32.totalorder %s15, 1
    %p106 = por %p104, %p105
    %p108 = scmp.ne.s32.totalorder %s91, %s107
    %p109 = scmp.eq.s32.totalorder %s15, 0
    %p110 = por %p108, %p109
    %p111 = scmp.le.s32.totalorder 1, %s9
    %p112 = scmp.lt.s32.totalorder %s9, 3
    %p113 = pnand %p111, %p112
    %p114 = pneg %p113
    // Predicated region
    $region9: #{forward.13} parent=5 // pred_check
      _
    $region10: #{forward.13} parent=5 // pred_check_branch
      %116 = sbr.rel (%p113) target = $region12
    $region11: #{forward.13} parent=5 // pred_region
      %s117 = ssub.s32 %s9, 1
      // Predicated region
      $region13: #{forward.13} parent=11 // pred_check
        %p118 = pneg %p56
      $region14: #{forward.13} parent=11 // pred_check_branch
        %120 = sbr.rel (%p118) target = $region16
      $region15: #{forward.13} parent=11 // pred_region
        _
      $region16: #{forward.13} parent=11 // pred_fallthru
        _
      // Predicated region
      $region17: #{forward.13} parent=11 // pred_check
        %p121 = pneg %p77
      $region18: #{forward.13} parent=11 // pred_check_branch
        %123 = sbr.rel (%p121) target = $region20
      $region19: #{forward.13} parent=11 // pred_region
        _
      $region20: #{forward.13} parent=11 // pred_fallthru
        _
    $region12: #{forward.13} parent=5 // pred_fallthru
      _
    %p124 = scmp.lt.s32.totalorder %s9, 2
    // Predicated region
    $region21: #{forward.13} parent=5 // pred_check
      %p125 = pneg %p124
    $region22: #{forward.13} parent=5 // pred_check_branch
      %127 = sbr.rel (%p125) target = $region24
    $region23: #{forward.13} parent=5 // pred_region
      // Predicated region
      $region25: #{forward.13} parent=23 // pred_check
        %p128 = pneg %p29
      $region26: #{forward.13} parent=23 // pred_check_branch
        %130 = sbr.rel (%p128) target = $region28
      $region27: #{forward.13} parent=23 // pred_region
        %p131 = scmp.lt.s32.totalorder %s9, 1
        %s132 = scalar_select %p131, %s9, 1
        %s133 = smul.addr %s132, 20
        %s134 = smul.addr %s133, 4
        %s135 = scalar_lea.vmem %s0, %s134
      $region28: #{forward.13} parent=23 // pred_fallthru
        _
    $region24: #{forward.13} parent=5 // pred_fallthru
      _
    %p136 = scmp.le.s32.totalorder 1, %s9
    %p137 = scmp.lt.s32.totalorder %s9, 3
    %p138 = pnand %p136, %p137
    %p139 = pneg %p138
    // Predicated region
    $region29: #{forward.13} parent=5 // pred_check
      _
    $region30: #{forward.13} parent=5 // pred_check_branch
      %141 = sbr.rel (%p138) target = $region32
    $region31: #{forward.13} parent=5 // pred_region
      %s142 = ssub.s32 %s9, 1
      %p143 = scmp.lt.s32.totalorder %s14, 1
      %s144 = scalar_select %p143, %s14, 1
      %s145 = smul.addr %s144, 20
      %s146 = smul.addr %s145, 4
      %s147 = scalar_lea.vmem %s0, %s146
      %p148 = pneg %p35
      %p149 = pneg %p32
      %p150 = pneg %p56
      %p151 = pneg %p53
      %p152 = pneg %p77
      %p153 = pneg %p74
      %p154 = pneg %p103
      %p155 = pneg %p100
      %p156 = scmp.lt.s32.totalorder %s14, 1
      %s157 = scalar_select %p156, %s14, 1
      %s158 = smul.addr %s157, 8
      %s159 = smul.addr %s158, 4
      %s160 = scalar_lea.vmem %s3, %s159
      %p161 = scmp.lt.s32.totalorder %s14, 1
      %s162 = scalar_select %p161, %s14, 1
      %s163 = smul.addr %s162, 20
      %s164 = smul.addr %s163, 4
      %s165 = scalar_lea.vmem %s0, %s164
      %p166 = scmp.lt.s32.totalorder %s14, 1
      %s167 = scalar_select %p166, %s14, 1
      %s168 = smul.addr %s167, 8
      %s169 = smul.addr %s168, 4
      %s170 = scalar_lea.vmem %s3, %s169
      %v172 = vld [vmem:[%s165] sm:$0xf]
      %v173 = vld [vmem:[%s165 + $0x8] sm:$0xf]
      %v174 = vld [vmem:[%s165 + $0x10] sm:$0xf]
      %v175 = vld [vmem:[%s165 + $0x18] sm:$0xf]
      %v176 = vld [vmem:[%s165 + $0x20] sm:$0xf]
      %v177 = vld [vmem:[%s165 + $0x28] sm:$0xf]
      %v178 = vld [vmem:[%s165 + $0x30] sm:$0xf]
      %v179 = vld [vmem:[%s165 + $0x38] sm:$0xf]
      %v180 = vld [vmem:[%s1] sm:$0xf]
      %v181 = vld [vmem:[%s1 + $0x4] sm:$0xf]
      %v182 = vld [vmem:[%s165 + $0x4] sm:$0x1]
      %v183 = vld [vmem:[%s165 + $0xc] sm:$0x1]
      %v184 = vld [vmem:[%s165 + $0x14] sm:$0x1]
      %v185 = vld [vmem:[%s165 + $0x1c] sm:$0x1]
      %v186 = vld [vmem:[%s165 + $0x24] sm:$0x1]
      %v187 = vld [vmem:[%s165 + $0x2c] sm:$0x1]
      %v188 = vld [vmem:[%s165 + $0x34] sm:$0x1]
      %v189 = vld [vmem:[%s165 + $0x3c] sm:$0x1]
      %vm190 = vsmask.f32 3328
      %vm191 = vsmask.f32 7440
      %vm192 = vmor %vm190, %vm191
      %v194 = vshrl.u32 %v172, 16
      %v196 = vrot.slane %v194, 4
      %v197 = vshll.u32 %v172, 16
      %v199 = vrot.slane %v197, 5
      %v200 = vor.u32 %v196, %v199
      %v201 = vrot.slane %v200, 4
      %v203 = vshll.u32 %v182, 16
      %v205 = vrot.slane %v203, 5
      %v206 = vsel %vm192, %v201, %v205
      %v208 = vshrl.u32 %v173, 16
      %v210 = vrot.slane %v208, 4
      %v211 = vshll.u32 %v173, 16
      %v213 = vrot.slane %v211, 5
      %v214 = vor.u32 %v210, %v213
      %v215 = vrot.slane %v214, 4
      %v217 = vshll.u32 %v183, 16
      %v219 = vrot.slane %v217, 5
      %v220 = vsel %vm192, %v215, %v219
      %v222 = vshrl.u32 %v174, 16
      %v224 = vrot.slane %v222, 4
      %v225 = vshll.u32 %v174, 16
      %v227 = vrot.slane %v225, 5
      %v228 = vor.u32 %v224, %v227
      %v229 = vrot.slane %v228, 4
      %v231 = vshll.u32 %v184, 16
      %v233 = vrot.slane %v231, 5
      %v234 = vsel %vm192, %v229, %v233
      %v236 = vshrl.u32 %v175, 16
      %v238 = vrot.slane %v236, 4
      %v239 = vshll.u32 %v175, 16
      %v241 = vrot.slane %v239, 5
      %v242 = vor.u32 %v238, %v241
      %v243 = vrot.slane %v242, 4
      %v245 = vshll.u32 %v185, 16
      %v247 = vrot.slane %v245, 5
      %v248 = vsel %vm192, %v243, %v247
      %v250 = vshrl.u32 %v176, 16
      %v252 = vrot.slane %v250, 4
      %v253 = vshll.u32 %v176, 16
      %v255 = vrot.slane %v253, 5
      %v256 = vor.u32 %v252, %v255
      %v257 = vrot.slane %v256, 4
      %v259 = vshll.u32 %v186, 16
      %v261 = vrot.slane %v259, 5
      %v262 = vsel %vm192, %v257, %v261
      %v264 = vshrl.u32 %v177, 16
      %v266 = vrot.slane %v264, 4
      %v267 = vshll.u32 %v177, 16
      %v269 = vrot.slane %v267, 5
      %v270 = vor.u32 %v266, %v269
      %v271 = vrot.slane %v270, 4
      %v273 = vshll.u32 %v187, 16
      %v275 = vrot.slane %v273, 5
      %v276 = vsel %vm192, %v271, %v275
      %v278 = vshrl.u32 %v178, 16
      %v280 = vrot.slane %v278, 4
      %v281 = vshll.u32 %v178, 16
      %v283 = vrot.slane %v281, 5
      %v284 = vor.u32 %v280, %v283
      %v285 = vrot.slane %v284, 4
      %v287 = vshll.u32 %v188, 16
      %v289 = vrot.slane %v287, 5
      %v290 = vsel %vm192, %v285, %v289
      %v292 = vshrl.u32 %v179, 16
      %v294 = vrot.slane %v292, 4
      %v295 = vshll.u32 %v179, 16
      %v297 = vrot.slane %v295, 5
      %v298 = vor.u32 %v294, %v297
      %v299 = vrot.slane %v298, 4
      %v301 = vshll.u32 %v189, 16
      %v303 = vrot.slane %v301, 5
      %v304 = vsel %vm192, %v299, %v303
      %s305 = scalar_lea.vmem %s1, 8
      %v306 = vld [vmem:[%s305] sm:$0xf]
      %v307 = vld [vmem:[%s305 + $0x4] sm:$0xf]
      %v308 = vunpack.c.l.b16 %v206
      %v309 = vunpack.c.l.b16 %v220
      %v310 = vunpack.c.l.b16 %v234
      %v311 = vunpack.c.l.b16 %v248
      %v312 = vunpack.c.l.b16 %v262
      %v313 = vunpack.c.l.b16 %v276
      %v314 = vunpack.c.l.b16 %v290
      %v315 = vunpack.c.l.b16 %v304
      %v316 = vpack.c.b16 %v309, %v308
      %v317 = vpack.c.b16 %v311, %v310
      %v318 = vpack.c.b16 %v313, %v312
      %v319 = vpack.c.b16 %v315, %v314
      %v322 = vunpack.c.l.b16 %v306
      %v323 = vunpack.c.l.b16 %v307
      %v324 = vpack.c.b16 %v323, %v322
      %vm326 = vcmask 130048
      %v328 = vsel %vm326, %v316, 0
      %v331 = vsel %vm326, %v317, 0
      %v334 = vsel %vm326, %v318, 0
      %v337 = vsel %vm326, %v319, 0
      %339 = vmatprep.subr.bf16.mxu0 0
      %340 = vmatpush1.bf16.msra.mxu0 %v324
      %341 = vmatprep.subr.bf16.mxu0 0
      %342 = vmatpush1.bf16.msra.mxu0 0
      %343 = vmatprep.subr.bf16.mxu0 0
      %344 = vmatpush1.bf16.msra.mxu0 0
      %345 = vmatprep.subr.bf16.mxu0 0
      %346 = vmatpush1.bf16.msra.mxu0 0
      %347 = vmatprep.subr.bf16.mxu0 0
      %348 = vmatpush1.bf16.msra.mxu0 0
      %349 = vmatprep.subr.bf16.mxu0 0
      %350 = vmatpush1.bf16.msra.mxu0 0
      %351 = vmatprep.subr.bf16.mxu0 0
      %352 = vmatpush1.bf16.msra.mxu0 0
      %353 = vmatprep.subr.bf16.mxu0 0
      %354 = vmatpush1.bf16.msra.mxu0 0
      %355 = vmatprep.subr.bf16.mxu0 0
      %356 = vmatpush1.bf16.msra.mxu0 0
      %357 = vmatprep.subr.bf16.mxu0 0
      %358 = vmatpush1.bf16.msra.mxu0 0
      %359 = vmatprep.subr.bf16.mxu0 0
      %360 = vmatpush1.bf16.msra.mxu0 0
      %361 = vmatprep.subr.bf16.mxu0 0
      %362 = vmatpush1.bf16.msra.mxu0 0
      %363 = vmatprep.subr.bf16.mxu0 0
      %364 = vmatpush1.bf16.msra.mxu0 0
      %365 = vmatprep.subr.bf16.mxu0 0
      %366 = vmatpush1.bf16.msra.mxu0 0
      %367 = vmatprep.subr.bf16.mxu0 0
      %368 = vmatpush1.bf16.msra.mxu0 0
      %369 = vmatprep.subr.bf16.mxu0 0
      %370 = vmatpush1.bf16.msra.mxu0 0
      %371 = vmatprep.mubr.bf16.mxu0 0
      %372 = vmatmul.mubr.bf16.gmra.mrb[0].mxu0 %v328
      %v373 = vpop.f32.mrb[0].mxu0
      %v374 = vadd.f32 0.0, %v373
      %v375 = vpop.f32.mrb[0].mxu0
      %v376 = vpop.f32.mrb[0].mxu0
      %v377 = vadd.f32 0.0, %v376
      %v378 = vpop.f32.mrb[0].mxu0
      %379 = vmatprep.mubr.bf16.mxu0 0
      %380 = vmatmul.mubr.bf16.gmra.mrb[0].mxu0 %v331
      %v381 = vpop.f32.mrb[0].mxu0
      %v382 = vadd.f32 0.0, %v381
      %v383 = vpop.f32.mrb[0].mxu0
      %v384 = vpop.f32.mrb[0].mxu0
      %v385 = vadd.f32 0.0, %v384
      %v386 = vpop.f32.mrb[0].mxu0
      %387 = vmatprep.mubr.bf16.mxu0 0
      %388 = vmatmul.mubr.bf16.gmra.mrb[0].mxu0 %v334
      %v389 = vpop.f32.mrb[0].mxu0
      %v390 = vadd.f32 0.0, %v389
      %v391 = vpop.f32.mrb[0].mxu0
      %v392 = vpop.f32.mrb[0].mxu0
      %v393 = vadd.f32 0.0, %v392
      %v394 = vpop.f32.mrb[0].mxu0
      %395 = vmatprep.mubr.bf16.mxu0 0
      %396 = vmatmul.mubr.bf16.gmra.mrb[0].mxu0 %v337
      %v397 = vpop.f32.mrb[0].mxu0
      %v398 = vadd.f32 0.0, %v397
      %v399 = vpop.f32.mrb[0].mxu0
      %v400 = vpop.f32.mrb[0].mxu0
      %v401 = vadd.f32 0.0, %v400
      %v402 = vpop.f32.mrb[0].mxu0
      %403 = vdwg.mxu0
      %v412 = vunpack.c.l.b16 %v172
      %v413 = vunpack.c.l.b16 %v173
      %v414 = vunpack.c.l.b16 %v174
      %v415 = vunpack.c.l.b16 %v175
      %v416 = vunpack.c.l.b16 %v176
      %v417 = vunpack.c.l.b16 %v177
      %v418 = vunpack.c.l.b16 %v178
      %v419 = vunpack.c.l.b16 %v179
      %v420 = vpack.c.b16 %v413, %v412
      %v421 = vpack.c.b16 %v415, %v414
      %v422 = vpack.c.b16 %v417, %v416
      %v423 = vpack.c.b16 %v419, %v418
      %v426 = vunpack.c.l.b16 %v180
      %v427 = vunpack.c.l.b16 %v181
      %v428 = vpack.c.b16 %v427, %v426
      %v431 = vsel %vm326, %v420, 0
      %v434 = vsel %vm326, %v421, 0
      %v437 = vsel %vm326, %v422, 0
      %v440 = vsel %vm326, %v423, 0
      %442 = vmatprep.subr.bf16.mxu0 0
      %443 = vmatpush1.bf16.msra.mxu0 %v428
      %444 = vmatprep.subr.bf16.mxu0 0
      %445 = vmatpush1.bf16.msra.mxu0 0
      %446 = vmatprep.subr.bf16.mxu0 0
      %447 = vmatpush1.bf16.msra.mxu0 0
      %448 = vmatprep.subr.bf16.mxu0 0
      %449 = vmatpush1.bf16.msra.mxu0 0
      %450 = vmatprep.subr.bf16.mxu0 0
      %451 = vmatpush1.bf16.msra.mxu0 0
      %452 = vmatprep.subr.bf16.mxu0 0
      %453 = vmatpush1.bf16.msra.mxu0 0
      %454 = vmatprep.subr.bf16.mxu0 0
      %455 = vmatpush1.bf16.msra.mxu0 0
      %456 = vmatprep.subr.bf16.mxu0 0
      %457 = vmatpush1.bf16.msra.mxu0 0
      %458 = vmatprep.subr.bf16.mxu0 0
      %459 = vmatpush1.bf16.msra.mxu0 0
      %460 = vmatprep.subr.bf16.mxu0 0
      %461 = vmatpush1.bf16.msra.mxu0 0
      %462 = vmatprep.subr.bf16.mxu0 0
      %463 = vmatpush1.bf16.msra.mxu0 0
      %464 = vmatprep.subr.bf16.mxu0 0
      %465 = vmatpush1.bf16.msra.mxu0 0
      %466 = vmatprep.subr.bf16.mxu0 0
      %467 = vmatpush1.bf16.msra.mxu0 0
      %468 = vmatprep.subr.bf16.mxu0 0
      %469 = vmatpush1.bf16.msra.mxu0 0
      %470 = vmatprep.subr.bf16.mxu0 0
      %471 = vmatpush1.bf16.msra.mxu0 0
      %472 = vmatprep.subr.bf16.mxu0 0
      %473 = vmatpush1.bf16.msra.mxu0 0
      %474 = vmatprep.mubr.bf16.mxu0 0
      %475 = vmatmul.mubr.bf16.gmra.mrb[0].mxu0 %v431
      %v476 = vpop.f32.mrb[0].mxu0
      %v477 = vadd.f32 %v374, %v476
      %v478 = vpop.f32.mrb[0].mxu0
      %v479 = vpop.f32.mrb[0].mxu0
      %v480 = vadd.f32 %v377, %v479
      %v481 = vpop.f32.mrb[0].mxu0
      %482 = vmatprep.mubr.bf16.mxu0 0
      %483 = vmatmul.mubr.bf16.gmra.mrb[0].mxu0 %v434
      %v484 = vpop.f32.mrb[0].mxu0
      %v485 = vadd.f32 %v382, %v484
      %v486 = vpop.f32.mrb[0].mxu0
      %v487 = vpop.f32.mrb[0].mxu0
      %v488 = vadd.f32 %v385, %v487
      %v489 = vpop.f32.mrb[0].mxu0
      %490 = vmatprep.mubr.bf16.mxu0 0
      %491 = vmatmul.mubr.bf16.gmra.mrb[0].mxu0 %v437
      %v492 = vpop.f32.mrb[0].mxu0
      %v493 = vadd.f32 %v390, %v492
      %v494 = vpop.f32.mrb[0].mxu0
      %v495 = vpop.f32.mrb[0].mxu0
      %v496 = vadd.f32 %v393, %v495
      %v497 = vpop.f32.mrb[0].mxu0
      %498 = vmatprep.mubr.bf16.mxu0 0
      %499 = vmatmul.mubr.bf16.gmra.mrb[0].mxu0 %v440
      %v500 = vpop.f32.mrb[0].mxu0
      %v501 = vadd.f32 %v398, %v500
      %v502 = vpop.f32.mrb[0].mxu0
      %v503 = vpop.f32.mrb[0].mxu0
      %v504 = vadd.f32 %v401, %v503
      %v505 = vpop.f32.mrb[0].mxu0
      %506 = vdwg.mxu0
      %v507 = vld [vmem:[%s165] sm:$0xe]
      %v508 = vld [vmem:[%s165 + $0x8] sm:$0xe]
      %v509 = vld [vmem:[%s165 + $0x10] sm:$0xe]
      %v510 = vld [vmem:[%s165 + $0x18] sm:$0xe]
      %v511 = vld [vmem:[%s165 + $0x20] sm:$0xe]
      %v512 = vld [vmem:[%s165 + $0x28] sm:$0xe]
      %v513 = vld [vmem:[%s165 + $0x30] sm:$0xe]
      %v514 = vld [vmem:[%s165 + $0x38] sm:$0xe]
      %vm531 = vcmask 1042432
      %vm532 = vcmask 1046532
      %vm533 = vmor %vm531, %vm532
      %v534 = vrot.slane %v507, 5
      %v535 = vrot.slane %v534, 4
      %v536 = vrot.slane %v182, 5
      %v537 = vsel %vm533, %v535, %v536
      %v538 = vrot.slane %v508, 5
      %v539 = vrot.slane %v538, 4
      %v540 = vrot.slane %v183, 5
      %v541 = vsel %vm533, %v539, %v540
      %v542 = vrot.slane %v509, 5
      %v543 = vrot.slane %v542, 4
      %v544 = vrot.slane %v184, 5
      %v545 = vsel %vm533, %v543, %v544
      %v546 = vrot.slane %v510, 5
      %v547 = vrot.slane %v546, 4
      %v548 = vrot.slane %v185, 5
      %v549 = vsel %vm533, %v547, %v548
      %v550 = vrot.slane %v511, 5
      %v551 = vrot.slane %v550, 4
      %v552 = vrot.slane %v186, 5
      %v553 = vsel %vm533, %v551, %v552
      %v554 = vrot.slane %v512, 5
      %v555 = vrot.slane %v554, 4
      %v556 = vrot.slane %v187, 5
      %v557 = vsel %vm533, %v555, %v556
      %v558 = vrot.slane %v513, 5
      %v559 = vrot.slane %v558, 4
      %v560 = vrot.slane %v188, 5
      %v561 = vsel %vm533, %v559, %v560
      %v562 = vrot.slane %v514, 5
      %v563 = vrot.slane %v562, 4
      %v564 = vrot.slane %v189, 5
      %v565 = vsel %vm533, %v563, %v564
      %s566 = scalar_lea.vmem %s1, 16
      %v567 = vld [vmem:[%s566] sm:$0xf]
      %v568 = vld [vmem:[%s566 + $0x4] sm:$0xf]
      %v569 = vunpack.c.l.b16 %v537
      %v570 = vunpack.c.l.b16 %v541
      %v571 = vunpack.c.l.b16 %v545
      %v572 = vunpack.c.l.b16 %v549
      %v573 = vunpack.c.l.b16 %v553
      %v574 = vunpack.c.l.b16 %v557
      %v575 = vunpack.c.l.b16 %v561
      %v576 = vunpack.c.l.b16 %v565
      %v577 = vpack.c.b16 %v570, %v569
      %v578 = vpack.c.b16 %v572, %v571
      %v579 = vpack.c.b16 %v574, %v573
      %v580 = vpack.c.b16 %v576, %v575
      %v583 = vunpack.c.l.b16 %v567
      %v584 = vunpack.c.l.b16 %v568
      %v585 = vpack.c.b16 %v584, %v583
      %v588 = vsel %vm326, %v577, 0
      %v591 = vsel %vm326, %v578, 0
      %v594 = vsel %vm326, %v579, 0
      %v597 = vsel %vm326, %v580, 0
      %599 = vmatprep.subr.bf16.mxu0 0
      %600 = vmatpush1.bf16.msra.mxu0 %v585
      %601 = vmatprep.subr.bf16.mxu0 0
      %602 = vmatpush1.bf16.msra.mxu0 0
      %603 = vmatprep.subr.bf16.mxu0 0
      %604 = vmatpush1.bf16.msra.mxu0 0
      %605 = vmatprep.subr.bf16.mxu0 0
      %606 = vmatpush1.bf16.msra.mxu0 0
      %607 = vmatprep.subr.bf16.mxu0 0
      %608 = vmatpush1.bf16.msra.mxu0 0
      %609 = vmatprep.subr.bf16.mxu0 0
      %610 = vmatpush1.bf16.msra.mxu0 0
      %611 = vmatprep.subr.bf16.mxu0 0
      %612 = vmatpush1.bf16.msra.mxu0 0
      %613 = vmatprep.subr.bf16.mxu0 0
      %614 = vmatpush1.bf16.msra.mxu0 0
      %615 = vmatprep.subr.bf16.mxu0 0
      %616 = vmatpush1.bf16.msra.mxu0 0
      %617 = vmatprep.subr.bf16.mxu0 0
      %618 = vmatpush1.bf16.msra.mxu0 0
      %619 = vmatprep.subr.bf16.mxu0 0
      %620 = vmatpush1.bf16.msra.mxu0 0
      %621 = vmatprep.subr.bf16.mxu0 0
      %622 = vmatpush1.bf16.msra.mxu0 0
      %623 = vmatprep.subr.bf16.mxu0 0
      %624 = vmatpush1.bf16.msra.mxu0 0
      %625 = vmatprep.subr.bf16.mxu0 0
      %626 = vmatpush1.bf16.msra.mxu0 0
      %627 = vmatprep.subr.bf16.mxu0 0
      %628 = vmatpush1.bf16.msra.mxu0 0
      %629 = vmatprep.subr.bf16.mxu0 0
      %630 = vmatpush1.bf16.msra.mxu0 0
      %631 = vmatprep.mubr.bf16.mxu0 0
      %632 = vmatmul.mubr.bf16.gmra.mrb[0].mxu0 %v588
      %v633 = vpop.f32.mrb[0].mxu0
      %v634 = vadd.f32 0.0, %v633
      %v635 = vpop.f32.mrb[0].mxu0
      %v636 = vpop.f32.mrb[0].mxu0
      %v637 = vadd.f32 0.0, %v636
      %v638 = vpop.f32.mrb[0].mxu0
      %639 = vmatprep.mubr.bf16.mxu0 0
      %640 = vmatmul.mubr.bf16.gmra.mrb[0].mxu0 %v591
      %v641 = vpop.f32.mrb[0].mxu0
      %v642 = vadd.f32 0.0, %v641
      %v643 = vpop.f32.mrb[0].mxu0
      %v644 = vpop.f32.mrb[0].mxu0
      %v645 = vadd.f32 0.0, %v644
      %v646 = vpop.f32.mrb[0].mxu0
      %647 = vmatprep.mubr.bf16.mxu0 0
      %648 = vmatmul.mubr.bf16.gmra.mrb[0].mxu0 %v594
      %v649 = vpop.f32.mrb[0].mxu0
      %v650 = vadd.f32 0.0, %v649
      %v651 = vpop.f32.mrb[0].mxu0
      %v652 = vpop.f32.mrb[0].mxu0
      %v653 = vadd.f32 0.0, %v652
      %v654 = vpop.f32.mrb[0].mxu0
      %655 = vmatprep.mubr.bf16.mxu0 0
      %656 = vmatmul.mubr.bf16.gmra.mrb[0].mxu0 %v597
      %v657 = vpop.f32.mrb[0].mxu0
      %v658 = vadd.f32 0.0, %v657
      %v659 = vpop.f32.mrb[0].mxu0
      %v660 = vpop.f32.mrb[0].mxu0
      %v661 = vadd.f32 0.0, %v660
      %v662 = vpop.f32.mrb[0].mxu0
      %663 = vdwg.mxu0
      %v664 = vadd.f32 %v477, %v634
      %v665 = vadd.f32 %v480, %v637
      %v666 = vadd.f32 %v485, %v642
      %v667 = vadd.f32 %v488, %v645
      %v668 = vadd.f32 %v493, %v650
      %v669 = vadd.f32 %v496, %v653
      %v670 = vadd.f32 %v501, %v658
      %v671 = vadd.f32 %v504, %v661
      %s672 = scalar_lea.vmem %s165, 8
      %v673 = vld [vmem:[%s672] sm:$0xf]
      %v674 = vld [vmem:[%s672 + $0x8] sm:$0xf]
      %v675 = vld [vmem:[%s672 + $0x10] sm:$0xf]
      %v676 = vld [vmem:[%s672 + $0x18] sm:$0xf]
      %v677 = vld [vmem:[%s672 + $0x20] sm:$0xf]
      %v678 = vld [vmem:[%s672 + $0x28] sm:$0xf]
      %v679 = vld [vmem:[%s672 + $0x30] sm:$0xf]
      %v680 = vld [vmem:[%s672 + $0x38] sm:$0xf]
      %s681 = scalar_lea.vmem %s1, 24
      %v682 = vld [vmem:[%s681] sm:$0xf]
      %v683 = vld [vmem:[%s681 + $0x4] sm:$0xf]
      %v692 = vunpack.c.l.b16 %v673
      %v693 = vunpack.c.l.b16 %v674
      %v694 = vunpack.c.l.b16 %v675
      %v695 = vunpack.c.l.b16 %v676
      %v696 = vunpack.c.l.b16 %v677
      %v697 = vunpack.c.l.b16 %v678
      %v698 = vunpack.c.l.b16 %v679
      %v699 = vunpack.c.l.b16 %v680
      %v700 = vpack.c.b16 %v693, %v692
      %v701 = vpack.c.b16 %v695, %v694
      %v702 = vpack.c.b16 %v697, %v696
      %v703 = vpack.c.b16 %v699, %v698
      %v706 = vunpack.c.l.b16 %v682
      %v707 = vunpack.c.l.b16 %v683
      %v708 = vpack.c.b16 %v707, %v706
      %v711 = vsel %vm326, %v700, 0
      %v714 = vsel %vm326, %v701, 0
      %v717 = vsel %vm326, %v702, 0
      %v720 = vsel %vm326, %v703, 0
      %722 = vmatprep.subr.bf16.mxu0 0
      %723 = vmatpush1.bf16.msra.mxu0 %v708
      %724 = vmatprep.subr.bf16.mxu0 0
      %725 = vmatpush1.bf16.msra.mxu0 0
      %726 = vmatprep.subr.bf16.mxu0 0
      %727 = vmatpush1.bf16.msra.mxu0 0
      %728 = vmatprep.subr.bf16.mxu0 0
      %729 = vmatpush1.bf16.msra.mxu0 0
      %730 = vmatprep.subr.bf16.mxu0 0
      %731 = vmatpush1.bf16.msra.mxu0 0
      %732 = vmatprep.subr.bf16.mxu0 0
      %733 = vmatpush1.bf16.msra.mxu0 0
      %734 = vmatprep.subr.bf16.mxu0 0
      %735 = vmatpush1.bf16.msra.mxu0 0
      %736 = vmatprep.subr.bf16.mxu0 0
      %737 = vmatpush1.bf16.msra.mxu0 0
      %738 = vmatprep.subr.bf16.mxu0 0
      %739 = vmatpush1.bf16.msra.mxu0 0
      %740 = vmatprep.subr.bf16.mxu0 0
      %741 = vmatpush1.bf16.msra.mxu0 0
      %742 = vmatprep.subr.bf16.mxu0 0
      %743 = vmatpush1.bf16.msra.mxu0 0
      %744 = vmatprep.subr.bf16.mxu0 0
      %745 = vmatpush1.bf16.msra.mxu0 0
      %746 = vmatprep.subr.bf16.mxu0 0
      %747 = vmatpush1.bf16.msra.mxu0 0
      %748 = vmatprep.subr.bf16.mxu0 0
      %749 = vmatpush1.bf16.msra.mxu0 0
      %750 = vmatprep.subr.bf16.mxu0 0
      %751 = vmatpush1.bf16.msra.mxu0 0
      %752 = vmatprep.subr.bf16.mxu0 0
      %753 = vmatpush1.bf16.msra.mxu0 0
      %754 = vmatprep.mubr.bf16.mxu0 0
      %755 = vmatmul.mubr.bf16.gmra.mrb[0].mxu0 %v711
      %v756 = vpop.f32.mrb[0].mxu0
      %v757 = vadd.f32 0.0, %v756
      %v758 = vpop.f32.mrb[0].mxu0
      %v759 = vpop.f32.mrb[0].mxu0
      %v760 = vadd.f32 0.0, %v759
      %v761 = vpop.f32.mrb[0].mxu0
      %762 = vmatprep.mubr.bf16.mxu0 0
      %763 = vmatmul.mubr.bf16.gmra.mrb[0].mxu0 %v714
      %v764 = vpop.f32.mrb[0].mxu0
      %v765 = vadd.f32 0.0, %v764
      %v766 = vpop.f32.mrb[0].mxu0
      %v767 = vpop.f32.mrb[0].mxu0
      %v768 = vadd.f32 0.0, %v767
      %v769 = vpop.f32.mrb[0].mxu0
      %770 = vmatprep.mubr.bf16.mxu0 0
      %771 = vmatmul.mubr.bf16.gmra.mrb[0].mxu0 %v717
      %v772 = vpop.f32.mrb[0].mxu0
      %v773 = vadd.f32 0.0, %v772
      %v774 = vpop.f32.mrb[0].mxu0
      %v775 = vpop.f32.mrb[0].mxu0
      %v776 = vadd.f32 0.0, %v775
      %v777 = vpop.f32.mrb[0].mxu0
      %778 = vmatprep.mubr.bf16.mxu0 0
      %779 = vmatmul.mubr.bf16.gmra.mrb[0].mxu0 %v720
      %v780 = vpop.f32.mrb[0].mxu0
      %v781 = vadd.f32 0.0, %v780
      %v782 = vpop.f32.mrb[0].mxu0
      %v783 = vpop.f32.mrb[0].mxu0
      %v784 = vadd.f32 0.0, %v783
      %v785 = vpop.f32.mrb[0].mxu0
      %786 = vdwg.mxu0
      %v787 = vadd.f32 %v664, %v757
      %v788 = vadd.f32 %v665, %v760
      %v789 = vadd.f32 %v666, %v765
      %v790 = vadd.f32 %v667, %v768
      %v791 = vadd.f32 %v668, %v773
      %v792 = vadd.f32 %v669, %v776
      %v793 = vadd.f32 %v670, %v781
      %v794 = vadd.f32 %v671, %v784
      %v795 = vld [vmem:[%s672] sm:$0xf]
      %v796 = vld [vmem:[%s672 + $0x4] sm:$0x1]
      %v797 = vld [vmem:[%s672 + $0x8] sm:$0xf]
      %v798 = vld [vmem:[%s672 + $0xc] sm:$0x1]
      %v799 = vld [vmem:[%s672 + $0x10] sm:$0xf]
      %v800 = vld [vmem:[%s672 + $0x14] sm:$0x1]
      %v801 = vld [vmem:[%s672 + $0x18] sm:$0xf]
      %v802 = vld [vmem:[%s672 + $0x1c] sm:$0x1]
      %v803 = vld [vmem:[%s672 + $0x20] sm:$0xf]
      %v804 = vld [vmem:[%s672 + $0x24] sm:$0x1]
      %v805 = vld [vmem:[%s672 + $0x28] sm:$0xf]
      %v806 = vld [vmem:[%s672 + $0x2c] sm:$0x1]
      %v807 = vld [vmem:[%s672 + $0x30] sm:$0xf]
      %v808 = vld [vmem:[%s672 + $0x34] sm:$0x1]
      %v809 = vld [vmem:[%s672 + $0x38] sm:$0xf]
      %v810 = vld [vmem:[%s672 + $0x3c] sm:$0x1]
      %v812 = vshrl.u32 %v795, 16
      %v814 = vrot.slane %v812, 4
      %v815 = vshll.u32 %v795, 16
      %v817 = vrot.slane %v815, 5
      %v818 = vor.u32 %v814, %v817
      %v819 = vrot.slane %v818, 4
      %v821 = vshll.u32 %v796, 16
      %v823 = vrot.slane %v821, 5
      %v824 = vsel %vm192, %v819, %v823
      %v826 = vshrl.u32 %v797, 16
      %v828 = vrot.slane %v826, 4
      %v829 = vshll.u32 %v797, 16
      %v831 = vrot.slane %v829, 5
      %v832 = vor.u32 %v828, %v831
      %v833 = vrot.slane %v832, 4
      %v835 = vshll.u32 %v798, 16
      %v837 = vrot.slane %v835, 5
      %v838 = vsel %vm192, %v833, %v837
      %v840 = vshrl.u32 %v799, 16
      %v842 = vrot.slane %v840, 4
      %v843 = vshll.u32 %v799, 16
      %v845 = vrot.slane %v843, 5
      %v846 = vor.u32 %v842, %v845
      %v847 = vrot.slane %v846, 4
      %v849 = vshll.u32 %v800, 16
      %v851 = vrot.slane %v849, 5
      %v852 = vsel %vm192, %v847, %v851
      %v854 = vshrl.u32 %v801, 16
      %v856 = vrot.slane %v854, 4
      %v857 = vshll.u32 %v801, 16
      %v859 = vrot.slane %v857, 5
      %v860 = vor.u32 %v856, %v859
      %v861 = vrot.slane %v860, 4
      %v863 = vshll.u32 %v802, 16
      %v865 = vrot.slane %v863, 5
      %v866 = vsel %vm192, %v861, %v865
      %v868 = vshrl.u32 %v803, 16
      %v870 = vrot.slane %v868, 4
      %v871 = vshll.u32 %v803, 16
      %v873 = vrot.slane %v871, 5
      %v874 = vor.u32 %v870, %v873
      %v875 = vrot.slane %v874, 4
      %v877 = vshll.u32 %v804, 16
      %v879 = vrot.slane %v877, 5
      %v880 = vsel %vm192, %v875, %v879
      %v882 = vshrl.u32 %v805, 16
      %v884 = vrot.slane %v882, 4
      %v885 = vshll.u32 %v805, 16
      %v887 = vrot.slane %v885, 5
      %v888 = vor.u32 %v884, %v887
      %v889 = vrot.slane %v888, 4
      %v891 = vshll.u32 %v806, 16
      %v893 = vrot.slane %v891, 5
      %v894 = vsel %vm192, %v889, %v893
      %v896 = vshrl.u32 %v807, 16
      %v898 = vrot.slane %v896, 4
      %v899 = vshll.u32 %v807, 16
      %v901 = vrot.slane %v899, 5
      %v902 = vor.u32 %v898, %v901
      %v903 = vrot.slane %v902, 4
      %v905 = vshll.u32 %v808, 16
      %v907 = vrot.slane %v905, 5
      %v908 = vsel %vm192, %v903, %v907
      %v910 = vshrl.u32 %v809, 16
      %v912 = vrot.slane %v910, 4
      %v913 = vshll.u32 %v809, 16
      %v915 = vrot.slane %v913, 5
      %v916 = vor.u32 %v912, %v915
      %v917 = vrot.slane %v916, 4
      %v919 = vshll.u32 %v810, 16
      %v921 = vrot.slane %v919, 5
      %v922 = vsel %vm192, %v917, %v921
      %s923 = scalar_lea.vmem %s1, 32
      %v924 = vld [vmem:[%s923] sm:$0xf]
      %v925 = vld [vmem:[%s923 + $0x4] sm:$0xf]
      %v926 = vunpack.c.l.b16 %v824
      %v927 = vunpack.c.l.b16 %v838
      %v928 = vunpack.c.l.b16 %v852
      %v929 = vunpack.c.l.b16 %v866
      %v930 = vunpack.c.l.b16 %v880
      %v931 = vunpack.c.l.b16 %v894
      %v932 = vunpack.c.l.b16 %v908
      %v933 = vunpack.c.l.b16 %v922
      %v934 = vpack.c.b16 %v927, %v926
      %v935 = vpack.c.b16 %v929, %v928
      %v936 = vpack.c.b16 %v931, %v930
      %v937 = vpack.c.b16 %v933, %v932
      %v940 = vunpack.c.l.b16 %v924
      %v941 = vunpack.c.l.b16 %v925
      %v942 = vpack.c.b16 %v941, %v940
      %v945 = vsel %vm326, %v934, 0
      %v948 = vsel %vm326, %v935, 0
      %v951 = vsel %vm326, %v936, 0
      %v954 = vsel %vm326, %v937, 0
      %956 = vmatprep.subr.bf16.mxu0 0
      %957 = vmatpush1.bf16.msra.mxu0 %v942
      %958 = vmatprep.subr.bf16.mxu0 0
      %959 = vmatpush1.bf16.msra.mxu0 0
      %960 = vmatprep.subr.bf16.mxu0 0
      %961 = vmatpush1.bf16.msra.mxu0 0
      %962 = vmatprep.subr.bf16.mxu0 0
      %963 = vmatpush1.bf16.msra.mxu0 0
      %964 = vmatprep.subr.bf16.mxu0 0
      %965 = vmatpush1.bf16.msra.mxu0 0
      %966 = vmatprep.subr.bf16.mxu0 0
      %967 = vmatpush1.bf16.msra.mxu0 0
      %968 = vmatprep.subr.bf16.mxu0 0
      %969 = vmatpush1.bf16.msra.mxu0 0
      %970 = vmatprep.subr.bf16.mxu0 0
      %971 = vmatpush1.bf16.msra.mxu0 0
      %972 = vmatprep.subr.bf16.mxu0 0
      %973 = vmatpush1.bf16.msra.mxu0 0
      %974 = vmatprep.subr.bf16.mxu0 0
      %975 = vmatpush1.bf16.msra.mxu0 0
      %976 = vmatprep.subr.bf16.mxu0 0
      %977 = vmatpush1.bf16.msra.mxu0 0
      %978 = vmatprep.subr.bf16.mxu0 0
      %979 = vmatpush1.bf16.msra.mxu0 0
      %980 = vmatprep.subr.bf16.mxu0 0
      %981 = vmatpush1.bf16.msra.mxu0 0
      %982 = vmatprep.subr.bf16.mxu0 0
      %983 = vmatpush1.bf16.msra.mxu0 0
      %984 = vmatprep.subr.bf16.mxu0 0
      %985 = vmatpush1.bf16.msra.mxu0 0
      %986 = vmatprep.subr.bf16.mxu0 0
      %987 = vmatpush1.bf16.msra.mxu0 0
      %988 = vmatprep.mubr.bf16.mxu0 0
      %989 = vmatmul.mubr.bf16.gmra.mrb[0].mxu0 %v945
      %v990 = vpop.f32.mrb[0].mxu0
      %v991 = vadd.f32 0.0, %v990
      %v992 = vpop.f32.mrb[0].mxu0
      %v993 = vpop.f32.mrb[0].mxu0
      %v994 = vadd.f32 0.0, %v993
      %v995 = vpop.f32.mrb[0].mxu0
      %996 = vmatprep.mubr.bf16.mxu0 0
      %997 = vmatmul.mubr.bf16.gmra.mrb[0].mxu0 %v948
      %v998 = vpop.f32.mrb[0].mxu0
      %v999 = vadd.f32 0.0, %v998
      %v1000 = vpop.f32.mrb[0].mxu0
      %v1001 = vpop.f32.mrb[0].mxu0
      %v1002 = vadd.f32 0.0, %v1001
      %v1003 = vpop.f32.mrb[0].mxu0
      %1004 = vmatprep.mubr.bf16.mxu0 0
      %1005 = vmatmul.mubr.bf16.gmra.mrb[0].mxu0 %v951
      %v1006 = vpop.f32.mrb[0].mxu0
      %v1007 = vadd.f32 0.0, %v1006
      %v1008 = vpop.f32.mrb[0].mxu0
      %v1009 = vpop.f32.mrb[0].mxu0
      %v1010 = vadd.f32 0.0, %v1009
      %v1011 = vpop.f32.mrb[0].mxu0
      %1012 = vmatprep.mubr.bf16.mxu0 0
      %1013 = vmatmul.mubr.bf16.gmra.mrb[0].mxu0 %v954
      %v1014 = vpop.f32.mrb[0].mxu0
      %v1015 = vadd.f32 0.0, %v1014
      %v1016 = vpop.f32.mrb[0].mxu0
      %v1017 = vpop.f32.mrb[0].mxu0
      %v1018 = vadd.f32 0.0, %v1017
      %v1019 = vpop.f32.mrb[0].mxu0
      %1020 = vdwg.mxu0
      %v1021 = vadd.f32 %v787, %v991
      %v1022 = vadd.f32 %v788, %v994
      %v1023 = vadd.f32 %v789, %v999
      %v1024 = vadd.f32 %v790, %v1002
      %v1025 = vadd.f32 %v791, %v1007
      %v1026 = vadd.f32 %v792, %v1010
      %v1027 = vadd.f32 %v793, %v1015
      %v1028 = vadd.f32 %v794, %v1018
      %v1029 = vld [vmem:[%s672] sm:$0xe]
      %v1030 = vld [vmem:[%s672 + $0x8] sm:$0xe]
      %v1031 = vld [vmem:[%s672 + $0x10] sm:$0xe]
      %v1032 = vld [vmem:[%s672 + $0x18] sm:$0xe]
      %v1033 = vld [vmem:[%s672 + $0x20] sm:$0xe]
      %v1034 = vld [vmem:[%s672 + $0x28] sm:$0xe]
      %v1035 = vld [vmem:[%s672 + $0x30] sm:$0xe]
      %v1036 = vld [vmem:[%s672 + $0x38] sm:$0xe]
      %v1053 = vrot.slane %v1029, 5
      %v1054 = vrot.slane %v1053, 4
      %v1055 = vrot.slane %v796, 5
      %v1056 = vsel %vm533, %v1054, %v1055
      %v1057 = vrot.slane %v1030, 5
      %v1058 = vrot.slane %v1057, 4
      %v1059 = vrot.slane %v798, 5
      %v1060 = vsel %vm533, %v1058, %v1059
      %v1061 = vrot.slane %v1031, 5
      %v1062 = vrot.slane %v1061, 4
      %v1063 = vrot.slane %v800, 5
      %v1064 = vsel %vm533, %v1062, %v1063
      %v1065 = vrot.slane %v1032, 5
      %v1066 = vrot.slane %v1065, 4
      %v1067 = vrot.slane %v802, 5
      %v1068 = vsel %vm533, %v1066, %v1067
      %v1069 = vrot.slane %v1033, 5
      %v1070 = vrot.slane %v1069, 4
      %v1071 = vrot.slane %v804, 5
      %v1072 = vsel %vm533, %v1070, %v1071
      %v1073 = vrot.slane %v1034, 5
      %v1074 = vrot.slane %v1073, 4
      %v1075 = vrot.slane %v806, 5
      %v1076 = vsel %vm533, %v1074, %v1075
      %v1077 = vrot.slane %v1035, 5
      %v1078 = vrot.slane %v1077, 4
      %v1079 = vrot.slane %v808, 5
      %v1080 = vsel %vm533, %v1078, %v1079
      %v1081 = vrot.slane %v1036, 5
      %v1082 = vrot.slane %v1081, 4
      %v1083 = vrot.slane %v810, 5
      %v1084 = vsel %vm533, %v1082, %v1083
      %s1085 = scalar_lea.vmem %s1, 40
      %v1086 = vld [vmem:[%s1085] sm:$0xf]
      %v1087 = vld [vmem:[%s1085 + $0x4] sm:$0xf]
      %v1088 = vunpack.c.l.b16 %v1056
      %v1089 = vunpack.c.l.b16 %v1060
      %v1090 = vunpack.c.l.b16 %v1064
      %v1091 = vunpack.c.l.b16 %v1068
      %v1092 = vunpack.c.l.b16 %v1072
      %v1093 = vunpack.c.l.b16 %v1076
      %v1094 = vunpack.c.l.b16 %v1080
      %v1095 = vunpack.c.l.b16 %v1084
      %v1096 = vpack.c.b16 %v1089, %v1088
      %v1097 = vpack.c.b16 %v1091, %v1090
      %v1098 = vpack.c.b16 %v1093, %v1092
      %v1099 = vpack.c.b16 %v1095, %v1094
      %v1102 = vunpack.c.l.b16 %v1086
      %v1103 = vunpack.c.l.b16 %v1087
      %v1104 = vpack.c.b16 %v1103, %v1102
      %v1107 = vsel %vm326, %v1096, 0
      %v1110 = vsel %vm326, %v1097, 0
      %v1113 = vsel %vm326, %v1098, 0
      %v1116 = vsel %vm326, %v1099, 0
      %1118 = vmatprep.subr.bf16.mxu0 0
      %1119 = vmatpush1.bf16.msra.mxu0 %v1104
      %1120 = vmatprep.subr.bf16.mxu0 0
      %1121 = vmatpush1.bf16.msra.mxu0 0
      %1122 = vmatprep.subr.bf16.mxu0 0
      %1123 = vmatpush1.bf16.msra.mxu0 0
      %1124 = vmatprep.subr.bf16.mxu0 0
      %1125 = vmatpush1.bf16.msra.mxu0 0
      %1126 = vmatprep.subr.bf16.mxu0 0
      %1127 = vmatpush1.bf16.msra.mxu0 0
      %1128 = vmatprep.subr.bf16.mxu0 0
      %1129 = vmatpush1.bf16.msra.mxu0 0
      %1130 = vmatprep.subr.bf16.mxu0 0
      %1131 = vmatpush1.bf16.msra.mxu0 0
      %1132 = vmatprep.subr.bf16.mxu0 0
      %1133 = vmatpush1.bf16.msra.mxu0 0
      %1134 = vmatprep.subr.bf16.mxu0 0
      %1135 = vmatpush1.bf16.msra.mxu0 0
      %1136 = vmatprep.subr.bf16.mxu0 0
      %1137 = vmatpush1.bf16.msra.mxu0 0
      %1138 = vmatprep.subr.bf16.mxu0 0
      %1139 = vmatpush1.bf16.msra.mxu0 0
      %1140 = vmatprep.subr.bf16.mxu0 0
      %1141 = vmatpush1.bf16.msra.mxu0 0
      %1142 = vmatprep.subr.bf16.mxu0 0
      %1143 = vmatpush1.bf16.msra.mxu0 0
      %1144 = vmatprep.subr.bf16.mxu0 0
      %1145 = vmatpush1.bf16.msra.mxu0 0
      %1146 = vmatprep.subr.bf16.mxu0 0
      %1147 = vmatpush1.bf16.msra.mxu0 0
      %1148 = vmatprep.subr.bf16.mxu0 0
      %1149 = vmatpush1.bf16.msra.mxu0 0
      %1150 = vmatprep.mubr.bf16.mxu0 0
      %1151 = vmatmul.mubr.bf16.gmra.mrb[0].mxu0 %v1107
      %v1152 = vpop.f32.mrb[0].mxu0
      %v1153 = vadd.f32 0.0, %v1152
      %v1154 = vpop.f32.mrb[0].mxu0
      %v1155 = vpop.f32.mrb[0].mxu0
      %v1156 = vadd.f32 0.0, %v1155
      %v1157 = vpop.f32.mrb[0].mxu0
      %1158 = vmatprep.mubr.bf16.mxu0 0
      %1159 = vmatmul.mubr.bf16.gmra.mrb[0].mxu0 %v1110
      %v1160 = vpop.f32.mrb[0].mxu0
      %v1161 = vadd.f32 0.0, %v1160
      %v1162 = vpop.f32.mrb[0].mxu0
      %v1163 = vpop.f32.mrb[0].mxu0
      %v1164 = vadd.f32 0.0, %v1163
      %v1165 = vpop.f32.mrb[0].mxu0
      %1166 = vmatprep.mubr.bf16.mxu0 0
      %1167 = vmatmul.mubr.bf16.gmra.mrb[0].mxu0 %v1113
      %v1168 = vpop.f32.mrb[0].mxu0
      %v1169 = vadd.f32 0.0, %v1168
      %v1170 = vpop.f32.mrb[0].mxu0
      %v1171 = vpop.f32.mrb[0].mxu0
      %v1172 = vadd.f32 0.0, %v1171
      %v1173 = vpop.f32.mrb[0].mxu0
      %1174 = vmatprep.mubr.bf16.mxu0 0
      %1175 = vmatmul.mubr.bf16.gmra.mrb[0].mxu0 %v1116
      %v1176 = vpop.f32.mrb[0].mxu0
      %v1177 = vadd.f32 0.0, %v1176
      %v1178 = vpop.f32.mrb[0].mxu0
      %v1179 = vpop.f32.mrb[0].mxu0
      %v1180 = vadd.f32 0.0, %v1179
      %v1181 = vpop.f32.mrb[0].mxu0
      %1182 = vdwg.mxu0
      %v1183 = vadd.f32 %v1021, %v1153
      %v1184 = vadd.f32 %v1022, %v1156
      %v1185 = vadd.f32 %v1023, %v1161
      %v1186 = vadd.f32 %v1024, %v1164
      %v1187 = vadd.f32 %v1025, %v1169
      %v1188 = vadd.f32 %v1026, %v1172
      %v1189 = vadd.f32 %v1027, %v1177
      %v1190 = vadd.f32 %v1028, %v1180
      %s1191 = scalar_lea.vmem %s165, 16
      %v1192 = vld [vmem:[%s1191] sm:$0xf]
      %v1193 = vld [vmem:[%s1191 + $0x8] sm:$0xf]
      %v1194 = vld [vmem:[%s1191 + $0x10] sm:$0xf]
      %v1195 = vld [vmem:[%s1191 + $0x18] sm:$0xf]
      %v1196 = vld [vmem:[%s1191 + $0x20] sm:$0xf]
      %v1197 = vld [vmem:[%s1191 + $0x28] sm:$0xf]
      %v1198 = vld [vmem:[%s1191 + $0x30] sm:$0xf]
      %v1199 = vld [vmem:[%s1191 + $0x38] sm:$0xf]
      %s1200 = scalar_lea.vmem %s1, 48
      %v1201 = vld [vmem:[%s1200] sm:$0xf]
      %v1202 = vld [vmem:[%s1200 + $0x4] sm:$0xf]
      %v1211 = vunpack.c.l.b16 %v1192
      %v1212 = vunpack.c.l.b16 %v1193
      %v1213 = vunpack.c.l.b16 %v1194
      %v1214 = vunpack.c.l.b16 %v1195
      %v1215 = vunpack.c.l.b16 %v1196
      %v1216 = vunpack.c.l.b16 %v1197
      %v1217 = vunpack.c.l.b16 %v1198
      %v1218 = vunpack.c.l.b16 %v1199
      %v1219 = vpack.c.b16 %v1212, %v1211
      %v1220 = vpack.c.b16 %v1214, %v1213
      %v1221 = vpack.c.b16 %v1216, %v1215
      %v1222 = vpack.c.b16 %v1218, %v1217
      %v1225 = vunpack.c.l.b16 %v1201
      %v1226 = vunpack.c.l.b16 %v1202
      %v1227 = vpack.c.b16 %v1226, %v1225
      %v1230 = vsel %vm326, %v1219, 0
      %v1233 = vsel %vm326, %v1220, 0
      %v1236 = vsel %vm326, %v1221, 0
      %v1239 = vsel %vm326, %v1222, 0
      %1241 = vmatprep.subr.bf16.mxu0 0
      %1242 = vmatpush1.bf16.msra.mxu0 %v1227
      %1243 = vmatprep.subr.bf16.mxu0 0
      %1244 = vmatpush1.bf16.msra.mxu0 0
      %1245 = vmatprep.subr.bf16.mxu0 0
      %1246 = vmatpush1.bf16.msra.mxu0 0
      %1247 = vmatprep.subr.bf16.mxu0 0
      %1248 = vmatpush1.bf16.msra.mxu0 0
      %1249 = vmatprep.subr.bf16.mxu0 0
      %1250 = vmatpush1.bf16.msra.mxu0 0
      %1251 = vmatprep.subr.bf16.mxu0 0
      %1252 = vmatpush1.bf16.msra.mxu0 0
      %1253 = vmatprep.subr.bf16.mxu0 0
      %1254 = vmatpush1.bf16.msra.mxu0 0
      %1255 = vmatprep.subr.bf16.mxu0 0
      %1256 = vmatpush1.bf16.msra.mxu0 0
      %1257 = vmatprep.subr.bf16.mxu0 0
      %1258 = vmatpush1.bf16.msra.mxu0 0
      %1259 = vmatprep.subr.bf16.mxu0 0
      %1260 = vmatpush1.bf16.msra.mxu0 0
      %1261 = vmatprep.subr.bf16.mxu0 0
      %1262 = vmatpush1.bf16.msra.mxu0 0
      %1263 = vmatprep.subr.bf16.mxu0 0
      %1264 = vmatpush1.bf16.msra.mxu0 0
      %1265 = vmatprep.subr.bf16.mxu0 0
      %1266 = vmatpush1.bf16.msra.mxu0 0
      %1267 = vmatprep.subr.bf16.mxu0 0
      %1268 = vmatpush1.bf16.msra.mxu0 0
      %1269 = vmatprep.subr.bf16.mxu0 0
      %1270 = vmatpush1.bf16.msra.mxu0 0
      %1271 = vmatprep.subr.bf16.mxu0 0
      %1272 = vmatpush1.bf16.msra.mxu0 0
      %1273 = vmatprep.mubr.bf16.mxu0 0
      %1274 = vmatmul.mubr.bf16.gmra.mrb[0].mxu0 %v1230
      %v1275 = vpop.f32.mrb[0].mxu0
      %v1276 = vadd.f32 0.0, %v1275
      %v1277 = vpop.f32.mrb[0].mxu0
      %v1278 = vpop.f32.mrb[0].mxu0
      %v1279 = vadd.f32 0.0, %v1278
      %v1280 = vpop.f32.mrb[0].mxu0
      %1281 = vmatprep.mubr.bf16.mxu0 0
      %1282 = vmatmul.mubr.bf16.gmra.mrb[0].mxu0 %v1233
      %v1283 = vpop.f32.mrb[0].mxu0
      %v1284 = vadd.f32 0.0, %v1283
      %v1285 = vpop.f32.mrb[0].mxu0
      %v1286 = vpop.f32.mrb[0].mxu0
      %v1287 = vadd.f32 0.0, %v1286
      %v1288 = vpop.f32.mrb[0].mxu0
      %1289 = vmatprep.mubr.bf16.mxu0 0
      %1290 = vmatmul.mubr.bf16.gmra.mrb[0].mxu0 %v1236
      %v1291 = vpop.f32.mrb[0].mxu0
      %v1292 = vadd.f32 0.0, %v1291
      %v1293 = vpop.f32.mrb[0].mxu0
      %v1294 = vpop.f32.mrb[0].mxu0
      %v1295 = vadd.f32 0.0, %v1294
      %v1296 = vpop.f32.mrb[0].mxu0
      %1297 = vmatprep.mubr.bf16.mxu0 0
      %1298 = vmatmul.mubr.bf16.gmra.mrb[0].mxu0 %v1239
      %v1299 = vpop.f32.mrb[0].mxu0
      %v1300 = vadd.f32 0.0, %v1299
      %v1301 = vpop.f32.mrb[0].mxu0
      %v1302 = vpop.f32.mrb[0].mxu0
      %v1303 = vadd.f32 0.0, %v1302
      %v1304 = vpop.f32.mrb[0].mxu0
      %1305 = vdwg.mxu0
      %v1306 = vadd.f32 %v1183, %v1276
      %v1307 = vadd.f32 %v1184, %v1279
      %v1308 = vadd.f32 %v1185, %v1284
      %v1309 = vadd.f32 %v1186, %v1287
      %v1310 = vadd.f32 %v1187, %v1292
      %v1311 = vadd.f32 %v1188, %v1295
      %v1312 = vadd.f32 %v1189, %v1300
      %v1313 = vadd.f32 %v1190, %v1303
      %v1314 = vld [vmem:[%s1191] sm:$0xf]
      %v1315 = vld [vmem:[%s1191 + $0x4] sm:$0x1]
      %v1316 = vld [vmem:[%s1191 + $0x8] sm:$0xf]
      %v1317 = vld [vmem:[%s1191 + $0xc] sm:$0x1]
      %v1318 = vld [vmem:[%s1191 + $0x10] sm:$0xf]
      %v1319 = vld [vmem:[%s1191 + $0x14] sm:$0x1]
      %v1320 = vld [vmem:[%s1191 + $0x18] sm:$0xf]
      %v1321 = vld [vmem:[%s1191 + $0x1c] sm:$0x1]
      %v1322 = vld [vmem:[%s1191 + $0x20] sm:$0xf]
      %v1323 = vld [vmem:[%s1191 + $0x24] sm:$0x1]
      %v1324 = vld [vmem:[%s1191 + $0x28] sm:$0xf]
      %v1325 = vld [vmem:[%s1191 + $0x2c] sm:$0x1]
      %v1326 = vld [vmem:[%s1191 + $0x30] sm:$0xf]
      %v1327 = vld [vmem:[%s1191 + $0x34] sm:$0x1]
      %v1328 = vld [vmem:[%s1191 + $0x38] sm:$0xf]
      %v1329 = vld [vmem:[%s1191 + $0x3c] sm:$0x1]
      %v1331 = vshrl.u32 %v1314, 16
      %v1333 = vrot.slane %v1331, 4
      %v1334 = vshll.u32 %v1314, 16
      %v1336 = vrot.slane %v1334, 5
      %v1337 = vor.u32 %v1333, %v1336
      %v1338 = vrot.slane %v1337, 4
      %v1340 = vshll.u32 %v1315, 16
      %v1342 = vrot.slane %v1340, 5
      %v1343 = vsel %vm192, %v1338, %v1342
      %v1345 = vshrl.u32 %v1316, 16
      %v1347 = vrot.slane %v1345, 4
      %v1348 = vshll.u32 %v1316, 16
      %v1350 = vrot.slane %v1348, 5
      %v1351 = vor.u32 %v1347, %v1350
      %v1352 = vrot.slane %v1351, 4
      %v1354 = vshll.u32 %v1317, 16
      %v1356 = vrot.slane %v1354, 5
      %v1357 = vsel %vm192, %v1352, %v1356
      %v1359 = vshrl.u32 %v1318, 16
      %v1361 = vrot.slane %v1359, 4
      %v1362 = vshll.u32 %v1318, 16
      %v1364 = vrot.slane %v1362, 5
      %v1365 = vor.u32 %v1361, %v1364
      %v1366 = vrot.slane %v1365, 4
      %v1368 = vshll.u32 %v1319, 16
      %v1370 = vrot.slane %v1368, 5
      %v1371 = vsel %vm192, %v1366, %v1370
      %v1373 = vshrl.u32 %v1320, 16
      %v1375 = vrot.slane %v1373, 4
      %v1376 = vshll.u32 %v1320, 16
      %v1378 = vrot.slane %v1376, 5
      %v1379 = vor.u32 %v1375, %v1378
      %v1380 = vrot.slane %v1379, 4
      %v1382 = vshll.u32 %v1321, 16
      %v1384 = vrot.slane %v1382, 5
      %v1385 = vsel %vm192, %v1380, %v1384
      %v1387 = vshrl.u32 %v1322, 16
      %v1389 = vrot.slane %v1387, 4
      %v1390 = vshll.u32 %v1322, 16
      %v1392 = vrot.slane %v1390, 5
      %v1393 = vor.u32 %v1389, %v1392
      %v1394 = vrot.slane %v1393, 4
      %v1396 = vshll.u32 %v1323, 16
      %v1398 = vrot.slane %v1396, 5
      %v1399 = vsel %vm192, %v1394, %v1398
      %v1401 = vshrl.u32 %v1324, 16
      %v1403 = vrot.slane %v1401, 4
      %v1404 = vshll.u32 %v1324, 16
      %v1406 = vrot.slane %v1404, 5
      %v1407 = vor.u32 %v1403, %v1406
      %v1408 = vrot.slane %v1407, 4
      %v1410 = vshll.u32 %v1325, 16
      %v1412 = vrot.slane %v1410, 5
      %v1413 = vsel %vm192, %v1408, %v1412
      %v1415 = vshrl.u32 %v1326, 16
      %v1417 = vrot.slane %v1415, 4
      %v1418 = vshll.u32 %v1326, 16
      %v1420 = vrot.slane %v1418, 5
      %v1421 = vor.u32 %v1417, %v1420
      %v1422 = vrot.slane %v1421, 4
      %v1424 = vshll.u32 %v1327, 16
      %v1426 = vrot.slane %v1424, 5
      %v1427 = vsel %vm192, %v1422, %v1426
      %v1429 = vshrl.u32 %v1328, 16
      %v1431 = vrot.slane %v1429, 4
      %v1432 = vshll.u32 %v1328, 16
      %v1434 = vrot.slane %v1432, 5
      %v1435 = vor.u32 %v1431, %v1434
      %v1436 = vrot.slane %v1435, 4
      %v1438 = vshll.u32 %v1329, 16
      %v1440 = vrot.slane %v1438, 5
      %v1441 = vsel %vm192, %v1436, %v1440
      %s1442 = scalar_lea.vmem %s1, 56
      %v1443 = vld [vmem:[%s1442] sm:$0xf]
      %v1444 = vld [vmem:[%s1442 + $0x4] sm:$0xf]
      %v1445 = vunpack.c.l.b16 %v1343
      %v1446 = vunpack.c.l.b16 %v1357
      %v1447 = vunpack.c.l.b16 %v1371
      %v1448 = vunpack.c.l.b16 %v1385
      %v1449 = vunpack.c.l.b16 %v1399
      %v1450 = vunpack.c.l.b16 %v1413
      %v1451 = vunpack.c.l.b16 %v1427
      %v1452 = vunpack.c.l.b16 %v1441
      %v1453 = vpack.c.b16 %v1446, %v1445
      %v1454 = vpack.c.b16 %v1448, %v1447
      %v1455 = vpack.c.b16 %v1450, %v1449
      %v1456 = vpack.c.b16 %v1452, %v1451
      %v1459 = vunpack.c.l.b16 %v1443
      %v1460 = vunpack.c.l.b16 %v1444
      %v1461 = vpack.c.b16 %v1460, %v1459
      %v1464 = vsel %vm326, %v1453, 0
      %v1467 = vsel %vm326, %v1454, 0
      %v1470 = vsel %vm326, %v1455, 0
      %v1473 = vsel %vm326, %v1456, 0
      %1475 = vmatprep.subr.bf16.mxu0 0
      %1476 = vmatpush1.bf16.msra.mxu0 %v1461
      %1477 = vmatprep.subr.bf16.mxu0 0
      %1478 = vmatpush1.bf16.msra.mxu0 0
      %1479 = vmatprep.subr.bf16.mxu0 0
      %1480 = vmatpush1.bf16.msra.mxu0 0
      %1481 = vmatprep.subr.bf16.mxu0 0
      %1482 = vmatpush1.bf16.msra.mxu0 0
      %1483 = vmatprep.subr.bf16.mxu0 0
      %1484 = vmatpush1.bf16.msra.mxu0 0
      %1485 = vmatprep.subr.bf16.mxu0 0
      %1486 = vmatpush1.bf16.msra.mxu0 0
      %1487 = vmatprep.subr.bf16.mxu0 0
      %1488 = vmatpush1.bf16.msra.mxu0 0
      %1489 = vmatprep.subr.bf16.mxu0 0
      %1490 = vmatpush1.bf16.msra.mxu0 0
      %1491 = vmatprep.subr.bf16.mxu0 0
      %1492 = vmatpush1.bf16.msra.mxu0 0
      %1493 = vmatprep.subr.bf16.mxu0 0
      %1494 = vmatpush1.bf16.msra.mxu0 0
      %1495 = vmatprep.subr.bf16.mxu0 0
      %1496 = vmatpush1.bf16.msra.mxu0 0
      %1497 = vmatprep.subr.bf16.mxu0 0
      %1498 = vmatpush1.bf16.msra.mxu0 0
      %1499 = vmatprep.subr.bf16.mxu0 0
      %1500 = vmatpush1.bf16.msra.mxu0 0
      %1501 = vmatprep.subr.bf16.mxu0 0
      %1502 = vmatpush1.bf16.msra.mxu0 0
      %1503 = vmatprep.subr.bf16.mxu0 0
      %1504 = vmatpush1.bf16.msra.mxu0 0
      %1505 = vmatprep.subr.bf16.mxu0 0
      %1506 = vmatpush1.bf16.msra.mxu0 0
      %1507 = vmatprep.mubr.bf16.mxu0 0
      %1508 = vmatmul.mubr.bf16.gmra.mrb[0].mxu0 %v1464
      %v1509 = vpop.f32.mrb[0].mxu0
      %v1510 = vadd.f32 0.0, %v1509
      %v1511 = vpop.f32.mrb[0].mxu0
      %v1512 = vpop.f32.mrb[0].mxu0
      %v1513 = vadd.f32 0.0, %v1512
      %v1514 = vpop.f32.mrb[0].mxu0
      %1515 = vmatprep.mubr.bf16.mxu0 0
      %1516 = vmatmul.mubr.bf16.gmra.mrb[0].mxu0 %v1467
      %v1517 = vpop.f32.mrb[0].mxu0
      %v1518 = vadd.f32 0.0, %v1517
      %v1519 = vpop.f32.mrb[0].mxu0
      %v1520 = vpop.f32.mrb[0].mxu0
      %v1521 = vadd.f32 0.0, %v1520
      %v1522 = vpop.f32.mrb[0].mxu0
      %1523 = vmatprep.mubr.bf16.mxu0 0
      %1524 = vmatmul.mubr.bf16.gmra.mrb[0].mxu0 %v1470
      %v1525 = vpop.f32.mrb[0].mxu0
      %v1526 = vadd.f32 0.0, %v1525
      %v1527 = vpop.f32.mrb[0].mxu0
      %v1528 = vpop.f32.mrb[0].mxu0
      %v1529 = vadd.f32 0.0, %v1528
      %v1530 = vpop.f32.mrb[0].mxu0
      %1531 = vmatprep.mubr.bf16.mxu0 0
      %1532 = vmatmul.mubr.bf16.gmra.mrb[0].mxu0 %v1473
      %v1533 = vpop.f32.mrb[0].mxu0
      %v1534 = vadd.f32 0.0, %v1533
      %v1535 = vpop.f32.mrb[0].mxu0
      %v1536 = vpop.f32.mrb[0].mxu0
      %v1537 = vadd.f32 0.0, %v1536
      %v1538 = vpop.f32.mrb[0].mxu0
      %1539 = vdwg.mxu0
      %v1540 = vadd.f32 %v1306, %v1510
      %v1541 = vadd.f32 %v1307, %v1513
      %v1542 = vadd.f32 %v1308, %v1518
      %v1543 = vadd.f32 %v1309, %v1521
      %v1544 = vadd.f32 %v1310, %v1526
      %v1545 = vadd.f32 %v1311, %v1529
      %v1546 = vadd.f32 %v1312, %v1534
      %v1547 = vadd.f32 %v1313, %v1537
      %v1548 = vld [vmem:[%s1191] sm:$0xe]
      %v1549 = vld [vmem:[%s1191 + $0x8] sm:$0xe]
      %v1550 = vld [vmem:[%s1191 + $0x10] sm:$0xe]
      %v1551 = vld [vmem:[%s1191 + $0x18] sm:$0xe]
      %v1552 = vld [vmem:[%s1191 + $0x20] sm:$0xe]
      %v1553 = vld [vmem:[%s1191 + $0x28] sm:$0xe]
      %v1554 = vld [vmem:[%s1191 + $0x30] sm:$0xe]
      %v1555 = vld [vmem:[%s1191 + $0x38] sm:$0xe]
      %v1572 = vrot.slane %v1548, 5
      %v1573 = vrot.slane %v1572, 4
      %v1574 = vrot.slane %v1315, 5
      %v1575 = vsel %vm533, %v1573, %v1574
      %v1576 = vrot.slane %v1549, 5
      %v1577 = vrot.slane %v1576, 4
      %v1578 = vrot.slane %v1317, 5
      %v1579 = vsel %vm533, %v1577, %v1578
      %v1580 = vrot.slane %v1550, 5
      %v1581 = vrot.slane %v1580, 4
      %v1582 = vrot.slane %v1319, 5
      %v1583 = vsel %vm533, %v1581, %v1582
      %v1584 = vrot.slane %v1551, 5
      %v1585 = vrot.slane %v1584, 4
      %v1586 = vrot.slane %v1321, 5
      %v1587 = vsel %vm533, %v1585, %v1586
      %v1588 = vrot.slane %v1552, 5
      %v1589 = vrot.slane %v1588, 4
      %v1590 = vrot.slane %v1323, 5
      %v1591 = vsel %vm533, %v1589, %v1590
      %v1592 = vrot.slane %v1553, 5
      %v1593 = vrot.slane %v1592, 4
      %v1594 = vrot.slane %v1325, 5
      %v1595 = vsel %vm533, %v1593, %v1594
      %v1596 = vrot.slane %v1554, 5
      %v1597 = vrot.slane %v1596, 4
      %v1598 = vrot.slane %v1327, 5
      %v1599 = vsel %vm533, %v1597, %v1598
      %v1600 = vrot.slane %v1555, 5
      %v1601 = vrot.slane %v1600, 4
      %v1602 = vrot.slane %v1329, 5
      %v1603 = vsel %vm533, %v1601, %v1602
      %s1604 = scalar_lea.vmem %s1, 64
      %v1605 = vld [vmem:[%s1604] sm:$0xf]
      %v1606 = vld [vmem:[%s1604 + $0x4] sm:$0xf]
      %v1607 = vunpack.c.l.b16 %v1575
      %v1608 = vunpack.c.l.b16 %v1579
      %v1609 = vunpack.c.l.b16 %v1583
      %v1610 = vunpack.c.l.b16 %v1587
      %v1611 = vunpack.c.l.b16 %v1591
      %v1612 = vunpack.c.l.b16 %v1595
      %v1613 = vunpack.c.l.b16 %v1599
      %v1614 = vunpack.c.l.b16 %v1603
      %v1615 = vpack.c.b16 %v1608, %v1607
      %v1616 = vpack.c.b16 %v1610, %v1609
      %v1617 = vpack.c.b16 %v1612, %v1611
      %v1618 = vpack.c.b16 %v1614, %v1613
      %v1621 = vunpack.c.l.b16 %v1605
      %v1622 = vunpack.c.l.b16 %v1606
      %v1623 = vpack.c.b16 %v1622, %v1621
      %v1626 = vsel %vm326, %v1615, 0
      %v1629 = vsel %vm326, %v1616, 0
      %v1632 = vsel %vm326, %v1617, 0
      %v1635 = vsel %vm326, %v1618, 0
      %1637 = vmatprep.subr.bf16.mxu0 0
      %1638 = vmatpush1.bf16.msra.mxu0 %v1623
      %1639 = vmatprep.subr.bf16.mxu0 0
      %1640 = vmatpush1.bf16.msra.mxu0 0
      %1641 = vmatprep.subr.bf16.mxu0 0
      %1642 = vmatpush1.bf16.msra.mxu0 0
      %1643 = vmatprep.subr.bf16.mxu0 0
      %1644 = vmatpush1.bf16.msra.mxu0 0
      %1645 = vmatprep.subr.bf16.mxu0 0
      %1646 = vmatpush1.bf16.msra.mxu0 0
      %1647 = vmatprep.subr.bf16.mxu0 0
      %1648 = vmatpush1.bf16.msra.mxu0 0
      %1649 = vmatprep.subr.bf16.mxu0 0
      %1650 = vmatpush1.bf16.msra.mxu0 0
      %1651 = vmatprep.subr.bf16.mxu0 0
      %1652 = vmatpush1.bf16.msra.mxu0 0
      %1653 = vmatprep.subr.bf16.mxu0 0
      %1654 = vmatpush1.bf16.msra.mxu0 0
      %1655 = vmatprep.subr.bf16.mxu0 0
      %1656 = vmatpush1.bf16.msra.mxu0 0
      %1657 = vmatprep.subr.bf16.mxu0 0
      %1658 = vmatpush1.bf16.msra.mxu0 0
      %1659 = vmatprep.subr.bf16.mxu0 0
      %1660 = vmatpush1.bf16.msra.mxu0 0
      %1661 = vmatprep.subr.bf16.mxu0 0
      %1662 = vmatpush1.bf16.msra.mxu0 0
      %1663 = vmatprep.subr.bf16.mxu0 0
      %1664 = vmatpush1.bf16.msra.mxu0 0
      %1665 = vmatprep.subr.bf16.mxu0 0
      %1666 = vmatpush1.bf16.msra.mxu0 0
      %1667 = vmatprep.subr.bf16.mxu0 0
      %1668 = vmatpush1.bf16.msra.mxu0 0
      %1669 = vmatprep.mubr.bf16.mxu0 0
      %1670 = vmatmul.mubr.bf16.gmra.mrb[0].mxu0 %v1626
      %v1671 = vpop.f32.mrb[0].mxu0
      %v1672 = vadd.f32 0.0, %v1671
      %v1673 = vpop.f32.mrb[0].mxu0
      %v1674 = vpop.f32.mrb[0].mxu0
      %v1675 = vadd.f32 0.0, %v1674
      %v1676 = vpop.f32.mrb[0].mxu0
      %1677 = vmatprep.mubr.bf16.mxu0 0
      %1678 = vmatmul.mubr.bf16.gmra.mrb[0].mxu0 %v1629
      %v1679 = vpop.f32.mrb[0].mxu0
      %v1680 = vadd.f32 0.0, %v1679
      %v1681 = vpop.f32.mrb[0].mxu0
      %v1682 = vpop.f32.mrb[0].mxu0
      %v1683 = vadd.f32 0.0, %v1682
      %v1684 = vpop.f32.mrb[0].mxu0
      %1685 = vmatprep.mubr.bf16.mxu0 0
      %1686 = vmatmul.mubr.bf16.gmra.mrb[0].mxu0 %v1632
      %v1687 = vpop.f32.mrb[0].mxu0
      %v1688 = vadd.f32 0.0, %v1687
      %v1689 = vpop.f32.mrb[0].mxu0
      %v1690 = vpop.f32.mrb[0].mxu0
      %v1691 = vadd.f32 0.0, %v1690
      %v1692 = vpop.f32.mrb[0].mxu0
      %1693 = vmatprep.mubr.bf16.mxu0 0
      %1694 = vmatmul.mubr.bf16.gmra.mrb[0].mxu0 %v1635
      %v1695 = vpop.f32.mrb[0].mxu0
      %v1696 = vadd.f32 0.0, %v1695
      %v1697 = vpop.f32.mrb[0].mxu0
      %v1698 = vpop.f32.mrb[0].mxu0
      %v1699 = vadd.f32 0.0, %v1698
      %v1700 = vpop.f32.mrb[0].mxu0
      %1701 = vdwg.mxu0
      %v1702 = vadd.f32 %v1540, %v1672
      %v1703 = vadd.f32 %v1541, %v1675
      %v1704 = vadd.f32 %v1542, %v1680
      %v1705 = vadd.f32 %v1543, %v1683
      %v1706 = vadd.f32 %v1544, %v1688
      %v1707 = vadd.f32 %v1545, %v1691
      %v1708 = vadd.f32 %v1546, %v1696
      %v1709 = vadd.f32 %v1547, %v1699
      %v1710 = vld [vmem:[%s2] sm:$0x1]
      %v1712 = vlaneseq
      %v1713 = vshrl.u32 %v1712, 7
      %v1714 = vsub.s32 0, %v1713
      %v1715 = vrot.slane %v1710, %v1714
      %v1717 = vadd.f32 %v1702, %v1715
      %v1718 = vadd.f32 %v1703, %v1715
      %v1719 = vadd.f32 %v1704, %v1715
      %v1720 = vadd.f32 %v1705, %v1715
      %v1721 = vadd.f32 %v1706, %v1715
      %v1722 = vadd.f32 %v1707, %v1715
      %v1723 = vadd.f32 %v1708, %v1715
      %v1724 = vadd.f32 %v1709, %v1715
      %v1725 = vpack.c.bf16 %v1717, %v1717
      %v1726 = vpack.c.bf16 %v1718, %v1718
      %v1727 = vpack.c.bf16 %v1719, %v1719
      %v1728 = vpack.c.bf16 %v1720, %v1720
      %v1729 = vpack.c.bf16 %v1721, %v1721
      %v1730 = vpack.c.bf16 %v1722, %v1722
      %v1731 = vpack.c.bf16 %v1723, %v1723
      %v1732 = vpack.c.bf16 %v1724, %v1724
      %1733 = vst [vmem:[%s170] sm:$0xf] %v1725
      %1734 = vst [vmem:[%s170 + $0x4] sm:$0xf] %v1726
      %1735 = vst [vmem:[%s170 + $0x8] sm:$0xf] %v1727
      %1736 = vst [vmem:[%s170 + $0xc] sm:$0xf] %v1728
      %1737 = vst [vmem:[%s170 + $0x10] sm:$0xf] %v1729
      %1738 = vst [vmem:[%s170 + $0x14] sm:$0xf] %v1730
      %1739 = vst [vmem:[%s170 + $0x18] sm:$0xf] %v1731
      %1740 = vst [vmem:[%s170 + $0x1c] sm:$0xf] %v1732
      %p1741 = scmp.lt.s32.totalorder %s14, 1
      %s1742 = scalar_select %p1741, %s14, 1
      %s1743 = smul.addr %s1742, 8
      %s1744 = smul.addr %s1743, 4
      %s1745 = scalar_lea.vmem %s3, %s1744
      // Predicated region
      $region33: #{forward.13} parent=31 // pred_check
        %p1746 = pneg %p100
      $region34: #{forward.13} parent=31 // pred_check_branch
        %1748 = sbr.rel (%p1746) target = $region36
      $region35: #{forward.13} parent=31 // pred_region
        _
      $region36: #{forward.13} parent=31 // pred_fallthru
        _
    $region32: #{forward.13} parent=5 // pred_fallthru
      _
    %p1749 = scmp.le.s32.totalorder 2, %s9
    // Predicated region
    $region37: #{forward.13} parent=5 // pred_check
      %p1750 = pneg %p1749
    $region38: #{forward.13} parent=5 // pred_check_branch
      %1752 = sbr.rel (%p1750) target = $region40
    $region39: #{forward.13} parent=5 // pred_region
      %s1753 = ssub.s32 %s9, 2
      // Predicated region
      $region41: #{forward.13} parent=39 // pred_check
        %p1754 = pneg %p106
      $region42: #{forward.13} parent=39 // pred_check_branch
        %1756 = sbr.rel (%p1754) target = $region44
      $region43: #{forward.13} parent=39 // pred_region
        %p1757 = scmp.lt.s32.totalorder %s15, 1
        %s1758 = scalar_select %p1757, %s15, 1
        %s1759 = smul.addr %s1758, 8
        %s1760 = smul.addr %s1759, 4
        %s1761 = scalar_lea.vmem %s3, %s1760
      $region44: #{forward.13} parent=39 // pred_fallthru
        _
    $region40: #{forward.13} parent=5 // pred_fallthru
      _
  $region6: #{forward.13} parent=0 // loop_footer
    %s13 = sadd.s32 1, %s9
  $region7: #{forward.13} parent=0 // loop_footer_branch
    %8 = sbr.rel target = $region3
  $region8: #{forward.13} parent=0 // loop_exit
    _

// kernel: forward.14
$region0: #{forward.14}
  #allocation0 [shape = 'u32[]', space=smem, size = 0x4, offset = 0x4, fixed_abs, tag = 'smem constant byte address 0x4 - core index']
  #allocation1 [shape = 'u32[144,128]{1,0:T(1,128)}', space=vmem, size = 0x12000, scoped, tag = 'internal scratch']
  %s0 = inlined_call_operand.vmem [shape: bf16[2,10,10,16], index: 0, kind: input, shape index: {}]
  %s1 = inlined_call_operand.vmem [shape: bf16[9,16,128], index: 1, kind: input, shape index: {}]
  %s2 = inlined_call_operand.vmem [shape: f32[1,128], index: 2, kind: input, shape index: {}]
  %s3 = inlined_call_operand.vmem [shape: bf16[128,128], index: 3, kind: input, shape index: {}]
  %s4 = inlined_call_operand.vmem [shape: f32[1,128], index: 4, kind: input, shape index: {}]
  %s5 = inlined_call_operand.vmem [shape: f32[2,8,8,128], index: 5, kind: output, shape index: {}]
  %s6 = sld [smem:[#allocation0]]
  $region53: #{forward.14} parent=0
    _
  %s8 = ssub.s32 1, %s6
  %s9 = scalar_select 0, %s8, %s6
  loop: start=0, step=1, limit=4
  $region2: #{forward.14} parent=0 // loop_pre_header
    _
  $region3: #{forward.14} parent=0 // loop_header
    %s11 = sphi 0, %s15
    %p12 = scmp.ge.s32.totalorder %s11, 4
    %s21 = sphi 0, %s23
    %s24 = sphi 0, %s21
    %s25 = sphi 0, %s24
    %s41 = sphi 0, %s25
    %s45 = sphi 0, %s45
    %s47 = sphi 0, %s45
    %s48 = sphi 0, %s47
    %s62 = sphi 0, %s48
    %s66 = sphi 0, %s66
    %s68 = sphi 0, %s66
    %s69 = sphi 0, %s68
    %s83 = sphi 0, %s69
    %s87 = sphi 0, %s87
    %s89 = sphi 0, %s87
    %s90 = sphi 0, %s89
    %s104 = sphi 0, %s90
    %s108 = sphi 0, %s108
    %s110 = sphi 0, %s108
    %s111 = sphi 0, %s110
    %s125 = sphi 0, %s111
    %s131 = sphi 0, %s133
    %s134 = sphi 0, %s131
    %s135 = sphi 0, %s134
    %s151 = sphi 0, %s135
  $region4: #{forward.14} parent=0 // loop_header_branch
    %14 = sbr.rel (%p12) target = $region8
  $region5: #{forward.14} parent=0 // loop_body
    %s16 = ssub.s32 %s11, 1
    %s17 = ssub.s32 %s11, 2
    %s18 = sadd.s32 %s11, 1
    %s19 = ssub.s32 %s11, %s18
    %p20 = scmp.eq.s32.totalorder %s19, 0
    %s22 = sadd.s32 %s21, 1
    %s23 = scalar_select %p20, %s21, %s22
    %p26 = pneg %p20
    %p27 = scmp.eq.s32.totalorder %s11, 1
    %p28 = por %p26, %p27
    %p29 = scmp.ne.s32.totalorder %s21, %s24
    %p30 = scmp.eq.s32.totalorder %s11, 0
    %p31 = por %p29, %p30
    %p32 = scmp.ne.s32.totalorder %s21, %s24
    %p33 = scmp.eq.s32.totalorder %s16, 1
    %p34 = por %p32, %p33
    %p35 = scmp.ne.s32.totalorder %s24, %s25
    %p36 = scmp.eq.s32.totalorder %s16, 0
    %p37 = por %p35, %p36
    %p38 = scmp.ne.s32.totalorder %s24, %s25
    %p39 = scmp.eq.s32.totalorder %s17, 1
    %p40 = por %p38, %p39
    %p42 = scmp.ne.s32.totalorder %s25, %s41
    %p43 = scmp.eq.s32.totalorder %s17, 0
    %p44 = por %p42, %p43
    %s46 = sadd.s32 %s45, 1
    %p49 = scmp.eq.s32.totalorder %s11, 1
    %p50 = scmp.ne.s32.totalorder %s45, %s47
    %p51 = scmp.eq.s32.totalorder %s11, 0
    %p52 = por %p50, %p51
    %p53 = scmp.ne.s32.totalorder %s45, %s47
    %p54 = scmp.eq.s32.totalorder %s16, 1
    %p55 = por %p53, %p54
    %p56 = scmp.ne.s32.totalorder %s47, %s48
    %p57 = scmp.eq.s32.totalorder %s16, 0
    %p58 = por %p56, %p57
    %p59 = scmp.ne.s32.totalorder %s47, %s48
    %p60 = scmp.eq.s32.totalorder %s17, 1
    %p61 = por %p59, %p60
    %p63 = scmp.ne.s32.totalorder %s48, %s62
    %p64 = scmp.eq.s32.totalorder %s17, 0
    %p65 = por %p63, %p64
    %s67 = sadd.s32 %s66, 1
    %p70 = scmp.eq.s32.totalorder %s11, 1
    %p71 = scmp.ne.s32.totalorder %s66, %s68
    %p72 = scmp.eq.s32.totalorder %s11, 0
    %p73 = por %p71, %p72
    %p74 = scmp.ne.s32.totalorder %s66, %s68
    %p75 = scmp.eq.s32.totalorder %s16, 1
    %p76 = por %p74, %p75
    %p77 = scmp.ne.s32.totalorder %s68, %s69
    %p78 = scmp.eq.s32.totalorder %s16, 0
    %p79 = por %p77, %p78
    %p80 = scmp.ne.s32.totalorder %s68, %s69
    %p81 = scmp.eq.s32.totalorder %s17, 1
    %p82 = por %p80, %p81
    %p84 = scmp.ne.s32.totalorder %s69, %s83
    %p85 = scmp.eq.s32.totalorder %s17, 0
    %p86 = por %p84, %p85
    %s88 = sadd.s32 %s87, 1
    %p91 = scmp.eq.s32.totalorder %s11, 1
    %p92 = scmp.ne.s32.totalorder %s87, %s89
    %p93 = scmp.eq.s32.totalorder %s11, 0
    %p94 = por %p92, %p93
    %p95 = scmp.ne.s32.totalorder %s87, %s89
    %p96 = scmp.eq.s32.totalorder %s16, 1
    %p97 = por %p95, %p96
    %p98 = scmp.ne.s32.totalorder %s89, %s90
    %p99 = scmp.eq.s32.totalorder %s16, 0
    %p100 = por %p98, %p99
    %p101 = scmp.ne.s32.totalorder %s89, %s90
    %p102 = scmp.eq.s32.totalorder %s17, 1
    %p103 = por %p101, %p102
    %p105 = scmp.ne.s32.totalorder %s90, %s104
    %p106 = scmp.eq.s32.totalorder %s17, 0
    %p107 = por %p105, %p106
    %s109 = sadd.s32 %s108, 1
    %p112 = scmp.eq.s32.totalorder %s11, 1
    %p113 = scmp.ne.s32.totalorder %s108, %s110
    %p114 = scmp.eq.s32.totalorder %s11, 0
    %p115 = por %p113, %p114
    %p116 = scmp.ne.s32.totalorder %s108, %s110
    %p117 = scmp.eq.s32.totalorder %s16, 1
    %p118 = por %p116, %p117
    %p119 = scmp.ne.s32.totalorder %s110, %s111
    %p120 = scmp.eq.s32.totalorder %s16, 0
    %p121 = por %p119, %p120
    %p122 = scmp.ne.s32.totalorder %s110, %s111
    %p123 = scmp.eq.s32.totalorder %s17, 1
    %p124 = por %p122, %p123
    %p126 = scmp.ne.s32.totalorder %s111, %s125
    %p127 = scmp.eq.s32.totalorder %s17, 0
    %p128 = por %p126, %p127
    %s129 = ssub.s32 %s11, %s18
    %p130 = scmp.eq.s32.totalorder %s129, 0
    %s132 = sadd.s32 %s131, 1
    %s133 = scalar_select %p130, %s131, %s132
    %p136 = pneg %p130
    %p137 = scmp.eq.s32.totalorder %s11, 1
    %p138 = por %p136, %p137
    %p139 = scmp.ne.s32.totalorder %s131, %s134
    %p140 = scmp.eq.s32.totalorder %s11, 0
    %p141 = por %p139, %p140
    %p142 = scmp.ne.s32.totalorder %s131, %s134
    %p143 = scmp.eq.s32.totalorder %s16, 1
    %p144 = por %p142, %p143
    %p145 = scmp.ne.s32.totalorder %s134, %s135
    %p146 = scmp.eq.s32.totalorder %s16, 0
    %p147 = por %p145, %p146
    %p148 = scmp.ne.s32.totalorder %s134, %s135
    %p149 = scmp.eq.s32.totalorder %s17, 1
    %p150 = por %p148, %p149
    %p152 = scmp.ne.s32.totalorder %s135, %s151
    %p153 = scmp.eq.s32.totalorder %s17, 0
    %p154 = por %p152, %p153
    %p155 = scmp.le.s32.totalorder 1, %s11
    %p156 = scmp.lt.s32.totalorder %s11, 3
    %p157 = pnand %p155, %p156
    %p158 = pneg %p157
    // Predicated region
    $region9: #{forward.14} parent=5 // pred_check
      _
    $region10: #{forward.14} parent=5 // pred_check_branch
      %160 = sbr.rel (%p157) target = $region12
    $region11: #{forward.14} parent=5 // pred_region
      %s161 = ssub.s32 %s11, 1
      // Predicated region
      $region13: #{forward.14} parent=11 // pred_check
        %p162 = pneg %p58
      $region14: #{forward.14} parent=11 // pred_check_branch
        %164 = sbr.rel (%p162) target = $region16
      $region15: #{forward.14} parent=11 // pred_region
        _
      $region16: #{forward.14} parent=11 // pred_fallthru
        _
      // Predicated region
      $region17: #{forward.14} parent=11 // pred_check
        %p165 = pneg %p79
      $region18: #{forward.14} parent=11 // pred_check_branch
        %167 = sbr.rel (%p165) target = $region20
      $region19: #{forward.14} parent=11 // pred_region
        _
      $region20: #{forward.14} parent=11 // pred_fallthru
        _
      // Predicated region
      $region21: #{forward.14} parent=11 // pred_check
        %p168 = pneg %p100
      $region22: #{forward.14} parent=11 // pred_check_branch
        %170 = sbr.rel (%p168) target = $region24
      $region23: #{forward.14} parent=11 // pred_region
        _
      $region24: #{forward.14} parent=11 // pred_fallthru
        _
      // Predicated region
      $region25: #{forward.14} parent=11 // pred_check
        %p171 = pneg %p121
      $region26: #{forward.14} parent=11 // pred_check_branch
        %173 = sbr.rel (%p171) target = $region28
      $region27: #{forward.14} parent=11 // pred_region
        _
      $region28: #{forward.14} parent=11 // pred_fallthru
        _
    $region12: #{forward.14} parent=5 // pred_fallthru
      _
    %p174 = scmp.lt.s32.totalorder %s11, 2
    // Predicated region
    $region29: #{forward.14} parent=5 // pred_check
      %p175 = pneg %p174
    $region30: #{forward.14} parent=5 // pred_check_branch
      %177 = sbr.rel (%p175) target = $region32
    $region31: #{forward.14} parent=5 // pred_region
      // Predicated region
      $region33: #{forward.14} parent=31 // pred_check
        %p178 = pneg %p31
      $region34: #{forward.14} parent=31 // pred_check_branch
        %180 = sbr.rel (%p178) target = $region36
      $region35: #{forward.14} parent=31 // pred_region
        %p181 = scmp.lt.s32.totalorder %s11, 1
        %s182 = scalar_select %p181, %s11, 1
        %s183 = smul.addr %s182, 20
        %s184 = smul.addr %s183, 4
        %s185 = scalar_lea.vmem %s0, %s184
      $region36: #{forward.14} parent=31 // pred_fallthru
        _
    $region32: #{forward.14} parent=5 // pred_fallthru
      _
    %p186 = scmp.le.s32.totalorder 1, %s11
    %p187 = scmp.lt.s32.totalorder %s11, 3
    %p188 = pnand %p186, %p187
    %p189 = pneg %p188
    // Predicated region
    $region37: #{forward.14} parent=5 // pred_check
      _
    $region38: #{forward.14} parent=5 // pred_check_branch
      %191 = sbr.rel (%p188) target = $region40
    $region39: #{forward.14} parent=5 // pred_region
      %s192 = ssub.s32 %s11, 1
      %p193 = scmp.lt.s32.totalorder %s16, 1
      %s194 = scalar_select %p193, %s16, 1
      %s195 = smul.addr %s194, 20
      %s196 = smul.addr %s195, 4
      %s197 = scalar_lea.vmem %s0, %s196
      %p198 = pneg %p37
      %p199 = pneg %p34
      %p200 = pneg %p58
      %p201 = pneg %p55
      %p202 = pneg %p79
      %p203 = pneg %p76
      %p204 = pneg %p100
      %p205 = pneg %p97
      %p206 = pneg %p121
      %p207 = pneg %p118
      %p208 = pneg %p147
      %p209 = pneg %p144
      %p210 = scmp.lt.s32.totalorder %s16, 1
      %s211 = scalar_select %p210, %s16, 1
      %s212 = smul.addr %s211, 8
      %s213 = smul.addr %s212, 8
      %s214 = scalar_lea.vmem %s5, %s213
      %p215 = scmp.lt.s32.totalorder %s16, 1
      %s216 = scalar_select %p215, %s16, 1
      %s217 = smul.addr %s216, 20
      %s218 = smul.addr %s217, 4
      %s219 = scalar_lea.vmem %s0, %s218
      %p220 = scmp.lt.s32.totalorder %s16, 1
      %s221 = scalar_select %p220, %s16, 1
      %s222 = smul.addr %s221, 8
      %s223 = smul.addr %s222, 8
      %s224 = scalar_lea.vmem %s5, %s223
      %v226 = vld [vmem:[%s219] sm:$0xf]
      %v227 = vld [vmem:[%s219 + $0x8] sm:$0xf]
      %v228 = vld [vmem:[%s219 + $0x10] sm:$0xf]
      %v229 = vld [vmem:[%s219 + $0x18] sm:$0xf]
      %v230 = vld [vmem:[%s219 + $0x20] sm:$0xf]
      %v231 = vld [vmem:[%s219 + $0x28] sm:$0xf]
      %v232 = vld [vmem:[%s219 + $0x30] sm:$0xf]
      %v233 = vld [vmem:[%s219 + $0x38] sm:$0xf]
      %v234 = vld [vmem:[%s1] sm:$0xf]
      %v235 = vld [vmem:[%s1 + $0x4] sm:$0xf]
      %v236 = vld [vmem:[%s219 + $0x4] sm:$0x1]
      %v237 = vld [vmem:[%s219 + $0xc] sm:$0x1]
      %v238 = vld [vmem:[%s219 + $0x14] sm:$0x1]
      %v239 = vld [vmem:[%s219 + $0x1c] sm:$0x1]
      %v240 = vld [vmem:[%s219 + $0x24] sm:$0x1]
      %v241 = vld [vmem:[%s219 + $0x2c] sm:$0x1]
      %v242 = vld [vmem:[%s219 + $0x34] sm:$0x1]
      %v243 = vld [vmem:[%s219 + $0x3c] sm:$0x1]
      %vm244 = vsmask.f32 3328
      %vm245 = vsmask.f32 7440
      %vm246 = vmor %vm244, %vm245
      %v248 = vshrl.u32 %v226, 16
      %v250 = vrot.slane %v248, 4
      %v251 = vshll.u32 %v226, 16
      %v253 = vrot.slane %v251, 5
      %v254 = vor.u32 %v250, %v253
      %v255 = vrot.slane %v254, 4
      %v257 = vshll.u32 %v236, 16
      %v259 = vrot.slane %v257, 5
      %v260 = vsel %vm246, %v255, %v259
      %v262 = vshrl.u32 %v227, 16
      %v264 = vrot.slane %v262, 4
      %v265 = vshll.u32 %v227, 16
      %v267 = vrot.slane %v265, 5
      %v268 = vor.u32 %v264, %v267
      %v269 = vrot.slane %v268, 4
      %v271 = vshll.u32 %v237, 16
      %v273 = vrot.slane %v271, 5
      %v274 = vsel %vm246, %v269, %v273
      %v276 = vshrl.u32 %v228, 16
      %v278 = vrot.slane %v276, 4
      %v279 = vshll.u32 %v228, 16
      %v281 = vrot.slane %v279, 5
      %v282 = vor.u32 %v278, %v281
      %v283 = vrot.slane %v282, 4
      %v285 = vshll.u32 %v238, 16
      %v287 = vrot.slane %v285, 5
      %v288 = vsel %vm246, %v283, %v287
      %v290 = vshrl.u32 %v229, 16
      %v292 = vrot.slane %v290, 4
      %v293 = vshll.u32 %v229, 16
      %v295 = vrot.slane %v293, 5
      %v296 = vor.u32 %v292, %v295
      %v297 = vrot.slane %v296, 4
      %v299 = vshll.u32 %v239, 16
      %v301 = vrot.slane %v299, 5
      %v302 = vsel %vm246, %v297, %v301
      %v304 = vshrl.u32 %v230, 16
      %v306 = vrot.slane %v304, 4
      %v307 = vshll.u32 %v230, 16
      %v309 = vrot.slane %v307, 5
      %v310 = vor.u32 %v306, %v309
      %v311 = vrot.slane %v310, 4
      %v313 = vshll.u32 %v240, 16
      %v315 = vrot.slane %v313, 5
      %v316 = vsel %vm246, %v311, %v315
      %v318 = vshrl.u32 %v231, 16
      %v320 = vrot.slane %v318, 4
      %v321 = vshll.u32 %v231, 16
      %v323 = vrot.slane %v321, 5
      %v324 = vor.u32 %v320, %v323
      %v325 = vrot.slane %v324, 4
      %v327 = vshll.u32 %v241, 16
      %v329 = vrot.slane %v327, 5
      %v330 = vsel %vm246, %v325, %v329
      %v332 = vshrl.u32 %v232, 16
      %v334 = vrot.slane %v332, 4
      %v335 = vshll.u32 %v232, 16
      %v337 = vrot.slane %v335, 5
      %v338 = vor.u32 %v334, %v337
      %v339 = vrot.slane %v338, 4
      %v341 = vshll.u32 %v242, 16
      %v343 = vrot.slane %v341, 5
      %v344 = vsel %vm246, %v339, %v343
      %v346 = vshrl.u32 %v233, 16
      %v348 = vrot.slane %v346, 4
      %v349 = vshll.u32 %v233, 16
      %v351 = vrot.slane %v349, 5
      %v352 = vor.u32 %v348, %v351
      %v353 = vrot.slane %v352, 4
      %v355 = vshll.u32 %v243, 16
      %v357 = vrot.slane %v355, 5
      %v358 = vsel %vm246, %v353, %v357
      %s359 = scalar_lea.vmem %s1, 8
      %v360 = vld [vmem:[%s359] sm:$0xf]
      %v361 = vld [vmem:[%s359 + $0x4] sm:$0xf]
      %v362 = vunpack.c.l.b16 %v260
      %v363 = vunpack.c.l.b16 %v274
      %v364 = vunpack.c.l.b16 %v288
      %v365 = vunpack.c.l.b16 %v302
      %v366 = vunpack.c.l.b16 %v316
      %v367 = vunpack.c.l.b16 %v330
      %v368 = vunpack.c.l.b16 %v344
      %v369 = vunpack.c.l.b16 %v358
      %v370 = vpack.c.b16 %v363, %v362
      %v371 = vpack.c.b16 %v365, %v364
      %v372 = vpack.c.b16 %v367, %v366
      %v373 = vpack.c.b16 %v369, %v368
      %v376 = vunpack.c.l.b16 %v360
      %v377 = vunpack.c.l.b16 %v361
      %v378 = vpack.c.b16 %v377, %v376
      %vm380 = vcmask 130048
      %v382 = vsel %vm380, %v370, 0
      %v385 = vsel %vm380, %v371, 0
      %v388 = vsel %vm380, %v372, 0
      %v391 = vsel %vm380, %v373, 0
      %393 = vmatprep.subr.bf16.mxu0 0
      %394 = vmatpush1.bf16.msra.mxu0 %v378
      %395 = vmatprep.subr.bf16.mxu0 0
      %396 = vmatpush1.bf16.msra.mxu0 0
      %397 = vmatprep.subr.bf16.mxu0 0
      %398 = vmatpush1.bf16.msra.mxu0 0
      %399 = vmatprep.subr.bf16.mxu0 0
      %400 = vmatpush1.bf16.msra.mxu0 0
      %401 = vmatprep.subr.bf16.mxu0 0
      %402 = vmatpush1.bf16.msra.mxu0 0
      %403 = vmatprep.subr.bf16.mxu0 0
      %404 = vmatpush1.bf16.msra.mxu0 0
      %405 = vmatprep.subr.bf16.mxu0 0
      %406 = vmatpush1.bf16.msra.mxu0 0
      %407 = vmatprep.subr.bf16.mxu0 0
      %408 = vmatpush1.bf16.msra.mxu0 0
      %409 = vmatprep.subr.bf16.mxu0 0
      %410 = vmatpush1.bf16.msra.mxu0 0
      %411 = vmatprep.subr.bf16.mxu0 0
      %412 = vmatpush1.bf16.msra.mxu0 0
      %413 = vmatprep.subr.bf16.mxu0 0
      %414 = vmatpush1.bf16.msra.mxu0 0
      %415 = vmatprep.subr.bf16.mxu0 0
      %416 = vmatpush1.bf16.msra.mxu0 0
      %417 = vmatprep.subr.bf16.mxu0 0
      %418 = vmatpush1.bf16.msra.mxu0 0
      %419 = vmatprep.subr.bf16.mxu0 0
      %420 = vmatpush1.bf16.msra.mxu0 0
      %421 = vmatprep.subr.bf16.mxu0 0
      %422 = vmatpush1.bf16.msra.mxu0 0
      %423 = vmatprep.subr.bf16.mxu0 0
      %424 = vmatpush1.bf16.msra.mxu0 0
      %425 = vmatprep.mubr.bf16.mxu0 0
      %426 = vmatmul.mubr.bf16.gmra.mrb[0].mxu0 %v382
      %v427 = vpop.f32.mrb[0].mxu0
      %v428 = vadd.f32 0.0, %v427
      %v429 = vpop.f32.mrb[0].mxu0
      %v430 = vpop.f32.mrb[0].mxu0
      %v431 = vadd.f32 0.0, %v430
      %v432 = vpop.f32.mrb[0].mxu0
      %433 = vmatprep.mubr.bf16.mxu0 0
      %434 = vmatmul.mubr.bf16.gmra.mrb[0].mxu0 %v385
      %v435 = vpop.f32.mrb[0].mxu0
      %v436 = vadd.f32 0.0, %v435
      %v437 = vpop.f32.mrb[0].mxu0
      %v438 = vpop.f32.mrb[0].mxu0
      %v439 = vadd.f32 0.0, %v438
      %v440 = vpop.f32.mrb[0].mxu0
      %441 = vmatprep.mubr.bf16.mxu0 0
      %442 = vmatmul.mubr.bf16.gmra.mrb[0].mxu0 %v388
      %v443 = vpop.f32.mrb[0].mxu0
      %v444 = vadd.f32 0.0, %v443
      %v445 = vpop.f32.mrb[0].mxu0
      %v446 = vpop.f32.mrb[0].mxu0
      %v447 = vadd.f32 0.0, %v446
      %v448 = vpop.f32.mrb[0].mxu0
      %449 = vmatprep.mubr.bf16.mxu0 0
      %450 = vmatmul.mubr.bf16.gmra.mrb[0].mxu0 %v391
      %v451 = vpop.f32.mrb[0].mxu0
      %v452 = vadd.f32 0.0, %v451
      %v453 = vpop.f32.mrb[0].mxu0
      %v454 = vpop.f32.mrb[0].mxu0
      %v455 = vadd.f32 0.0, %v454
      %v456 = vpop.f32.mrb[0].mxu0
      %457 = vdwg.mxu0
      %v466 = vunpack.c.l.b16 %v226
      %v467 = vunpack.c.l.b16 %v227
      %v468 = vunpack.c.l.b16 %v228
      %v469 = vunpack.c.l.b16 %v229
      %v470 = vunpack.c.l.b16 %v230
      %v471 = vunpack.c.l.b16 %v231
      %v472 = vunpack.c.l.b16 %v232
      %v473 = vunpack.c.l.b16 %v233
      %v474 = vpack.c.b16 %v467, %v466
      %v475 = vpack.c.b16 %v469, %v468
      %v476 = vpack.c.b16 %v471, %v470
      %v477 = vpack.c.b16 %v473, %v472
      %v480 = vunpack.c.l.b16 %v234
      %v481 = vunpack.c.l.b16 %v235
      %v482 = vpack.c.b16 %v481, %v480
      %v485 = vsel %vm380, %v474, 0
      %v488 = vsel %vm380, %v475, 0
      %v491 = vsel %vm380, %v476, 0
      %v494 = vsel %vm380, %v477, 0
      %496 = vmatprep.subr.bf16.mxu0 0
      %497 = vmatpush1.bf16.msra.mxu0 %v482
      %498 = vmatprep.subr.bf16.mxu0 0
      %499 = vmatpush1.bf16.msra.mxu0 0
      %500 = vmatprep.subr.bf16.mxu0 0
      %501 = vmatpush1.bf16.msra.mxu0 0
      %502 = vmatprep.subr.bf16.mxu0 0
      %503 = vmatpush1.bf16.msra.mxu0 0
      %504 = vmatprep.subr.bf16.mxu0 0
      %505 = vmatpush1.bf16.msra.mxu0 0
      %506 = vmatprep.subr.bf16.mxu0 0
      %507 = vmatpush1.bf16.msra.mxu0 0
      %508 = vmatprep.subr.bf16.mxu0 0
      %509 = vmatpush1.bf16.msra.mxu0 0
      %510 = vmatprep.subr.bf16.mxu0 0
      %511 = vmatpush1.bf16.msra.mxu0 0
      %512 = vmatprep.subr.bf16.mxu0 0
      %513 = vmatpush1.bf16.msra.mxu0 0
      %514 = vmatprep.subr.bf16.mxu0 0
      %515 = vmatpush1.bf16.msra.mxu0 0
      %516 = vmatprep.subr.bf16.mxu0 0
      %517 = vmatpush1.bf16.msra.mxu0 0
      %518 = vmatprep.subr.bf16.mxu0 0
      %519 = vmatpush1.bf16.msra.mxu0 0
      %520 = vmatprep.subr.bf16.mxu0 0
      %521 = vmatpush1.bf16.msra.mxu0 0
      %522 = vmatprep.subr.bf16.mxu0 0
      %523 = vmatpush1.bf16.msra.mxu0 0
      %524 = vmatprep.subr.bf16.mxu0 0
      %525 = vmatpush1.bf16.msra.mxu0 0
      %526 = vmatprep.subr.bf16.mxu0 0
      %527 = vmatpush1.bf16.msra.mxu0 0
      %528 = vmatprep.mubr.bf16.mxu0 0
      %529 = vmatmul.mubr.bf16.gmra.mrb[0].mxu0 %v485
      %v530 = vpop.f32.mrb[0].mxu0
      %v531 = vadd.f32 %v428, %v530
      %v532 = vpop.f32.mrb[0].mxu0
      %v533 = vpop.f32.mrb[0].mxu0
      %v534 = vadd.f32 %v431, %v533
      %v535 = vpop.f32.mrb[0].mxu0
      %536 = vmatprep.mubr.bf16.mxu0 0
      %537 = vmatmul.mubr.bf16.gmra.mrb[0].mxu0 %v488
      %v538 = vpop.f32.mrb[0].mxu0
      %v539 = vadd.f32 %v436, %v538
      %v540 = vpop.f32.mrb[0].mxu0
      %v541 = vpop.f32.mrb[0].mxu0
      %v542 = vadd.f32 %v439, %v541
      %v543 = vpop.f32.mrb[0].mxu0
      %544 = vmatprep.mubr.bf16.mxu0 0
      %545 = vmatmul.mubr.bf16.gmra.mrb[0].mxu0 %v491
      %v546 = vpop.f32.mrb[0].mxu0
      %v547 = vadd.f32 %v444, %v546
      %v548 = vpop.f32.mrb[0].mxu0
      %v549 = vpop.f32.mrb[0].mxu0
      %v550 = vadd.f32 %v447, %v549
      %v551 = vpop.f32.mrb[0].mxu0
      %552 = vmatprep.mubr.bf16.mxu0 0
      %553 = vmatmul.mubr.bf16.gmra.mrb[0].mxu0 %v494
      %v554 = vpop.f32.mrb[0].mxu0
      %v555 = vadd.f32 %v452, %v554
      %v556 = vpop.f32.mrb[0].mxu0
      %v557 = vpop.f32.mrb[0].mxu0
      %v558 = vadd.f32 %v455, %v557
      %v559 = vpop.f32.mrb[0].mxu0
      %560 = vdwg.mxu0
      %v561 = vld [vmem:[%s219] sm:$0xe]
      %v562 = vld [vmem:[%s219 + $0x8] sm:$0xe]
      %v563 = vld [vmem:[%s219 + $0x10] sm:$0xe]
      %v564 = vld [vmem:[%s219 + $0x18] sm:$0xe]
      %v565 = vld [vmem:[%s219 + $0x20] sm:$0xe]
      %v566 = vld [vmem:[%s219 + $0x28] sm:$0xe]
      %v567 = vld [vmem:[%s219 + $0x30] sm:$0xe]
      %v568 = vld [vmem:[%s219 + $0x38] sm:$0xe]
      %vm585 = vcmask 1042432
      %vm586 = vcmask 1046532
      %vm587 = vmor %vm585, %vm586
      %v588 = vrot.slane %v561, 5
      %v589 = vrot.slane %v588, 4
      %v590 = vrot.slane %v236, 5
      %v591 = vsel %vm587, %v589, %v590
      %v592 = vrot.slane %v562, 5
      %v593 = vrot.slane %v592, 4
      %v594 = vrot.slane %v237, 5
      %v595 = vsel %vm587, %v593, %v594
      %v596 = vrot.slane %v563, 5
      %v597 = vrot.slane %v596, 4
      %v598 = vrot.slane %v238, 5
      %v599 = vsel %vm587, %v597, %v598
      %v600 = vrot.slane %v564, 5
      %v601 = vrot.slane %v600, 4
      %v602 = vrot.slane %v239, 5
      %v603 = vsel %vm587, %v601, %v602
      %v604 = vrot.slane %v565, 5
      %v605 = vrot.slane %v604, 4
      %v606 = vrot.slane %v240, 5
      %v607 = vsel %vm587, %v605, %v606
      %v608 = vrot.slane %v566, 5
      %v609 = vrot.slane %v608, 4
      %v610 = vrot.slane %v241, 5
      %v611 = vsel %vm587, %v609, %v610
      %v612 = vrot.slane %v567, 5
      %v613 = vrot.slane %v612, 4
      %v614 = vrot.slane %v242, 5
      %v615 = vsel %vm587, %v613, %v614
      %v616 = vrot.slane %v568, 5
      %v617 = vrot.slane %v616, 4
      %v618 = vrot.slane %v243, 5
      %v619 = vsel %vm587, %v617, %v618
      %s620 = scalar_lea.vmem %s1, 16
      %v621 = vld [vmem:[%s620] sm:$0xf]
      %v622 = vld [vmem:[%s620 + $0x4] sm:$0xf]
      %v623 = vunpack.c.l.b16 %v591
      %v624 = vunpack.c.l.b16 %v595
      %v625 = vunpack.c.l.b16 %v599
      %v626 = vunpack.c.l.b16 %v603
      %v627 = vunpack.c.l.b16 %v607
      %v628 = vunpack.c.l.b16 %v611
      %v629 = vunpack.c.l.b16 %v615
      %v630 = vunpack.c.l.b16 %v619
      %v631 = vpack.c.b16 %v624, %v623
      %v632 = vpack.c.b16 %v626, %v625
      %v633 = vpack.c.b16 %v628, %v627
      %v634 = vpack.c.b16 %v630, %v629
      %v637 = vunpack.c.l.b16 %v621
      %v638 = vunpack.c.l.b16 %v622
      %v639 = vpack.c.b16 %v638, %v637
      %v642 = vsel %vm380, %v631, 0
      %v645 = vsel %vm380, %v632, 0
      %v648 = vsel %vm380, %v633, 0
      %v651 = vsel %vm380, %v634, 0
      %653 = vmatprep.subr.bf16.mxu0 0
      %654 = vmatpush1.bf16.msra.mxu0 %v639
      %655 = vmatprep.subr.bf16.mxu0 0
      %656 = vmatpush1.bf16.msra.mxu0 0
      %657 = vmatprep.subr.bf16.mxu0 0
      %658 = vmatpush1.bf16.msra.mxu0 0
      %659 = vmatprep.subr.bf16.mxu0 0
      %660 = vmatpush1.bf16.msra.mxu0 0
      %661 = vmatprep.subr.bf16.mxu0 0
      %662 = vmatpush1.bf16.msra.mxu0 0
      %663 = vmatprep.subr.bf16.mxu0 0
      %664 = vmatpush1.bf16.msra.mxu0 0
      %665 = vmatprep.subr.bf16.mxu0 0
      %666 = vmatpush1.bf16.msra.mxu0 0
      %667 = vmatprep.subr.bf16.mxu0 0
      %668 = vmatpush1.bf16.msra.mxu0 0
      %669 = vmatprep.subr.bf16.mxu0 0
      %670 = vmatpush1.bf16.msra.mxu0 0
      %671 = vmatprep.subr.bf16.mxu0 0
      %672 = vmatpush1.bf16.msra.mxu0 0
      %673 = vmatprep.subr.bf16.mxu0 0
      %674 = vmatpush1.bf16.msra.mxu0 0
      %675 = vmatprep.subr.bf16.mxu0 0
      %676 = vmatpush1.bf16.msra.mxu0 0
      %677 = vmatprep.subr.bf16.mxu0 0
      %678 = vmatpush1.bf16.msra.mxu0 0
      %679 = vmatprep.subr.bf16.mxu0 0
      %680 = vmatpush1.bf16.msra.mxu0 0
      %681 = vmatprep.subr.bf16.mxu0 0
      %682 = vmatpush1.bf16.msra.mxu0 0
      %683 = vmatprep.subr.bf16.mxu0 0
      %684 = vmatpush1.bf16.msra.mxu0 0
      %685 = vmatprep.mubr.bf16.mxu0 0
      %686 = vmatmul.mubr.bf16.gmra.mrb[0].mxu0 %v642
      %v687 = vpop.f32.mrb[0].mxu0
      %v688 = vadd.f32 0.0, %v687
      %v689 = vpop.f32.mrb[0].mxu0
      %v690 = vpop.f32.mrb[0].mxu0
      %v691 = vadd.f32 0.0, %v690
      %v692 = vpop.f32.mrb[0].mxu0
      %693 = vmatprep.mubr.bf16.mxu0 0
      %694 = vmatmul.mubr.bf16.gmra.mrb[0].mxu0 %v645
      %v695 = vpop.f32.mrb[0].mxu0
      %v696 = vadd.f32 0.0, %v695
      %v697 = vpop.f32.mrb[0].mxu0
      %v698 = vpop.f32.mrb[0].mxu0
      %v699 = vadd.f32 0.0, %v698
      %v700 = vpop.f32.mrb[0].mxu0
      %701 = vmatprep.mubr.bf16.mxu0 0
      %702 = vmatmul.mubr.bf16.gmra.mrb[0].mxu0 %v648
      %v703 = vpop.f32.mrb[0].mxu0
      %v704 = vadd.f32 0.0, %v703
      %v705 = vpop.f32.mrb[0].mxu0
      %v706 = vpop.f32.mrb[0].mxu0
      %v707 = vadd.f32 0.0, %v706
      %v708 = vpop.f32.mrb[0].mxu0
      %709 = vmatprep.mubr.bf16.mxu0 0
      %710 = vmatmul.mubr.bf16.gmra.mrb[0].mxu0 %v651
      %v711 = vpop.f32.mrb[0].mxu0
      %v712 = vadd.f32 0.0, %v711
      %v713 = vpop.f32.mrb[0].mxu0
      %v714 = vpop.f32.mrb[0].mxu0
      %v715 = vadd.f32 0.0, %v714
      %v716 = vpop.f32.mrb[0].mxu0
      %717 = vdwg.mxu0
      %v718 = vadd.f32 %v531, %v688
      %v719 = vadd.f32 %v534, %v691
      %v720 = vadd.f32 %v539, %v696
      %v721 = vadd.f32 %v542, %v699
      %v722 = vadd.f32 %v547, %v704
      %v723 = vadd.f32 %v550, %v707
      %v724 = vadd.f32 %v555, %v712
      %v725 = vadd.f32 %v558, %v715
      %s726 = scalar_lea.vmem %s219, 8
      %v727 = vld [vmem:[%s726] sm:$0xf]
      %v728 = vld [vmem:[%s726 + $0x8] sm:$0xf]
      %v729 = vld [vmem:[%s726 + $0x10] sm:$0xf]
      %v730 = vld [vmem:[%s726 + $0x18] sm:$0xf]
      %v731 = vld [vmem:[%s726 + $0x20] sm:$0xf]
      %v732 = vld [vmem:[%s726 + $0x28] sm:$0xf]
      %v733 = vld [vmem:[%s726 + $0x30] sm:$0xf]
      %v734 = vld [vmem:[%s726 + $0x38] sm:$0xf]
      %s735 = scalar_lea.vmem %s1, 24
      %v736 = vld [vmem:[%s735] sm:$0xf]
      %v737 = vld [vmem:[%s735 + $0x4] sm:$0xf]
      %v746 = vunpack.c.l.b16 %v727
      %v747 = vunpack.c.l.b16 %v728
      %v748 = vunpack.c.l.b16 %v729
      %v749 = vunpack.c.l.b16 %v730
      %v750 = vunpack.c.l.b16 %v731
      %v751 = vunpack.c.l.b16 %v732
      %v752 = vunpack.c.l.b16 %v733
      %v753 = vunpack.c.l.b16 %v734
      %v754 = vpack.c.b16 %v747, %v746
      %v755 = vpack.c.b16 %v749, %v748
      %v756 = vpack.c.b16 %v751, %v750
      %v757 = vpack.c.b16 %v753, %v752
      %v760 = vunpack.c.l.b16 %v736
      %v761 = vunpack.c.l.b16 %v737
      %v762 = vpack.c.b16 %v761, %v760
      %v765 = vsel %vm380, %v754, 0
      %v768 = vsel %vm380, %v755, 0
      %v771 = vsel %vm380, %v756, 0
      %v774 = vsel %vm380, %v757, 0
      %776 = vmatprep.subr.bf16.mxu0 0
      %777 = vmatpush1.bf16.msra.mxu0 %v762
      %778 = vmatprep.subr.bf16.mxu0 0
      %779 = vmatpush1.bf16.msra.mxu0 0
      %780 = vmatprep.subr.bf16.mxu0 0
      %781 = vmatpush1.bf16.msra.mxu0 0
      %782 = vmatprep.subr.bf16.mxu0 0
      %783 = vmatpush1.bf16.msra.mxu0 0
      %784 = vmatprep.subr.bf16.mxu0 0
      %785 = vmatpush1.bf16.msra.mxu0 0
      %786 = vmatprep.subr.bf16.mxu0 0
      %787 = vmatpush1.bf16.msra.mxu0 0
      %788 = vmatprep.subr.bf16.mxu0 0
      %789 = vmatpush1.bf16.msra.mxu0 0
      %790 = vmatprep.subr.bf16.mxu0 0
      %791 = vmatpush1.bf16.msra.mxu0 0
      %792 = vmatprep.subr.bf16.mxu0 0
      %793 = vmatpush1.bf16.msra.mxu0 0
      %794 = vmatprep.subr.bf16.mxu0 0
      %795 = vmatpush1.bf16.msra.mxu0 0
      %796 = vmatprep.subr.bf16.mxu0 0
      %797 = vmatpush1.bf16.msra.mxu0 0
      %798 = vmatprep.subr.bf16.mxu0 0
      %799 = vmatpush1.bf16.msra.mxu0 0
      %800 = vmatprep.subr.bf16.mxu0 0
      %801 = vmatpush1.bf16.msra.mxu0 0
      %802 = vmatprep.subr.bf16.mxu0 0
      %803 = vmatpush1.bf16.msra.mxu0 0
      %804 = vmatprep.subr.bf16.mxu0 0
      %805 = vmatpush1.bf16.msra.mxu0 0
      %806 = vmatprep.subr.bf16.mxu0 0
      %807 = vmatpush1.bf16.msra.mxu0 0
      %808 = vmatprep.mubr.bf16.mxu0 0
      %809 = vmatmul.mubr.bf16.gmra.mrb[0].mxu0 %v765
      %v810 = vpop.f32.mrb[0].mxu0
      %v811 = vadd.f32 0.0, %v810
      %v812 = vpop.f32.mrb[0].mxu0
      %v813 = vpop.f32.mrb[0].mxu0
      %v814 = vadd.f32 0.0, %v813
      %v815 = vpop.f32.mrb[0].mxu0
      %816 = vmatprep.mubr.bf16.mxu0 0
      %817 = vmatmul.mubr.bf16.gmra.mrb[0].mxu0 %v768
      %v818 = vpop.f32.mrb[0].mxu0
      %v819 = vadd.f32 0.0, %v818
      %v820 = vpop.f32.mrb[0].mxu0
      %v821 = vpop.f32.mrb[0].mxu0
      %v822 = vadd.f32 0.0, %v821
      %v823 = vpop.f32.mrb[0].mxu0
      %824 = vmatprep.mubr.bf16.mxu0 0
      %825 = vmatmul.mubr.bf16.gmra.mrb[0].mxu0 %v771
      %v826 = vpop.f32.mrb[0].mxu0
      %v827 = vadd.f32 0.0, %v826
      %v828 = vpop.f32.mrb[0].mxu0
      %v829 = vpop.f32.mrb[0].mxu0
      %v830 = vadd.f32 0.0, %v829
      %v831 = vpop.f32.mrb[0].mxu0
      %832 = vmatprep.mubr.bf16.mxu0 0
      %833 = vmatmul.mubr.bf16.gmra.mrb[0].mxu0 %v774
      %v834 = vpop.f32.mrb[0].mxu0
      %v835 = vadd.f32 0.0, %v834
      %v836 = vpop.f32.mrb[0].mxu0
      %v837 = vpop.f32.mrb[0].mxu0
      %v838 = vadd.f32 0.0, %v837
      %v839 = vpop.f32.mrb[0].mxu0
      %840 = vdwg.mxu0
      %v841 = vadd.f32 %v718, %v811
      %v842 = vadd.f32 %v719, %v814
      %v843 = vadd.f32 %v720, %v819
      %v844 = vadd.f32 %v721, %v822
      %v845 = vadd.f32 %v722, %v827
      %v846 = vadd.f32 %v723, %v830
      %v847 = vadd.f32 %v724, %v835
      %v848 = vadd.f32 %v725, %v838
      %v849 = vld [vmem:[%s726] sm:$0xf]
      %v850 = vld [vmem:[%s726 + $0x4] sm:$0x1]
      %v851 = vld [vmem:[%s726 + $0x8] sm:$0xf]
      %v852 = vld [vmem:[%s726 + $0xc] sm:$0x1]
      %v853 = vld [vmem:[%s726 + $0x10] sm:$0xf]
      %v854 = vld [vmem:[%s726 + $0x14] sm:$0x1]
      %v855 = vld [vmem:[%s726 + $0x18] sm:$0xf]
      %v856 = vld [vmem:[%s726 + $0x1c] sm:$0x1]
      %v857 = vld [vmem:[%s726 + $0x20] sm:$0xf]
      %v858 = vld [vmem:[%s726 + $0x24] sm:$0x1]
      %v859 = vld [vmem:[%s726 + $0x28] sm:$0xf]
      %v860 = vld [vmem:[%s726 + $0x2c] sm:$0x1]
      %v861 = vld [vmem:[%s726 + $0x30] sm:$0xf]
      %v862 = vld [vmem:[%s726 + $0x34] sm:$0x1]
      %v863 = vld [vmem:[%s726 + $0x38] sm:$0xf]
      %v864 = vld [vmem:[%s726 + $0x3c] sm:$0x1]
      %v866 = vshrl.u32 %v849, 16
      %v868 = vrot.slane %v866, 4
      %v869 = vshll.u32 %v849, 16
      %v871 = vrot.slane %v869, 5
      %v872 = vor.u32 %v868, %v871
      %v873 = vrot.slane %v872, 4
      %v875 = vshll.u32 %v850, 16
      %v877 = vrot.slane %v875, 5
      %v878 = vsel %vm246, %v873, %v877
      %v880 = vshrl.u32 %v851, 16
      %v882 = vrot.slane %v880, 4
      %v883 = vshll.u32 %v851, 16
      %v885 = vrot.slane %v883, 5
      %v886 = vor.u32 %v882, %v885
      %v887 = vrot.slane %v886, 4
      %v889 = vshll.u32 %v852, 16
      %v891 = vrot.slane %v889, 5
      %v892 = vsel %vm246, %v887, %v891
      %v894 = vshrl.u32 %v853, 16
      %v896 = vrot.slane %v894, 4
      %v897 = vshll.u32 %v853, 16
      %v899 = vrot.slane %v897, 5
      %v900 = vor.u32 %v896, %v899
      %v901 = vrot.slane %v900, 4
      %v903 = vshll.u32 %v854, 16
      %v905 = vrot.slane %v903, 5
      %v906 = vsel %vm246, %v901, %v905
      %v908 = vshrl.u32 %v855, 16
      %v910 = vrot.slane %v908, 4
      %v911 = vshll.u32 %v855, 16
      %v913 = vrot.slane %v911, 5
      %v914 = vor.u32 %v910, %v913
      %v915 = vrot.slane %v914, 4
      %v917 = vshll.u32 %v856, 16
      %v919 = vrot.slane %v917, 5
      %v920 = vsel %vm246, %v915, %v919
      %v922 = vshrl.u32 %v857, 16
      %v924 = vrot.slane %v922, 4
      %v925 = vshll.u32 %v857, 16
      %v927 = vrot.slane %v925, 5
      %v928 = vor.u32 %v924, %v927
      %v929 = vrot.slane %v928, 4
      %v931 = vshll.u32 %v858, 16
      %v933 = vrot.slane %v931, 5
      %v934 = vsel %vm246, %v929, %v933
      %v936 = vshrl.u32 %v859, 16
      %v938 = vrot.slane %v936, 4
      %v939 = vshll.u32 %v859, 16
      %v941 = vrot.slane %v939, 5
      %v942 = vor.u32 %v938, %v941
      %v943 = vrot.slane %v942, 4
      %v945 = vshll.u32 %v860, 16
      %v947 = vrot.slane %v945, 5
      %v948 = vsel %vm246, %v943, %v947
      %v950 = vshrl.u32 %v861, 16
      %v952 = vrot.slane %v950, 4
      %v953 = vshll.u32 %v861, 16
      %v955 = vrot.slane %v953, 5
      %v956 = vor.u32 %v952, %v955
      %v957 = vrot.slane %v956, 4
      %v959 = vshll.u32 %v862, 16
      %v961 = vrot.slane %v959, 5
      %v962 = vsel %vm246, %v957, %v961
      %v964 = vshrl.u32 %v863, 16
      %v966 = vrot.slane %v964, 4
      %v967 = vshll.u32 %v863, 16
      %v969 = vrot.slane %v967, 5
      %v970 = vor.u32 %v966, %v969
      %v971 = vrot.slane %v970, 4
      %v973 = vshll.u32 %v864, 16
      %v975 = vrot.slane %v973, 5
      %v976 = vsel %vm246, %v971, %v975
      %s977 = scalar_lea.vmem %s1, 32
      %v978 = vld [vmem:[%s977] sm:$0xf]
      %v979 = vld [vmem:[%s977 + $0x4] sm:$0xf]
      %v980 = vunpack.c.l.b16 %v878
      %v981 = vunpack.c.l.b16 %v892
      %v982 = vunpack.c.l.b16 %v906
      %v983 = vunpack.c.l.b16 %v920
      %v984 = vunpack.c.l.b16 %v934
      %v985 = vunpack.c.l.b16 %v948
      %v986 = vunpack.c.l.b16 %v962
      %v987 = vunpack.c.l.b16 %v976
      %v988 = vpack.c.b16 %v981, %v980
      %v989 = vpack.c.b16 %v983, %v982
      %v990 = vpack.c.b16 %v985, %v984
      %v991 = vpack.c.b16 %v987, %v986
      %v994 = vunpack.c.l.b16 %v978
      %v995 = vunpack.c.l.b16 %v979
      %v996 = vpack.c.b16 %v995, %v994
      %v999 = vsel %vm380, %v988, 0
      %v1002 = vsel %vm380, %v989, 0
      %v1005 = vsel %vm380, %v990, 0
      %v1008 = vsel %vm380, %v991, 0
      %1010 = vmatprep.subr.bf16.mxu0 0
      %1011 = vmatpush1.bf16.msra.mxu0 %v996
      %1012 = vmatprep.subr.bf16.mxu0 0
      %1013 = vmatpush1.bf16.msra.mxu0 0
      %1014 = vmatprep.subr.bf16.mxu0 0
      %1015 = vmatpush1.bf16.msra.mxu0 0
      %1016 = vmatprep.subr.bf16.mxu0 0
      %1017 = vmatpush1.bf16.msra.mxu0 0
      %1018 = vmatprep.subr.bf16.mxu0 0
      %1019 = vmatpush1.bf16.msra.mxu0 0
      %1020 = vmatprep.subr.bf16.mxu0 0
      %1021 = vmatpush1.bf16.msra.mxu0 0
      %1022 = vmatprep.subr.bf16.mxu0 0
      %1023 = vmatpush1.bf16.msra.mxu0 0
      %1024 = vmatprep.subr.bf16.mxu0 0
      %1025 = vmatpush1.bf16.msra.mxu0 0
      %1026 = vmatprep.subr.bf16.mxu0 0
      %1027 = vmatpush1.bf16.msra.mxu0 0
      %1028 = vmatprep.subr.bf16.mxu0 0
      %1029 = vmatpush1.bf16.msra.mxu0 0
      %1030 = vmatprep.subr.bf16.mxu0 0
      %1031 = vmatpush1.bf16.msra.mxu0 0
      %1032 = vmatprep.subr.bf16.mxu0 0
      %1033 = vmatpush1.bf16.msra.mxu0 0
      %1034 = vmatprep.subr.bf16.mxu0 0
      %1035 = vmatpush1.bf16.msra.mxu0 0
      %1036 = vmatprep.subr.bf16.mxu0 0
      %1037 = vmatpush1.bf16.msra.mxu0 0
      %1038 = vmatprep.subr.bf16.mxu0 0
      %1039 = vmatpush1.bf16.msra.mxu0 0
      %1040 = vmatprep.subr.bf16.mxu0 0
      %1041 = vmatpush1.bf16.msra.mxu0 0
      %1042 = vmatprep.mubr.bf16.mxu0 0
      %1043 = vmatmul.mubr.bf16.gmra.mrb[0].mxu0 %v999
      %v1044 = vpop.f32.mrb[0].mxu0
      %v1045 = vadd.f32 0.0, %v1044
      %v1046 = vpop.f32.mrb[0].mxu0
      %v1047 = vpop.f32.mrb[0].mxu0
      %v1048 = vadd.f32 0.0, %v1047
      %v1049 = vpop.f32.mrb[0].mxu0
      %1050 = vmatprep.mubr.bf16.mxu0 0
      %1051 = vmatmul.mubr.bf16.gmra.mrb[0].mxu0 %v1002
      %v1052 = vpop.f32.mrb[0].mxu0
      %v1053 = vadd.f32 0.0, %v1052
      %v1054 = vpop.f32.mrb[0].mxu0
      %v1055 = vpop.f32.mrb[0].mxu0
      %v1056 = vadd.f32 0.0, %v1055
      %v1057 = vpop.f32.mrb[0].mxu0
      %1058 = vmatprep.mubr.bf16.mxu0 0
      %1059 = vmatmul.mubr.bf16.gmra.mrb[0].mxu0 %v1005
      %v1060 = vpop.f32.mrb[0].mxu0
      %v1061 = vadd.f32 0.0, %v1060
      %v1062 = vpop.f32.mrb[0].mxu0
      %v1063 = vpop.f32.mrb[0].mxu0
      %v1064 = vadd.f32 0.0, %v1063
      %v1065 = vpop.f32.mrb[0].mxu0
      %1066 = vmatprep.mubr.bf16.mxu0 0
      %1067 = vmatmul.mubr.bf16.gmra.mrb[0].mxu0 %v1008
      %v1068 = vpop.f32.mrb[0].mxu0
      %v1069 = vadd.f32 0.0, %v1068
      %v1070 = vpop.f32.mrb[0].mxu0
      %v1071 = vpop.f32.mrb[0].mxu0
      %v1072 = vadd.f32 0.0, %v1071
      %v1073 = vpop.f32.mrb[0].mxu0
      %1074 = vdwg.mxu0
      %v1075 = vadd.f32 %v841, %v1045
      %v1076 = vadd.f32 %v842, %v1048
      %v1077 = vadd.f32 %v843, %v1053
      %v1078 = vadd.f32 %v844, %v1056
      %v1079 = vadd.f32 %v845, %v1061
      %v1080 = vadd.f32 %v846, %v1064
      %v1081 = vadd.f32 %v847, %v1069
      %v1082 = vadd.f32 %v848, %v1072
      %v1083 = vld [vmem:[%s726] sm:$0xe]
      %v1084 = vld [vmem:[%s726 + $0x8] sm:$0xe]
      %v1085 = vld [vmem:[%s726 + $0x10] sm:$0xe]
      %v1086 = vld [vmem:[%s726 + $0x18] sm:$0xe]
      %v1087 = vld [vmem:[%s726 + $0x20] sm:$0xe]
      %v1088 = vld [vmem:[%s726 + $0x28] sm:$0xe]
      %v1089 = vld [vmem:[%s726 + $0x30] sm:$0xe]
      %v1090 = vld [vmem:[%s726 + $0x38] sm:$0xe]
      %v1107 = vrot.slane %v1083, 5
      %v1108 = vrot.slane %v1107, 4
      %v1109 = vrot.slane %v850, 5
      %v1110 = vsel %vm587, %v1108, %v1109
      %v1111 = vrot.slane %v1084, 5
      %v1112 = vrot.slane %v1111, 4
      %v1113 = vrot.slane %v852, 5
      %v1114 = vsel %vm587, %v1112, %v1113
      %v1115 = vrot.slane %v1085, 5
      %v1116 = vrot.slane %v1115, 4
      %v1117 = vrot.slane %v854, 5
      %v1118 = vsel %vm587, %v1116, %v1117
      %v1119 = vrot.slane %v1086, 5
      %v1120 = vrot.slane %v1119, 4
      %v1121 = vrot.slane %v856, 5
      %v1122 = vsel %vm587, %v1120, %v1121
      %v1123 = vrot.slane %v1087, 5
      %v1124 = vrot.slane %v1123, 4
      %v1125 = vrot.slane %v858, 5
      %v1126 = vsel %vm587, %v1124, %v1125
      %v1127 = vrot.slane %v1088, 5
      %v1128 = vrot.slane %v1127, 4
      %v1129 = vrot.slane %v860, 5
      %v1130 = vsel %vm587, %v1128, %v1129
      %v1131 = vrot.slane %v1089, 5
      %v1132 = vrot.slane %v1131, 4
      %v1133 = vrot.slane %v862, 5
      %v1134 = vsel %vm587, %v1132, %v1133
      %v1135 = vrot.slane %v1090, 5
      %v1136 = vrot.slane %v1135, 4
      %v1137 = vrot.slane %v864, 5
      %v1138 = vsel %vm587, %v1136, %v1137
      %s1139 = scalar_lea.vmem %s1, 40
      %v1140 = vld [vmem:[%s1139] sm:$0xf]
      %v1141 = vld [vmem:[%s1139 + $0x4] sm:$0xf]
      %v1142 = vunpack.c.l.b16 %v1110
      %v1143 = vunpack.c.l.b16 %v1114
      %v1144 = vunpack.c.l.b16 %v1118
      %v1145 = vunpack.c.l.b16 %v1122
      %v1146 = vunpack.c.l.b16 %v1126
      %v1147 = vunpack.c.l.b16 %v1130
      %v1148 = vunpack.c.l.b16 %v1134
      %v1149 = vunpack.c.l.b16 %v1138
      %v1150 = vpack.c.b16 %v1143, %v1142
      %v1151 = vpack.c.b16 %v1145, %v1144
      %v1152 = vpack.c.b16 %v1147, %v1146
      %v1153 = vpack.c.b16 %v1149, %v1148
      %v1156 = vunpack.c.l.b16 %v1140
      %v1157 = vunpack.c.l.b16 %v1141
      %v1158 = vpack.c.b16 %v1157, %v1156
      %v1161 = vsel %vm380, %v1150, 0
      %v1164 = vsel %vm380, %v1151, 0
      %v1167 = vsel %vm380, %v1152, 0
      %v1170 = vsel %vm380, %v1153, 0
      %1172 = vmatprep.subr.bf16.mxu0 0
      %1173 = vmatpush1.bf16.msra.mxu0 %v1158
      %1174 = vmatprep.subr.bf16.mxu0 0
      %1175 = vmatpush1.bf16.msra.mxu0 0
      %1176 = vmatprep.subr.bf16.mxu0 0
      %1177 = vmatpush1.bf16.msra.mxu0 0
      %1178 = vmatprep.subr.bf16.mxu0 0
      %1179 = vmatpush1.bf16.msra.mxu0 0
      %1180 = vmatprep.subr.bf16.mxu0 0
      %1181 = vmatpush1.bf16.msra.mxu0 0
      %1182 = vmatprep.subr.bf16.mxu0 0
      %1183 = vmatpush1.bf16.msra.mxu0 0
      %1184 = vmatprep.subr.bf16.mxu0 0
      %1185 = vmatpush1.bf16.msra.mxu0 0
      %1186 = vmatprep.subr.bf16.mxu0 0
      %1187 = vmatpush1.bf16.msra.mxu0 0
      %1188 = vmatprep.subr.bf16.mxu0 0
      %1189 = vmatpush1.bf16.msra.mxu0 0
      %1190 = vmatprep.subr.bf16.mxu0 0
      %1191 = vmatpush1.bf16.msra.mxu0 0
      %1192 = vmatprep.subr.bf16.mxu0 0
      %1193 = vmatpush1.bf16.msra.mxu0 0
      %1194 = vmatprep.subr.bf16.mxu0 0
      %1195 = vmatpush1.bf16.msra.mxu0 0
      %1196 = vmatprep.subr.bf16.mxu0 0
      %1197 = vmatpush1.bf16.msra.mxu0 0
      %1198 = vmatprep.subr.bf16.mxu0 0
      %1199 = vmatpush1.bf16.msra.mxu0 0
      %1200 = vmatprep.subr.bf16.mxu0 0
      %1201 = vmatpush1.bf16.msra.mxu0 0
      %1202 = vmatprep.subr.bf16.mxu0 0
      %1203 = vmatpush1.bf16.msra.mxu0 0
      %1204 = vmatprep.mubr.bf16.mxu0 0
      %1205 = vmatmul.mubr.bf16.gmra.mrb[0].mxu0 %v1161
      %v1206 = vpop.f32.mrb[0].mxu0
      %v1207 = vadd.f32 0.0, %v1206
      %v1208 = vpop.f32.mrb[0].mxu0
      %v1209 = vpop.f32.mrb[0].mxu0
      %v1210 = vadd.f32 0.0, %v1209
      %v1211 = vpop.f32.mrb[0].mxu0
      %1212 = vmatprep.mubr.bf16.mxu0 0
      %1213 = vmatmul.mubr.bf16.gmra.mrb[0].mxu0 %v1164
      %v1214 = vpop.f32.mrb[0].mxu0
      %v1215 = vadd.f32 0.0, %v1214
      %v1216 = vpop.f32.mrb[0].mxu0
      %v1217 = vpop.f32.mrb[0].mxu0
      %v1218 = vadd.f32 0.0, %v1217
      %v1219 = vpop.f32.mrb[0].mxu0
      %1220 = vmatprep.mubr.bf16.mxu0 0
      %1221 = vmatmul.mubr.bf16.gmra.mrb[0].mxu0 %v1167
      %v1222 = vpop.f32.mrb[0].mxu0
      %v1223 = vadd.f32 0.0, %v1222
      %v1224 = vpop.f32.mrb[0].mxu0
      %v1225 = vpop.f32.mrb[0].mxu0
      %v1226 = vadd.f32 0.0, %v1225
      %v1227 = vpop.f32.mrb[0].mxu0
      %1228 = vmatprep.mubr.bf16.mxu0 0
      %1229 = vmatmul.mubr.bf16.gmra.mrb[0].mxu0 %v1170
      %v1230 = vpop.f32.mrb[0].mxu0
      %v1231 = vadd.f32 0.0, %v1230
      %v1232 = vpop.f32.mrb[0].mxu0
      %v1233 = vpop.f32.mrb[0].mxu0
      %v1234 = vadd.f32 0.0, %v1233
      %v1235 = vpop.f32.mrb[0].mxu0
      %1236 = vdwg.mxu0
      %v1237 = vadd.f32 %v1075, %v1207
      %v1238 = vadd.f32 %v1076, %v1210
      %v1239 = vadd.f32 %v1077, %v1215
      %v1240 = vadd.f32 %v1078, %v1218
      %v1241 = vadd.f32 %v1079, %v1223
      %v1242 = vadd.f32 %v1080, %v1226
      %v1243 = vadd.f32 %v1081, %v1231
      %v1244 = vadd.f32 %v1082, %v1234
      %s1245 = scalar_lea.vmem %s219, 16
      %v1246 = vld [vmem:[%s1245] sm:$0xf]
      %v1247 = vld [vmem:[%s1245 + $0x8] sm:$0xf]
      %v1248 = vld [vmem:[%s1245 + $0x10] sm:$0xf]
      %v1249 = vld [vmem:[%s1245 + $0x18] sm:$0xf]
      %v1250 = vld [vmem:[%s1245 + $0x20] sm:$0xf]
      %v1251 = vld [vmem:[%s1245 + $0x28] sm:$0xf]
      %v1252 = vld [vmem:[%s1245 + $0x30] sm:$0xf]
      %v1253 = vld [vmem:[%s1245 + $0x38] sm:$0xf]
      %s1254 = scalar_lea.vmem %s1, 48
      %v1255 = vld [vmem:[%s1254] sm:$0xf]
      %v1256 = vld [vmem:[%s1254 + $0x4] sm:$0xf]
      %v1265 = vunpack.c.l.b16 %v1246
      %v1266 = vunpack.c.l.b16 %v1247
      %v1267 = vunpack.c.l.b16 %v1248
      %v1268 = vunpack.c.l.b16 %v1249
      %v1269 = vunpack.c.l.b16 %v1250
      %v1270 = vunpack.c.l.b16 %v1251
      %v1271 = vunpack.c.l.b16 %v1252
      %v1272 = vunpack.c.l.b16 %v1253
      %v1273 = vpack.c.b16 %v1266, %v1265
      %v1274 = vpack.c.b16 %v1268, %v1267
      %v1275 = vpack.c.b16 %v1270, %v1269
      %v1276 = vpack.c.b16 %v1272, %v1271
      %v1279 = vunpack.c.l.b16 %v1255
      %v1280 = vunpack.c.l.b16 %v1256
      %v1281 = vpack.c.b16 %v1280, %v1279
      %v1284 = vsel %vm380, %v1273, 0
      %v1287 = vsel %vm380, %v1274, 0
      %v1290 = vsel %vm380, %v1275, 0
      %v1293 = vsel %vm380, %v1276, 0
      %1295 = vmatprep.subr.bf16.mxu0 0
      %1296 = vmatpush1.bf16.msra.mxu0 %v1281
      %1297 = vmatprep.subr.bf16.mxu0 0
      %1298 = vmatpush1.bf16.msra.mxu0 0
      %1299 = vmatprep.subr.bf16.mxu0 0
      %1300 = vmatpush1.bf16.msra.mxu0 0
      %1301 = vmatprep.subr.bf16.mxu0 0
      %1302 = vmatpush1.bf16.msra.mxu0 0
      %1303 = vmatprep.subr.bf16.mxu0 0
      %1304 = vmatpush1.bf16.msra.mxu0 0
      %1305 = vmatprep.subr.bf16.mxu0 0
      %1306 = vmatpush1.bf16.msra.mxu0 0
      %1307 = vmatprep.subr.bf16.mxu0 0
      %1308 = vmatpush1.bf16.msra.mxu0 0
      %1309 = vmatprep.subr.bf16.mxu0 0
      %1310 = vmatpush1.bf16.msra.mxu0 0
      %1311 = vmatprep.subr.bf16.mxu0 0
      %1312 = vmatpush1.bf16.msra.mxu0 0
      %1313 = vmatprep.subr.bf16.mxu0 0
      %1314 = vmatpush1.bf16.msra.mxu0 0
      %1315 = vmatprep.subr.bf16.mxu0 0
      %1316 = vmatpush1.bf16.msra.mxu0 0
      %1317 = vmatprep.subr.bf16.mxu0 0
      %1318 = vmatpush1.bf16.msra.mxu0 0
      %1319 = vmatprep.subr.bf16.mxu0 0
      %1320 = vmatpush1.bf16.msra.mxu0 0
      %1321 = vmatprep.subr.bf16.mxu0 0
      %1322 = vmatpush1.bf16.msra.mxu0 0
      %1323 = vmatprep.subr.bf16.mxu0 0
      %1324 = vmatpush1.bf16.msra.mxu0 0
      %1325 = vmatprep.subr.bf16.mxu0 0
      %1326 = vmatpush1.bf16.msra.mxu0 0
      %1327 = vmatprep.mubr.bf16.mxu0 0
      %1328 = vmatmul.mubr.bf16.gmra.mrb[0].mxu0 %v1284
      %v1329 = vpop.f32.mrb[0].mxu0
      %v1330 = vadd.f32 0.0, %v1329
      %v1331 = vpop.f32.mrb[0].mxu0
      %v1332 = vpop.f32.mrb[0].mxu0
      %v1333 = vadd.f32 0.0, %v1332
      %v1334 = vpop.f32.mrb[0].mxu0
      %1335 = vmatprep.mubr.bf16.mxu0 0
      %1336 = vmatmul.mubr.bf16.gmra.mrb[0].mxu0 %v1287
      %v1337 = vpop.f32.mrb[0].mxu0
      %v1338 = vadd.f32 0.0, %v1337
      %v1339 = vpop.f32.mrb[0].mxu0
      %v1340 = vpop.f32.mrb[0].mxu0
      %v1341 = vadd.f32 0.0, %v1340
      %v1342 = vpop.f32.mrb[0].mxu0
      %1343 = vmatprep.mubr.bf16.mxu0 0
      %1344 = vmatmul.mubr.bf16.gmra.mrb[0].mxu0 %v1290
      %v1345 = vpop.f32.mrb[0].mxu0
      %v1346 = vadd.f32 0.0, %v1345
      %v1347 = vpop.f32.mrb[0].mxu0
      %v1348 = vpop.f32.mrb[0].mxu0
      %v1349 = vadd.f32 0.0, %v1348
      %v1350 = vpop.f32.mrb[0].mxu0
      %1351 = vmatprep.mubr.bf16.mxu0 0
      %1352 = vmatmul.mubr.bf16.gmra.mrb[0].mxu0 %v1293
      %v1353 = vpop.f32.mrb[0].mxu0
      %v1354 = vadd.f32 0.0, %v1353
      %v1355 = vpop.f32.mrb[0].mxu0
      %v1356 = vpop.f32.mrb[0].mxu0
      %v1357 = vadd.f32 0.0, %v1356
      %v1358 = vpop.f32.mrb[0].mxu0
      %1359 = vdwg.mxu0
      %v1360 = vadd.f32 %v1237, %v1330
      %v1361 = vadd.f32 %v1238, %v1333
      %v1362 = vadd.f32 %v1239, %v1338
      %v1363 = vadd.f32 %v1240, %v1341
      %v1364 = vadd.f32 %v1241, %v1346
      %v1365 = vadd.f32 %v1242, %v1349
      %v1366 = vadd.f32 %v1243, %v1354
      %v1367 = vadd.f32 %v1244, %v1357
      %v1368 = vld [vmem:[%s1245] sm:$0xf]
      %v1369 = vld [vmem:[%s1245 + $0x4] sm:$0x1]
      %v1370 = vld [vmem:[%s1245 + $0x8] sm:$0xf]
      %v1371 = vld [vmem:[%s1245 + $0xc] sm:$0x1]
      %v1372 = vld [vmem:[%s1245 + $0x10] sm:$0xf]
      %v1373 = vld [vmem:[%s1245 + $0x14] sm:$0x1]
      %v1374 = vld [vmem:[%s1245 + $0x18] sm:$0xf]
      %v1375 = vld [vmem:[%s1245 + $0x1c] sm:$0x1]
      %v1376 = vld [vmem:[%s1245 + $0x20] sm:$0xf]
      %v1377 = vld [vmem:[%s1245 + $0x24] sm:$0x1]
      %v1378 = vld [vmem:[%s1245 + $0x28] sm:$0xf]
      %v1379 = vld [vmem:[%s1245 + $0x2c] sm:$0x1]
      %v1380 = vld [vmem:[%s1245 + $0x30] sm:$0xf]
      %v1381 = vld [vmem:[%s1245 + $0x34] sm:$0x1]
      %v1382 = vld [vmem:[%s1245 + $0x38] sm:$0xf]
      %v1383 = vld [vmem:[%s1245 + $0x3c] sm:$0x1]
      %v1385 = vshrl.u32 %v1368, 16
      %v1387 = vrot.slane %v1385, 4
      %v1388 = vshll.u32 %v1368, 16
      %v1390 = vrot.slane %v1388, 5
      %v1391 = vor.u32 %v1387, %v1390
      %v1392 = vrot.slane %v1391, 4
      %v1394 = vshll.u32 %v1369, 16
      %v1396 = vrot.slane %v1394, 5
      %v1397 = vsel %vm246, %v1392, %v1396
      %v1399 = vshrl.u32 %v1370, 16
      %v1401 = vrot.slane %v1399, 4
      %v1402 = vshll.u32 %v1370, 16
      %v1404 = vrot.slane %v1402, 5
      %v1405 = vor.u32 %v1401, %v1404
      %v1406 = vrot.slane %v1405, 4
      %v1408 = vshll.u32 %v1371, 16
      %v1410 = vrot.slane %v1408, 5
      %v1411 = vsel %vm246, %v1406, %v1410
      %v1413 = vshrl.u32 %v1372, 16
      %v1415 = vrot.slane %v1413, 4
      %v1416 = vshll.u32 %v1372, 16
      %v1418 = vrot.slane %v1416, 5
      %v1419 = vor.u32 %v1415, %v1418
      %v1420 = vrot.slane %v1419, 4
      %v1422 = vshll.u32 %v1373, 16
      %v1424 = vrot.slane %v1422, 5
      %v1425 = vsel %vm246, %v1420, %v1424
      %v1427 = vshrl.u32 %v1374, 16
      %v1429 = vrot.slane %v1427, 4
      %v1430 = vshll.u32 %v1374, 16
      %v1432 = vrot.slane %v1430, 5
      %v1433 = vor.u32 %v1429, %v1432
      %v1434 = vrot.slane %v1433, 4
      %v1436 = vshll.u32 %v1375, 16
      %v1438 = vrot.slane %v1436, 5
      %v1439 = vsel %vm246, %v1434, %v1438
      %v1441 = vshrl.u32 %v1376, 16
      %v1443 = vrot.slane %v1441, 4
      %v1444 = vshll.u32 %v1376, 16
      %v1446 = vrot.slane %v1444, 5
      %v1447 = vor.u32 %v1443, %v1446
      %v1448 = vrot.slane %v1447, 4
      %v1450 = vshll.u32 %v1377, 16
      %v1452 = vrot.slane %v1450, 5
      %v1453 = vsel %vm246, %v1448, %v1452
      %v1455 = vshrl.u32 %v1378, 16
      %v1457 = vrot.slane %v1455, 4
      %v1458 = vshll.u32 %v1378, 16
      %v1460 = vrot.slane %v1458, 5
      %v1461 = vor.u32 %v1457, %v1460
      %v1462 = vrot.slane %v1461, 4
      %v1464 = vshll.u32 %v1379, 16
      %v1466 = vrot.slane %v1464, 5
      %v1467 = vsel %vm246, %v1462, %v1466
      %v1469 = vshrl.u32 %v1380, 16
      %v1471 = vrot.slane %v1469, 4
      %v1472 = vshll.u32 %v1380, 16
      %v1474 = vrot.slane %v1472, 5
      %v1475 = vor.u32 %v1471, %v1474
      %v1476 = vrot.slane %v1475, 4
      %v1478 = vshll.u32 %v1381, 16
      %v1480 = vrot.slane %v1478, 5
      %v1481 = vsel %vm246, %v1476, %v1480
      %v1483 = vshrl.u32 %v1382, 16
      %v1485 = vrot.slane %v1483, 4
      %v1486 = vshll.u32 %v1382, 16
      %v1488 = vrot.slane %v1486, 5
      %v1489 = vor.u32 %v1485, %v1488
      %v1490 = vrot.slane %v1489, 4
      %v1492 = vshll.u32 %v1383, 16
      %v1494 = vrot.slane %v1492, 5
      %v1495 = vsel %vm246, %v1490, %v1494
      %s1496 = scalar_lea.vmem %s1, 56
      %v1497 = vld [vmem:[%s1496] sm:$0xf]
      %v1498 = vld [vmem:[%s1496 + $0x4] sm:$0xf]
      %v1499 = vunpack.c.l.b16 %v1397
      %v1500 = vunpack.c.l.b16 %v1411
      %v1501 = vunpack.c.l.b16 %v1425
      %v1502 = vunpack.c.l.b16 %v1439
      %v1503 = vunpack.c.l.b16 %v1453
      %v1504 = vunpack.c.l.b16 %v1467
      %v1505 = vunpack.c.l.b16 %v1481
      %v1506 = vunpack.c.l.b16 %v1495
      %v1507 = vpack.c.b16 %v1500, %v1499
      %v1508 = vpack.c.b16 %v1502, %v1501
      %v1509 = vpack.c.b16 %v1504, %v1503
      %v1510 = vpack.c.b16 %v1506, %v1505
      %v1513 = vunpack.c.l.b16 %v1497
      %v1514 = vunpack.c.l.b16 %v1498
      %v1515 = vpack.c.b16 %v1514, %v1513
      %v1518 = vsel %vm380, %v1507, 0
      %v1521 = vsel %vm380, %v1508, 0
      %v1524 = vsel %vm380, %v1509, 0
      %v1527 = vsel %vm380, %v1510, 0
      %1529 = vmatprep.subr.bf16.mxu0 0
      %1530 = vmatpush1.bf16.msra.mxu0 %v1515
      %1531 = vmatprep.subr.bf16.mxu0 0
      %1532 = vmatpush1.bf16.msra.mxu0 0
      %1533 = vmatprep.subr.bf16.mxu0 0
      %1534 = vmatpush1.bf16.msra.mxu0 0
      %1535 = vmatprep.subr.bf16.mxu0 0
      %1536 = vmatpush1.bf16.msra.mxu0 0
      %1537 = vmatprep.subr.bf16.mxu0 0
      %1538 = vmatpush1.bf16.msra.mxu0 0
      %1539 = vmatprep.subr.bf16.mxu0 0
      %1540 = vmatpush1.bf16.msra.mxu0 0
      %1541 = vmatprep.subr.bf16.mxu0 0
      %1542 = vmatpush1.bf16.msra.mxu0 0
      %1543 = vmatprep.subr.bf16.mxu0 0
      %1544 = vmatpush1.bf16.msra.mxu0 0
      %1545 = vmatprep.subr.bf16.mxu0 0
      %1546 = vmatpush1.bf16.msra.mxu0 0
      %1547 = vmatprep.subr.bf16.mxu0 0
      %1548 = vmatpush1.bf16.msra.mxu0 0
      %1549 = vmatprep.subr.bf16.mxu0 0
      %1550 = vmatpush1.bf16.msra.mxu0 0
      %1551 = vmatprep.subr.bf16.mxu0 0
      %1552 = vmatpush1.bf16.msra.mxu0 0
      %1553 = vmatprep.subr.bf16.mxu0 0
      %1554 = vmatpush1.bf16.msra.mxu0 0
      %1555 = vmatprep.subr.bf16.mxu0 0
      %1556 = vmatpush1.bf16.msra.mxu0 0
      %1557 = vmatprep.subr.bf16.mxu0 0
      %1558 = vmatpush1.bf16.msra.mxu0 0
      %1559 = vmatprep.subr.bf16.mxu0 0
      %1560 = vmatpush1.bf16.msra.mxu0 0
      %1561 = vmatprep.mubr.bf16.mxu0 0
      %1562 = vmatmul.mubr.bf16.gmra.mrb[0].mxu0 %v1518
      %v1563 = vpop.f32.mrb[0].mxu0
      %v1564 = vadd.f32 0.0, %v1563
      %v1565 = vpop.f32.mrb[0].mxu0
      %v1566 = vpop.f32.mrb[0].mxu0
      %v1567 = vadd.f32 0.0, %v1566
      %v1568 = vpop.f32.mrb[0].mxu0
      %1569 = vmatprep.mubr.bf16.mxu0 0
      %1570 = vmatmul.mubr.bf16.gmra.mrb[0].mxu0 %v1521
      %v1571 = vpop.f32.mrb[0].mxu0
      %v1572 = vadd.f32 0.0, %v1571
      %v1573 = vpop.f32.mrb[0].mxu0
      %v1574 = vpop.f32.mrb[0].mxu0
      %v1575 = vadd.f32 0.0, %v1574
      %v1576 = vpop.f32.mrb[0].mxu0
      %1577 = vmatprep.mubr.bf16.mxu0 0
      %1578 = vmatmul.mubr.bf16.gmra.mrb[0].mxu0 %v1524
      %v1579 = vpop.f32.mrb[0].mxu0
      %v1580 = vadd.f32 0.0, %v1579
      %v1581 = vpop.f32.mrb[0].mxu0
      %v1582 = vpop.f32.mrb[0].mxu0
      %v1583 = vadd.f32 0.0, %v1582
      %v1584 = vpop.f32.mrb[0].mxu0
      %1585 = vmatprep.mubr.bf16.mxu0 0
      %1586 = vmatmul.mubr.bf16.gmra.mrb[0].mxu0 %v1527
      %v1587 = vpop.f32.mrb[0].mxu0
      %v1588 = vadd.f32 0.0, %v1587
      %v1589 = vpop.f32.mrb[0].mxu0
      %v1590 = vpop.f32.mrb[0].mxu0
      %v1591 = vadd.f32 0.0, %v1590
      %v1592 = vpop.f32.mrb[0].mxu0
      %1593 = vdwg.mxu0
      %v1594 = vadd.f32 %v1360, %v1564
      %v1595 = vadd.f32 %v1361, %v1567
      %v1596 = vadd.f32 %v1362, %v1572
      %v1597 = vadd.f32 %v1363, %v1575
      %v1598 = vadd.f32 %v1364, %v1580
      %v1599 = vadd.f32 %v1365, %v1583
      %v1600 = vadd.f32 %v1366, %v1588
      %v1601 = vadd.f32 %v1367, %v1591
      %v1602 = vld [vmem:[%s1245] sm:$0xe]
      %v1603 = vld [vmem:[%s1245 + $0x8] sm:$0xe]
      %v1604 = vld [vmem:[%s1245 + $0x10] sm:$0xe]
      %v1605 = vld [vmem:[%s1245 + $0x18] sm:$0xe]
      %v1606 = vld [vmem:[%s1245 + $0x20] sm:$0xe]
      %v1607 = vld [vmem:[%s1245 + $0x28] sm:$0xe]
      %v1608 = vld [vmem:[%s1245 + $0x30] sm:$0xe]
      %v1609 = vld [vmem:[%s1245 + $0x38] sm:$0xe]
      %v1626 = vrot.slane %v1602, 5
      %v1627 = vrot.slane %v1626, 4
      %v1628 = vrot.slane %v1369, 5
      %v1629 = vsel %vm587, %v1627, %v1628
      %v1630 = vrot.slane %v1603, 5
      %v1631 = vrot.slane %v1630, 4
      %v1632 = vrot.slane %v1371, 5
      %v1633 = vsel %vm587, %v1631, %v1632
      %v1634 = vrot.slane %v1604, 5
      %v1635 = vrot.slane %v1634, 4
      %v1636 = vrot.slane %v1373, 5
      %v1637 = vsel %vm587, %v1635, %v1636
      %v1638 = vrot.slane %v1605, 5
      %v1639 = vrot.slane %v1638, 4
      %v1640 = vrot.slane %v1375, 5
      %v1641 = vsel %vm587, %v1639, %v1640
      %v1642 = vrot.slane %v1606, 5
      %v1643 = vrot.slane %v1642, 4
      %v1644 = vrot.slane %v1377, 5
      %v1645 = vsel %vm587, %v1643, %v1644
      %v1646 = vrot.slane %v1607, 5
      %v1647 = vrot.slane %v1646, 4
      %v1648 = vrot.slane %v1379, 5
      %v1649 = vsel %vm587, %v1647, %v1648
      %v1650 = vrot.slane %v1608, 5
      %v1651 = vrot.slane %v1650, 4
      %v1652 = vrot.slane %v1381, 5
      %v1653 = vsel %vm587, %v1651, %v1652
      %v1654 = vrot.slane %v1609, 5
      %v1655 = vrot.slane %v1654, 4
      %v1656 = vrot.slane %v1383, 5
      %v1657 = vsel %vm587, %v1655, %v1656
      %s1658 = scalar_lea.vmem %s1, 64
      %v1659 = vld [vmem:[%s1658] sm:$0xf]
      %v1660 = vld [vmem:[%s1658 + $0x4] sm:$0xf]
      %v1661 = vunpack.c.l.b16 %v1629
      %v1662 = vunpack.c.l.b16 %v1633
      %v1663 = vunpack.c.l.b16 %v1637
      %v1664 = vunpack.c.l.b16 %v1641
      %v1665 = vunpack.c.l.b16 %v1645
      %v1666 = vunpack.c.l.b16 %v1649
      %v1667 = vunpack.c.l.b16 %v1653
      %v1668 = vunpack.c.l.b16 %v1657
      %v1669 = vpack.c.b16 %v1662, %v1661
      %v1670 = vpack.c.b16 %v1664, %v1663
      %v1671 = vpack.c.b16 %v1666, %v1665
      %v1672 = vpack.c.b16 %v1668, %v1667
      %v1675 = vunpack.c.l.b16 %v1659
      %v1676 = vunpack.c.l.b16 %v1660
      %v1677 = vpack.c.b16 %v1676, %v1675
      %v1680 = vsel %vm380, %v1669, 0
      %v1683 = vsel %vm380, %v1670, 0
      %v1686 = vsel %vm380, %v1671, 0
      %v1689 = vsel %vm380, %v1672, 0
      %1691 = vmatprep.subr.bf16.mxu0 0
      %1692 = vmatpush1.bf16.msra.mxu0 %v1677
      %1693 = vmatprep.subr.bf16.mxu0 0
      %1694 = vmatpush1.bf16.msra.mxu0 0
      %1695 = vmatprep.subr.bf16.mxu0 0
      %1696 = vmatpush1.bf16.msra.mxu0 0
      %1697 = vmatprep.subr.bf16.mxu0 0
      %1698 = vmatpush1.bf16.msra.mxu0 0
      %1699 = vmatprep.subr.bf16.mxu0 0
      %1700 = vmatpush1.bf16.msra.mxu0 0
      %1701 = vmatprep.subr.bf16.mxu0 0
      %1702 = vmatpush1.bf16.msra.mxu0 0
      %1703 = vmatprep.subr.bf16.mxu0 0
      %1704 = vmatpush1.bf16.msra.mxu0 0
      %1705 = vmatprep.subr.bf16.mxu0 0
      %1706 = vmatpush1.bf16.msra.mxu0 0
      %1707 = vmatprep.subr.bf16.mxu0 0
      %1708 = vmatpush1.bf16.msra.mxu0 0
      %1709 = vmatprep.subr.bf16.mxu0 0
      %1710 = vmatpush1.bf16.msra.mxu0 0
      %1711 = vmatprep.subr.bf16.mxu0 0
      %1712 = vmatpush1.bf16.msra.mxu0 0
      %1713 = vmatprep.subr.bf16.mxu0 0
      %1714 = vmatpush1.bf16.msra.mxu0 0
      %1715 = vmatprep.subr.bf16.mxu0 0
      %1716 = vmatpush1.bf16.msra.mxu0 0
      %1717 = vmatprep.subr.bf16.mxu0 0
      %1718 = vmatpush1.bf16.msra.mxu0 0
      %1719 = vmatprep.subr.bf16.mxu0 0
      %1720 = vmatpush1.bf16.msra.mxu0 0
      %1721 = vmatprep.subr.bf16.mxu0 0
      %1722 = vmatpush1.bf16.msra.mxu0 0
      %1723 = vmatprep.mubr.bf16.mxu0 0
      %1724 = vmatmul.mubr.bf16.gmra.mrb[0].mxu0 %v1680
      %v1725 = vpop.f32.mrb[0].mxu0
      %v1726 = vadd.f32 0.0, %v1725
      %v1727 = vpop.f32.mrb[0].mxu0
      %v1728 = vpop.f32.mrb[0].mxu0
      %v1729 = vadd.f32 0.0, %v1728
      %v1730 = vpop.f32.mrb[0].mxu0
      %1731 = vmatprep.mubr.bf16.mxu0 0
      %1732 = vmatmul.mubr.bf16.gmra.mrb[0].mxu0 %v1683
      %v1733 = vpop.f32.mrb[0].mxu0
      %v1734 = vadd.f32 0.0, %v1733
      %v1735 = vpop.f32.mrb[0].mxu0
      %v1736 = vpop.f32.mrb[0].mxu0
      %v1737 = vadd.f32 0.0, %v1736
      %v1738 = vpop.f32.mrb[0].mxu0
      %1739 = vmatprep.mubr.bf16.mxu0 0
      %1740 = vmatmul.mubr.bf16.gmra.mrb[0].mxu0 %v1686
      %v1741 = vpop.f32.mrb[0].mxu0
      %v1742 = vadd.f32 0.0, %v1741
      %v1743 = vpop.f32.mrb[0].mxu0
      %v1744 = vpop.f32.mrb[0].mxu0
      %v1745 = vadd.f32 0.0, %v1744
      %v1746 = vpop.f32.mrb[0].mxu0
      %1747 = vmatprep.mubr.bf16.mxu0 0
      %1748 = vmatmul.mubr.bf16.gmra.mrb[0].mxu0 %v1689
      %v1749 = vpop.f32.mrb[0].mxu0
      %v1750 = vadd.f32 0.0, %v1749
      %v1751 = vpop.f32.mrb[0].mxu0
      %v1752 = vpop.f32.mrb[0].mxu0
      %v1753 = vadd.f32 0.0, %v1752
      %v1754 = vpop.f32.mrb[0].mxu0
      %1755 = vdwg.mxu0
      %v1756 = vadd.f32 %v1594, %v1726
      %v1757 = vadd.f32 %v1595, %v1729
      %v1758 = vadd.f32 %v1596, %v1734
      %v1759 = vadd.f32 %v1597, %v1737
      %v1760 = vadd.f32 %v1598, %v1742
      %v1761 = vadd.f32 %v1599, %v1745
      %v1762 = vadd.f32 %v1600, %v1750
      %v1763 = vadd.f32 %v1601, %v1753
      %v1764 = vld [vmem:[%s2] sm:$0x1]
      %v1766 = vlaneseq
      %v1767 = vshrl.u32 %v1766, 7
      %v1768 = vsub.s32 0, %v1767
      %v1769 = vrot.slane %v1764, %v1768
      %v1771 = vadd.f32 %v1756, %v1769
      %v1772 = vadd.f32 %v1757, %v1769
      %v1773 = vadd.f32 %v1758, %v1769
      %v1774 = vadd.f32 %v1759, %v1769
      %v1775 = vadd.f32 %v1760, %v1769
      %v1776 = vadd.f32 %v1761, %v1769
      %v1777 = vadd.f32 %v1762, %v1769
      %v1778 = vadd.f32 %v1763, %v1769
      %v1779 = vmax.f32 %v1771, 0.0
      %v1780 = vmax.f32 %v1772, 0.0
      %v1781 = vmax.f32 %v1773, 0.0
      %v1782 = vmax.f32 %v1774, 0.0
      %v1783 = vmax.f32 %v1775, 0.0
      %v1784 = vmax.f32 %v1776, 0.0
      %v1785 = vmax.f32 %v1777, 0.0
      %v1786 = vmax.f32 %v1778, 0.0
      %v1787 = vpack.c.bf16 %v1780, %v1779
      %v1788 = vpack.c.bf16 %v1782, %v1781
      %v1789 = vpack.c.bf16 %v1784, %v1783
      %v1790 = vpack.c.bf16 %v1786, %v1785
      %v1791 = vld [vmem:[%s3] sm:$0xf]
      %v1792 = vld [vmem:[%s3 + $0x4] sm:$0xf]
      %v1793 = vld [vmem:[%s3 + $0x8] sm:$0xf]
      %v1794 = vld [vmem:[%s3 + $0xc] sm:$0xf]
      %v1795 = vld [vmem:[%s3 + $0x10] sm:$0xf]
      %v1796 = vld [vmem:[%s3 + $0x14] sm:$0xf]
      %v1797 = vld [vmem:[%s3 + $0x18] sm:$0xf]
      %v1798 = vld [vmem:[%s3 + $0x1c] sm:$0xf]
      %v1799 = vld [vmem:[%s3 + $0x20] sm:$0xf]
      %v1800 = vld [vmem:[%s3 + $0x24] sm:$0xf]
      %v1801 = vld [vmem:[%s3 + $0x28] sm:$0xf]
      %v1802 = vld [vmem:[%s3 + $0x2c] sm:$0xf]
      %v1803 = vld [vmem:[%s3 + $0x30] sm:$0xf]
      %v1804 = vld [vmem:[%s3 + $0x34] sm:$0xf]
      %v1805 = vld [vmem:[%s3 + $0x38] sm:$0xf]
      %v1806 = vld [vmem:[%s3 + $0x3c] sm:$0xf]
      %v1807 = vld [vmem:[%s4] sm:$0x1]
      %v1809 = vlaneseq
      %v1810 = vshrl.u32 %v1809, 7
      %v1811 = vsub.s32 0, %v1810
      %v1812 = vrot.slane %v1807, %v1811
      %v1830 = vunpack.c.l.b16 %v1791
      %v1831 = vunpack.c.l.b16 %v1792
      %v1832 = vunpack.c.l.b16 %v1793
      %v1833 = vunpack.c.l.b16 %v1794
      %v1834 = vunpack.c.l.b16 %v1795
      %v1835 = vunpack.c.l.b16 %v1796
      %v1836 = vunpack.c.l.b16 %v1797
      %v1837 = vunpack.c.l.b16 %v1798
      %v1838 = vunpack.c.l.b16 %v1799
      %v1839 = vunpack.c.l.b16 %v1800
      %v1840 = vunpack.c.l.b16 %v1801
      %v1841 = vunpack.c.l.b16 %v1802
      %v1842 = vunpack.c.l.b16 %v1803
      %v1843 = vunpack.c.l.b16 %v1804
      %v1844 = vunpack.c.l.b16 %v1805
      %v1845 = vunpack.c.l.b16 %v1806
      %v1846 = vpack.c.b16 %v1831, %v1830
      %v1847 = vpack.c.b16 %v1833, %v1832
      %v1848 = vpack.c.b16 %v1835, %v1834
      %v1849 = vpack.c.b16 %v1837, %v1836
      %v1850 = vpack.c.b16 %v1839, %v1838
      %v1851 = vpack.c.b16 %v1841, %v1840
      %v1852 = vpack.c.b16 %v1843, %v1842
      %v1853 = vpack.c.b16 %v1845, %v1844
      %1862 = vmatprep.subr.bf16.mxu0 0
      %1863 = vmatpush1.bf16.msra.mxu0 %v1846
      %1864 = vmatprep.subr.bf16.mxu0 0
      %1865 = vmatpush1.bf16.msra.mxu0 %v1847
      %1866 = vmatprep.subr.bf16.mxu0 0
      %1867 = vmatpush1.bf16.msra.mxu0 %v1848
      %1868 = vmatprep.subr.bf16.mxu0 0
      %1869 = vmatpush1.bf16.msra.mxu0 %v1849
      %1870 = vmatprep.subr.bf16.mxu0 0
      %1871 = vmatpush1.bf16.msra.mxu0 %v1850
      %1872 = vmatprep.subr.bf16.mxu0 0
      %1873 = vmatpush1.bf16.msra.mxu0 %v1851
      %1874 = vmatprep.subr.bf16.mxu0 0
      %1875 = vmatpush1.bf16.msra.mxu0 %v1852
      %1876 = vmatprep.subr.bf16.mxu0 0
      %1877 = vmatpush1.bf16.msra.mxu0 %v1853
      %1878 = vmatprep.subr.bf16.mxu0 0
      %1879 = vmatpush1.bf16.msra.mxu0 0
      %1880 = vmatprep.subr.bf16.mxu0 0
      %1881 = vmatpush1.bf16.msra.mxu0 0
      %1882 = vmatprep.subr.bf16.mxu0 0
      %1883 = vmatpush1.bf16.msra.mxu0 0
      %1884 = vmatprep.subr.bf16.mxu0 0
      %1885 = vmatpush1.bf16.msra.mxu0 0
      %1886 = vmatprep.subr.bf16.mxu0 0
      %1887 = vmatpush1.bf16.msra.mxu0 0
      %1888 = vmatprep.subr.bf16.mxu0 0
      %1889 = vmatpush1.bf16.msra.mxu0 0
      %1890 = vmatprep.subr.bf16.mxu0 0
      %1891 = vmatpush1.bf16.msra.mxu0 0
      %1892 = vmatprep.subr.bf16.mxu0 0
      %1893 = vmatpush1.bf16.msra.mxu0 0
      %1894 = vmatprep.mubr.bf16.mxu0 0
      %1895 = vmatmul.mubr.bf16.gmra.mrb[0].mxu0 %v1787
      %v1896 = vpop.f32.mrb[0].mxu0
      %v1897 = vadd.f32 %v1812, %v1896
      %v1898 = vpop.f32.mrb[0].mxu0
      %v1899 = vpop.f32.mrb[0].mxu0
      %v1900 = vadd.f32 %v1812, %v1899
      %v1901 = vpop.f32.mrb[0].mxu0
      %1902 = vmatprep.mubr.bf16.mxu0 0
      %1903 = vmatmul.mubr.bf16.gmra.mrb[0].mxu0 %v1788
      %v1904 = vpop.f32.mrb[0].mxu0
      %v1905 = vadd.f32 %v1812, %v1904
      %v1906 = vpop.f32.mrb[0].mxu0
      %v1907 = vpop.f32.mrb[0].mxu0
      %v1908 = vadd.f32 %v1812, %v1907
      %v1909 = vpop.f32.mrb[0].mxu0
      %1910 = vmatprep.mubr.bf16.mxu0 0
      %1911 = vmatmul.mubr.bf16.gmra.mrb[0].mxu0 %v1789
      %v1912 = vpop.f32.mrb[0].mxu0
      %v1913 = vadd.f32 %v1812, %v1912
      %v1914 = vpop.f32.mrb[0].mxu0
      %v1915 = vpop.f32.mrb[0].mxu0
      %v1916 = vadd.f32 %v1812, %v1915
      %v1917 = vpop.f32.mrb[0].mxu0
      %1918 = vmatprep.mubr.bf16.mxu0 0
      %1919 = vmatmul.mubr.bf16.gmra.mrb[0].mxu0 %v1790
      %v1920 = vpop.f32.mrb[0].mxu0
      %v1921 = vadd.f32 %v1812, %v1920
      %v1922 = vpop.f32.mrb[0].mxu0
      %v1923 = vpop.f32.mrb[0].mxu0
      %v1924 = vadd.f32 %v1812, %v1923
      %v1925 = vpop.f32.mrb[0].mxu0
      %1926 = vdwg.mxu0
      %1927 = vst [vmem:[%s224] sm:$0xff] %v1897
      %1928 = vst [vmem:[%s224 + $0x8] sm:$0xff] %v1900
      %1929 = vst [vmem:[%s224 + $0x10] sm:$0xff] %v1905
      %1930 = vst [vmem:[%s224 + $0x18] sm:$0xff] %v1908
      %1931 = vst [vmem:[%s224 + $0x20] sm:$0xff] %v1913
      %1932 = vst [vmem:[%s224 + $0x28] sm:$0xff] %v1916
      %1933 = vst [vmem:[%s224 + $0x30] sm:$0xff] %v1921
      %1934 = vst [vmem:[%s224 + $0x38] sm:$0xff] %v1924
      %p1935 = scmp.lt.s32.totalorder %s16, 1
      %s1936 = scalar_select %p1935, %s16, 1
      %s1937 = smul.addr %s1936, 8
      %s1938 = smul.addr %s1937, 8
      %s1939 = scalar_lea.vmem %s5, %s1938
      // Predicated region
      $region41: #{forward.14} parent=39 // pred_check
        %p1940 = pneg %p144
      $region42: #{forward.14} parent=39 // pred_check_branch
        %1942 = sbr.rel (%p1940) target = $region44
      $region43: #{forward.14} parent=39 // pred_region
        _
      $region44: #{forward.14} parent=39 // pred_fallthru
        _
    $region40: #{forward.14} parent=5 // pred_fallthru
      _
    %p1943 = scmp.le.s32.totalorder 2, %s11
    // Predicated region
    $region45: #{forward.14} parent=5 // pred_check
      %p1944 = pneg %p1943
    $region46: #{forward.14} parent=5 // pred_check_branch
      %1946 = sbr.rel (%p1944) target = $region48
    $region47: #{forward.14} parent=5 // pred_region
      %s1947 = ssub.s32 %s11, 2
      // Predicated region
      $region49: #{forward.14} parent=47 // pred_check
        %p1948 = pneg %p150
      $region50: #{forward.14} parent=47 // pred_check_branch
        %1950 = sbr.rel (%p1948) target = $region52
      $region51: #{forward.14} parent=47 // pred_region
        %p1951 = scmp.lt.s32.totalorder %s17, 1
        %s1952 = scalar_select %p1951, %s17, 1
        %s1953 = smul.addr %s1952, 8
        %s1954 = smul.addr %s1953, 8
        %s1955 = scalar_lea.vmem %s5, %s1954
      $region52: #{forward.14} parent=47 // pred_fallthru
        _
    $region48: #{forward.14} parent=5 // pred_fallthru
      _
  $region6: #{forward.14} parent=0 // loop_footer
    %s15 = sadd.s32 1, %s11
  $region7: #{forward.14} parent=0 // loop_footer_branch
    %10 = sbr.rel target = $region3
  $region8: #{forward.14} parent=0 // loop_exit
    _

// kernel: ne.0.clone
$region0: #{ne.0.clone}
  #allocation2 [shape = 's32[1]{0}', space=sflag, size = 0x4, scoped, tag = 'scoped memory for ne.0.clone']
  %s0 = inlined_call_operand.<no memory space> [shape: s32[], index: 0, kind: input, shape index: {}]
  %s1 = inlined_call_operand.hbm [shape: s32[2,8], index: 1, kind: output, shape index: {}]
  %v2 = vstv %s0
  $region1: #{ne.0.clone} parent=0
    #allocation0 [shape = 'u8[1024]{0}', space=vmem, size = 0x400, scoped, tag = 'operand span for operand 1']
    #allocation1 [shape = 's32[1]{0}', space=sflag, size = 0x4, scoped, tag = 'scoped memory for ne.0.clone']
    %3 = vsyncpa [#allocation1], 0
    %4 = vst [vmem:[#allocation0] sm:$0x3] %v2
    %s6 = ssub.s32 32, 32
    %7 = vsyncadd [#allocation1], %s6
    %s9 = sshll.u32 [#allocation0], 4
    %s10 = int_to_ptr.vmem [resolvable:$true] %s9
    %12 = dma.vmem_to_hbm [thread:$0]  %s10, 32, %s1, [#allocation1]
    %13 = dma.done [#allocation1], 32
    %14 = vsyncpa [#allocation1], 1

// kernel: forward.15
$region0: #{forward.15}
  #allocation0 [shape = 'u32[]', space=smem, size = 0x4, offset = 0x4, fixed_abs, tag = 'smem constant byte address 0x4 - core index']
  #allocation1 [shape = 'u32[144,128]{1,0:T(1,128)}', space=vmem, size = 0x12000, scoped, tag = 'internal scratch']
  %s0 = inlined_call_operand.vmem [shape: bf16[16,784], index: 0, kind: input, shape index: {}]
  %s1 = inlined_call_operand.vmem [shape: bf16[784,128], index: 1, kind: input, shape index: {}]
  %s2 = inlined_call_operand.vmem [shape: f32[1,128], index: 2, kind: input, shape index: {}]
  %s3 = inlined_call_operand.vmem [shape: bf16[128,128], index: 3, kind: input, shape index: {}]
  %s4 = inlined_call_operand.vmem [shape: f32[1,128], index: 4, kind: input, shape index: {}]
  %s5 = inlined_call_operand.vmem [shape: bf16[128,128], index: 5, kind: input, shape index: {}]
  %s6 = inlined_call_operand.vmem [shape: f32[1,128], index: 6, kind: input, shape index: {}]
  %s7 = inlined_call_operand.vmem [shape: f32[16,128], index: 7, kind: output, shape index: {}]
  %s8 = sld [smem:[#allocation0]]
  $region38: #{forward.15} parent=0
    _
  %s10 = ssub.s32 1, %s8
  %s11 = scalar_select 0, %s10, %s8
  // Predicated region
  $region2: #{forward.15} parent=0 // pred_check
    _
  $region3: #{forward.15} parent=0 // pred_check_branch
    %13 = sbr.rel (0) target = $region5
  $region4: #{forward.15} parent=0 // pred_region
    _
  $region5: #{forward.15} parent=0 // pred_fallthru
    _
  // Predicated region
  $region6: #{forward.15} parent=0 // pred_check
    _
  $region7: #{forward.15} parent=0 // pred_check_branch
    %15 = sbr.rel (0) target = $region9
  $region8: #{forward.15} parent=0 // pred_region
    _
  $region9: #{forward.15} parent=0 // pred_fallthru
    _
  // Predicated region
  $region10: #{forward.15} parent=0 // pred_check
    _
  $region11: #{forward.15} parent=0 // pred_check_branch
    %17 = sbr.rel (0) target = $region13
  $region12: #{forward.15} parent=0 // pred_region
    _
  $region13: #{forward.15} parent=0 // pred_fallthru
    _
  // Predicated region
  $region14: #{forward.15} parent=0 // pred_check
    _
  $region15: #{forward.15} parent=0 // pred_check_branch
    %19 = sbr.rel (0) target = $region17
  $region16: #{forward.15} parent=0 // pred_region
    _
  $region17: #{forward.15} parent=0 // pred_fallthru
    _
  // Predicated region
  $region18: #{forward.15} parent=0 // pred_check
    _
  $region19: #{forward.15} parent=0 // pred_check_branch
    %21 = sbr.rel (0) target = $region21
  $region20: #{forward.15} parent=0 // pred_region
    _
  $region21: #{forward.15} parent=0 // pred_fallthru
    _
  // Predicated region
  $region22: #{forward.15} parent=0 // pred_check
    _
  $region23: #{forward.15} parent=0 // pred_check_branch
    %23 = sbr.rel (0) target = $region25
  $region24: #{forward.15} parent=0 // pred_region
    _
  $region25: #{forward.15} parent=0 // pred_fallthru
    _
  // Predicated region
  $region26: #{forward.15} parent=0 // pred_check
    _
  $region27: #{forward.15} parent=0 // pred_check_branch
    %25 = sbr.rel (0) target = $region29
  $region28: #{forward.15} parent=0 // pred_region
    _
  $region29: #{forward.15} parent=0 // pred_fallthru
    _
  %v27 = vld [vmem:[%s0] sm:$0xff]
  %v28 = vld [vmem:[%s0 + $0x8] sm:$0xff]
  %v29 = vld [vmem:[%s0 + $0x10] sm:$0xff]
  %v30 = vld [vmem:[%s0 + $0x18] sm:$0xf]
  %v31 = vld [vmem:[%s0 + $0x1c] sm:$0xff]
  %v32 = vld [vmem:[%s0 + $0x24] sm:$0xff]
  %v33 = vld [vmem:[%s0 + $0x2c] sm:$0xff]
  %v34 = vld [vmem:[%s0 + $0x34] sm:$0xf]
  %v35 = vld [vmem:[%s1] sm:$0xf]
  %v36 = vld [vmem:[%s1 + $0x4] sm:$0xf]
  %v37 = vld [vmem:[%s1 + $0x8] sm:$0xf]
  %v38 = vld [vmem:[%s1 + $0xc] sm:$0xf]
  %v39 = vld [vmem:[%s1 + $0x10] sm:$0xf]
  %v40 = vld [vmem:[%s1 + $0x14] sm:$0xf]
  %v41 = vld [vmem:[%s1 + $0x18] sm:$0xf]
  %v42 = vld [vmem:[%s1 + $0x1c] sm:$0xf]
  %v43 = vld [vmem:[%s1 + $0x20] sm:$0xf]
  %v44 = vld [vmem:[%s1 + $0x24] sm:$0xf]
  %v45 = vld [vmem:[%s1 + $0x28] sm:$0xf]
  %v46 = vld [vmem:[%s1 + $0x2c] sm:$0xf]
  %v47 = vld [vmem:[%s1 + $0x30] sm:$0xf]
  %v48 = vld [vmem:[%s1 + $0x34] sm:$0xf]
  %v49 = vld [vmem:[%s1 + $0x38] sm:$0xf]
  %v50 = vld [vmem:[%s1 + $0x3c] sm:$0xf]
  %v51 = vld [vmem:[%s1 + $0x40] sm:$0xf]
  %v52 = vld [vmem:[%s1 + $0x44] sm:$0xf]
  %v53 = vld [vmem:[%s1 + $0x48] sm:$0xf]
  %v54 = vld [vmem:[%s1 + $0x4c] sm:$0xf]
  %v55 = vld [vmem:[%s1 + $0x50] sm:$0xf]
  %v56 = vld [vmem:[%s1 + $0x54] sm:$0xf]
  %v57 = vld [vmem:[%s1 + $0x58] sm:$0xf]
  %v58 = vld [vmem:[%s1 + $0x5c] sm:$0xf]
  %v59 = vld [vmem:[%s1 + $0x60] sm:$0xf]
  %v60 = vld [vmem:[%s1 + $0x64] sm:$0xf]
  %v61 = vld [vmem:[%s1 + $0x68] sm:$0xf]
  %v62 = vld [vmem:[%s1 + $0x6c] sm:$0xf]
  %v63 = vld [vmem:[%s1 + $0x70] sm:$0xf]
  %v64 = vld [vmem:[%s1 + $0x74] sm:$0xf]
  %v65 = vld [vmem:[%s1 + $0x78] sm:$0xf]
  %v66 = vld [vmem:[%s1 + $0x7c] sm:$0xf]
  %v67 = vld [vmem:[%s1 + $0x80] sm:$0xf]
  %v68 = vld [vmem:[%s1 + $0x84] sm:$0xf]
  %v69 = vld [vmem:[%s1 + $0x88] sm:$0xf]
  %v70 = vld [vmem:[%s1 + $0x8c] sm:$0xf]
  %v71 = vld [vmem:[%s1 + $0x90] sm:$0xf]
  %v72 = vld [vmem:[%s1 + $0x94] sm:$0xf]
  %v73 = vld [vmem:[%s1 + $0x98] sm:$0xf]
  %v74 = vld [vmem:[%s1 + $0x9c] sm:$0xf]
  %v75 = vld [vmem:[%s1 + $0xa0] sm:$0xf]
  %v76 = vld [vmem:[%s1 + $0xa4] sm:$0xf]
  %v77 = vld [vmem:[%s1 + $0xa8] sm:$0xf]
  %v78 = vld [vmem:[%s1 + $0xac] sm:$0xf]
  %v79 = vld [vmem:[%s1 + $0xb0] sm:$0xf]
  %v80 = vld [vmem:[%s1 + $0xb4] sm:$0xf]
  %v81 = vld [vmem:[%s1 + $0xb8] sm:$0xf]
  %v82 = vld [vmem:[%s1 + $0xbc] sm:$0xf]
  %v83 = vld [vmem:[%s1 + $0xc0] sm:$0xf]
  %v84 = vld [vmem:[%s1 + $0xc4] sm:$0xf]
  %v85 = vld [vmem:[%s1 + $0xc8] sm:$0xf]
  %v86 = vld [vmem:[%s1 + $0xcc] sm:$0xf]
  %v87 = vld [vmem:[%s1 + $0xd0] sm:$0xf]
  %v88 = vld [vmem:[%s1 + $0xd4] sm:$0xf]
  %v89 = vld [vmem:[%s1 + $0xd8] sm:$0xf]
  %v90 = vld [vmem:[%s1 + $0xdc] sm:$0xf]
  %v91 = vld [vmem:[%s1 + $0xe0] sm:$0xf]
  %v92 = vld [vmem:[%s1 + $0xe4] sm:$0xf]
  %v93 = vld [vmem:[%s1 + $0xe8] sm:$0xf]
  %v94 = vld [vmem:[%s1 + $0xec] sm:$0xf]
  %v95 = vld [vmem:[%s1 + $0xf0] sm:$0xf]
  %v96 = vld [vmem:[%s1 + $0xf4] sm:$0xf]
  %v97 = vld [vmem:[%s1 + $0xf8] sm:$0xf]
  %v98 = vld [vmem:[%s1 + $0xfc] sm:$0xf]
  %v99 = vld [vmem:[%s1 + $0x100] sm:$0xf]
  %v100 = vld [vmem:[%s1 + $0x104] sm:$0xf]
  %v101 = vld [vmem:[%s1 + $0x108] sm:$0xf]
  %v102 = vld [vmem:[%s1 + $0x10c] sm:$0xf]
  %v103 = vld [vmem:[%s1 + $0x110] sm:$0xf]
  %v104 = vld [vmem:[%s1 + $0x114] sm:$0xf]
  %v105 = vld [vmem:[%s1 + $0x118] sm:$0xf]
  %v106 = vld [vmem:[%s1 + $0x11c] sm:$0xf]
  %v107 = vld [vmem:[%s1 + $0x120] sm:$0xf]
  %v108 = vld [vmem:[%s1 + $0x124] sm:$0xf]
  %v109 = vld [vmem:[%s1 + $0x128] sm:$0xf]
  %v110 = vld [vmem:[%s1 + $0x12c] sm:$0xf]
  %v111 = vld [vmem:[%s1 + $0x130] sm:$0xf]
  %v112 = vld [vmem:[%s1 + $0x134] sm:$0xf]
  %v113 = vld [vmem:[%s1 + $0x138] sm:$0xf]
  %v114 = vld [vmem:[%s1 + $0x13c] sm:$0xf]
  %v115 = vld [vmem:[%s1 + $0x140] sm:$0xf]
  %v116 = vld [vmem:[%s1 + $0x144] sm:$0xf]
  %v117 = vld [vmem:[%s1 + $0x148] sm:$0xf]
  %v118 = vld [vmem:[%s1 + $0x14c] sm:$0xf]
  %v119 = vld [vmem:[%s1 + $0x150] sm:$0xf]
  %v120 = vld [vmem:[%s1 + $0x154] sm:$0xf]
  %v121 = vld [vmem:[%s1 + $0x158] sm:$0xf]
  %v122 = vld [vmem:[%s1 + $0x15c] sm:$0xf]
  %v123 = vld [vmem:[%s1 + $0x160] sm:$0xf]
  %v124 = vld [vmem:[%s1 + $0x164] sm:$0xf]
  %v125 = vld [vmem:[%s1 + $0x168] sm:$0xf]
  %v126 = vld [vmem:[%s1 + $0x16c] sm:$0xf]
  %v127 = vld [vmem:[%s1 + $0x170] sm:$0xf]
  %v128 = vld [vmem:[%s1 + $0x174] sm:$0xf]
  %v129 = vld [vmem:[%s1 + $0x178] sm:$0xf]
  %v130 = vld [vmem:[%s1 + $0x17c] sm:$0xf]
  %v131 = vld [vmem:[%s1 + $0x180] sm:$0xf]
  %v132 = vld [vmem:[%s1 + $0x184] sm:$0xf]
  %v133 = vld [vmem:[%s2] sm:$0x1]
  %v135 = vlaneseq
  %v136 = vshrl.u32 %v135, 7
  %v137 = vsub.s32 0, %v136
  %v138 = vrot.slane %v133, %v137
  %v148 = vunpack.c.l.b16 %v27
  %v149 = vunpack.c.h.b16 %v27
  %v150 = vunpack.c.l.b16 %v28
  %v151 = vunpack.c.h.b16 %v28
  %v152 = vunpack.c.l.b16 %v29
  %v153 = vunpack.c.h.b16 %v29
  %v154 = vunpack.c.l.b16 %v30
  %v155 = vunpack.c.l.b16 %v31
  %v156 = vunpack.c.h.b16 %v31
  %v157 = vunpack.c.l.b16 %v32
  %v158 = vunpack.c.h.b16 %v32
  %v159 = vunpack.c.l.b16 %v33
  %v160 = vunpack.c.h.b16 %v33
  %v161 = vunpack.c.l.b16 %v34
  %v162 = vpack.c.b16 %v155, %v148
  %v163 = vpack.c.b16 %v156, %v149
  %v164 = vpack.c.b16 %v157, %v150
  %v165 = vpack.c.b16 %v158, %v151
  %v166 = vpack.c.b16 %v159, %v152
  %v167 = vpack.c.b16 %v160, %v153
  %v168 = vpack.c.b16 %v161, %v154
  %v273 = vunpack.c.l.b16 %v35
  %v274 = vunpack.c.l.b16 %v36
  %v275 = vunpack.c.l.b16 %v37
  %v276 = vunpack.c.l.b16 %v38
  %v277 = vunpack.c.l.b16 %v39
  %v278 = vunpack.c.l.b16 %v40
  %v279 = vunpack.c.l.b16 %v41
  %v280 = vunpack.c.l.b16 %v42
  %v281 = vunpack.c.l.b16 %v43
  %v282 = vunpack.c.l.b16 %v44
  %v283 = vunpack.c.l.b16 %v45
  %v284 = vunpack.c.l.b16 %v46
  %v285 = vunpack.c.l.b16 %v47
  %v286 = vunpack.c.l.b16 %v48
  %v287 = vunpack.c.l.b16 %v49
  %v288 = vunpack.c.l.b16 %v50
  %v289 = vunpack.c.l.b16 %v51
  %v290 = vunpack.c.l.b16 %v52
  %v291 = vunpack.c.l.b16 %v53
  %v292 = vunpack.c.l.b16 %v54
  %v293 = vunpack.c.l.b16 %v55
  %v294 = vunpack.c.l.b16 %v56
  %v295 = vunpack.c.l.b16 %v57
  %v296 = vunpack.c.l.b16 %v58
  %v297 = vunpack.c.l.b16 %v59
  %v298 = vunpack.c.l.b16 %v60
  %v299 = vunpack.c.l.b16 %v61
  %v300 = vunpack.c.l.b16 %v62
  %v301 = vunpack.c.l.b16 %v63
  %v302 = vunpack.c.l.b16 %v64
  %v303 = vunpack.c.l.b16 %v65
  %v304 = vunpack.c.l.b16 %v66
  %v305 = vunpack.c.l.b16 %v67
  %v306 = vunpack.c.l.b16 %v68
  %v307 = vunpack.c.l.b16 %v69
  %v308 = vunpack.c.l.b16 %v70
  %v309 = vunpack.c.l.b16 %v71
  %v310 = vunpack.c.l.b16 %v72
  %v311 = vunpack.c.l.b16 %v73
  %v312 = vunpack.c.l.b16 %v74
  %v313 = vunpack.c.l.b16 %v75
  %v314 = vunpack.c.l.b16 %v76
  %v315 = vunpack.c.l.b16 %v77
  %v316 = vunpack.c.l.b16 %v78
  %v317 = vunpack.c.l.b16 %v79
  %v318 = vunpack.c.l.b16 %v80
  %v319 = vunpack.c.l.b16 %v81
  %v320 = vunpack.c.l.b16 %v82
  %v321 = vunpack.c.l.b16 %v83
  %v322 = vunpack.c.l.b16 %v84
  %v323 = vunpack.c.l.b16 %v85
  %v324 = vunpack.c.l.b16 %v86
  %v325 = vunpack.c.l.b16 %v87
  %v326 = vunpack.c.l.b16 %v88
  %v327 = vunpack.c.l.b16 %v89
  %v328 = vunpack.c.l.b16 %v90
  %v329 = vunpack.c.l.b16 %v91
  %v330 = vunpack.c.l.b16 %v92
  %v331 = vunpack.c.l.b16 %v93
  %v332 = vunpack.c.l.b16 %v94
  %v333 = vunpack.c.l.b16 %v95
  %v334 = vunpack.c.l.b16 %v96
  %v335 = vunpack.c.l.b16 %v97
  %v336 = vunpack.c.l.b16 %v98
  %v337 = vunpack.c.l.b16 %v99
  %v338 = vunpack.c.l.b16 %v100
  %v339 = vunpack.c.l.b16 %v101
  %v340 = vunpack.c.l.b16 %v102
  %v341 = vunpack.c.l.b16 %v103
  %v342 = vunpack.c.l.b16 %v104
  %v343 = vunpack.c.l.b16 %v105
  %v344 = vunpack.c.l.b16 %v106
  %v345 = vunpack.c.l.b16 %v107
  %v346 = vunpack.c.l.b16 %v108
  %v347 = vunpack.c.l.b16 %v109
  %v348 = vunpack.c.l.b16 %v110
  %v349 = vunpack.c.l.b16 %v111
  %v350 = vunpack.c.l.b16 %v112
  %v351 = vunpack.c.l.b16 %v113
  %v352 = vunpack.c.l.b16 %v114
  %v353 = vunpack.c.l.b16 %v115
  %v354 = vunpack.c.l.b16 %v116
  %v355 = vunpack.c.l.b16 %v117
  %v356 = vunpack.c.l.b16 %v118
  %v357 = vunpack.c.l.b16 %v119
  %v358 = vunpack.c.l.b16 %v120
  %v359 = vunpack.c.l.b16 %v121
  %v360 = vunpack.c.l.b16 %v122
  %v361 = vunpack.c.l.b16 %v123
  %v362 = vunpack.c.l.b16 %v124
  %v363 = vunpack.c.l.b16 %v125
  %v364 = vunpack.c.l.b16 %v126
  %v365 = vunpack.c.l.b16 %v127
  %v366 = vunpack.c.l.b16 %v128
  %v367 = vunpack.c.l.b16 %v129
  %v368 = vunpack.c.l.b16 %v130
  %v369 = vunpack.c.l.b16 %v131
  %v370 = vunpack.c.l.b16 %v132
  %v371 = vpack.c.b16 %v274, %v273
  %v372 = vpack.c.b16 %v276, %v275
  %v373 = vpack.c.b16 %v278, %v277
  %v374 = vpack.c.b16 %v280, %v279
  %v375 = vpack.c.b16 %v282, %v281
  %v376 = vpack.c.b16 %v284, %v283
  %v377 = vpack.c.b16 %v286, %v285
  %v378 = vpack.c.b16 %v288, %v287
  %v379 = vpack.c.b16 %v290, %v289
  %v380 = vpack.c.b16 %v292, %v291
  %v381 = vpack.c.b16 %v294, %v293
  %v382 = vpack.c.b16 %v296, %v295
  %v383 = vpack.c.b16 %v298, %v297
  %v384 = vpack.c.b16 %v300, %v299
  %v385 = vpack.c.b16 %v302, %v301
  %v386 = vpack.c.b16 %v304, %v303
  %v387 = vpack.c.b16 %v306, %v305
  %v388 = vpack.c.b16 %v308, %v307
  %v389 = vpack.c.b16 %v310, %v309
  %v390 = vpack.c.b16 %v312, %v311
  %v391 = vpack.c.b16 %v314, %v313
  %v392 = vpack.c.b16 %v316, %v315
  %v393 = vpack.c.b16 %v318, %v317
  %v394 = vpack.c.b16 %v320, %v319
  %v395 = vpack.c.b16 %v322, %v321
  %v396 = vpack.c.b16 %v324, %v323
  %v397 = vpack.c.b16 %v326, %v325
  %v398 = vpack.c.b16 %v328, %v327
  %v399 = vpack.c.b16 %v330, %v329
  %v400 = vpack.c.b16 %v332, %v331
  %v401 = vpack.c.b16 %v334, %v333
  %v402 = vpack.c.b16 %v336, %v335
  %v403 = vpack.c.b16 %v338, %v337
  %v404 = vpack.c.b16 %v340, %v339
  %v405 = vpack.c.b16 %v342, %v341
  %v406 = vpack.c.b16 %v344, %v343
  %v407 = vpack.c.b16 %v346, %v345
  %v408 = vpack.c.b16 %v348, %v347
  %v409 = vpack.c.b16 %v350, %v349
  %v410 = vpack.c.b16 %v352, %v351
  %v411 = vpack.c.b16 %v354, %v353
  %v412 = vpack.c.b16 %v356, %v355
  %v413 = vpack.c.b16 %v358, %v357
  %v414 = vpack.c.b16 %v360, %v359
  %v415 = vpack.c.b16 %v362, %v361
  %v416 = vpack.c.b16 %v364, %v363
  %v417 = vpack.c.b16 %v366, %v365
  %v418 = vpack.c.b16 %v368, %v367
  %v419 = vpack.c.b16 %v370, %v369
  %vm469 = vcmask 130048
  %v471 = vsel %vm469, %v168, 0
  %473 = vmatprep.subr.bf16.mxu0 0
  %474 = vmatpush1.bf16.msra.mxu0 %v371
  %475 = vmatprep.subr.bf16.mxu0 0
  %476 = vmatpush1.bf16.msra.mxu0 %v372
  %477 = vmatprep.subr.bf16.mxu0 0
  %478 = vmatpush1.bf16.msra.mxu0 %v373
  %479 = vmatprep.subr.bf16.mxu0 0
  %480 = vmatpush1.bf16.msra.mxu0 %v374
  %481 = vmatprep.subr.bf16.mxu0 0
  %482 = vmatpush1.bf16.msra.mxu0 %v375
  %483 = vmatprep.subr.bf16.mxu0 0
  %484 = vmatpush1.bf16.msra.mxu0 %v376
  %485 = vmatprep.subr.bf16.mxu0 0
  %486 = vmatpush1.bf16.msra.mxu0 %v377
  %487 = vmatprep.subr.bf16.mxu0 0
  %488 = vmatpush1.bf16.msra.mxu0 %v378
  %489 = vmatprep.subr.bf16.mxu0 0
  %490 = vmatpush1.bf16.msra.mxu0 %v379
  %491 = vmatprep.subr.bf16.mxu0 0
  %492 = vmatpush1.bf16.msra.mxu0 %v380
  %493 = vmatprep.subr.bf16.mxu0 0
  %494 = vmatpush1.bf16.msra.mxu0 %v381
  %495 = vmatprep.subr.bf16.mxu0 0
  %496 = vmatpush1.bf16.msra.mxu0 %v382
  %497 = vmatprep.subr.bf16.mxu0 0
  %498 = vmatpush1.bf16.msra.mxu0 %v383
  %499 = vmatprep.subr.bf16.mxu0 0
  %500 = vmatpush1.bf16.msra.mxu0 %v384
  %501 = vmatprep.subr.bf16.mxu0 0
  %502 = vmatpush1.bf16.msra.mxu0 %v385
  %503 = vmatprep.subr.bf16.mxu0 0
  %504 = vmatpush1.bf16.msra.mxu0 %v386
  %505 = vmatprep.mubr.bf16.mxu0 %v163
  %506 = vmatmul.mubr.bf16.gmra.mrb[0].mxu0 %v162
  %v507 = vpop.f32.mrb[0].mxu0
  %v508 = vadd.f32 %v138, %v507
  %v509 = vpop.f32.mrb[0].mxu0
  %v510 = vpop.f32.mrb[0].mxu0
  %v511 = vadd.f32 %v138, %v510
  %v512 = vpop.f32.mrb[0].mxu0
  %513 = vdwg.mxu0
  %514 = vmatprep.subr.bf16.mxu0 0
  %515 = vmatpush1.bf16.msra.mxu0 %v387
  %516 = vmatprep.subr.bf16.mxu0 0
  %517 = vmatpush1.bf16.msra.mxu0 %v388
  %518 = vmatprep.subr.bf16.mxu0 0
  %519 = vmatpush1.bf16.msra.mxu0 %v389
  %520 = vmatprep.subr.bf16.mxu0 0
  %521 = vmatpush1.bf16.msra.mxu0 %v390
  %522 = vmatprep.subr.bf16.mxu0 0
  %523 = vmatpush1.bf16.msra.mxu0 %v391
  %524 = vmatprep.subr.bf16.mxu0 0
  %525 = vmatpush1.bf16.msra.mxu0 %v392
  %526 = vmatprep.subr.bf16.mxu0 0
  %527 = vmatpush1.bf16.msra.mxu0 %v393
  %528 = vmatprep.subr.bf16.mxu0 0
  %529 = vmatpush1.bf16.msra.mxu0 %v394
  %530 = vmatprep.subr.bf16.mxu0 0
  %531 = vmatpush1.bf16.msra.mxu0 %v395
  %532 = vmatprep.subr.bf16.mxu0 0
  %533 = vmatpush1.bf16.msra.mxu0 %v396
  %534 = vmatprep.subr.bf16.mxu0 0
  %535 = vmatpush1.bf16.msra.mxu0 %v397
  %536 = vmatprep.subr.bf16.mxu0 0
  %537 = vmatpush1.bf16.msra.mxu0 %v398
  %538 = vmatprep.subr.bf16.mxu0 0
  %539 = vmatpush1.bf16.msra.mxu0 %v399
  %540 = vmatprep.subr.bf16.mxu0 0
  %541 = vmatpush1.bf16.msra.mxu0 %v400
  %542 = vmatprep.subr.bf16.mxu0 0
  %543 = vmatpush1.bf16.msra.mxu0 %v401
  %544 = vmatprep.subr.bf16.mxu0 0
  %545 = vmatpush1.bf16.msra.mxu0 %v402
  %546 = vmatprep.mubr.bf16.mxu0 %v165
  %547 = vmatmul.mubr.bf16.gmra.mrb[0].mxu0 %v164
  %v548 = vpop.f32.mrb[0].mxu0
  %v549 = vadd.f32 %v508, %v548
  %v550 = vpop.f32.mrb[0].mxu0
  %v551 = vpop.f32.mrb[0].mxu0
  %v552 = vadd.f32 %v511, %v551
  %v553 = vpop.f32.mrb[0].mxu0
  %554 = vdwg.mxu0
  %555 = vmatprep.subr.bf16.mxu0 0
  %556 = vmatpush1.bf16.msra.mxu0 %v403
  %557 = vmatprep.subr.bf16.mxu0 0
  %558 = vmatpush1.bf16.msra.mxu0 %v404
  %559 = vmatprep.subr.bf16.mxu0 0
  %560 = vmatpush1.bf16.msra.mxu0 %v405
  %561 = vmatprep.subr.bf16.mxu0 0
  %562 = vmatpush1.bf16.msra.mxu0 %v406
  %563 = vmatprep.subr.bf16.mxu0 0
  %564 = vmatpush1.bf16.msra.mxu0 %v407
  %565 = vmatprep.subr.bf16.mxu0 0
  %566 = vmatpush1.bf16.msra.mxu0 %v408
  %567 = vmatprep.subr.bf16.mxu0 0
  %568 = vmatpush1.bf16.msra.mxu0 %v409
  %569 = vmatprep.subr.bf16.mxu0 0
  %570 = vmatpush1.bf16.msra.mxu0 %v410
  %571 = vmatprep.subr.bf16.mxu0 0
  %572 = vmatpush1.bf16.msra.mxu0 %v411
  %573 = vmatprep.subr.bf16.mxu0 0
  %574 = vmatpush1.bf16.msra.mxu0 %v412
  %575 = vmatprep.subr.bf16.mxu0 0
  %576 = vmatpush1.bf16.msra.mxu0 %v413
  %577 = vmatprep.subr.bf16.mxu0 0
  %578 = vmatpush1.bf16.msra.mxu0 %v414
  %579 = vmatprep.subr.bf16.mxu0 0
  %580 = vmatpush1.bf16.msra.mxu0 %v415
  %581 = vmatprep.subr.bf16.mxu0 0
  %582 = vmatpush1.bf16.msra.mxu0 %v416
  %583 = vmatprep.subr.bf16.mxu0 0
  %584 = vmatpush1.bf16.msra.mxu0 %v417
  %585 = vmatprep.subr.bf16.mxu0 0
  %586 = vmatpush1.bf16.msra.mxu0 %v418
  %587 = vmatprep.mubr.bf16.mxu0 %v167
  %588 = vmatmul.mubr.bf16.gmra.mrb[0].mxu0 %v166
  %v589 = vpop.f32.mrb[0].mxu0
  %v590 = vadd.f32 %v549, %v589
  %v591 = vpop.f32.mrb[0].mxu0
  %v592 = vpop.f32.mrb[0].mxu0
  %v593 = vadd.f32 %v552, %v592
  %v594 = vpop.f32.mrb[0].mxu0
  %595 = vdwg.mxu0
  %596 = vmatprep.subr.bf16.mxu0 0
  %597 = vmatpush1.bf16.msra.mxu0 %v419
  %598 = vmatprep.subr.bf16.mxu0 0
  %599 = vmatpush1.bf16.msra.mxu0 0
  %600 = vmatprep.subr.bf16.mxu0 0
  %601 = vmatpush1.bf16.msra.mxu0 0
  %602 = vmatprep.subr.bf16.mxu0 0
  %603 = vmatpush1.bf16.msra.mxu0 0
  %604 = vmatprep.subr.bf16.mxu0 0
  %605 = vmatpush1.bf16.msra.mxu0 0
  %606 = vmatprep.subr.bf16.mxu0 0
  %607 = vmatpush1.bf16.msra.mxu0 0
  %608 = vmatprep.subr.bf16.mxu0 0
  %609 = vmatpush1.bf16.msra.mxu0 0
  %610 = vmatprep.subr.bf16.mxu0 0
  %611 = vmatpush1.bf16.msra.mxu0 0
  %612 = vmatprep.subr.bf16.mxu0 0
  %613 = vmatpush1.bf16.msra.mxu0 0
  %614 = vmatprep.subr.bf16.mxu0 0
  %615 = vmatpush1.bf16.msra.mxu0 0
  %616 = vmatprep.subr.bf16.mxu0 0
  %617 = vmatpush1.bf16.msra.mxu0 0
  %618 = vmatprep.subr.bf16.mxu0 0
  %619 = vmatpush1.bf16.msra.mxu0 0
  %620 = vmatprep.subr.bf16.mxu0 0
  %621 = vmatpush1.bf16.msra.mxu0 0
  %622 = vmatprep.subr.bf16.mxu0 0
  %623 = vmatpush1.bf16.msra.mxu0 0
  %624 = vmatprep.subr.bf16.mxu0 0
  %625 = vmatpush1.bf16.msra.mxu0 0
  %626 = vmatprep.subr.bf16.mxu0 0
  %627 = vmatpush1.bf16.msra.mxu0 0
  %628 = vmatprep.mubr.bf16.mxu0 0
  %629 = vmatmul.mubr.bf16.gmra.mrb[0].mxu0 %v471
  %v630 = vpop.f32.mrb[0].mxu0
  %v631 = vadd.f32 %v590, %v630
  %v632 = vpop.f32.mrb[0].mxu0
  %v633 = vpop.f32.mrb[0].mxu0
  %v634 = vadd.f32 %v593, %v633
  %v635 = vpop.f32.mrb[0].mxu0
  %636 = vdwg.mxu0
  %v637 = vmax.f32 %v631, 0.0
  %v638 = vmax.f32 %v634, 0.0
  %v639 = vpack.c.bf16 %v638, %v637
  %v640 = vld [vmem:[%s3] sm:$0xf]
  %v641 = vld [vmem:[%s3 + $0x4] sm:$0xf]
  %v642 = vld [vmem:[%s3 + $0x8] sm:$0xf]
  %v643 = vld [vmem:[%s3 + $0xc] sm:$0xf]
  %v644 = vld [vmem:[%s3 + $0x10] sm:$0xf]
  %v645 = vld [vmem:[%s3 + $0x14] sm:$0xf]
  %v646 = vld [vmem:[%s3 + $0x18] sm:$0xf]
  %v647 = vld [vmem:[%s3 + $0x1c] sm:$0xf]
  %v648 = vld [vmem:[%s3 + $0x20] sm:$0xf]
  %v649 = vld [vmem:[%s3 + $0x24] sm:$0xf]
  %v650 = vld [vmem:[%s3 + $0x28] sm:$0xf]
  %v651 = vld [vmem:[%s3 + $0x2c] sm:$0xf]
  %v652 = vld [vmem:[%s3 + $0x30] sm:$0xf]
  %v653 = vld [vmem:[%s3 + $0x34] sm:$0xf]
  %v654 = vld [vmem:[%s3 + $0x38] sm:$0xf]
  %v655 = vld [vmem:[%s3 + $0x3c] sm:$0xf]
  %v656 = vld [vmem:[%s4] sm:$0x1]
  %v658 = vlaneseq
  %v659 = vshrl.u32 %v658, 7
  %v660 = vsub.s32 0, %v659
  %v661 = vrot.slane %v656, %v660
  %v679 = vunpack.c.l.b16 %v640
  %v680 = vunpack.c.l.b16 %v641
  %v681 = vunpack.c.l.b16 %v642
  %v682 = vunpack.c.l.b16 %v643
  %v683 = vunpack.c.l.b16 %v644
  %v684 = vunpack.c.l.b16 %v645
  %v685 = vunpack.c.l.b16 %v646
  %v686 = vunpack.c.l.b16 %v647
  %v687 = vunpack.c.l.b16 %v648
  %v688 = vunpack.c.l.b16 %v649
  %v689 = vunpack.c.l.b16 %v650
  %v690 = vunpack.c.l.b16 %v651
  %v691 = vunpack.c.l.b16 %v652
  %v692 = vunpack.c.l.b16 %v653
  %v693 = vunpack.c.l.b16 %v654
  %v694 = vunpack.c.l.b16 %v655
  %v695 = vpack.c.b16 %v680, %v679
  %v696 = vpack.c.b16 %v682, %v681
  %v697 = vpack.c.b16 %v684, %v683
  %v698 = vpack.c.b16 %v686, %v685
  %v699 = vpack.c.b16 %v688, %v687
  %v700 = vpack.c.b16 %v690, %v689
  %v701 = vpack.c.b16 %v692, %v691
  %v702 = vpack.c.b16 %v694, %v693
  %711 = vmatprep.subr.bf16.mxu0 0
  %712 = vmatpush1.bf16.msra.mxu0 %v695
  %713 = vmatprep.subr.bf16.mxu0 0
  %714 = vmatpush1.bf16.msra.mxu0 %v696
  %715 = vmatprep.subr.bf16.mxu0 0
  %716 = vmatpush1.bf16.msra.mxu0 %v697
  %717 = vmatprep.subr.bf16.mxu0 0
  %718 = vmatpush1.bf16.msra.mxu0 %v698
  %719 = vmatprep.subr.bf16.mxu0 0
  %720 = vmatpush1.bf16.msra.mxu0 %v699
  %721 = vmatprep.subr.bf16.mxu0 0
  %722 = vmatpush1.bf16.msra.mxu0 %v700
  %723 = vmatprep.subr.bf16.mxu0 0
  %724 = vmatpush1.bf16.msra.mxu0 %v701
  %725 = vmatprep.subr.bf16.mxu0 0
  %726 = vmatpush1.bf16.msra.mxu0 %v702
  %727 = vmatprep.subr.bf16.mxu0 0
  %728 = vmatpush1.bf16.msra.mxu0 0
  %729 = vmatprep.subr.bf16.mxu0 0
  %730 = vmatpush1.bf16.msra.mxu0 0
  %731 = vmatprep.subr.bf16.mxu0 0
  %732 = vmatpush1.bf16.msra.mxu0 0
  %733 = vmatprep.subr.bf16.mxu0 0
  %734 = vmatpush1.bf16.msra.mxu0 0
  %735 = vmatprep.subr.bf16.mxu0 0
  %736 = vmatpush1.bf16.msra.mxu0 0
  %737 = vmatprep.subr.bf16.mxu0 0
  %738 = vmatpush1.bf16.msra.mxu0 0
  %739 = vmatprep.subr.bf16.mxu0 0
  %740 = vmatpush1.bf16.msra.mxu0 0
  %741 = vmatprep.subr.bf16.mxu0 0
  %742 = vmatpush1.bf16.msra.mxu0 0
  %743 = vmatprep.mubr.bf16.mxu0 0
  %744 = vmatmul.mubr.bf16.gmra.mrb[0].mxu0 %v639
  %v745 = vpop.f32.mrb[0].mxu0
  %v746 = vadd.f32 %v661, %v745
  %v747 = vpop.f32.mrb[0].mxu0
  %v748 = vpop.f32.mrb[0].mxu0
  %v749 = vadd.f32 %v661, %v748
  %v750 = vpop.f32.mrb[0].mxu0
  %751 = vdwg.mxu0
  %v752 = vmax.f32 %v746, 0.0
  %v753 = vmax.f32 %v749, 0.0
  %v754 = vpack.c.bf16 %v753, %v752
  %v755 = vld [vmem:[%s5] sm:$0xf]
  %v756 = vld [vmem:[%s5 + $0x4] sm:$0xf]
  %v757 = vld [vmem:[%s5 + $0x8] sm:$0xf]
  %v758 = vld [vmem:[%s5 + $0xc] sm:$0xf]
  %v759 = vld [vmem:[%s5 + $0x10] sm:$0xf]
  %v760 = vld [vmem:[%s5 + $0x14] sm:$0xf]
  %v761 = vld [vmem:[%s5 + $0x18] sm:$0xf]
  %v762 = vld [vmem:[%s5 + $0x1c] sm:$0xf]
  %v763 = vld [vmem:[%s5 + $0x20] sm:$0xf]
  %v764 = vld [vmem:[%s5 + $0x24] sm:$0xf]
  %v765 = vld [vmem:[%s5 + $0x28] sm:$0xf]
  %v766 = vld [vmem:[%s5 + $0x2c] sm:$0xf]
  %v767 = vld [vmem:[%s5 + $0x30] sm:$0xf]
  %v768 = vld [vmem:[%s5 + $0x34] sm:$0xf]
  %v769 = vld [vmem:[%s5 + $0x38] sm:$0xf]
  %v770 = vld [vmem:[%s5 + $0x3c] sm:$0xf]
  %v771 = vld [vmem:[%s6] sm:$0x1]
  %v773 = vlaneseq
  %v774 = vshrl.u32 %v773, 7
  %v775 = vsub.s32 0, %v774
  %v776 = vrot.slane %v771, %v775
  %v794 = vunpack.c.l.b16 %v755
  %v795 = vunpack.c.l.b16 %v756
  %v796 = vunpack.c.l.b16 %v757
  %v797 = vunpack.c.l.b16 %v758
  %v798 = vunpack.c.l.b16 %v759
  %v799 = vunpack.c.l.b16 %v760
  %v800 = vunpack.c.l.b16 %v761
  %v801 = vunpack.c.l.b16 %v762
  %v802 = vunpack.c.l.b16 %v763
  %v803 = vunpack.c.l.b16 %v764
  %v804 = vunpack.c.l.b16 %v765
  %v805 = vunpack.c.l.b16 %v766
  %v806 = vunpack.c.l.b16 %v767
  %v807 = vunpack.c.l.b16 %v768
  %v808 = vunpack.c.l.b16 %v769
  %v809 = vunpack.c.l.b16 %v770
  %v810 = vpack.c.b16 %v795, %v794
  %v811 = vpack.c.b16 %v797, %v796
  %v812 = vpack.c.b16 %v799, %v798
  %v813 = vpack.c.b16 %v801, %v800
  %v814 = vpack.c.b16 %v803, %v802
  %v815 = vpack.c.b16 %v805, %v804
  %v816 = vpack.c.b16 %v807, %v806
  %v817 = vpack.c.b16 %v809, %v808
  %826 = vmatprep.subr.bf16.mxu0 0
  %827 = vmatpush1.bf16.msra.mxu0 %v810
  %828 = vmatprep.subr.bf16.mxu0 0
  %829 = vmatpush1.bf16.msra.mxu0 %v811
  %830 = vmatprep.subr.bf16.mxu0 0
  %831 = vmatpush1.bf16.msra.mxu0 %v812
  %832 = vmatprep.subr.bf16.mxu0 0
  %833 = vmatpush1.bf16.msra.mxu0 %v813
  %834 = vmatprep.subr.bf16.mxu0 0
  %835 = vmatpush1.bf16.msra.mxu0 %v814
  %836 = vmatprep.subr.bf16.mxu0 0
  %837 = vmatpush1.bf16.msra.mxu0 %v815
  %838 = vmatprep.subr.bf16.mxu0 0
  %839 = vmatpush1.bf16.msra.mxu0 %v816
  %840 = vmatprep.subr.bf16.mxu0 0
  %841 = vmatpush1.bf16.msra.mxu0 %v817
  %842 = vmatprep.subr.bf16.mxu0 0
  %843 = vmatpush1.bf16.msra.mxu0 0
  %844 = vmatprep.subr.bf16.mxu0 0
  %845 = vmatpush1.bf16.msra.mxu0 0
  %846 = vmatprep.subr.bf16.mxu0 0
  %847 = vmatpush1.bf16.msra.mxu0 0
  %848 = vmatprep.subr.bf16.mxu0 0
  %849 = vmatpush1.bf16.msra.mxu0 0
  %850 = vmatprep.subr.bf16.mxu0 0
  %851 = vmatpush1.bf16.msra.mxu0 0
  %852 = vmatprep.subr.bf16.mxu0 0
  %853 = vmatpush1.bf16.msra.mxu0 0
  %854 = vmatprep.subr.bf16.mxu0 0
  %855 = vmatpush1.bf16.msra.mxu0 0
  %856 = vmatprep.subr.bf16.mxu0 0
  %857 = vmatpush1.bf16.msra.mxu0 0
  %858 = vmatprep.mubr.bf16.mxu0 0
  %859 = vmatmul.mubr.bf16.gmra.mrb[0].mxu0 %v754
  %v860 = vpop.f32.mrb[0].mxu0
  %v861 = vadd.f32 %v776, %v860
  %v862 = vpop.f32.mrb[0].mxu0
  %v863 = vpop.f32.mrb[0].mxu0
  %v864 = vadd.f32 %v776, %v863
  %v865 = vpop.f32.mrb[0].mxu0
  %866 = vdwg.mxu0
  %867 = vst [vmem:[%s7] sm:$0xff] %v861
  %868 = vst [vmem:[%s7 + $0x8] sm:$0xff] %v864
  // Predicated region
  $region30: #{forward.15} parent=0 // pred_check
    _
  $region31: #{forward.15} parent=0 // pred_check_branch
    %870 = sbr.rel (0) target = $region33
  $region32: #{forward.15} parent=0 // pred_region
    _
  $region33: #{forward.15} parent=0 // pred_fallthru
    _
  // Predicated region
  $region34: #{forward.15} parent=0 // pred_check
    _
  $region35: #{forward.15} parent=0 // pred_check_branch
    %872 = sbr.rel (0) target = $region37
  $region36: #{forward.15} parent=0 // pred_region
    _
  $region37: #{forward.15} parent=0 // pred_fallthru
    _

</llo_original>
